<compile_context>
chip_gen: v7x
topology: tpu7x:2x2x1
jax: 0.10.0
libtpu: 0.0.40
codegen_flags: <defaults>
</compile_context>

<pallas_src>
import math

import jax
import jax.numpy as jnp
from jax import lax
from jax.experimental import pallas as pl
from jax.experimental.pallas import tpu as pltpu

# ----------------------------- config (synthetic BertConfig) -----------------
VOCAB = 64
HIDDEN = 32
LAYERS = 2
HEADS = 4
HEAD_DIM = HIDDEN // HEADS
INTER = 64
MAX_POS = 16
TYPE_VOCAB = 2
LN_EPS = 1e-12

B, S = 2, 8          # batch, sequence length
BS = B * S           # flattened rows


# ----------------------------- fused kernel ----------------------------------
def _bert_kernel(
    # data
    ids_ref, tt_ref, amask_ref, lbl_ref, nsp_lbl_ref,
    # embeddings
    word_emb_ref, pos_emb_ref, type_emb_ref, emb_ln_g_ref, emb_ln_b_ref,
    # stacked per-layer params
    qkv_w_ref, qkv_b_ref, ao_w_ref, ao_b_ref, a_ln_g_ref, a_ln_b_ref,
    i_w_ref, i_b_ref, o_w_ref, o_b_ref, o_ln_g_ref, o_ln_b_ref,
    # heads
    pooler_w_ref, pooler_b_ref, mlm_w_ref, mlm_b_ref,
    mlm_ln_g_ref, mlm_ln_b_ref, decoder_b_ref, nsp_w_ref, nsp_b_ref,
    # output
    out_ref,
    # scratch
    qkv_ref, ctx_ref):

  f32 = jnp.float32

  def layer_norm(x, g, b):
    mu = jnp.mean(x, axis=-1, keepdims=True)
    var = jnp.mean((x - mu) * (x - mu), axis=-1, keepdims=True)
    return (x - mu) * lax.rsqrt(var + LN_EPS) * g + b

  def gelu(x):
    # original BERT gelu: x * 0.5 * (1 + erf(x / sqrt(2)))
    return x * 0.5 * (1.0 + lax.erf(x * (1.0 / math.sqrt(2.0))))

  def dot(a, b):
    return jnp.dot(a, b, preferred_element_type=f32)

  def dot_bt(a, b):   # a @ b.T without materializing a transpose
    return lax.dot_general(a, b, (((1,), (1,)), ((), ())),
                           preferred_element_type=f32)

  # ---------------- embeddings ----------------
  ids = ids_ref[...]                                              # (BS, 1) i32
  word_oh = (lax.broadcasted_iota(jnp.int32, (BS, VOCAB), 1) == ids).astype(f32)
  word = dot(word_oh, word_emb_ref[...])                          # (BS, H)

  tt = tt_ref[...]                                                # (BS, 1) i32
  type_oh = (lax.broadcasted_iota(jnp.int32, (BS, TYPE_VOCAB), 1) == tt).astype(f32)
  typ = dot(type_oh, type_emb_ref[...])                           # (BS, H)

  # tile position embeddings for each batch via the VMEM scratch
  for b in range(B):
    ctx_ref[b * S:(b + 1) * S, :] = pos_emb_ref[0:S, :]
  pos = ctx_ref[...]                                              # (BS, H)

  hidden = layer_norm(word + typ + pos, emb_ln_g_ref[...], emb_ln_b_ref[...])

  # ---------------- attention mask bias (built in-kernel) ----------------
  bias_rows = []
  for b in range(B):
    mask_row = amask_ref[b:b + 1, :].astype(f32)                  # (1, S)
    bias_rows.append((1.0 - mask_row) * -10000.0)

  scale = 1.0 / math.sqrt(HEAD_DIM)

  # ---------------- encoder layers (unrolled) ----------------
  for l in range(LAYERS):
    qkv_ref[...] = dot(hidden, qkv_w_ref[l]) + qkv_b_ref[l]       # (BS, 3H)
    for b in range(B):
      bias_b = bias_rows[b]
      r0, r1 = b * S, (b + 1) * S
      for h in range(HEADS):
        c0 = h * HEAD_DIM
        q = qkv_ref[r0:r1, c0:c0 + HEAD_DIM]                      # (S, HD)
        k = qkv_ref[r0:r1, HIDDEN + c0:HIDDEN + c0 + HEAD_DIM]
        v = qkv_ref[r0:r1, 2 * HIDDEN + c0:2 * HIDDEN + c0 + HEAD_DIM]
        s = dot_bt(q, k) * scale + bias_b                         # (S, S)
        s = s - jnp.max(s, axis=-1, keepdims=True)
        p = jnp.exp(s)
        p = p / jnp.sum(p, axis=-1, keepdims=True)
        ctx_ref[r0:r1, c0:c0 + HEAD_DIM] = dot(p, v)              # (S, HD)

    attn = dot(ctx_ref[...], ao_w_ref[l]) + ao_b_ref[l]
    hidden = layer_norm(attn + hidden, a_ln_g_ref[l], a_ln_b_ref[l])
    inter = gelu(dot(hidden, i_w_ref[l]) + i_b_ref[l])
    ffn = dot(inter, o_w_ref[l]) + o_b_ref[l]
    hidden = layer_norm(ffn + hidden, o_ln_g_ref[l], o_ln_b_ref[l])

  # keep the final hidden in scratch so first-token rows can be ref-sliced
  ctx_ref[...] = hidden

  # ---------------- MLM head + masked-LM loss ----------------
  trans = gelu(dot(hidden, mlm_w_ref[...]) + mlm_b_ref[...])
  trans = layer_norm(trans, mlm_ln_g_ref[...], mlm_ln_b_ref[...])
  # tied decoder: trans @ word_emb.T done as a transposed dot_general
  mlm_logits = dot_bt(trans, word_emb_ref[...]) + decoder_b_ref[...]   # (BS, V)

  lbl = lbl_ref[...]                                               # (BS, 1) i32
  valid = (lbl != -1).astype(f32)                                  # (BS, 1)
  tgt_oh = (lax.broadcasted_iota(jnp.int32, (BS, VOCAB), 1) == lbl).astype(f32)
  m = jnp.max(mlm_logits, axis=-1, keepdims=True)
  lse = jnp.log(jnp.sum(jnp.exp(mlm_logits - m), axis=-1, keepdims=True)) + m
  tgt = jnp.sum(tgt_oh * mlm_logits, axis=-1, keepdims=True)
  per_row = (lse - tgt) * valid                                    # (BS, 1)

  ones_row = jnp.ones((1, BS), f32)
  row_sum = dot(ones_row, per_row)                                 # (1, 1)
  valid_sum = dot(ones_row, valid)                                 # (1, 1)
  mlm_loss = row_sum / jnp.maximum(valid_sum, 1.0)
  # NOTE: if every label is -1 PyTorch returns NaN; this returns 0 (edge case).

  # ---------------- pooler + NSP loss ----------------
  nsp_acc = jnp.zeros((1, 1), f32)
  for b in range(B):
    first = ctx_ref[b * S:b * S + 1, :]                            # (1, H)
    pooled = jnp.tanh(dot(first, pooler_w_ref[...]) + pooler_b_ref[...])
    logits2 = dot(pooled, nsp_w_ref[...]) + nsp_b_ref[...]         # (1, 2)
    lab = nsp_lbl_ref[b]                                           # SMEM scalar
    oh2 = (lax.broadcasted_iota(jnp.int32, (1, 2), 1) == lab).astype(f32)
    m2 = jnp.max(logits2, axis=-1, keepdims=True)
    lse2 = jnp.log(jnp.sum(jnp.exp(logits2 - m2), axis=-1, keepdims=True)) + m2
    tgt2 = jnp.sum(oh2 * logits2, axis=-1, keepdims=True)
    nsp_acc = nsp_acc + (lse2 - tgt2)
  nsp_loss = nsp_acc * (1.0 / B)

  out_ref[...] = mlm_loss + nsp_loss                               # (1, 1)


# ----------------------------- parameters ------------------------------------
def init_params(key):
  def nrm(k, shape):
    return 0.02 * jax.random.normal(k, shape, jnp.float32)

  keys = iter(jax.random.split(key, 64))
  ones = lambda s: jnp.ones(s, jnp.float32)
  zeros = lambda s: jnp.zeros(s, jnp.float32)
  return {
      "word_emb": nrm(next(keys), (VOCAB, HIDDEN)),
      "pos_emb": nrm(next(keys), (MAX_POS, HIDDEN)),
      "type_emb": nrm(next(keys), (TYPE_VOCAB, HIDDEN)),
      "emb_ln_g": ones((1, HIDDEN)), "emb_ln_b": zeros((1, HIDDEN)),
      # stacked per-layer params, QKV fused into one (H, 3H) weight
      "qkv_w": nrm(next(keys), (LAYERS, HIDDEN, 3 * HIDDEN)),
      "qkv_b": zeros((LAYERS, 1, 3 * HIDDEN)),
      "ao_w": nrm(next(keys), (LAYERS, HIDDEN, HIDDEN)),
      "ao_b": zeros((LAYERS, 1, HIDDEN)),
      "a_ln_g": ones((LAYERS, 1, HIDDEN)), "a_ln_b": zeros((LAYERS, 1, HIDDEN)),
      "i_w": nrm(next(keys), (LAYERS, HIDDEN, INTER)),
      "i_b": zeros((LAYERS, 1, INTER)),
      "o_w": nrm(next(keys), (LAYERS, INTER, HIDDEN)),
      "o_b": zeros((LAYERS, 1, HIDDEN)),
      "o_ln_g": ones((LAYERS, 1, HIDDEN)), "o_ln_b": zeros((LAYERS, 1, HIDDEN)),
      # heads
      "pooler_w": nrm(next(keys), (HIDDEN, HIDDEN)), "pooler_b": zeros((1, HIDDEN)),
      "mlm_w": nrm(next(keys), (HIDDEN, HIDDEN)), "mlm_b": zeros((1, HIDDEN)),
      "mlm_ln_g": ones((1, HIDDEN)), "mlm_ln_b": zeros((1, HIDDEN)),
      "decoder_b": zeros((1, VOCAB)),
      "nsp_w": nrm(next(keys), (HIDDEN, 2)), "nsp_b": zeros((1, 2)),
  }


# ----------------------------- forward wrapper --------------------------------
def bert_for_pretraining(params, input_ids, token_type_ids, attention_mask,
                         labels, next_sentence_label):
  args = [
      input_ids.reshape(BS, 1).astype(jnp.int32),
      token_type_ids.reshape(BS, 1).astype(jnp.int32),
      attention_mask.astype(jnp.int32),
      labels.reshape(BS, 1).astype(jnp.int32),
      next_sentence_label.astype(jnp.int32),
      params["word_emb"], params["pos_emb"], params["type_emb"],
      params["emb_ln_g"], params["emb_ln_b"],
      params["qkv_w"], params["qkv_b"], params["ao_w"], params["ao_b"],
      params["a_ln_g"], params["a_ln_b"], params["i_w"], params["i_b"],
      params["o_w"], params["o_b"], params["o_ln_g"], params["o_ln_b"],
      params["pooler_w"], params["pooler_b"],
      params["mlm_w"], params["mlm_b"], params["mlm_ln_g"], params["mlm_ln_b"],
      params["decoder_b"], params["nsp_w"], params["nsp_b"],
  ]
  in_specs = [pl.BlockSpec(memory_space=pltpu.MemorySpace.VMEM) for _ in args]
  in_specs[4] = pl.BlockSpec(memory_space=pltpu.MemorySpace.SMEM)  # nsp labels

  loss = pl.pallas_call(
      _bert_kernel,
      out_shape=jax.ShapeDtypeStruct((1, 1), jnp.float32),
      in_specs=in_specs,
      out_specs=pl.BlockSpec(memory_space=pltpu.MemorySpace.VMEM),
      scratch_shapes=[
          pltpu.VMEM((BS, 3 * HIDDEN), jnp.float32),  # fused QKV slab
          pltpu.VMEM((BS, HIDDEN), jnp.float32),      # ctx / pos / hidden slab
      ],
  )(*args)
  return loss[0, 0]


# ----------------------------- main -------------------------------------------
if __name__ == "__main__":
  root = jax.random.PRNGKey(0)
  k_param, k_ids, k_typ, k_lab, k_nsp = jax.random.split(root, 5)

  params = init_params(k_param)

  input_ids = jax.random.randint(k_ids, (B, S), 0, VOCAB, dtype=jnp.int32)
  token_type_ids = jax.random.randint(k_typ, (B, S), 0, TYPE_VOCAB, dtype=jnp.int32)
  attention_mask = jnp.ones((B, S), jnp.int32).at[:, -2:].set(0)
  # masked-LM labels: a few real targets, rest ignored (-1)
  labels = jnp.full((B, S), -1, jnp.int32)
  labels = labels.at[:, 1].set(jax.random.randint(k_lab, (B,), 0, VOCAB, dtype=jnp.int32))
  labels = labels.at[:, 3].set(jax.random.randint(k_nsp, (B,), 0, VOCAB, dtype=jnp.int32))
  next_sentence_label = jax.random.randint(k_nsp, (B,), 0, 2, dtype=jnp.int32)

  loss = jax.jit(bert_for_pretraining)(
      params, input_ids, token_type_ids, attention_mask, labels, next_sentence_label)
  jax.block_until_ready(loss)
  assert loss.shape == () and jnp.isfinite(loss)
  print("KERNEL_OK")
</pallas_src>

<mosaic_0001>
module attributes {stable_mosaic.version = 11 : i64} {
  func.func @_bert_kernel(%arg0: memref<16x1xi32, #tpu.memory_space<vmem>>, %arg1: memref<16x1xi32, #tpu.memory_space<vmem>>, %arg2: memref<2x8xi32, #tpu.memory_space<vmem>>, %arg3: memref<16x1xi32, #tpu.memory_space<vmem>>, %arg4: memref<2xi32, #tpu.memory_space<smem>>, %arg5: memref<64x32xf32, #tpu.memory_space<vmem>>, %arg6: memref<16x32xf32, #tpu.memory_space<vmem>>, %arg7: memref<2x32xf32, #tpu.memory_space<vmem>>, %arg8: memref<1x32xf32, #tpu.memory_space<vmem>>, %arg9: memref<1x32xf32, #tpu.memory_space<vmem>>, %arg10: memref<2x32x96xf32, #tpu.memory_space<vmem>>, %arg11: memref<2x1x96xf32, #tpu.memory_space<vmem>>, %arg12: memref<2x32x32xf32, #tpu.memory_space<vmem>>, %arg13: memref<2x1x32xf32, #tpu.memory_space<vmem>>, %arg14: memref<2x1x32xf32, #tpu.memory_space<vmem>>, %arg15: memref<2x1x32xf32, #tpu.memory_space<vmem>>, %arg16: memref<2x32x64xf32, #tpu.memory_space<vmem>>, %arg17: memref<2x1x64xf32, #tpu.memory_space<vmem>>, %arg18: memref<2x64x32xf32, #tpu.memory_space<vmem>>, %arg19: memref<2x1x32xf32, #tpu.memory_space<vmem>>, %arg20: memref<2x1x32xf32, #tpu.memory_space<vmem>>, %arg21: memref<2x1x32xf32, #tpu.memory_space<vmem>>, %arg22: memref<32x32xf32, #tpu.memory_space<vmem>>, %arg23: memref<1x32xf32, #tpu.memory_space<vmem>>, %arg24: memref<32x32xf32, #tpu.memory_space<vmem>>, %arg25: memref<1x32xf32, #tpu.memory_space<vmem>>, %arg26: memref<1x32xf32, #tpu.memory_space<vmem>>, %arg27: memref<1x32xf32, #tpu.memory_space<vmem>>, %arg28: memref<1x64xf32, #tpu.memory_space<vmem>>, %arg29: memref<32x2xf32, #tpu.memory_space<vmem>>, %arg30: memref<1x2xf32, #tpu.memory_space<vmem>>, %arg31: memref<1x1xf32, #tpu.memory_space<vmem>>, %arg32: memref<16x96xf32, #tpu.memory_space<vmem>>, %arg33: memref<16x32xf32, #tpu.memory_space<vmem>>) attributes {dimension_semantics = [], scalar_prefetch = 0 : i64, scratch_operands = 2 : i64, tpu.core_type = #tpu.core_type<tc>} {
    %c0 = arith.constant 0 : index
    %c0_0 = arith.constant 0 : index
    %0 = vector.load %arg0[%c0, %c0_0] : memref<16x1xi32, #tpu.memory_space<vmem>>, vector<16x1xi32>
    %1 = tpu.iota {dimensions = array<i32: 1>} : vector<16x64xi32>
    %2 = vector.broadcast %0 : vector<16x1xi32> to vector<16x64xi32>
    %3 = arith.cmpi eq, %1, %2 : vector<16x64xi32>
    %4 = arith.extui %3 : vector<16x64xi1> to vector<16x64xi32>
    %5 = arith.sitofp %4 : vector<16x64xi32> to vector<16x64xf32>
    %c0_1 = arith.constant 0 : index
    %c0_2 = arith.constant 0 : index
    %6 = vector.load %arg5[%c0_1, %c0_2] : memref<64x32xf32, #tpu.memory_space<vmem>>, vector<64x32xf32>
    %cst = arith.constant dense<0.000000e+00> : vector<16x32xf32>
    %7 = tpu.matmul %5, %6, %cst {dimension_numbers = #tpu.dot_dimension_numbers<[1], [0], [0], [1], [0, 0, 1, 1], [], []>} : vector<16x64xf32>, vector<64x32xf32>, vector<16x32xf32> -> vector<16x32xf32>
    %c0_3 = arith.constant 0 : index
    %c0_4 = arith.constant 0 : index
    %8 = vector.load %arg1[%c0_3, %c0_4] : memref<16x1xi32, #tpu.memory_space<vmem>>, vector<16x1xi32>
    %9 = tpu.iota {dimensions = array<i32: 1>} : vector<16x2xi32>
    %10 = vector.broadcast %8 : vector<16x1xi32> to vector<16x2xi32>
    %11 = arith.cmpi eq, %9, %10 : vector<16x2xi32>
    %12 = arith.extui %11 : vector<16x2xi1> to vector<16x2xi32>
    %13 = arith.sitofp %12 : vector<16x2xi32> to vector<16x2xf32>
    %c0_5 = arith.constant 0 : index
    %c0_6 = arith.constant 0 : index
    %14 = vector.load %arg7[%c0_5, %c0_6] : memref<2x32xf32, #tpu.memory_space<vmem>>, vector<2x32xf32>
    %cst_7 = arith.constant dense<0.000000e+00> : vector<16x32xf32>
    %15 = tpu.matmul %13, %14, %cst_7 {dimension_numbers = #tpu.dot_dimension_numbers<[1], [0], [0], [1], [0, 0, 1, 1], [], []>} : vector<16x2xf32>, vector<2x32xf32>, vector<16x32xf32> -> vector<16x32xf32>
    %c0_8 = arith.constant 0 : index
    %c0_9 = arith.constant 0 : index
    %16 = vector.load %arg6[%c0_8, %c0_9] : memref<16x32xf32, #tpu.memory_space<vmem>>, vector<8x32xf32>
    %c0_10 = arith.constant 0 : index
    %c0_11 = arith.constant 0 : index
    %17 = vector.load %arg33[%c0_10, %c0_11] : memref<16x32xf32, #tpu.memory_space<vmem>>, vector<8x32xf32>
    tpu.vector_store %arg33[%c0_10, %c0_11], %16 {strides = array<i32>} : memref<16x32xf32, #tpu.memory_space<vmem>>, vector<8x32xf32>,
    %c0_12 = arith.constant 0 : index
    %c0_13 = arith.constant 0 : index
    %18 = vector.load %arg6[%c0_12, %c0_13] : memref<16x32xf32, #tpu.memory_space<vmem>>, vector<8x32xf32>
    %c8 = arith.constant 8 : index
    %c0_14 = arith.constant 0 : index
    %19 = vector.load %arg33[%c8, %c0_14] : memref<16x32xf32, #tpu.memory_space<vmem>>, vector<8x32xf32>
    tpu.vector_store %arg33[%c8, %c0_14], %18 {strides = array<i32>} : memref<16x32xf32, #tpu.memory_space<vmem>>, vector<8x32xf32>,
    %c0_15 = arith.constant 0 : index
    %c0_16 = arith.constant 0 : index
    %20 = vector.load %arg33[%c0_15, %c0_16] : memref<16x32xf32, #tpu.memory_space<vmem>>, vector<16x32xf32>
    %21 = arith.addf %7, %15 : vector<16x32xf32>
    %22 = arith.addf %21, %20 : vector<16x32xf32>
    %c0_17 = arith.constant 0 : index
    %c0_18 = arith.constant 0 : index
    %23 = vector.load %arg8[%c0_17, %c0_18] : memref<1x32xf32, #tpu.memory_space<vmem>>, vector<1x32xf32>
    %c0_19 = arith.constant 0 : index
    %c0_20 = arith.constant 0 : index
    %24 = vector.load %arg9[%c0_19, %c0_20] : memref<1x32xf32, #tpu.memory_space<vmem>>, vector<1x32xf32>
    %cst_21 = arith.constant dense<0.000000e+00> : vector<16xf32>
    %25 = vector.multi_reduction <add>, %22, %cst_21 [1] : vector<16x32xf32> to vector<16xf32>
    %26 = vector.shape_cast %25 : vector<16xf32> to vector<16x1xf32>
    %cst_22 = arith.constant 3.200000e+01 : f32
    %27 = vector.broadcast %cst_22 : f32 to vector<16x1xf32>
    %28 = arith.divf %26, %27 : vector<16x1xf32>
    %29 = vector.broadcast %28 : vector<16x1xf32> to vector<16x32xf32>
    %30 = arith.subf %22, %29 : vector<16x32xf32>
    %31 = vector.broadcast %28 : vector<16x1xf32> to vector<16x32xf32>
    %32 = arith.subf %22, %31 : vector<16x32xf32>
    %33 = arith.mulf %30, %32 : vector<16x32xf32>
    %cst_23 = arith.constant dense<0.000000e+00> : vector<16xf32>
    %34 = vector.multi_reduction <add>, %33, %cst_23 [1] : vector<16x32xf32> to vector<16xf32>
    %35 = vector.shape_cast %34 : vector<16xf32> to vector<16x1xf32>
    %cst_24 = arith.constant 3.200000e+01 : f32
    %36 = vector.broadcast %cst_24 : f32 to vector<16x1xf32>
    %37 = arith.divf %35, %36 : vector<16x1xf32>
    %38 = vector.broadcast %28 : vector<16x1xf32> to vector<16x32xf32>
    %39 = arith.subf %22, %38 : vector<16x32xf32>
    %cst_25 = arith.constant 9.99999996E-13 : f32
    %40 = vector.broadcast %cst_25 : f32 to vector<16x1xf32>
    %41 = arith.addf %37, %40 : vector<16x1xf32>
    %42 = math.rsqrt %41 : vector<16x1xf32>
    %43 = vector.broadcast %42 : vector<16x1xf32> to vector<16x32xf32>
    %44 = arith.mulf %39, %43 : vector<16x32xf32>
    %45 = vector.broadcast %23 : vector<1x32xf32> to vector<16x32xf32>
    %46 = arith.mulf %44, %45 : vector<16x32xf32>
    %47 = vector.broadcast %24 : vector<1x32xf32> to vector<16x32xf32>
    %48 = arith.addf %46, %47 : vector<16x32xf32>
    %c0_26 = arith.constant 0 : index
    %c0_27 = arith.constant 0 : index
    %49 = vector.load %arg2[%c0_26, %c0_27] : memref<2x8xi32, #tpu.memory_space<vmem>>, vector<1x8xi32>
    %50 = arith.sitofp %49 : vector<1x8xi32> to vector<1x8xf32>
    %cst_28 = arith.constant 1.000000e+00 : f32
    %51 = vector.broadcast %cst_28 : f32 to vector<1x8xf32>
    %52 = arith.subf %51, %50 : vector<1x8xf32>
    %cst_29 = arith.constant -1.000000e+04 : f32
    %53 = vector.broadcast %cst_29 : f32 to vector<1x8xf32>
    %54 = arith.mulf %52, %53 : vector<1x8xf32>
    %c1 = arith.constant 1 : index
    %c0_30 = arith.constant 0 : index
    %55 = vector.load %arg2[%c1, %c0_30] : memref<2x8xi32, #tpu.memory_space<vmem>>, vector<1x8xi32>
    %56 = arith.sitofp %55 : vector<1x8xi32> to vector<1x8xf32>
    %cst_31 = arith.constant 1.000000e+00 : f32
    %57 = vector.broadcast %cst_31 : f32 to vector<1x8xf32>
    %58 = arith.subf %57, %56 : vector<1x8xf32>
    %cst_32 = arith.constant -1.000000e+04 : f32
    %59 = vector.broadcast %cst_32 : f32 to vector<1x8xf32>
    %60 = arith.mulf %58, %59 : vector<1x8xf32>
    %c0_33 = arith.constant 0 : index
    %c0_34 = arith.constant 0 : index
    %c0_35 = arith.constant 0 : index
    %61 = vector.load %arg10[%c0_33, %c0_34, %c0_35] : memref<2x32x96xf32, #tpu.memory_space<vmem>>, vector<1x32x96xf32>
    %62 = vector.shape_cast %61 : vector<1x32x96xf32> to vector<32x96xf32>
    %cst_36 = arith.constant dense<0.000000e+00> : vector<16x96xf32>
    %63 = tpu.matmul %48, %62, %cst_36 {dimension_numbers = #tpu.dot_dimension_numbers<[1], [0], [0], [1], [0, 0, 1, 1], [], []>} : vector<16x32xf32>, vector<32x96xf32>, vector<16x96xf32> -> vector<16x96xf32>
    %c0_37 = arith.constant 0 : index
    %c0_38 = arith.constant 0 : index
    %c0_39 = arith.constant 0 : index
    %64 = vector.load %arg11[%c0_37, %c0_38, %c0_39] : memref<2x1x96xf32, #tpu.memory_space<vmem>>, vector<1x1x96xf32>
    %65 = vector.shape_cast %64 : vector<1x1x96xf32> to vector<1x96xf32>
    %66 = vector.broadcast %65 : vector<1x96xf32> to vector<16x96xf32>
    %67 = arith.addf %63, %66 : vector<16x96xf32>
    %c0_40 = arith.constant 0 : index
    %c0_41 = arith.constant 0 : index
    %68 = vector.load %arg32[%c0_40, %c0_41] : memref<16x96xf32, #tpu.memory_space<vmem>>, vector<16x96xf32>
    tpu.vector_store %arg32[%c0_40, %c0_41], %67 {strides = array<i32>} : memref<16x96xf32, #tpu.memory_space<vmem>>, vector<16x96xf32>,
    %c0_42 = arith.constant 0 : index
    %c0_43 = arith.constant 0 : index
    %69 = vector.load %arg32[%c0_42, %c0_43] : memref<16x96xf32, #tpu.memory_space<vmem>>, vector<8x8xf32>
    %c0_44 = arith.constant 0 : index
    %c32 = arith.constant 32 : index
    %70 = vector.load %arg32[%c0_44, %c32] : memref<16x96xf32, #tpu.memory_space<vmem>>, vector<8x8xf32>
    %c0_45 = arith.constant 0 : index
    %c64 = arith.constant 64 : index
    %71 = vector.load %arg32[%c0_45, %c64] : memref<16x96xf32, #tpu.memory_space<vmem>>, vector<8x8xf32>
    %cst_46 = arith.constant dense<0.000000e+00> : vector<8x8xf32>
    %72 = tpu.matmul %69, %70, %cst_46 {dimension_numbers = #tpu.dot_dimension_numbers<[1], [1], [0], [0], [0, 0, 1, 0], [], []>} : vector<8x8xf32>, vector<8x8xf32>, vector<8x8xf32> -> vector<8x8xf32>
    %cst_47 = arith.constant 0.353553385 : f32
    %73 = vector.broadcast %cst_47 : f32 to vector<8x8xf32>
    %74 = arith.mulf %72, %73 : vector<8x8xf32>
    %75 = vector.broadcast %54 : vector<1x8xf32> to vector<8x8xf32>
    %76 = arith.addf %74, %75 : vector<8x8xf32>
    %cst_48 = arith.constant dense<0xFF800000> : vector<8xf32>
    %77 = vector.multi_reduction <maximumf>, %76, %cst_48 [1] : vector<8x8xf32> to vector<8xf32>
    %78 = vector.shape_cast %77 : vector<8xf32> to vector<8x1xf32>
    %79 = vector.broadcast %78 : vector<8x1xf32> to vector<8x8xf32>
    %80 = arith.subf %76, %79 : vector<8x8xf32>
    %81 = math.exp %80 : vector<8x8xf32>
    %cst_49 = arith.constant dense<0.000000e+00> : vector<8xf32>
    %82 = vector.multi_reduction <add>, %81, %cst_49 [1] : vector<8x8xf32> to vector<8xf32>
    %83 = vector.shape_cast %82 : vector<8xf32> to vector<8x1xf32>
    %84 = vector.broadcast %83 : vector<8x1xf32> to vector<8x8xf32>
    %85 = arith.divf %81, %84 : vector<8x8xf32>
    %cst_50 = arith.constant dense<0.000000e+00> : vector<8x8xf32>
    %86 = tpu.matmul %85, %71, %cst_50 {dimension_numbers = #tpu.dot_dimension_numbers<[1], [0], [0], [1], [0, 0, 1, 1], [], []>} : vector<8x8xf32>, vector<8x8xf32>, vector<8x8xf32> -> vector<8x8xf32>
    %c0_51 = arith.constant 0 : index
    %c0_52 = arith.constant 0 : index
    %87 = vector.load %arg33[%c0_51, %c0_52] : memref<16x32xf32, #tpu.memory_space<vmem>>, vector<8x8xf32>
    tpu.vector_store %arg33[%c0_51, %c0_52], %86 {strides = array<i32>} : memref<16x32xf32, #tpu.memory_space<vmem>>, vector<8x8xf32>,
    %c0_53 = arith.constant 0 : index
    %c8_54 = arith.constant 8 : index
    %88 = vector.load %arg32[%c0_53, %c8_54] : memref<16x96xf32, #tpu.memory_space<vmem>>, vector<8x8xf32>
    %c0_55 = arith.constant 0 : index
    %c40 = arith.constant 40 : index
    %89 = vector.load %arg32[%c0_55, %c40] : memref<16x96xf32, #tpu.memory_space<vmem>>, vector<8x8xf32>
    %c0_56 = arith.constant 0 : index
    %c72 = arith.constant 72 : index
    %90 = vector.load %arg32[%c0_56, %c72] : memref<16x96xf32, #tpu.memory_space<vmem>>, vector<8x8xf32>
    %cst_57 = arith.constant dense<0.000000e+00> : vector<8x8xf32>
    %91 = tpu.matmul %88, %89, %cst_57 {dimension_numbers = #tpu.dot_dimension_numbers<[1], [1], [0], [0], [0, 0, 1, 0], [], []>} : vector<8x8xf32>, vector<8x8xf32>, vector<8x8xf32> -> vector<8x8xf32>
    %cst_58 = arith.constant 0.353553385 : f32
    %92 = vector.broadcast %cst_58 : f32 to vector<8x8xf32>
    %93 = arith.mulf %91, %92 : vector<8x8xf32>
    %94 = vector.broadcast %54 : vector<1x8xf32> to vector<8x8xf32>
    %95 = arith.addf %93, %94 : vector<8x8xf32>
    %cst_59 = arith.constant dense<0xFF800000> : vector<8xf32>
    %96 = vector.multi_reduction <maximumf>, %95, %cst_59 [1] : vector<8x8xf32> to vector<8xf32>
    %97 = vector.shape_cast %96 : vector<8xf32> to vector<8x1xf32>
    %98 = vector.broadcast %97 : vector<8x1xf32> to vector<8x8xf32>
    %99 = arith.subf %95, %98 : vector<8x8xf32>
    %100 = math.exp %99 : vector<8x8xf32>
    %cst_60 = arith.constant dense<0.000000e+00> : vector<8xf32>
    %101 = vector.multi_reduction <add>, %100, %cst_60 [1] : vector<8x8xf32> to vector<8xf32>
    %102 = vector.shape_cast %101 : vector<8xf32> to vector<8x1xf32>
    %103 = vector.broadcast %102 : vector<8x1xf32> to vector<8x8xf32>
    %104 = arith.divf %100, %103 : vector<8x8xf32>
    %cst_61 = arith.constant dense<0.000000e+00> : vector<8x8xf32>
    %105 = tpu.matmul %104, %90, %cst_61 {dimension_numbers = #tpu.dot_dimension_numbers<[1], [0], [0], [1], [0, 0, 1, 1], [], []>} : vector<8x8xf32>, vector<8x8xf32>, vector<8x8xf32> -> vector<8x8xf32>
    %c0_62 = arith.constant 0 : index
    %c8_63 = arith.constant 8 : index
    %106 = vector.load %arg33[%c0_62, %c8_63] : memref<16x32xf32, #tpu.memory_space<vmem>>, vector<8x8xf32>
    tpu.vector_store %arg33[%c0_62, %c8_63], %105 {strides = array<i32>} : memref<16x32xf32, #tpu.memory_space<vmem>>, vector<8x8xf32>,
    %c0_64 = arith.constant 0 : index
    %c16 = arith.constant 16 : index
    %107 = vector.load %arg32[%c0_64, %c16] : memref<16x96xf32, #tpu.memory_space<vmem>>, vector<8x8xf32>
    %c0_65 = arith.constant 0 : index
    %c48 = arith.constant 48 : index
    %108 = vector.load %arg32[%c0_65, %c48] : memref<16x96xf32, #tpu.memory_space<vmem>>, vector<8x8xf32>
    %c0_66 = arith.constant 0 : index
    %c80 = arith.constant 80 : index
    %109 = vector.load %arg32[%c0_66, %c80] : memref<16x96xf32, #tpu.memory_space<vmem>>, vector<8x8xf32>
    %cst_67 = arith.constant dense<0.000000e+00> : vector<8x8xf32>
    %110 = tpu.matmul %107, %108, %cst_67 {dimension_numbers = #tpu.dot_dimension_numbers<[1], [1], [0], [0], [0, 0, 1, 0], [], []>} : vector<8x8xf32>, vector<8x8xf32>, vector<8x8xf32> -> vector<8x8xf32>
    %cst_68 = arith.constant 0.353553385 : f32
    %111 = vector.broadcast %cst_68 : f32 to vector<8x8xf32>
    %112 = arith.mulf %110, %111 : vector<8x8xf32>
    %113 = vector.broadcast %54 : vector<1x8xf32> to vector<8x8xf32>
    %114 = arith.addf %112, %113 : vector<8x8xf32>
    %cst_69 = arith.constant dense<0xFF800000> : vector<8xf32>
    %115 = vector.multi_reduction <maximumf>, %114, %cst_69 [1] : vector<8x8xf32> to vector<8xf32>
    %116 = vector.shape_cast %115 : vector<8xf32> to vector<8x1xf32>
    %117 = vector.broadcast %116 : vector<8x1xf32> to vector<8x8xf32>
    %118 = arith.subf %114, %117 : vector<8x8xf32>
    %119 = math.exp %118 : vector<8x8xf32>
    %cst_70 = arith.constant dense<0.000000e+00> : vector<8xf32>
    %120 = vector.multi_reduction <add>, %119, %cst_70 [1] : vector<8x8xf32> to vector<8xf32>
    %121 = vector.shape_cast %120 : vector<8xf32> to vector<8x1xf32>
    %122 = vector.broadcast %121 : vector<8x1xf32> to vector<8x8xf32>
    %123 = arith.divf %119, %122 : vector<8x8xf32>
    %cst_71 = arith.constant dense<0.000000e+00> : vector<8x8xf32>
    %124 = tpu.matmul %123, %109, %cst_71 {dimension_numbers = #tpu.dot_dimension_numbers<[1], [0], [0], [1], [0, 0, 1, 1], [], []>} : vector<8x8xf32>, vector<8x8xf32>, vector<8x8xf32> -> vector<8x8xf32>
    %c0_72 = arith.constant 0 : index
    %c16_73 = arith.constant 16 : index
    %125 = vector.load %arg33[%c0_72, %c16_73] : memref<16x32xf32, #tpu.memory_space<vmem>>, vector<8x8xf32>
    tpu.vector_store %arg33[%c0_72, %c16_73], %124 {strides = array<i32>} : memref<16x32xf32, #tpu.memory_space<vmem>>, vector<8x8xf32>,
    %c0_74 = arith.constant 0 : index
    %c24 = arith.constant 24 : index
    %126 = vector.load %arg32[%c0_74, %c24] : memref<16x96xf32, #tpu.memory_space<vmem>>, vector<8x8xf32>
    %c0_75 = arith.constant 0 : index
    %c56 = arith.constant 56 : index
    %127 = vector.load %arg32[%c0_75, %c56] : memref<16x96xf32, #tpu.memory_space<vmem>>, vector<8x8xf32>
    %c0_76 = arith.constant 0 : index
    %c88 = arith.constant 88 : index
    %128 = vector.load %arg32[%c0_76, %c88] : memref<16x96xf32, #tpu.memory_space<vmem>>, vector<8x8xf32>
    %cst_77 = arith.constant dense<0.000000e+00> : vector<8x8xf32>
    %129 = tpu.matmul %126, %127, %cst_77 {dimension_numbers = #tpu.dot_dimension_numbers<[1], [1], [0], [0], [0, 0, 1, 0], [], []>} : vector<8x8xf32>, vector<8x8xf32>, vector<8x8xf32> -> vector<8x8xf32>
    %cst_78 = arith.constant 0.353553385 : f32
    %130 = vector.broadcast %cst_78 : f32 to vector<8x8xf32>
    %131 = arith.mulf %129, %130 : vector<8x8xf32>
    %132 = vector.broadcast %54 : vector<1x8xf32> to vector<8x8xf32>
    %133 = arith.addf %131, %132 : vector<8x8xf32>
    %cst_79 = arith.constant dense<0xFF800000> : vector<8xf32>
    %134 = vector.multi_reduction <maximumf>, %133, %cst_79 [1] : vector<8x8xf32> to vector<8xf32>
    %135 = vector.shape_cast %134 : vector<8xf32> to vector<8x1xf32>
    %136 = vector.broadcast %135 : vector<8x1xf32> to vector<8x8xf32>
    %137 = arith.subf %133, %136 : vector<8x8xf32>
    %138 = math.exp %137 : vector<8x8xf32>
    %cst_80 = arith.constant dense<0.000000e+00> : vector<8xf32>
    %139 = vector.multi_reduction <add>, %138, %cst_80 [1] : vector<8x8xf32> to vector<8xf32>
    %140 = vector.shape_cast %139 : vector<8xf32> to vector<8x1xf32>
    %141 = vector.broadcast %140 : vector<8x1xf32> to vector<8x8xf32>
    %142 = arith.divf %138, %141 : vector<8x8xf32>
    %cst_81 = arith.constant dense<0.000000e+00> : vector<8x8xf32>
    %143 = tpu.matmul %142, %128, %cst_81 {dimension_numbers = #tpu.dot_dimension_numbers<[1], [0], [0], [1], [0, 0, 1, 1], [], []>} : vector<8x8xf32>, vector<8x8xf32>, vector<8x8xf32> -> vector<8x8xf32>
    %c0_82 = arith.constant 0 : index
    %c24_83 = arith.constant 24 : index
    %144 = vector.load %arg33[%c0_82, %c24_83] : memref<16x32xf32, #tpu.memory_space<vmem>>, vector<8x8xf32>
    tpu.vector_store %arg33[%c0_82, %c24_83], %143 {strides = array<i32>} : memref<16x32xf32, #tpu.memory_space<vmem>>, vector<8x8xf32>,
    %c8_84 = arith.constant 8 : index
    %c0_85 = arith.constant 0 : index
    %145 = vector.load %arg32[%c8_84, %c0_85] : memref<16x96xf32, #tpu.memory_space<vmem>>, vector<8x8xf32>
    %c8_86 = arith.constant 8 : index
    %c32_87 = arith.constant 32 : index
    %146 = vector.load %arg32[%c8_86, %c32_87] : memref<16x96xf32, #tpu.memory_space<vmem>>, vector<8x8xf32>
    %c8_88 = arith.constant 8 : index
    %c64_89 = arith.constant 64 : index
    %147 = vector.load %arg32[%c8_88, %c64_89] : memref<16x96xf32, #tpu.memory_space<vmem>>, vector<8x8xf32>
    %cst_90 = arith.constant dense<0.000000e+00> : vector<8x8xf32>
    %148 = tpu.matmul %145, %146, %cst_90 {dimension_numbers = #tpu.dot_dimension_numbers<[1], [1], [0], [0], [0, 0, 1, 0], [], []>} : vector<8x8xf32>, vector<8x8xf32>, vector<8x8xf32> -> vector<8x8xf32>
    %cst_91 = arith.constant 0.353553385 : f32
    %149 = vector.broadcast %cst_91 : f32 to vector<8x8xf32>
    %150 = arith.mulf %148, %149 : vector<8x8xf32>
    %151 = vector.broadcast %60 : vector<1x8xf32> to vector<8x8xf32>
    %152 = arith.addf %150, %151 : vector<8x8xf32>
    %cst_92 = arith.constant dense<0xFF800000> : vector<8xf32>
    %153 = vector.multi_reduction <maximumf>, %152, %cst_92 [1] : vector<8x8xf32> to vector<8xf32>
    %154 = vector.shape_cast %153 : vector<8xf32> to vector<8x1xf32>
    %155 = vector.broadcast %154 : vector<8x1xf32> to vector<8x8xf32>
    %156 = arith.subf %152, %155 : vector<8x8xf32>
    %157 = math.exp %156 : vector<8x8xf32>
    %cst_93 = arith.constant dense<0.000000e+00> : vector<8xf32>
    %158 = vector.multi_reduction <add>, %157, %cst_93 [1] : vector<8x8xf32> to vector<8xf32>
    %159 = vector.shape_cast %158 : vector<8xf32> to vector<8x1xf32>
    %160 = vector.broadcast %159 : vector<8x1xf32> to vector<8x8xf32>
    %161 = arith.divf %157, %160 : vector<8x8xf32>
    %cst_94 = arith.constant dense<0.000000e+00> : vector<8x8xf32>
    %162 = tpu.matmul %161, %147, %cst_94 {dimension_numbers = #tpu.dot_dimension_numbers<[1], [0], [0], [1], [0, 0, 1, 1], [], []>} : vector<8x8xf32>, vector<8x8xf32>, vector<8x8xf32> -> vector<8x8xf32>
    %c8_95 = arith.constant 8 : index
    %c0_96 = arith.constant 0 : index
    %163 = vector.load %arg33[%c8_95, %c0_96] : memref<16x32xf32, #tpu.memory_space<vmem>>, vector<8x8xf32>
    tpu.vector_store %arg33[%c8_95, %c0_96], %162 {strides = array<i32>} : memref<16x32xf32, #tpu.memory_space<vmem>>, vector<8x8xf32>,
    %c8_97 = arith.constant 8 : index
    %c8_98 = arith.constant 8 : index
    %164 = vector.load %arg32[%c8_97, %c8_98] : memref<16x96xf32, #tpu.memory_space<vmem>>, vector<8x8xf32>
    %c8_99 = arith.constant 8 : index
    %c40_100 = arith.constant 40 : index
    %165 = vector.load %arg32[%c8_99, %c40_100] : memref<16x96xf32, #tpu.memory_space<vmem>>, vector<8x8xf32>
    %c8_101 = arith.constant 8 : index
    %c72_102 = arith.constant 72 : index
    %166 = vector.load %arg32[%c8_101, %c72_102] : memref<16x96xf32, #tpu.memory_space<vmem>>, vector<8x8xf32>
    %cst_103 = arith.constant dense<0.000000e+00> : vector<8x8xf32>
    %167 = tpu.matmul %164, %165, %cst_103 {dimension_numbers = #tpu.dot_dimension_numbers<[1], [1], [0], [0], [0, 0, 1, 0], [], []>} : vector<8x8xf32>, vector<8x8xf32>, vector<8x8xf32> -> vector<8x8xf32>
    %cst_104 = arith.constant 0.353553385 : f32
    %168 = vector.broadcast %cst_104 : f32 to vector<8x8xf32>
    %169 = arith.mulf %167, %168 : vector<8x8xf32>
    %170 = vector.broadcast %60 : vector<1x8xf32> to vector<8x8xf32>
    %171 = arith.addf %169, %170 : vector<8x8xf32>
    %cst_105 = arith.constant dense<0xFF800000> : vector<8xf32>
    %172 = vector.multi_reduction <maximumf>, %171, %cst_105 [1] : vector<8x8xf32> to vector<8xf32>
    %173 = vector.shape_cast %172 : vector<8xf32> to vector<8x1xf32>
    %174 = vector.broadcast %173 : vector<8x1xf32> to vector<8x8xf32>
    %175 = arith.subf %171, %174 : vector<8x8xf32>
    %176 = math.exp %175 : vector<8x8xf32>
    %cst_106 = arith.constant dense<0.000000e+00> : vector<8xf32>
    %177 = vector.multi_reduction <add>, %176, %cst_106 [1] : vector<8x8xf32> to vector<8xf32>
    %178 = vector.shape_cast %177 : vector<8xf32> to vector<8x1xf32>
    %179 = vector.broadcast %178 : vector<8x1xf32> to vector<8x8xf32>
    %180 = arith.divf %176, %179 : vector<8x8xf32>
    %cst_107 = arith.constant dense<0.000000e+00> : vector<8x8xf32>
    %181 = tpu.matmul %180, %166, %cst_107 {dimension_numbers = #tpu.dot_dimension_numbers<[1], [0], [0], [1], [0, 0, 1, 1], [], []>} : vector<8x8xf32>, vector<8x8xf32>, vector<8x8xf32> -> vector<8x8xf32>
    %c8_108 = arith.constant 8 : index
    %c8_109 = arith.constant 8 : index
    %182 = vector.load %arg33[%c8_108, %c8_109] : memref<16x32xf32, #tpu.memory_space<vmem>>, vector<8x8xf32>
    tpu.vector_store %arg33[%c8_108, %c8_109], %181 {strides = array<i32>} : memref<16x32xf32, #tpu.memory_space<vmem>>, vector<8x8xf32>,
    %c8_110 = arith.constant 8 : index
    %c16_111 = arith.constant 16 : index
    %183 = vector.load %arg32[%c8_110, %c16_111] : memref<16x96xf32, #tpu.memory_space<vmem>>, vector<8x8xf32>
    %c8_112 = arith.constant 8 : index
    %c48_113 = arith.constant 48 : index
    %184 = vector.load %arg32[%c8_112, %c48_113] : memref<16x96xf32, #tpu.memory_space<vmem>>, vector<8x8xf32>
    %c8_114 = arith.constant 8 : index
    %c80_115 = arith.constant 80 : index
    %185 = vector.load %arg32[%c8_114, %c80_115] : memref<16x96xf32, #tpu.memory_space<vmem>>, vector<8x8xf32>
    %cst_116 = arith.constant dense<0.000000e+00> : vector<8x8xf32>
    %186 = tpu.matmul %183, %184, %cst_116 {dimension_numbers = #tpu.dot_dimension_numbers<[1], [1], [0], [0], [0, 0, 1, 0], [], []>} : vector<8x8xf32>, vector<8x8xf32>, vector<8x8xf32> -> vector<8x8xf32>
    %cst_117 = arith.constant 0.353553385 : f32
    %187 = vector.broadcast %cst_117 : f32 to vector<8x8xf32>
    %188 = arith.mulf %186, %187 : vector<8x8xf32>
    %189 = vector.broadcast %60 : vector<1x8xf32> to vector<8x8xf32>
    %190 = arith.addf %188, %189 : vector<8x8xf32>
    %cst_118 = arith.constant dense<0xFF800000> : vector<8xf32>
    %191 = vector.multi_reduction <maximumf>, %190, %cst_118 [1] : vector<8x8xf32> to vector<8xf32>
    %192 = vector.shape_cast %191 : vector<8xf32> to vector<8x1xf32>
    %193 = vector.broadcast %192 : vector<8x1xf32> to vector<8x8xf32>
    %194 = arith.subf %190, %193 : vector<8x8xf32>
    %195 = math.exp %194 : vector<8x8xf32>
    %cst_119 = arith.constant dense<0.000000e+00> : vector<8xf32>
    %196 = vector.multi_reduction <add>, %195, %cst_119 [1] : vector<8x8xf32> to vector<8xf32>
    %197 = vector.shape_cast %196 : vector<8xf32> to vector<8x1xf32>
    %198 = vector.broadcast %197 : vector<8x1xf32> to vector<8x8xf32>
    %199 = arith.divf %195, %198 : vector<8x8xf32>
    %cst_120 = arith.constant dense<0.000000e+00> : vector<8x8xf32>
    %200 = tpu.matmul %199, %185, %cst_120 {dimension_numbers = #tpu.dot_dimension_numbers<[1], [0], [0], [1], [0, 0, 1, 1], [], []>} : vector<8x8xf32>, vector<8x8xf32>, vector<8x8xf32> -> vector<8x8xf32>
    %c8_121 = arith.constant 8 : index
    %c16_122 = arith.constant 16 : index
    %201 = vector.load %arg33[%c8_121, %c16_122] : memref<16x32xf32, #tpu.memory_space<vmem>>, vector<8x8xf32>
    tpu.vector_store %arg33[%c8_121, %c16_122], %200 {strides = array<i32>} : memref<16x32xf32, #tpu.memory_space<vmem>>, vector<8x8xf32>,
    %c8_123 = arith.constant 8 : index
    %c24_124 = arith.constant 24 : index
    %202 = vector.load %arg32[%c8_123, %c24_124] : memref<16x96xf32, #tpu.memory_space<vmem>>, vector<8x8xf32>
    %c8_125 = arith.constant 8 : index
    %c56_126 = arith.constant 56 : index
    %203 = vector.load %arg32[%c8_125, %c56_126] : memref<16x96xf32, #tpu.memory_space<vmem>>, vector<8x8xf32>
    %c8_127 = arith.constant 8 : index
    %c88_128 = arith.constant 88 : index
    %204 = vector.load %arg32[%c8_127, %c88_128] : memref<16x96xf32, #tpu.memory_space<vmem>>, vector<8x8xf32>
    %cst_129 = arith.constant dense<0.000000e+00> : vector<8x8xf32>
    %205 = tpu.matmul %202, %203, %cst_129 {dimension_numbers = #tpu.dot_dimension_numbers<[1], [1], [0], [0], [0, 0, 1, 0], [], []>} : vector<8x8xf32>, vector<8x8xf32>, vector<8x8xf32> -> vector<8x8xf32>
    %cst_130 = arith.constant 0.353553385 : f32
    %206 = vector.broadcast %cst_130 : f32 to vector<8x8xf32>
    %207 = arith.mulf %205, %206 : vector<8x8xf32>
    %208 = vector.broadcast %60 : vector<1x8xf32> to vector<8x8xf32>
    %209 = arith.addf %207, %208 : vector<8x8xf32>
    %cst_131 = arith.constant dense<0xFF800000> : vector<8xf32>
    %210 = vector.multi_reduction <maximumf>, %209, %cst_131 [1] : vector<8x8xf32> to vector<8xf32>
    %211 = vector.shape_cast %210 : vector<8xf32> to vector<8x1xf32>
    %212 = vector.broadcast %211 : vector<8x1xf32> to vector<8x8xf32>
    %213 = arith.subf %209, %212 : vector<8x8xf32>
    %214 = math.exp %213 : vector<8x8xf32>
    %cst_132 = arith.constant dense<0.000000e+00> : vector<8xf32>
    %215 = vector.multi_reduction <add>, %214, %cst_132 [1] : vector<8x8xf32> to vector<8xf32>
    %216 = vector.shape_cast %215 : vector<8xf32> to vector<8x1xf32>
    %217 = vector.broadcast %216 : vector<8x1xf32> to vector<8x8xf32>
    %218 = arith.divf %214, %217 : vector<8x8xf32>
    %cst_133 = arith.constant dense<0.000000e+00> : vector<8x8xf32>
    %219 = tpu.matmul %218, %204, %cst_133 {dimension_numbers = #tpu.dot_dimension_numbers<[1], [0], [0], [1], [0, 0, 1, 1], [], []>} : vector<8x8xf32>, vector<8x8xf32>, vector<8x8xf32> -> vector<8x8xf32>
    %c8_134 = arith.constant 8 : index
    %c24_135 = arith.constant 24 : index
    %220 = vector.load %arg33[%c8_134, %c24_135] : memref<16x32xf32, #tpu.memory_space<vmem>>, vector<8x8xf32>
    tpu.vector_store %arg33[%c8_134, %c24_135], %219 {strides = array<i32>} : memref<16x32xf32, #tpu.memory_space<vmem>>, vector<8x8xf32>,
    %c0_136 = arith.constant 0 : index
    %c0_137 = arith.constant 0 : index
    %221 = vector.load %arg33[%c0_136, %c0_137] : memref<16x32xf32, #tpu.memory_space<vmem>>, vector<16x32xf32>
    %c0_138 = arith.constant 0 : index
    %c0_139 = arith.constant 0 : index
    %c0_140 = arith.constant 0 : index
    %222 = vector.load %arg12[%c0_138, %c0_139, %c0_140] : memref<2x32x32xf32, #tpu.memory_space<vmem>>, vector<1x32x32xf32>
    %223 = vector.shape_cast %222 : vector<1x32x32xf32> to vector<32x32xf32>
    %cst_141 = arith.constant dense<0.000000e+00> : vector<16x32xf32>
    %224 = tpu.matmul %221, %223, %cst_141 {dimension_numbers = #tpu.dot_dimension_numbers<[1], [0], [0], [1], [0, 0, 1, 1], [], []>} : vector<16x32xf32>, vector<32x32xf32>, vector<16x32xf32> -> vector<16x32xf32>
    %c0_142 = arith.constant 0 : index
    %c0_143 = arith.constant 0 : index
    %c0_144 = arith.constant 0 : index
    %225 = vector.load %arg13[%c0_142, %c0_143, %c0_144] : memref<2x1x32xf32, #tpu.memory_space<vmem>>, vector<1x1x32xf32>
    %226 = vector.shape_cast %225 : vector<1x1x32xf32> to vector<1x32xf32>
    %227 = vector.broadcast %226 : vector<1x32xf32> to vector<16x32xf32>
    %228 = arith.addf %224, %227 : vector<16x32xf32>
    %229 = arith.addf %228, %48 : vector<16x32xf32>
    %c0_145 = arith.constant 0 : index
    %c0_146 = arith.constant 0 : index
    %c0_147 = arith.constant 0 : index
    %230 = vector.load %arg14[%c0_145, %c0_146, %c0_147] : memref<2x1x32xf32, #tpu.memory_space<vmem>>, vector<1x1x32xf32>
    %231 = vector.shape_cast %230 : vector<1x1x32xf32> to vector<1x32xf32>
    %c0_148 = arith.constant 0 : index
    %c0_149 = arith.constant 0 : index
    %c0_150 = arith.constant 0 : index
    %232 = vector.load %arg15[%c0_148, %c0_149, %c0_150] : memref<2x1x32xf32, #tpu.memory_space<vmem>>, vector<1x1x32xf32>
    %233 = vector.shape_cast %232 : vector<1x1x32xf32> to vector<1x32xf32>
    %cst_151 = arith.constant dense<0.000000e+00> : vector<16xf32>
    %234 = vector.multi_reduction <add>, %229, %cst_151 [1] : vector<16x32xf32> to vector<16xf32>
    %235 = vector.shape_cast %234 : vector<16xf32> to vector<16x1xf32>
    %cst_152 = arith.constant 3.200000e+01 : f32
    %236 = vector.broadcast %cst_152 : f32 to vector<16x1xf32>
    %237 = arith.divf %235, %236 : vector<16x1xf32>
    %238 = vector.broadcast %237 : vector<16x1xf32> to vector<16x32xf32>
    %239 = arith.subf %229, %238 : vector<16x32xf32>
    %240 = vector.broadcast %237 : vector<16x1xf32> to vector<16x32xf32>
    %241 = arith.subf %229, %240 : vector<16x32xf32>
    %242 = arith.mulf %239, %241 : vector<16x32xf32>
    %cst_153 = arith.constant dense<0.000000e+00> : vector<16xf32>
    %243 = vector.multi_reduction <add>, %242, %cst_153 [1] : vector<16x32xf32> to vector<16xf32>
    %244 = vector.shape_cast %243 : vector<16xf32> to vector<16x1xf32>
    %cst_154 = arith.constant 3.200000e+01 : f32
    %245 = vector.broadcast %cst_154 : f32 to vector<16x1xf32>
    %246 = arith.divf %244, %245 : vector<16x1xf32>
    %247 = vector.broadcast %237 : vector<16x1xf32> to vector<16x32xf32>
    %248 = arith.subf %229, %247 : vector<16x32xf32>
    %cst_155 = arith.constant 9.99999996E-13 : f32
    %249 = vector.broadcast %cst_155 : f32 to vector<16x1xf32>
    %250 = arith.addf %246, %249 : vector<16x1xf32>
    %251 = math.rsqrt %250 : vector<16x1xf32>
    %252 = vector.broadcast %251 : vector<16x1xf32> to vector<16x32xf32>
    %253 = arith.mulf %248, %252 : vector<16x32xf32>
    %254 = vector.broadcast %231 : vector<1x32xf32> to vector<16x32xf32>
    %255 = arith.mulf %253, %254 : vector<16x32xf32>
    %256 = vector.broadcast %233 : vector<1x32xf32> to vector<16x32xf32>
    %257 = arith.addf %255, %256 : vector<16x32xf32>
    %c0_156 = arith.constant 0 : index
    %c0_157 = arith.constant 0 : index
    %c0_158 = arith.constant 0 : index
    %258 = vector.load %arg16[%c0_156, %c0_157, %c0_158] : memref<2x32x64xf32, #tpu.memory_space<vmem>>, vector<1x32x64xf32>
    %259 = vector.shape_cast %258 : vector<1x32x64xf32> to vector<32x64xf32>
    %cst_159 = arith.constant dense<0.000000e+00> : vector<16x64xf32>
    %260 = tpu.matmul %257, %259, %cst_159 {dimension_numbers = #tpu.dot_dimension_numbers<[1], [0], [0], [1], [0, 0, 1, 1], [], []>} : vector<16x32xf32>, vector<32x64xf32>, vector<16x64xf32> -> vector<16x64xf32>
    %c0_160 = arith.constant 0 : index
    %c0_161 = arith.constant 0 : index
    %c0_162 = arith.constant 0 : index
    %261 = vector.load %arg17[%c0_160, %c0_161, %c0_162] : memref<2x1x64xf32, #tpu.memory_space<vmem>>, vector<1x1x64xf32>
    %262 = vector.shape_cast %261 : vector<1x1x64xf32> to vector<1x64xf32>
    %263 = vector.broadcast %262 : vector<1x64xf32> to vector<16x64xf32>
    %264 = arith.addf %260, %263 : vector<16x64xf32>
    %cst_163 = arith.constant 5.000000e-01 : f32
    %265 = vector.broadcast %cst_163 : f32 to vector<16x64xf32>
    %266 = arith.mulf %264, %265 : vector<16x64xf32>
    %cst_164 = arith.constant 0.707106769 : f32
    %267 = vector.broadcast %cst_164 : f32 to vector<16x64xf32>
    %268 = arith.mulf %264, %267 : vector<16x64xf32>
    %269 = math.erf %268 : vector<16x64xf32>
    %cst_165 = arith.constant 1.000000e+00 : f32
    %270 = vector.broadcast %cst_165 : f32 to vector<16x64xf32>
    %271 = arith.addf %270, %269 : vector<16x64xf32>
    %272 = arith.mulf %266, %271 : vector<16x64xf32>
    %c0_166 = arith.constant 0 : index
    %c0_167 = arith.constant 0 : index
    %c0_168 = arith.constant 0 : index
    %273 = vector.load %arg18[%c0_166, %c0_167, %c0_168] : memref<2x64x32xf32, #tpu.memory_space<vmem>>, vector<1x64x32xf32>
    %274 = vector.shape_cast %273 : vector<1x64x32xf32> to vector<64x32xf32>
    %cst_169 = arith.constant dense<0.000000e+00> : vector<16x32xf32>
    %275 = tpu.matmul %272, %274, %cst_169 {dimension_numbers = #tpu.dot_dimension_numbers<[1], [0], [0], [1], [0, 0, 1, 1], [], []>} : vector<16x64xf32>, vector<64x32xf32>, vector<16x32xf32> -> vector<16x32xf32>
    %c0_170 = arith.constant 0 : index
    %c0_171 = arith.constant 0 : index
    %c0_172 = arith.constant 0 : index
    %276 = vector.load %arg19[%c0_170, %c0_171, %c0_172] : memref<2x1x32xf32, #tpu.memory_space<vmem>>, vector<1x1x32xf32>
    %277 = vector.shape_cast %276 : vector<1x1x32xf32> to vector<1x32xf32>
    %278 = vector.broadcast %277 : vector<1x32xf32> to vector<16x32xf32>
    %279 = arith.addf %275, %278 : vector<16x32xf32>
    %280 = arith.addf %279, %257 : vector<16x32xf32>
    %c0_173 = arith.constant 0 : index
    %c0_174 = arith.constant 0 : index
    %c0_175 = arith.constant 0 : index
    %281 = vector.load %arg20[%c0_173, %c0_174, %c0_175] : memref<2x1x32xf32, #tpu.memory_space<vmem>>, vector<1x1x32xf32>
    %282 = vector.shape_cast %281 : vector<1x1x32xf32> to vector<1x32xf32>
    %c0_176 = arith.constant 0 : index
    %c0_177 = arith.constant 0 : index
    %c0_178 = arith.constant 0 : index
    %283 = vector.load %arg21[%c0_176, %c0_177, %c0_178] : memref<2x1x32xf32, #tpu.memory_space<vmem>>, vector<1x1x32xf32>
    %284 = vector.shape_cast %283 : vector<1x1x32xf32> to vector<1x32xf32>
    %cst_179 = arith.constant dense<0.000000e+00> : vector<16xf32>
    %285 = vector.multi_reduction <add>, %280, %cst_179 [1] : vector<16x32xf32> to vector<16xf32>
    %286 = vector.shape_cast %285 : vector<16xf32> to vector<16x1xf32>
    %cst_180 = arith.constant 3.200000e+01 : f32
    %287 = vector.broadcast %cst_180 : f32 to vector<16x1xf32>
    %288 = arith.divf %286, %287 : vector<16x1xf32>
    %289 = vector.broadcast %288 : vector<16x1xf32> to vector<16x32xf32>
    %290 = arith.subf %280, %289 : vector<16x32xf32>
    %291 = vector.broadcast %288 : vector<16x1xf32> to vector<16x32xf32>
    %292 = arith.subf %280, %291 : vector<16x32xf32>
    %293 = arith.mulf %290, %292 : vector<16x32xf32>
    %cst_181 = arith.constant dense<0.000000e+00> : vector<16xf32>
    %294 = vector.multi_reduction <add>, %293, %cst_181 [1] : vector<16x32xf32> to vector<16xf32>
    %295 = vector.shape_cast %294 : vector<16xf32> to vector<16x1xf32>
    %cst_182 = arith.constant 3.200000e+01 : f32
    %296 = vector.broadcast %cst_182 : f32 to vector<16x1xf32>
    %297 = arith.divf %295, %296 : vector<16x1xf32>
    %298 = vector.broadcast %288 : vector<16x1xf32> to vector<16x32xf32>
    %299 = arith.subf %280, %298 : vector<16x32xf32>
    %cst_183 = arith.constant 9.99999996E-13 : f32
    %300 = vector.broadcast %cst_183 : f32 to vector<16x1xf32>
    %301 = arith.addf %297, %300 : vector<16x1xf32>
    %302 = math.rsqrt %301 : vector<16x1xf32>
    %303 = vector.broadcast %302 : vector<16x1xf32> to vector<16x32xf32>
    %304 = arith.mulf %299, %303 : vector<16x32xf32>
    %305 = vector.broadcast %282 : vector<1x32xf32> to vector<16x32xf32>
    %306 = arith.mulf %304, %305 : vector<16x32xf32>
    %307 = vector.broadcast %284 : vector<1x32xf32> to vector<16x32xf32>
    %308 = arith.addf %306, %307 : vector<16x32xf32>
    %c1_184 = arith.constant 1 : index
    %c0_185 = arith.constant 0 : index
    %c0_186 = arith.constant 0 : index
    %309 = vector.load %arg10[%c1_184, %c0_185, %c0_186] : memref<2x32x96xf32, #tpu.memory_space<vmem>>, vector<1x32x96xf32>
    %310 = vector.shape_cast %309 : vector<1x32x96xf32> to vector<32x96xf32>
    %cst_187 = arith.constant dense<0.000000e+00> : vector<16x96xf32>
    %311 = tpu.matmul %308, %310, %cst_187 {dimension_numbers = #tpu.dot_dimension_numbers<[1], [0], [0], [1], [0, 0, 1, 1], [], []>} : vector<16x32xf32>, vector<32x96xf32>, vector<16x96xf32> -> vector<16x96xf32>
    %c1_188 = arith.constant 1 : index
    %c0_189 = arith.constant 0 : index
    %c0_190 = arith.constant 0 : index
    %312 = vector.load %arg11[%c1_188, %c0_189, %c0_190] : memref<2x1x96xf32, #tpu.memory_space<vmem>>, vector<1x1x96xf32>
    %313 = vector.shape_cast %312 : vector<1x1x96xf32> to vector<1x96xf32>
    %314 = vector.broadcast %313 : vector<1x96xf32> to vector<16x96xf32>
    %315 = arith.addf %311, %314 : vector<16x96xf32>
    %c0_191 = arith.constant 0 : index
    %c0_192 = arith.constant 0 : index
    %316 = vector.load %arg32[%c0_191, %c0_192] : memref<16x96xf32, #tpu.memory_space<vmem>>, vector<16x96xf32>
    tpu.vector_store %arg32[%c0_191, %c0_192], %315 {strides = array<i32>} : memref<16x96xf32, #tpu.memory_space<vmem>>, vector<16x96xf32>,
    %c0_193 = arith.constant 0 : index
    %c0_194 = arith.constant 0 : index
    %317 = vector.load %arg32[%c0_193, %c0_194] : memref<16x96xf32, #tpu.memory_space<vmem>>, vector<8x8xf32>
    %c0_195 = arith.constant 0 : index
    %c32_196 = arith.constant 32 : index
    %318 = vector.load %arg32[%c0_195, %c32_196] : memref<16x96xf32, #tpu.memory_space<vmem>>, vector<8x8xf32>
    %c0_197 = arith.constant 0 : index
    %c64_198 = arith.constant 64 : index
    %319 = vector.load %arg32[%c0_197, %c64_198] : memref<16x96xf32, #tpu.memory_space<vmem>>, vector<8x8xf32>
    %cst_199 = arith.constant dense<0.000000e+00> : vector<8x8xf32>
    %320 = tpu.matmul %317, %318, %cst_199 {dimension_numbers = #tpu.dot_dimension_numbers<[1], [1], [0], [0], [0, 0, 1, 0], [], []>} : vector<8x8xf32>, vector<8x8xf32>, vector<8x8xf32> -> vector<8x8xf32>
    %cst_200 = arith.constant 0.353553385 : f32
    %321 = vector.broadcast %cst_200 : f32 to vector<8x8xf32>
    %322 = arith.mulf %320, %321 : vector<8x8xf32>
    %323 = vector.broadcast %54 : vector<1x8xf32> to vector<8x8xf32>
    %324 = arith.addf %322, %323 : vector<8x8xf32>
    %cst_201 = arith.constant dense<0xFF800000> : vector<8xf32>
    %325 = vector.multi_reduction <maximumf>, %324, %cst_201 [1] : vector<8x8xf32> to vector<8xf32>
    %326 = vector.shape_cast %325 : vector<8xf32> to vector<8x1xf32>
    %327 = vector.broadcast %326 : vector<8x1xf32> to vector<8x8xf32>
    %328 = arith.subf %324, %327 : vector<8x8xf32>
    %329 = math.exp %328 : vector<8x8xf32>
    %cst_202 = arith.constant dense<0.000000e+00> : vector<8xf32>
    %330 = vector.multi_reduction <add>, %329, %cst_202 [1] : vector<8x8xf32> to vector<8xf32>
    %331 = vector.shape_cast %330 : vector<8xf32> to vector<8x1xf32>
    %332 = vector.broadcast %331 : vector<8x1xf32> to vector<8x8xf32>
    %333 = arith.divf %329, %332 : vector<8x8xf32>
    %cst_203 = arith.constant dense<0.000000e+00> : vector<8x8xf32>
    %334 = tpu.matmul %333, %319, %cst_203 {dimension_numbers = #tpu.dot_dimension_numbers<[1], [0], [0], [1], [0, 0, 1, 1], [], []>} : vector<8x8xf32>, vector<8x8xf32>, vector<8x8xf32> -> vector<8x8xf32>
    %c0_204 = arith.constant 0 : index
    %c0_205 = arith.constant 0 : index
    %335 = vector.load %arg33[%c0_204, %c0_205] : memref<16x32xf32, #tpu.memory_space<vmem>>, vector<8x8xf32>
    tpu.vector_store %arg33[%c0_204, %c0_205], %334 {strides = array<i32>} : memref<16x32xf32, #tpu.memory_space<vmem>>, vector<8x8xf32>,
    %c0_206 = arith.constant 0 : index
    %c8_207 = arith.constant 8 : index
    %336 = vector.load %arg32[%c0_206, %c8_207] : memref<16x96xf32, #tpu.memory_space<vmem>>, vector<8x8xf32>
    %c0_208 = arith.constant 0 : index
    %c40_209 = arith.constant 40 : index
    %337 = vector.load %arg32[%c0_208, %c40_209] : memref<16x96xf32, #tpu.memory_space<vmem>>, vector<8x8xf32>
    %c0_210 = arith.constant 0 : index
    %c72_211 = arith.constant 72 : index
    %338 = vector.load %arg32[%c0_210, %c72_211] : memref<16x96xf32, #tpu.memory_space<vmem>>, vector<8x8xf32>
    %cst_212 = arith.constant dense<0.000000e+00> : vector<8x8xf32>
    %339 = tpu.matmul %336, %337, %cst_212 {dimension_numbers = #tpu.dot_dimension_numbers<[1], [1], [0], [0], [0, 0, 1, 0], [], []>} : vector<8x8xf32>, vector<8x8xf32>, vector<8x8xf32> -> vector<8x8xf32>
    %cst_213 = arith.constant 0.353553385 : f32
    %340 = vector.broadcast %cst_213 : f32 to vector<8x8xf32>
    %341 = arith.mulf %339, %340 : vector<8x8xf32>
    %342 = vector.broadcast %54 : vector<1x8xf32> to vector<8x8xf32>
    %343 = arith.addf %341, %342 : vector<8x8xf32>
    %cst_214 = arith.constant dense<0xFF800000> : vector<8xf32>
    %344 = vector.multi_reduction <maximumf>, %343, %cst_214 [1] : vector<8x8xf32> to vector<8xf32>
    %345 = vector.shape_cast %344 : vector<8xf32> to vector<8x1xf32>
    %346 = vector.broadcast %345 : vector<8x1xf32> to vector<8x8xf32>
    %347 = arith.subf %343, %346 : vector<8x8xf32>
    %348 = math.exp %347 : vector<8x8xf32>
    %cst_215 = arith.constant dense<0.000000e+00> : vector<8xf32>
    %349 = vector.multi_reduction <add>, %348, %cst_215 [1] : vector<8x8xf32> to vector<8xf32>
    %350 = vector.shape_cast %349 : vector<8xf32> to vector<8x1xf32>
    %351 = vector.broadcast %350 : vector<8x1xf32> to vector<8x8xf32>
    %352 = arith.divf %348, %351 : vector<8x8xf32>
    %cst_216 = arith.constant dense<0.000000e+00> : vector<8x8xf32>
    %353 = tpu.matmul %352, %338, %cst_216 {dimension_numbers = #tpu.dot_dimension_numbers<[1], [0], [0], [1], [0, 0, 1, 1], [], []>} : vector<8x8xf32>, vector<8x8xf32>, vector<8x8xf32> -> vector<8x8xf32>
    %c0_217 = arith.constant 0 : index
    %c8_218 = arith.constant 8 : index
    %354 = vector.load %arg33[%c0_217, %c8_218] : memref<16x32xf32, #tpu.memory_space<vmem>>, vector<8x8xf32>
    tpu.vector_store %arg33[%c0_217, %c8_218], %353 {strides = array<i32>} : memref<16x32xf32, #tpu.memory_space<vmem>>, vector<8x8xf32>,
    %c0_219 = arith.constant 0 : index
    %c16_220 = arith.constant 16 : index
    %355 = vector.load %arg32[%c0_219, %c16_220] : memref<16x96xf32, #tpu.memory_space<vmem>>, vector<8x8xf32>
    %c0_221 = arith.constant 0 : index
    %c48_222 = arith.constant 48 : index
    %356 = vector.load %arg32[%c0_221, %c48_222] : memref<16x96xf32, #tpu.memory_space<vmem>>, vector<8x8xf32>
    %c0_223 = arith.constant 0 : index
    %c80_224 = arith.constant 80 : index
    %357 = vector.load %arg32[%c0_223, %c80_224] : memref<16x96xf32, #tpu.memory_space<vmem>>, vector<8x8xf32>
    %cst_225 = arith.constant dense<0.000000e+00> : vector<8x8xf32>
    %358 = tpu.matmul %355, %356, %cst_225 {dimension_numbers = #tpu.dot_dimension_numbers<[1], [1], [0], [0], [0, 0, 1, 0], [], []>} : vector<8x8xf32>, vector<8x8xf32>, vector<8x8xf32> -> vector<8x8xf32>
    %cst_226 = arith.constant 0.353553385 : f32
    %359 = vector.broadcast %cst_226 : f32 to vector<8x8xf32>
    %360 = arith.mulf %358, %359 : vector<8x8xf32>
    %361 = vector.broadcast %54 : vector<1x8xf32> to vector<8x8xf32>
    %362 = arith.addf %360, %361 : vector<8x8xf32>
    %cst_227 = arith.constant dense<0xFF800000> : vector<8xf32>
    %363 = vector.multi_reduction <maximumf>, %362, %cst_227 [1] : vector<8x8xf32> to vector<8xf32>
    %364 = vector.shape_cast %363 : vector<8xf32> to vector<8x1xf32>
    %365 = vector.broadcast %364 : vector<8x1xf32> to vector<8x8xf32>
    %366 = arith.subf %362, %365 : vector<8x8xf32>
    %367 = math.exp %366 : vector<8x8xf32>
    %cst_228 = arith.constant dense<0.000000e+00> : vector<8xf32>
    %368 = vector.multi_reduction <add>, %367, %cst_228 [1] : vector<8x8xf32> to vector<8xf32>
    %369 = vector.shape_cast %368 : vector<8xf32> to vector<8x1xf32>
    %370 = vector.broadcast %369 : vector<8x1xf32> to vector<8x8xf32>
    %371 = arith.divf %367, %370 : vector<8x8xf32>
    %cst_229 = arith.constant dense<0.000000e+00> : vector<8x8xf32>
    %372 = tpu.matmul %371, %357, %cst_229 {dimension_numbers = #tpu.dot_dimension_numbers<[1], [0], [0], [1], [0, 0, 1, 1], [], []>} : vector<8x8xf32>, vector<8x8xf32>, vector<8x8xf32> -> vector<8x8xf32>
    %c0_230 = arith.constant 0 : index
    %c16_231 = arith.constant 16 : index
    %373 = vector.load %arg33[%c0_230, %c16_231] : memref<16x32xf32, #tpu.memory_space<vmem>>, vector<8x8xf32>
    tpu.vector_store %arg33[%c0_230, %c16_231], %372 {strides = array<i32>} : memref<16x32xf32, #tpu.memory_space<vmem>>, vector<8x8xf32>,
    %c0_232 = arith.constant 0 : index
    %c24_233 = arith.constant 24 : index
    %374 = vector.load %arg32[%c0_232, %c24_233] : memref<16x96xf32, #tpu.memory_space<vmem>>, vector<8x8xf32>
    %c0_234 = arith.constant 0 : index
    %c56_235 = arith.constant 56 : index
    %375 = vector.load %arg32[%c0_234, %c56_235] : memref<16x96xf32, #tpu.memory_space<vmem>>, vector<8x8xf32>
    %c0_236 = arith.constant 0 : index
    %c88_237 = arith.constant 88 : index
    %376 = vector.load %arg32[%c0_236, %c88_237] : memref<16x96xf32, #tpu.memory_space<vmem>>, vector<8x8xf32>
    %cst_238 = arith.constant dense<0.000000e+00> : vector<8x8xf32>
    %377 = tpu.matmul %374, %375, %cst_238 {dimension_numbers = #tpu.dot_dimension_numbers<[1], [1], [0], [0], [0, 0, 1, 0], [], []>} : vector<8x8xf32>, vector<8x8xf32>, vector<8x8xf32> -> vector<8x8xf32>
    %cst_239 = arith.constant 0.353553385 : f32
    %378 = vector.broadcast %cst_239 : f32 to vector<8x8xf32>
    %379 = arith.mulf %377, %378 : vector<8x8xf32>
    %380 = vector.broadcast %54 : vector<1x8xf32> to vector<8x8xf32>
    %381 = arith.addf %379, %380 : vector<8x8xf32>
    %cst_240 = arith.constant dense<0xFF800000> : vector<8xf32>
    %382 = vector.multi_reduction <maximumf>, %381, %cst_240 [1] : vector<8x8xf32> to vector<8xf32>
    %383 = vector.shape_cast %382 : vector<8xf32> to vector<8x1xf32>
    %384 = vector.broadcast %383 : vector<8x1xf32> to vector<8x8xf32>
    %385 = arith.subf %381, %384 : vector<8x8xf32>
    %386 = math.exp %385 : vector<8x8xf32>
    %cst_241 = arith.constant dense<0.000000e+00> : vector<8xf32>
    %387 = vector.multi_reduction <add>, %386, %cst_241 [1] : vector<8x8xf32> to vector<8xf32>
    %388 = vector.shape_cast %387 : vector<8xf32> to vector<8x1xf32>
    %389 = vector.broadcast %388 : vector<8x1xf32> to vector<8x8xf32>
    %390 = arith.divf %386, %389 : vector<8x8xf32>
    %cst_242 = arith.constant dense<0.000000e+00> : vector<8x8xf32>
    %391 = tpu.matmul %390, %376, %cst_242 {dimension_numbers = #tpu.dot_dimension_numbers<[1], [0], [0], [1], [0, 0, 1, 1], [], []>} : vector<8x8xf32>, vector<8x8xf32>, vector<8x8xf32> -> vector<8x8xf32>
    %c0_243 = arith.constant 0 : index
    %c24_244 = arith.constant 24 : index
    %392 = vector.load %arg33[%c0_243, %c24_244] : memref<16x32xf32, #tpu.memory_space<vmem>>, vector<8x8xf32>
    tpu.vector_store %arg33[%c0_243, %c24_244], %391 {strides = array<i32>} : memref<16x32xf32, #tpu.memory_space<vmem>>, vector<8x8xf32>,
    %c8_245 = arith.constant 8 : index
    %c0_246 = arith.constant 0 : index
    %393 = vector.load %arg32[%c8_245, %c0_246] : memref<16x96xf32, #tpu.memory_space<vmem>>, vector<8x8xf32>
    %c8_247 = arith.constant 8 : index
    %c32_248 = arith.constant 32 : index
    %394 = vector.load %arg32[%c8_247, %c32_248] : memref<16x96xf32, #tpu.memory_space<vmem>>, vector<8x8xf32>
    %c8_249 = arith.constant 8 : index
    %c64_250 = arith.constant 64 : index
    %395 = vector.load %arg32[%c8_249, %c64_250] : memref<16x96xf32, #tpu.memory_space<vmem>>, vector<8x8xf32>
    %cst_251 = arith.constant dense<0.000000e+00> : vector<8x8xf32>
    %396 = tpu.matmul %393, %394, %cst_251 {dimension_numbers = #tpu.dot_dimension_numbers<[1], [1], [0], [0], [0, 0, 1, 0], [], []>} : vector<8x8xf32>, vector<8x8xf32>, vector<8x8xf32> -> vector<8x8xf32>
    %cst_252 = arith.constant 0.353553385 : f32
    %397 = vector.broadcast %cst_252 : f32 to vector<8x8xf32>
    %398 = arith.mulf %396, %397 : vector<8x8xf32>
    %399 = vector.broadcast %60 : vector<1x8xf32> to vector<8x8xf32>
    %400 = arith.addf %398, %399 : vector<8x8xf32>
    %cst_253 = arith.constant dense<0xFF800000> : vector<8xf32>
    %401 = vector.multi_reduction <maximumf>, %400, %cst_253 [1] : vector<8x8xf32> to vector<8xf32>
    %402 = vector.shape_cast %401 : vector<8xf32> to vector<8x1xf32>
    %403 = vector.broadcast %402 : vector<8x1xf32> to vector<8x8xf32>
    %404 = arith.subf %400, %403 : vector<8x8xf32>
    %405 = math.exp %404 : vector<8x8xf32>
    %cst_254 = arith.constant dense<0.000000e+00> : vector<8xf32>
    %406 = vector.multi_reduction <add>, %405, %cst_254 [1] : vector<8x8xf32> to vector<8xf32>
    %407 = vector.shape_cast %406 : vector<8xf32> to vector<8x1xf32>
    %408 = vector.broadcast %407 : vector<8x1xf32> to vector<8x8xf32>
    %409 = arith.divf %405, %408 : vector<8x8xf32>
    %cst_255 = arith.constant dense<0.000000e+00> : vector<8x8xf32>
    %410 = tpu.matmul %409, %395, %cst_255 {dimension_numbers = #tpu.dot_dimension_numbers<[1], [0], [0], [1], [0, 0, 1, 1], [], []>} : vector<8x8xf32>, vector<8x8xf32>, vector<8x8xf32> -> vector<8x8xf32>
    %c8_256 = arith.constant 8 : index
    %c0_257 = arith.constant 0 : index
    %411 = vector.load %arg33[%c8_256, %c0_257] : memref<16x32xf32, #tpu.memory_space<vmem>>, vector<8x8xf32>
    tpu.vector_store %arg33[%c8_256, %c0_257], %410 {strides = array<i32>} : memref<16x32xf32, #tpu.memory_space<vmem>>, vector<8x8xf32>,
    %c8_258 = arith.constant 8 : index
    %c8_259 = arith.constant 8 : index
    %412 = vector.load %arg32[%c8_258, %c8_259] : memref<16x96xf32, #tpu.memory_space<vmem>>, vector<8x8xf32>
    %c8_260 = arith.constant 8 : index
    %c40_261 = arith.constant 40 : index
    %413 = vector.load %arg32[%c8_260, %c40_261] : memref<16x96xf32, #tpu.memory_space<vmem>>, vector<8x8xf32>
    %c8_262 = arith.constant 8 : index
    %c72_263 = arith.constant 72 : index
    %414 = vector.load %arg32[%c8_262, %c72_263] : memref<16x96xf32, #tpu.memory_space<vmem>>, vector<8x8xf32>
    %cst_264 = arith.constant dense<0.000000e+00> : vector<8x8xf32>
    %415 = tpu.matmul %412, %413, %cst_264 {dimension_numbers = #tpu.dot_dimension_numbers<[1], [1], [0], [0], [0, 0, 1, 0], [], []>} : vector<8x8xf32>, vector<8x8xf32>, vector<8x8xf32> -> vector<8x8xf32>
    %cst_265 = arith.constant 0.353553385 : f32
    %416 = vector.broadcast %cst_265 : f32 to vector<8x8xf32>
    %417 = arith.mulf %415, %416 : vector<8x8xf32>
    %418 = vector.broadcast %60 : vector<1x8xf32> to vector<8x8xf32>
    %419 = arith.addf %417, %418 : vector<8x8xf32>
    %cst_266 = arith.constant dense<0xFF800000> : vector<8xf32>
    %420 = vector.multi_reduction <maximumf>, %419, %cst_266 [1] : vector<8x8xf32> to vector<8xf32>
    %421 = vector.shape_cast %420 : vector<8xf32> to vector<8x1xf32>
    %422 = vector.broadcast %421 : vector<8x1xf32> to vector<8x8xf32>
    %423 = arith.subf %419, %422 : vector<8x8xf32>
    %424 = math.exp %423 : vector<8x8xf32>
    %cst_267 = arith.constant dense<0.000000e+00> : vector<8xf32>
    %425 = vector.multi_reduction <add>, %424, %cst_267 [1] : vector<8x8xf32> to vector<8xf32>
    %426 = vector.shape_cast %425 : vector<8xf32> to vector<8x1xf32>
    %427 = vector.broadcast %426 : vector<8x1xf32> to vector<8x8xf32>
    %428 = arith.divf %424, %427 : vector<8x8xf32>
    %cst_268 = arith.constant dense<0.000000e+00> : vector<8x8xf32>
    %429 = tpu.matmul %428, %414, %cst_268 {dimension_numbers = #tpu.dot_dimension_numbers<[1], [0], [0], [1], [0, 0, 1, 1], [], []>} : vector<8x8xf32>, vector<8x8xf32>, vector<8x8xf32> -> vector<8x8xf32>
    %c8_269 = arith.constant 8 : index
    %c8_270 = arith.constant 8 : index
    %430 = vector.load %arg33[%c8_269, %c8_270] : memref<16x32xf32, #tpu.memory_space<vmem>>, vector<8x8xf32>
    tpu.vector_store %arg33[%c8_269, %c8_270], %429 {strides = array<i32>} : memref<16x32xf32, #tpu.memory_space<vmem>>, vector<8x8xf32>,
    %c8_271 = arith.constant 8 : index
    %c16_272 = arith.constant 16 : index
    %431 = vector.load %arg32[%c8_271, %c16_272] : memref<16x96xf32, #tpu.memory_space<vmem>>, vector<8x8xf32>
    %c8_273 = arith.constant 8 : index
    %c48_274 = arith.constant 48 : index
    %432 = vector.load %arg32[%c8_273, %c48_274] : memref<16x96xf32, #tpu.memory_space<vmem>>, vector<8x8xf32>
    %c8_275 = arith.constant 8 : index
    %c80_276 = arith.constant 80 : index
    %433 = vector.load %arg32[%c8_275, %c80_276] : memref<16x96xf32, #tpu.memory_space<vmem>>, vector<8x8xf32>
    %cst_277 = arith.constant dense<0.000000e+00> : vector<8x8xf32>
    %434 = tpu.matmul %431, %432, %cst_277 {dimension_numbers = #tpu.dot_dimension_numbers<[1], [1], [0], [0], [0, 0, 1, 0], [], []>} : vector<8x8xf32>, vector<8x8xf32>, vector<8x8xf32> -> vector<8x8xf32>
    %cst_278 = arith.constant 0.353553385 : f32
    %435 = vector.broadcast %cst_278 : f32 to vector<8x8xf32>
    %436 = arith.mulf %434, %435 : vector<8x8xf32>
    %437 = vector.broadcast %60 : vector<1x8xf32> to vector<8x8xf32>
    %438 = arith.addf %436, %437 : vector<8x8xf32>
    %cst_279 = arith.constant dense<0xFF800000> : vector<8xf32>
    %439 = vector.multi_reduction <maximumf>, %438, %cst_279 [1] : vector<8x8xf32> to vector<8xf32>
    %440 = vector.shape_cast %439 : vector<8xf32> to vector<8x1xf32>
    %441 = vector.broadcast %440 : vector<8x1xf32> to vector<8x8xf32>
    %442 = arith.subf %438, %441 : vector<8x8xf32>
    %443 = math.exp %442 : vector<8x8xf32>
    %cst_280 = arith.constant dense<0.000000e+00> : vector<8xf32>
    %444 = vector.multi_reduction <add>, %443, %cst_280 [1] : vector<8x8xf32> to vector<8xf32>
    %445 = vector.shape_cast %444 : vector<8xf32> to vector<8x1xf32>
    %446 = vector.broadcast %445 : vector<8x1xf32> to vector<8x8xf32>
    %447 = arith.divf %443, %446 : vector<8x8xf32>
    %cst_281 = arith.constant dense<0.000000e+00> : vector<8x8xf32>
    %448 = tpu.matmul %447, %433, %cst_281 {dimension_numbers = #tpu.dot_dimension_numbers<[1], [0], [0], [1], [0, 0, 1, 1], [], []>} : vector<8x8xf32>, vector<8x8xf32>, vector<8x8xf32> -> vector<8x8xf32>
    %c8_282 = arith.constant 8 : index
    %c16_283 = arith.constant 16 : index
    %449 = vector.load %arg33[%c8_282, %c16_283] : memref<16x32xf32, #tpu.memory_space<vmem>>, vector<8x8xf32>
    tpu.vector_store %arg33[%c8_282, %c16_283], %448 {strides = array<i32>} : memref<16x32xf32, #tpu.memory_space<vmem>>, vector<8x8xf32>,
    %c8_284 = arith.constant 8 : index
    %c24_285 = arith.constant 24 : index
    %450 = vector.load %arg32[%c8_284, %c24_285] : memref<16x96xf32, #tpu.memory_space<vmem>>, vector<8x8xf32>
    %c8_286 = arith.constant 8 : index
    %c56_287 = arith.constant 56 : index
    %451 = vector.load %arg32[%c8_286, %c56_287] : memref<16x96xf32, #tpu.memory_space<vmem>>, vector<8x8xf32>
    %c8_288 = arith.constant 8 : index
    %c88_289 = arith.constant 88 : index
    %452 = vector.load %arg32[%c8_288, %c88_289] : memref<16x96xf32, #tpu.memory_space<vmem>>, vector<8x8xf32>
    %cst_290 = arith.constant dense<0.000000e+00> : vector<8x8xf32>
    %453 = tpu.matmul %450, %451, %cst_290 {dimension_numbers = #tpu.dot_dimension_numbers<[1], [1], [0], [0], [0, 0, 1, 0], [], []>} : vector<8x8xf32>, vector<8x8xf32>, vector<8x8xf32> -> vector<8x8xf32>
    %cst_291 = arith.constant 0.353553385 : f32
    %454 = vector.broadcast %cst_291 : f32 to vector<8x8xf32>
    %455 = arith.mulf %453, %454 : vector<8x8xf32>
    %456 = vector.broadcast %60 : vector<1x8xf32> to vector<8x8xf32>
    %457 = arith.addf %455, %456 : vector<8x8xf32>
    %cst_292 = arith.constant dense<0xFF800000> : vector<8xf32>
    %458 = vector.multi_reduction <maximumf>, %457, %cst_292 [1] : vector<8x8xf32> to vector<8xf32>
    %459 = vector.shape_cast %458 : vector<8xf32> to vector<8x1xf32>
    %460 = vector.broadcast %459 : vector<8x1xf32> to vector<8x8xf32>
    %461 = arith.subf %457, %460 : vector<8x8xf32>
    %462 = math.exp %461 : vector<8x8xf32>
    %cst_293 = arith.constant dense<0.000000e+00> : vector<8xf32>
    %463 = vector.multi_reduction <add>, %462, %cst_293 [1] : vector<8x8xf32> to vector<8xf32>
    %464 = vector.shape_cast %463 : vector<8xf32> to vector<8x1xf32>
    %465 = vector.broadcast %464 : vector<8x1xf32> to vector<8x8xf32>
    %466 = arith.divf %462, %465 : vector<8x8xf32>
    %cst_294 = arith.constant dense<0.000000e+00> : vector<8x8xf32>
    %467 = tpu.matmul %466, %452, %cst_294 {dimension_numbers = #tpu.dot_dimension_numbers<[1], [0], [0], [1], [0, 0, 1, 1], [], []>} : vector<8x8xf32>, vector<8x8xf32>, vector<8x8xf32> -> vector<8x8xf32>
    %c8_295 = arith.constant 8 : index
    %c24_296 = arith.constant 24 : index
    %468 = vector.load %arg33[%c8_295, %c24_296] : memref<16x32xf32, #tpu.memory_space<vmem>>, vector<8x8xf32>
    tpu.vector_store %arg33[%c8_295, %c24_296], %467 {strides = array<i32>} : memref<16x32xf32, #tpu.memory_space<vmem>>, vector<8x8xf32>,
    %c0_297 = arith.constant 0 : index
    %c0_298 = arith.constant 0 : index
    %469 = vector.load %arg33[%c0_297, %c0_298] : memref<16x32xf32, #tpu.memory_space<vmem>>, vector<16x32xf32>
    %c1_299 = arith.constant 1 : index
    %c0_300 = arith.constant 0 : index
    %c0_301 = arith.constant 0 : index
    %470 = vector.load %arg12[%c1_299, %c0_300, %c0_301] : memref<2x32x32xf32, #tpu.memory_space<vmem>>, vector<1x32x32xf32>
    %471 = vector.shape_cast %470 : vector<1x32x32xf32> to vector<32x32xf32>
    %cst_302 = arith.constant dense<0.000000e+00> : vector<16x32xf32>
    %472 = tpu.matmul %469, %471, %cst_302 {dimension_numbers = #tpu.dot_dimension_numbers<[1], [0], [0], [1], [0, 0, 1, 1], [], []>} : vector<16x32xf32>, vector<32x32xf32>, vector<16x32xf32> -> vector<16x32xf32>
    %c1_303 = arith.constant 1 : index
    %c0_304 = arith.constant 0 : index
    %c0_305 = arith.constant 0 : index
    %473 = vector.load %arg13[%c1_303, %c0_304, %c0_305] : memref<2x1x32xf32, #tpu.memory_space<vmem>>, vector<1x1x32xf32>
    %474 = vector.shape_cast %473 : vector<1x1x32xf32> to vector<1x32xf32>
    %475 = vector.broadcast %474 : vector<1x32xf32> to vector<16x32xf32>
    %476 = arith.addf %472, %475 : vector<16x32xf32>
    %477 = arith.addf %476, %308 : vector<16x32xf32>
    %c1_306 = arith.constant 1 : index
    %c0_307 = arith.constant 0 : index
    %c0_308 = arith.constant 0 : index
    %478 = vector.load %arg14[%c1_306, %c0_307, %c0_308] : memref<2x1x32xf32, #tpu.memory_space<vmem>>, vector<1x1x32xf32>
    %479 = vector.shape_cast %478 : vector<1x1x32xf32> to vector<1x32xf32>
    %c1_309 = arith.constant 1 : index
    %c0_310 = arith.constant 0 : index
    %c0_311 = arith.constant 0 : index
    %480 = vector.load %arg15[%c1_309, %c0_310, %c0_311] : memref<2x1x32xf32, #tpu.memory_space<vmem>>, vector<1x1x32xf32>
    %481 = vector.shape_cast %480 : vector<1x1x32xf32> to vector<1x32xf32>
    %cst_312 = arith.constant dense<0.000000e+00> : vector<16xf32>
    %482 = vector.multi_reduction <add>, %477, %cst_312 [1] : vector<16x32xf32> to vector<16xf32>
    %483 = vector.shape_cast %482 : vector<16xf32> to vector<16x1xf32>
    %cst_313 = arith.constant 3.200000e+01 : f32
    %484 = vector.broadcast %cst_313 : f32 to vector<16x1xf32>
    %485 = arith.divf %483, %484 : vector<16x1xf32>
    %486 = vector.broadcast %485 : vector<16x1xf32> to vector<16x32xf32>
    %487 = arith.subf %477, %486 : vector<16x32xf32>
    %488 = vector.broadcast %485 : vector<16x1xf32> to vector<16x32xf32>
    %489 = arith.subf %477, %488 : vector<16x32xf32>
    %490 = arith.mulf %487, %489 : vector<16x32xf32>
    %cst_314 = arith.constant dense<0.000000e+00> : vector<16xf32>
    %491 = vector.multi_reduction <add>, %490, %cst_314 [1] : vector<16x32xf32> to vector<16xf32>
    %492 = vector.shape_cast %491 : vector<16xf32> to vector<16x1xf32>
    %cst_315 = arith.constant 3.200000e+01 : f32
    %493 = vector.broadcast %cst_315 : f32 to vector<16x1xf32>
    %494 = arith.divf %492, %493 : vector<16x1xf32>
    %495 = vector.broadcast %485 : vector<16x1xf32> to vector<16x32xf32>
    %496 = arith.subf %477, %495 : vector<16x32xf32>
    %cst_316 = arith.constant 9.99999996E-13 : f32
    %497 = vector.broadcast %cst_316 : f32 to vector<16x1xf32>
    %498 = arith.addf %494, %497 : vector<16x1xf32>
    %499 = math.rsqrt %498 : vector<16x1xf32>
    %500 = vector.broadcast %499 : vector<16x1xf32> to vector<16x32xf32>
    %501 = arith.mulf %496, %500 : vector<16x32xf32>
    %502 = vector.broadcast %479 : vector<1x32xf32> to vector<16x32xf32>
    %503 = arith.mulf %501, %502 : vector<16x32xf32>
    %504 = vector.broadcast %481 : vector<1x32xf32> to vector<16x32xf32>
    %505 = arith.addf %503, %504 : vector<16x32xf32>
    %c1_317 = arith.constant 1 : index
    %c0_318 = arith.constant 0 : index
    %c0_319 = arith.constant 0 : index
    %506 = vector.load %arg16[%c1_317, %c0_318, %c0_319] : memref<2x32x64xf32, #tpu.memory_space<vmem>>, vector<1x32x64xf32>
    %507 = vector.shape_cast %506 : vector<1x32x64xf32> to vector<32x64xf32>
    %cst_320 = arith.constant dense<0.000000e+00> : vector<16x64xf32>
    %508 = tpu.matmul %505, %507, %cst_320 {dimension_numbers = #tpu.dot_dimension_numbers<[1], [0], [0], [1], [0, 0, 1, 1], [], []>} : vector<16x32xf32>, vector<32x64xf32>, vector<16x64xf32> -> vector<16x64xf32>
    %c1_321 = arith.constant 1 : index
    %c0_322 = arith.constant 0 : index
    %c0_323 = arith.constant 0 : index
    %509 = vector.load %arg17[%c1_321, %c0_322, %c0_323] : memref<2x1x64xf32, #tpu.memory_space<vmem>>, vector<1x1x64xf32>
    %510 = vector.shape_cast %509 : vector<1x1x64xf32> to vector<1x64xf32>
    %511 = vector.broadcast %510 : vector<1x64xf32> to vector<16x64xf32>
    %512 = arith.addf %508, %511 : vector<16x64xf32>
    %cst_324 = arith.constant 5.000000e-01 : f32
    %513 = vector.broadcast %cst_324 : f32 to vector<16x64xf32>
    %514 = arith.mulf %512, %513 : vector<16x64xf32>
    %cst_325 = arith.constant 0.707106769 : f32
    %515 = vector.broadcast %cst_325 : f32 to vector<16x64xf32>
    %516 = arith.mulf %512, %515 : vector<16x64xf32>
    %517 = math.erf %516 : vector<16x64xf32>
    %cst_326 = arith.constant 1.000000e+00 : f32
    %518 = vector.broadcast %cst_326 : f32 to vector<16x64xf32>
    %519 = arith.addf %518, %517 : vector<16x64xf32>
    %520 = arith.mulf %514, %519 : vector<16x64xf32>
    %c1_327 = arith.constant 1 : index
    %c0_328 = arith.constant 0 : index
    %c0_329 = arith.constant 0 : index
    %521 = vector.load %arg18[%c1_327, %c0_328, %c0_329] : memref<2x64x32xf32, #tpu.memory_space<vmem>>, vector<1x64x32xf32>
    %522 = vector.shape_cast %521 : vector<1x64x32xf32> to vector<64x32xf32>
    %cst_330 = arith.constant dense<0.000000e+00> : vector<16x32xf32>
    %523 = tpu.matmul %520, %522, %cst_330 {dimension_numbers = #tpu.dot_dimension_numbers<[1], [0], [0], [1], [0, 0, 1, 1], [], []>} : vector<16x64xf32>, vector<64x32xf32>, vector<16x32xf32> -> vector<16x32xf32>
    %c1_331 = arith.constant 1 : index
    %c0_332 = arith.constant 0 : index
    %c0_333 = arith.constant 0 : index
    %524 = vector.load %arg19[%c1_331, %c0_332, %c0_333] : memref<2x1x32xf32, #tpu.memory_space<vmem>>, vector<1x1x32xf32>
    %525 = vector.shape_cast %524 : vector<1x1x32xf32> to vector<1x32xf32>
    %526 = vector.broadcast %525 : vector<1x32xf32> to vector<16x32xf32>
    %527 = arith.addf %523, %526 : vector<16x32xf32>
    %528 = arith.addf %527, %505 : vector<16x32xf32>
    %c1_334 = arith.constant 1 : index
    %c0_335 = arith.constant 0 : index
    %c0_336 = arith.constant 0 : index
    %529 = vector.load %arg20[%c1_334, %c0_335, %c0_336] : memref<2x1x32xf32, #tpu.memory_space<vmem>>, vector<1x1x32xf32>
    %530 = vector.shape_cast %529 : vector<1x1x32xf32> to vector<1x32xf32>
    %c1_337 = arith.constant 1 : index
    %c0_338 = arith.constant 0 : index
    %c0_339 = arith.constant 0 : index
    %531 = vector.load %arg21[%c1_337, %c0_338, %c0_339] : memref<2x1x32xf32, #tpu.memory_space<vmem>>, vector<1x1x32xf32>
    %532 = vector.shape_cast %531 : vector<1x1x32xf32> to vector<1x32xf32>
    %cst_340 = arith.constant dense<0.000000e+00> : vector<16xf32>
    %533 = vector.multi_reduction <add>, %528, %cst_340 [1] : vector<16x32xf32> to vector<16xf32>
    %534 = vector.shape_cast %533 : vector<16xf32> to vector<16x1xf32>
    %cst_341 = arith.constant 3.200000e+01 : f32
    %535 = vector.broadcast %cst_341 : f32 to vector<16x1xf32>
    %536 = arith.divf %534, %535 : vector<16x1xf32>
    %537 = vector.broadcast %536 : vector<16x1xf32> to vector<16x32xf32>
    %538 = arith.subf %528, %537 : vector<16x32xf32>
    %539 = vector.broadcast %536 : vector<16x1xf32> to vector<16x32xf32>
    %540 = arith.subf %528, %539 : vector<16x32xf32>
    %541 = arith.mulf %538, %540 : vector<16x32xf32>
    %cst_342 = arith.constant dense<0.000000e+00> : vector<16xf32>
    %542 = vector.multi_reduction <add>, %541, %cst_342 [1] : vector<16x32xf32> to vector<16xf32>
    %543 = vector.shape_cast %542 : vector<16xf32> to vector<16x1xf32>
    %cst_343 = arith.constant 3.200000e+01 : f32
    %544 = vector.broadcast %cst_343 : f32 to vector<16x1xf32>
    %545 = arith.divf %543, %544 : vector<16x1xf32>
    %546 = vector.broadcast %536 : vector<16x1xf32> to vector<16x32xf32>
    %547 = arith.subf %528, %546 : vector<16x32xf32>
    %cst_344 = arith.constant 9.99999996E-13 : f32
    %548 = vector.broadcast %cst_344 : f32 to vector<16x1xf32>
    %549 = arith.addf %545, %548 : vector<16x1xf32>
    %550 = math.rsqrt %549 : vector<16x1xf32>
    %551 = vector.broadcast %550 : vector<16x1xf32> to vector<16x32xf32>
    %552 = arith.mulf %547, %551 : vector<16x32xf32>
    %553 = vector.broadcast %530 : vector<1x32xf32> to vector<16x32xf32>
    %554 = arith.mulf %552, %553 : vector<16x32xf32>
    %555 = vector.broadcast %532 : vector<1x32xf32> to vector<16x32xf32>
    %556 = arith.addf %554, %555 : vector<16x32xf32>
    %c0_345 = arith.constant 0 : index
    %c0_346 = arith.constant 0 : index
    %557 = vector.load %arg33[%c0_345, %c0_346] : memref<16x32xf32, #tpu.memory_space<vmem>>, vector<16x32xf32>
    tpu.vector_store %arg33[%c0_345, %c0_346], %556 {strides = array<i32>} : memref<16x32xf32, #tpu.memory_space<vmem>>, vector<16x32xf32>,
    %c0_347 = arith.constant 0 : index
    %c0_348 = arith.constant 0 : index
    %558 = vector.load %arg24[%c0_347, %c0_348] : memref<32x32xf32, #tpu.memory_space<vmem>>, vector<32x32xf32>
    %cst_349 = arith.constant dense<0.000000e+00> : vector<16x32xf32>
    %559 = tpu.matmul %556, %558, %cst_349 {dimension_numbers = #tpu.dot_dimension_numbers<[1], [0], [0], [1], [0, 0, 1, 1], [], []>} : vector<16x32xf32>, vector<32x32xf32>, vector<16x32xf32> -> vector<16x32xf32>
    %c0_350 = arith.constant 0 : index
    %c0_351 = arith.constant 0 : index
    %560 = vector.load %arg25[%c0_350, %c0_351] : memref<1x32xf32, #tpu.memory_space<vmem>>, vector<1x32xf32>
    %561 = vector.broadcast %560 : vector<1x32xf32> to vector<16x32xf32>
    %562 = arith.addf %559, %561 : vector<16x32xf32>
    %cst_352 = arith.constant 5.000000e-01 : f32
    %563 = vector.broadcast %cst_352 : f32 to vector<16x32xf32>
    %564 = arith.mulf %562, %563 : vector<16x32xf32>
    %cst_353 = arith.constant 0.707106769 : f32
    %565 = vector.broadcast %cst_353 : f32 to vector<16x32xf32>
    %566 = arith.mulf %562, %565 : vector<16x32xf32>
    %567 = math.erf %566 : vector<16x32xf32>
    %cst_354 = arith.constant 1.000000e+00 : f32
    %568 = vector.broadcast %cst_354 : f32 to vector<16x32xf32>
    %569 = arith.addf %568, %567 : vector<16x32xf32>
    %570 = arith.mulf %564, %569 : vector<16x32xf32>
    %c0_355 = arith.constant 0 : index
    %c0_356 = arith.constant 0 : index
    %571 = vector.load %arg26[%c0_355, %c0_356] : memref<1x32xf32, #tpu.memory_space<vmem>>, vector<1x32xf32>
    %c0_357 = arith.constant 0 : index
    %c0_358 = arith.constant 0 : index
    %572 = vector.load %arg27[%c0_357, %c0_358] : memref<1x32xf32, #tpu.memory_space<vmem>>, vector<1x32xf32>
    %cst_359 = arith.constant dense<0.000000e+00> : vector<16xf32>
    %573 = vector.multi_reduction <add>, %570, %cst_359 [1] : vector<16x32xf32> to vector<16xf32>
    %574 = vector.shape_cast %573 : vector<16xf32> to vector<16x1xf32>
    %cst_360 = arith.constant 3.200000e+01 : f32
    %575 = vector.broadcast %cst_360 : f32 to vector<16x1xf32>
    %576 = arith.divf %574, %575 : vector<16x1xf32>
    %577 = vector.broadcast %576 : vector<16x1xf32> to vector<16x32xf32>
    %578 = arith.subf %570, %577 : vector<16x32xf32>
    %579 = vector.broadcast %576 : vector<16x1xf32> to vector<16x32xf32>
    %580 = arith.subf %570, %579 : vector<16x32xf32>
    %581 = arith.mulf %578, %580 : vector<16x32xf32>
    %cst_361 = arith.constant dense<0.000000e+00> : vector<16xf32>
    %582 = vector.multi_reduction <add>, %581, %cst_361 [1] : vector<16x32xf32> to vector<16xf32>
    %583 = vector.shape_cast %582 : vector<16xf32> to vector<16x1xf32>
    %cst_362 = arith.constant 3.200000e+01 : f32
    %584 = vector.broadcast %cst_362 : f32 to vector<16x1xf32>
    %585 = arith.divf %583, %584 : vector<16x1xf32>
    %586 = vector.broadcast %576 : vector<16x1xf32> to vector<16x32xf32>
    %587 = arith.subf %570, %586 : vector<16x32xf32>
    %cst_363 = arith.constant 9.99999996E-13 : f32
    %588 = vector.broadcast %cst_363 : f32 to vector<16x1xf32>
    %589 = arith.addf %585, %588 : vector<16x1xf32>
    %590 = math.rsqrt %589 : vector<16x1xf32>
    %591 = vector.broadcast %590 : vector<16x1xf32> to vector<16x32xf32>
    %592 = arith.mulf %587, %591 : vector<16x32xf32>
    %593 = vector.broadcast %571 : vector<1x32xf32> to vector<16x32xf32>
    %594 = arith.mulf %592, %593 : vector<16x32xf32>
    %595 = vector.broadcast %572 : vector<1x32xf32> to vector<16x32xf32>
    %596 = arith.addf %594, %595 : vector<16x32xf32>
    %c0_364 = arith.constant 0 : index
    %c0_365 = arith.constant 0 : index
    %597 = vector.load %arg5[%c0_364, %c0_365] : memref<64x32xf32, #tpu.memory_space<vmem>>, vector<64x32xf32>
    %cst_366 = arith.constant dense<0.000000e+00> : vector<16x64xf32>
    %598 = tpu.matmul %596, %597, %cst_366 {dimension_numbers = #tpu.dot_dimension_numbers<[1], [1], [0], [0], [0, 0, 1, 0], [], []>} : vector<16x32xf32>, vector<64x32xf32>, vector<16x64xf32> -> vector<16x64xf32>
    %c0_367 = arith.constant 0 : index
    %c0_368 = arith.constant 0 : index
    %599 = vector.load %arg28[%c0_367, %c0_368] : memref<1x64xf32, #tpu.memory_space<vmem>>, vector<1x64xf32>
    %600 = vector.broadcast %599 : vector<1x64xf32> to vector<16x64xf32>
    %601 = arith.addf %598, %600 : vector<16x64xf32>
    %c0_369 = arith.constant 0 : index
    %c0_370 = arith.constant 0 : index
    %602 = vector.load %arg3[%c0_369, %c0_370] : memref<16x1xi32, #tpu.memory_space<vmem>>, vector<16x1xi32>
    %c-1_i32 = arith.constant -1 : i32
    %603 = vector.broadcast %c-1_i32 : i32 to vector<16x1xi32>
    %604 = arith.cmpi ne, %602, %603 : vector<16x1xi32>
    %605 = arith.extui %604 : vector<16x1xi1> to vector<16x1xi32>
    %606 = arith.sitofp %605 : vector<16x1xi32> to vector<16x1xf32>
    %607 = tpu.iota {dimensions = array<i32: 1>} : vector<16x64xi32>
    %608 = vector.broadcast %602 : vector<16x1xi32> to vector<16x64xi32>
    %609 = arith.cmpi eq, %607, %608 : vector<16x64xi32>
    %610 = arith.extui %609 : vector<16x64xi1> to vector<16x64xi32>
    %611 = arith.sitofp %610 : vector<16x64xi32> to vector<16x64xf32>
    %cst_371 = arith.constant dense<0xFF800000> : vector<16xf32>
    %612 = vector.multi_reduction <maximumf>, %601, %cst_371 [1] : vector<16x64xf32> to vector<16xf32>
    %613 = vector.shape_cast %612 : vector<16xf32> to vector<16x1xf32>
    %614 = vector.broadcast %613 : vector<16x1xf32> to vector<16x64xf32>
    %615 = arith.subf %601, %614 : vector<16x64xf32>
    %616 = math.exp %615 : vector<16x64xf32>
    %cst_372 = arith.constant dense<0.000000e+00> : vector<16xf32>
    %617 = vector.multi_reduction <add>, %616, %cst_372 [1] : vector<16x64xf32> to vector<16xf32>
    %618 = vector.shape_cast %617 : vector<16xf32> to vector<16x1xf32>
    %619 = math.log %618 : vector<16x1xf32>
    %620 = arith.addf %619, %613 : vector<16x1xf32>
    %621 = arith.mulf %611, %601 : vector<16x64xf32>
    %cst_373 = arith.constant dense<0.000000e+00> : vector<16xf32>
    %622 = vector.multi_reduction <add>, %621, %cst_373 [1] : vector<16x64xf32> to vector<16xf32>
    %623 = vector.shape_cast %622 : vector<16xf32> to vector<16x1xf32>
    %624 = arith.subf %620, %623 : vector<16x1xf32>
    %625 = arith.mulf %624, %606 : vector<16x1xf32>
    %cst_374 = arith.constant 1.000000e+00 : f32
    %626 = vector.broadcast %cst_374 : f32 to vector<1x16xf32>
    %cst_375 = arith.constant dense<0.000000e+00> : vector<1x1xf32>
    %627 = tpu.matmul %626, %625, %cst_375 {dimension_numbers = #tpu.dot_dimension_numbers<[1], [0], [0], [1], [0, 0, 1, 1], [], []>} : vector<1x16xf32>, vector<16x1xf32>, vector<1x1xf32> -> vector<1x1xf32>
    %cst_376 = arith.constant dense<0.000000e+00> : vector<1x1xf32>
    %628 = tpu.matmul %626, %606, %cst_376 {dimension_numbers = #tpu.dot_dimension_numbers<[1], [0], [0], [1], [0, 0, 1, 1], [], []>} : vector<1x16xf32>, vector<16x1xf32>, vector<1x1xf32> -> vector<1x1xf32>
    %cst_377 = arith.constant 1.000000e+00 : f32
    %629 = vector.broadcast %cst_377 : f32 to vector<1x1xf32>
    %630 = arith.maximumf %628, %629 : vector<1x1xf32>
    %631 = arith.divf %627, %630 : vector<1x1xf32>
    %cst_378 = arith.constant 0.000000e+00 : f32
    %632 = vector.broadcast %cst_378 : f32 to vector<1x1xf32>
    %c0_379 = arith.constant 0 : index
    %c0_380 = arith.constant 0 : index
    %633 = vector.load %arg33[%c0_379, %c0_380] : memref<16x32xf32, #tpu.memory_space<vmem>>, vector<1x32xf32>
    %c0_381 = arith.constant 0 : index
    %c0_382 = arith.constant 0 : index
    %634 = vector.load %arg22[%c0_381, %c0_382] : memref<32x32xf32, #tpu.memory_space<vmem>>, vector<32x32xf32>
    %cst_383 = arith.constant dense<0.000000e+00> : vector<1x32xf32>
    %635 = tpu.matmul %633, %634, %cst_383 {dimension_numbers = #tpu.dot_dimension_numbers<[1], [0], [0], [1], [0, 0, 1, 1], [], []>} : vector<1x32xf32>, vector<32x32xf32>, vector<1x32xf32> -> vector<1x32xf32>
    %c0_384 = arith.constant 0 : index
    %c0_385 = arith.constant 0 : index
    %636 = vector.load %arg23[%c0_384, %c0_385] : memref<1x32xf32, #tpu.memory_space<vmem>>, vector<1x32xf32>
    %637 = arith.addf %635, %636 : vector<1x32xf32>
    %638 = math.tanh %637 : vector<1x32xf32>
    %c0_386 = arith.constant 0 : index
    %c0_387 = arith.constant 0 : index
    %639 = vector.load %arg29[%c0_386, %c0_387] : memref<32x2xf32, #tpu.memory_space<vmem>>, vector<32x2xf32>
    %cst_388 = arith.constant dense<0.000000e+00> : vector<1x2xf32>
    %640 = tpu.matmul %638, %639, %cst_388 {dimension_numbers = #tpu.dot_dimension_numbers<[1], [0], [0], [1], [0, 0, 1, 1], [], []>} : vector<1x32xf32>, vector<32x2xf32>, vector<1x2xf32> -> vector<1x2xf32>
    %c0_389 = arith.constant 0 : index
    %c0_390 = arith.constant 0 : index
    %641 = vector.load %arg30[%c0_389, %c0_390] : memref<1x2xf32, #tpu.memory_space<vmem>>, vector<1x2xf32>
    %642 = arith.addf %640, %641 : vector<1x2xf32>
    %c0_391 = arith.constant 0 : index
    %643 = memref.load %arg4[%c0_391] : memref<2xi32, #tpu.memory_space<smem>>
    %644 = tpu.iota {dimensions = array<i32: 1>} : vector<1x2xi32>
    %645 = vector.broadcast %643 : i32 to vector<1x2xi32>
    %646 = arith.cmpi eq, %644, %645 : vector<1x2xi32>
    %647 = arith.extui %646 : vector<1x2xi1> to vector<1x2xi32>
    %648 = arith.sitofp %647 : vector<1x2xi32> to vector<1x2xf32>
    %cst_392 = arith.constant dense<0xFF800000> : vector<1xf32>
    %649 = vector.multi_reduction <maximumf>, %642, %cst_392 [1] : vector<1x2xf32> to vector<1xf32>
    %650 = vector.shape_cast %649 : vector<1xf32> to vector<1x1xf32>
    %651 = vector.broadcast %650 : vector<1x1xf32> to vector<1x2xf32>
    %652 = arith.subf %642, %651 : vector<1x2xf32>
    %653 = math.exp %652 : vector<1x2xf32>
    %cst_393 = arith.constant dense<0.000000e+00> : vector<1xf32>
    %654 = vector.multi_reduction <add>, %653, %cst_393 [1] : vector<1x2xf32> to vector<1xf32>
    %655 = vector.shape_cast %654 : vector<1xf32> to vector<1x1xf32>
    %656 = math.log %655 : vector<1x1xf32>
    %657 = arith.addf %656, %650 : vector<1x1xf32>
    %658 = arith.mulf %648, %642 : vector<1x2xf32>
    %cst_394 = arith.constant dense<0.000000e+00> : vector<1xf32>
    %659 = vector.multi_reduction <add>, %658, %cst_394 [1] : vector<1x2xf32> to vector<1xf32>
    %660 = vector.shape_cast %659 : vector<1xf32> to vector<1x1xf32>
    %661 = arith.subf %657, %660 : vector<1x1xf32>
    %662 = arith.addf %632, %661 : vector<1x1xf32>
    %c8_395 = arith.constant 8 : index
    %c0_396 = arith.constant 0 : index
    %663 = vector.load %arg33[%c8_395, %c0_396] : memref<16x32xf32, #tpu.memory_space<vmem>>, vector<1x32xf32>
    %c0_397 = arith.constant 0 : index
    %c0_398 = arith.constant 0 : index
    %664 = vector.load %arg22[%c0_397, %c0_398] : memref<32x32xf32, #tpu.memory_space<vmem>>, vector<32x32xf32>
    %cst_399 = arith.constant dense<0.000000e+00> : vector<1x32xf32>
    %665 = tpu.matmul %663, %664, %cst_399 {dimension_numbers = #tpu.dot_dimension_numbers<[1], [0], [0], [1], [0, 0, 1, 1], [], []>} : vector<1x32xf32>, vector<32x32xf32>, vector<1x32xf32> -> vector<1x32xf32>
    %c0_400 = arith.constant 0 : index
    %c0_401 = arith.constant 0 : index
    %666 = vector.load %arg23[%c0_400, %c0_401] : memref<1x32xf32, #tpu.memory_space<vmem>>, vector<1x32xf32>
    %667 = arith.addf %665, %666 : vector<1x32xf32>
    %668 = math.tanh %667 : vector<1x32xf32>
    %c0_402 = arith.constant 0 : index
    %c0_403 = arith.constant 0 : index
    %669 = vector.load %arg29[%c0_402, %c0_403] : memref<32x2xf32, #tpu.memory_space<vmem>>, vector<32x2xf32>
    %cst_404 = arith.constant dense<0.000000e+00> : vector<1x2xf32>
    %670 = tpu.matmul %668, %669, %cst_404 {dimension_numbers = #tpu.dot_dimension_numbers<[1], [0], [0], [1], [0, 0, 1, 1], [], []>} : vector<1x32xf32>, vector<32x2xf32>, vector<1x2xf32> -> vector<1x2xf32>
    %c0_405 = arith.constant 0 : index
    %c0_406 = arith.constant 0 : index
    %671 = vector.load %arg30[%c0_405, %c0_406] : memref<1x2xf32, #tpu.memory_space<vmem>>, vector<1x2xf32>
    %672 = arith.addf %670, %671 : vector<1x2xf32>
    %c1_407 = arith.constant 1 : index
    %673 = memref.load %arg4[%c1_407] : memref<2xi32, #tpu.memory_space<smem>>
    %674 = tpu.iota {dimensions = array<i32: 1>} : vector<1x2xi32>
    %675 = vector.broadcast %673 : i32 to vector<1x2xi32>
    %676 = arith.cmpi eq, %674, %675 : vector<1x2xi32>
    %677 = arith.extui %676 : vector<1x2xi1> to vector<1x2xi32>
    %678 = arith.sitofp %677 : vector<1x2xi32> to vector<1x2xf32>
    %cst_408 = arith.constant dense<0xFF800000> : vector<1xf32>
    %679 = vector.multi_reduction <maximumf>, %672, %cst_408 [1] : vector<1x2xf32> to vector<1xf32>
    %680 = vector.shape_cast %679 : vector<1xf32> to vector<1x1xf32>
    %681 = vector.broadcast %680 : vector<1x1xf32> to vector<1x2xf32>
    %682 = arith.subf %672, %681 : vector<1x2xf32>
    %683 = math.exp %682 : vector<1x2xf32>
    %cst_409 = arith.constant dense<0.000000e+00> : vector<1xf32>
    %684 = vector.multi_reduction <add>, %683, %cst_409 [1] : vector<1x2xf32> to vector<1xf32>
    %685 = vector.shape_cast %684 : vector<1xf32> to vector<1x1xf32>
    %686 = math.log %685 : vector<1x1xf32>
    %687 = arith.addf %686, %680 : vector<1x1xf32>
    %688 = arith.mulf %678, %672 : vector<1x2xf32>
    %cst_410 = arith.constant dense<0.000000e+00> : vector<1xf32>
    %689 = vector.multi_reduction <add>, %688, %cst_410 [1] : vector<1x2xf32> to vector<1xf32>
    %690 = vector.shape_cast %689 : vector<1xf32> to vector<1x1xf32>
    %691 = arith.subf %687, %690 : vector<1x1xf32>
    %692 = arith.addf %662, %691 : vector<1x1xf32>
    %cst_411 = arith.constant 5.000000e-01 : f32
    %693 = vector.broadcast %cst_411 : f32 to vector<1x1xf32>
    %694 = arith.mulf %692, %693 : vector<1x1xf32>
    %695 = arith.addf %631, %694 : vector<1x1xf32>
    %c0_412 = arith.constant 0 : index
    %c0_413 = arith.constant 0 : index
    %696 = vector.load %arg31[%c0_412, %c0_413] : memref<1x1xf32, #tpu.memory_space<vmem>>, vector<1x1xf32>
    tpu.vector_store %arg31[%c0_412, %c0_413], %695 {strides = array<i32>} : memref<1x1xf32, #tpu.memory_space<vmem>>, vector<1x1xf32>,
    return
  }
}

</mosaic_0001>

<llo_original>
// kernel: bert_for_pretraining.1
$region0: #{bert_for_pretraining.1}
  #allocation0 [shape = 'u32[]', space=smem, size = 0x4, offset = 0x4, fixed_abs, tag = 'smem constant byte address 0x4 - core index']
  #allocation1 [shape = 'u32[144,128]{1,0:T(1,128)}', space=vmem, size = 0x12000, scoped, tag = 'internal scratch']
  #allocation2 [shape = 'f32[16,96]{1,0:T(8,128)}', space=vmem, size = 0x2000, scoped, tag = 'scratch operand']
  #allocation3 [shape = 'f32[16,32]{1,0:T(8,128)}', space=vmem, size = 0x2000, scoped, tag = 'scratch operand']
  %s0 = inlined_call_operand.smem [shape: u32[32], index: -1, kind: input, shape index: {}]
  %s1 = sld [smem:[%s0]]
  %s2 = scalar_lea.smem %s0, 1
  %s3 = sld [smem:[%s2]]
  %s4 = scalar_lea.smem %s0, 2
  %s5 = sld [smem:[%s4]]
  %s6 = scalar_lea.smem %s0, 3
  %s7 = sld [smem:[%s6]]
  %s8 = scalar_lea.smem %s0, 4
  %s9 = sld [smem:[%s8]]
  %s10 = scalar_lea.smem %s0, 5
  %s11 = sld [smem:[%s10]]
  %s12 = scalar_lea.smem %s0, 6
  %s13 = sld [smem:[%s12]]
  %s14 = scalar_lea.smem %s0, 7
  %s15 = sld [smem:[%s14]]
  %s16 = scalar_lea.smem %s0, 8
  %s17 = sld [smem:[%s16]]
  %s18 = scalar_lea.smem %s0, 9
  %s19 = sld [smem:[%s18]]
  %s20 = scalar_lea.smem %s0, 10
  %s21 = sld [smem:[%s20]]
  %s22 = scalar_lea.smem %s0, 11
  %s23 = sld [smem:[%s22]]
  %s24 = scalar_lea.smem %s0, 12
  %s25 = sld [smem:[%s24]]
  %s26 = scalar_lea.smem %s0, 13
  %s27 = sld [smem:[%s26]]
  %s28 = scalar_lea.smem %s0, 14
  %s29 = sld [smem:[%s28]]
  %s30 = scalar_lea.smem %s0, 15
  %s31 = sld [smem:[%s30]]
  %s32 = scalar_lea.smem %s0, 16
  %s33 = sld [smem:[%s32]]
  %s34 = scalar_lea.smem %s0, 17
  %s35 = sld [smem:[%s34]]
  %s36 = scalar_lea.smem %s0, 18
  %s37 = sld [smem:[%s36]]
  %s38 = scalar_lea.smem %s0, 19
  %s39 = sld [smem:[%s38]]
  %s40 = scalar_lea.smem %s0, 20
  %s41 = sld [smem:[%s40]]
  %s42 = scalar_lea.smem %s0, 21
  %s43 = sld [smem:[%s42]]
  %s44 = scalar_lea.smem %s0, 22
  %s45 = sld [smem:[%s44]]
  %s46 = scalar_lea.smem %s0, 23
  %s47 = sld [smem:[%s46]]
  %s48 = scalar_lea.smem %s0, 24
  %s49 = sld [smem:[%s48]]
  %s50 = scalar_lea.smem %s0, 25
  %s51 = sld [smem:[%s50]]
  %s52 = scalar_lea.smem %s0, 26
  %s53 = sld [smem:[%s52]]
  %s54 = scalar_lea.smem %s0, 27
  %s55 = sld [smem:[%s54]]
  %s56 = scalar_lea.smem %s0, 28
  %s57 = sld [smem:[%s56]]
  %s58 = scalar_lea.smem %s0, 29
  %s59 = sld [smem:[%s58]]
  %s60 = scalar_lea.smem %s0, 30
  %s61 = sld [smem:[%s60]]
  %s62 = scalar_lea.smem %s0, 31
  %s63 = sld [smem:[%s62]]
  %s64 = sld [smem:[#allocation0]]
  $region154: #{bert_for_pretraining.1} parent=0
    _
  %s66 = ssub.s32 1, %s64
  %s67 = scalar_select 0, %s66, %s64
  $region1: #{bert_for_pretraining.1} parent=0
    #allocation4 [shape = 'u8[512]{0}', space=smem, size = 0x200, scoped, tag = 'input window, operand 4, single buffered']
    #allocation5 [shape = 's32[1]{0}', space=sflag, size = 0x4, scoped, tag = 'scoped memory for bert_for_pretraining.1']
    #allocation6 [shape = 's32[1]{0}', space=sflag, size = 0x4, scoped, tag = 'scoped memory for bert_for_pretraining.1']
    #allocation7 [shape = 's32[1]{0}', space=sflag, size = 0x4, scoped, tag = 'scoped memory for bert_for_pretraining.1']
    #allocation8 [shape = 'u8[512]{0}', space=vmem, size = 0x400, scoped, tag = 'input window, operand 9, single buffered']
    #allocation9 [shape = 'u8[1024]{0}', space=vmem, size = 0x400, scoped, tag = 'input window, operand 14, single buffered']
    #allocation10 [shape = 's32[1]{0}', space=sflag, size = 0x4, scoped, tag = 'scoped memory for bert_for_pretraining.1']
    #allocation11 [shape = 'u8[1024]{0}', space=vmem, size = 0x400, scoped, tag = 'input window, operand 15, single buffered']
    #allocation12 [shape = 'u8[512]{0}', space=vmem, size = 0x400, scoped, tag = 'input window, operand 28, single buffered']
    #allocation13 [shape = 's32[1]{0}', space=sflag, size = 0x4, scoped, tag = 'scoped memory for bert_for_pretraining.1']
    #allocation14 [shape = 'u8[512]{0}', space=vmem, size = 0x400, scoped, tag = 'output window, operand 0, single buffered']
    %68 = vsyncpa [#allocation7], 0
    %69 = vsyncpa [#allocation5], 0
    %70 = vsyncpa [#allocation10], 0
    %71 = vsyncpa [#allocation13], 0
    %72 = vsyncpa [#allocation6], 0
    // Predicated region
    $region2: #{bert_for_pretraining.1} parent=1 // pred_check
      _
    $region3: #{bert_for_pretraining.1} parent=1 // pred_check_branch
      %74 = sbr.rel (0) target = $region5
    $region4: #{bert_for_pretraining.1} parent=1 // pred_region
      _
    $region5: #{bert_for_pretraining.1} parent=1 // pred_fallthru
      _
    // Predicated region
    $region6: #{bert_for_pretraining.1} parent=1 // pred_check
      _
    $region7: #{bert_for_pretraining.1} parent=1 // pred_check_branch
      %76 = sbr.rel (0) target = $region9
    $region8: #{bert_for_pretraining.1} parent=1 // pred_region
      _
    $region9: #{bert_for_pretraining.1} parent=1 // pred_fallthru
      _
    // Predicated region
    $region10: #{bert_for_pretraining.1} parent=1 // pred_check
      _
    $region11: #{bert_for_pretraining.1} parent=1 // pred_check_branch
      %78 = sbr.rel (0) target = $region13
    $region12: #{bert_for_pretraining.1} parent=1 // pred_region
      _
    $region13: #{bert_for_pretraining.1} parent=1 // pred_fallthru
      _
    // Predicated region
    $region14: #{bert_for_pretraining.1} parent=1 // pred_check
      _
    $region15: #{bert_for_pretraining.1} parent=1 // pred_check_branch
      %80 = sbr.rel (0) target = $region17
    $region16: #{bert_for_pretraining.1} parent=1 // pred_region
      _
    $region17: #{bert_for_pretraining.1} parent=1 // pred_fallthru
      _
    // Predicated region
    $region18: #{bert_for_pretraining.1} parent=1 // pred_check
      _
    $region19: #{bert_for_pretraining.1} parent=1 // pred_check_branch
      %82 = sbr.rel (0) target = $region21
    $region20: #{bert_for_pretraining.1} parent=1 // pred_region
      %s84 = ssub.s32 16, 16
      %85 = vsyncadd [#allocation7], %s84
      %s87 = sshll.u32 %s9, 4
      %s88 = int_to_ptr.vmem [resolvable:$true] %s87
      %90 = dma.vmem_to_smem %s88, 16, [#allocation4], [#allocation7]
    $region21: #{bert_for_pretraining.1} parent=1 // pred_fallthru
      _
    // Predicated region
    $region22: #{bert_for_pretraining.1} parent=1 // pred_check
      _
    $region23: #{bert_for_pretraining.1} parent=1 // pred_check_branch
      %92 = sbr.rel (0) target = $region25
    $region24: #{bert_for_pretraining.1} parent=1 // pred_region
      _
    $region25: #{bert_for_pretraining.1} parent=1 // pred_fallthru
      _
    // Predicated region
    $region26: #{bert_for_pretraining.1} parent=1 // pred_check
      _
    $region27: #{bert_for_pretraining.1} parent=1 // pred_check_branch
      %94 = sbr.rel (0) target = $region29
    $region28: #{bert_for_pretraining.1} parent=1 // pred_region
      _
    $region29: #{bert_for_pretraining.1} parent=1 // pred_fallthru
      _
    // Predicated region
    $region30: #{bert_for_pretraining.1} parent=1 // pred_check
      _
    $region31: #{bert_for_pretraining.1} parent=1 // pred_check_branch
      %96 = sbr.rel (0) target = $region33
    $region32: #{bert_for_pretraining.1} parent=1 // pred_region
      _
    $region33: #{bert_for_pretraining.1} parent=1 // pred_fallthru
      _
    // Predicated region
    $region34: #{bert_for_pretraining.1} parent=1 // pred_check
      _
    $region35: #{bert_for_pretraining.1} parent=1 // pred_check_branch
      %98 = sbr.rel (0) target = $region37
    $region36: #{bert_for_pretraining.1} parent=1 // pred_region
      _
    $region37: #{bert_for_pretraining.1} parent=1 // pred_fallthru
      _
    // Predicated region
    $region38: #{bert_for_pretraining.1} parent=1 // pred_check
      _
    $region39: #{bert_for_pretraining.1} parent=1 // pred_check_branch
      %100 = sbr.rel (0) target = $region41
    $region40: #{bert_for_pretraining.1} parent=1 // pred_region
      %s102 = ssub.s32 16, 16
      %103 = vsyncadd [#allocation5], %s102
      %s105 = sshll.u32 [#allocation8], 4
      %s106 = int_to_ptr.vmem [resolvable:$true] %s105
      %108 = dma.hbm_to_vmem [thread:$0]  %s19, 16, %s106, [#allocation5]
    $region41: #{bert_for_pretraining.1} parent=1 // pred_fallthru
      _
    // Predicated region
    $region42: #{bert_for_pretraining.1} parent=1 // pred_check
      _
    $region43: #{bert_for_pretraining.1} parent=1 // pred_check_branch
      %110 = sbr.rel (0) target = $region45
    $region44: #{bert_for_pretraining.1} parent=1 // pred_region
      _
    $region45: #{bert_for_pretraining.1} parent=1 // pred_fallthru
      _
    // Predicated region
    $region46: #{bert_for_pretraining.1} parent=1 // pred_check
      _
    $region47: #{bert_for_pretraining.1} parent=1 // pred_check_branch
      %112 = sbr.rel (0) target = $region49
    $region48: #{bert_for_pretraining.1} parent=1 // pred_region
      _
    $region49: #{bert_for_pretraining.1} parent=1 // pred_fallthru
      _
    // Predicated region
    $region50: #{bert_for_pretraining.1} parent=1 // pred_check
      _
    $region51: #{bert_for_pretraining.1} parent=1 // pred_check_branch
      %114 = sbr.rel (0) target = $region53
    $region52: #{bert_for_pretraining.1} parent=1 // pred_region
      _
    $region53: #{bert_for_pretraining.1} parent=1 // pred_fallthru
      _
    // Predicated region
    $region54: #{bert_for_pretraining.1} parent=1 // pred_check
      _
    $region55: #{bert_for_pretraining.1} parent=1 // pred_check_branch
      %116 = sbr.rel (0) target = $region57
    $region56: #{bert_for_pretraining.1} parent=1 // pred_region
      _
    $region57: #{bert_for_pretraining.1} parent=1 // pred_fallthru
      _
    // Predicated region
    $region58: #{bert_for_pretraining.1} parent=1 // pred_check
      _
    $region59: #{bert_for_pretraining.1} parent=1 // pred_check_branch
      %118 = sbr.rel (0) target = $region61
    $region60: #{bert_for_pretraining.1} parent=1 // pred_region
      %s120 = ssub.s32 32, 32
      %121 = vsyncadd [#allocation10], %s120
      %s122 = sshll.u32 [#allocation9], 4
      %s123 = int_to_ptr.vmem [resolvable:$true] %s122
      %128 = dma.hbm_to_vmem [thread:$0]  %s29, 32, %s123, [#allocation10], 16, 16, 1
    $region61: #{bert_for_pretraining.1} parent=1 // pred_fallthru
      _
    // Predicated region
    $region62: #{bert_for_pretraining.1} parent=1 // pred_check
      _
    $region63: #{bert_for_pretraining.1} parent=1 // pred_check_branch
      %130 = sbr.rel (0) target = $region65
    $region64: #{bert_for_pretraining.1} parent=1 // pred_region
      %s132 = ssub.s32 32, 32
      %133 = vsyncadd [#allocation10], %s132
      %s134 = sshll.u32 [#allocation11], 4
      %s135 = int_to_ptr.vmem [resolvable:$true] %s134
      %140 = dma.hbm_to_vmem [thread:$0]  %s31, 32, %s135, [#allocation10], 16, 16, 1
    $region65: #{bert_for_pretraining.1} parent=1 // pred_fallthru
      _
    // Predicated region
    $region66: #{bert_for_pretraining.1} parent=1 // pred_check
      _
    $region67: #{bert_for_pretraining.1} parent=1 // pred_check_branch
      %142 = sbr.rel (0) target = $region69
    $region68: #{bert_for_pretraining.1} parent=1 // pred_region
      _
    $region69: #{bert_for_pretraining.1} parent=1 // pred_fallthru
      _
    // Predicated region
    $region70: #{bert_for_pretraining.1} parent=1 // pred_check
      _
    $region71: #{bert_for_pretraining.1} parent=1 // pred_check_branch
      %144 = sbr.rel (0) target = $region73
    $region72: #{bert_for_pretraining.1} parent=1 // pred_region
      _
    $region73: #{bert_for_pretraining.1} parent=1 // pred_fallthru
      _
    // Predicated region
    $region74: #{bert_for_pretraining.1} parent=1 // pred_check
      _
    $region75: #{bert_for_pretraining.1} parent=1 // pred_check_branch
      %146 = sbr.rel (0) target = $region77
    $region76: #{bert_for_pretraining.1} parent=1 // pred_region
      _
    $region77: #{bert_for_pretraining.1} parent=1 // pred_fallthru
      _
    // Predicated region
    $region78: #{bert_for_pretraining.1} parent=1 // pred_check
      _
    $region79: #{bert_for_pretraining.1} parent=1 // pred_check_branch
      %148 = sbr.rel (0) target = $region81
    $region80: #{bert_for_pretraining.1} parent=1 // pred_region
      _
    $region81: #{bert_for_pretraining.1} parent=1 // pred_fallthru
      _
    // Predicated region
    $region82: #{bert_for_pretraining.1} parent=1 // pred_check
      _
    $region83: #{bert_for_pretraining.1} parent=1 // pred_check_branch
      %150 = sbr.rel (0) target = $region85
    $region84: #{bert_for_pretraining.1} parent=1 // pred_region
      _
    $region85: #{bert_for_pretraining.1} parent=1 // pred_fallthru
      _
    // Predicated region
    $region86: #{bert_for_pretraining.1} parent=1 // pred_check
      _
    $region87: #{bert_for_pretraining.1} parent=1 // pred_check_branch
      %152 = sbr.rel (0) target = $region89
    $region88: #{bert_for_pretraining.1} parent=1 // pred_region
      _
    $region89: #{bert_for_pretraining.1} parent=1 // pred_fallthru
      _
    // Predicated region
    $region90: #{bert_for_pretraining.1} parent=1 // pred_check
      _
    $region91: #{bert_for_pretraining.1} parent=1 // pred_check_branch
      %154 = sbr.rel (0) target = $region93
    $region92: #{bert_for_pretraining.1} parent=1 // pred_region
      _
    $region93: #{bert_for_pretraining.1} parent=1 // pred_fallthru
      _
    // Predicated region
    $region94: #{bert_for_pretraining.1} parent=1 // pred_check
      _
    $region95: #{bert_for_pretraining.1} parent=1 // pred_check_branch
      %156 = sbr.rel (0) target = $region97
    $region96: #{bert_for_pretraining.1} parent=1 // pred_region
      _
    $region97: #{bert_for_pretraining.1} parent=1 // pred_fallthru
      _
    // Predicated region
    $region98: #{bert_for_pretraining.1} parent=1 // pred_check
      _
    $region99: #{bert_for_pretraining.1} parent=1 // pred_check_branch
      %158 = sbr.rel (0) target = $region101
    $region100: #{bert_for_pretraining.1} parent=1 // pred_region
      _
    $region101: #{bert_for_pretraining.1} parent=1 // pred_fallthru
      _
    // Predicated region
    $region102: #{bert_for_pretraining.1} parent=1 // pred_check
      _
    $region103: #{bert_for_pretraining.1} parent=1 // pred_check_branch
      %160 = sbr.rel (0) target = $region105
    $region104: #{bert_for_pretraining.1} parent=1 // pred_region
      _
    $region105: #{bert_for_pretraining.1} parent=1 // pred_fallthru
      _
    // Predicated region
    $region106: #{bert_for_pretraining.1} parent=1 // pred_check
      _
    $region107: #{bert_for_pretraining.1} parent=1 // pred_check_branch
      %162 = sbr.rel (0) target = $region109
    $region108: #{bert_for_pretraining.1} parent=1 // pred_region
      _
    $region109: #{bert_for_pretraining.1} parent=1 // pred_fallthru
      _
    // Predicated region
    $region110: #{bert_for_pretraining.1} parent=1 // pred_check
      _
    $region111: #{bert_for_pretraining.1} parent=1 // pred_check_branch
      %164 = sbr.rel (0) target = $region113
    $region112: #{bert_for_pretraining.1} parent=1 // pred_region
      _
    $region113: #{bert_for_pretraining.1} parent=1 // pred_fallthru
      _
    // Predicated region
    $region114: #{bert_for_pretraining.1} parent=1 // pred_check
      _
    $region115: #{bert_for_pretraining.1} parent=1 // pred_check_branch
      %166 = sbr.rel (0) target = $region117
    $region116: #{bert_for_pretraining.1} parent=1 // pred_region
      %s168 = ssub.s32 16, 16
      %169 = vsyncadd [#allocation13], %s168
      %s171 = sshll.u32 [#allocation12], 4
      %s172 = int_to_ptr.vmem [resolvable:$true] %s171
      %174 = dma.hbm_to_vmem [thread:$0]  %s57, 16, %s172, [#allocation13]
    $region117: #{bert_for_pretraining.1} parent=1 // pred_fallthru
      _
    // Predicated region
    $region118: #{bert_for_pretraining.1} parent=1 // pred_check
      _
    $region119: #{bert_for_pretraining.1} parent=1 // pred_check_branch
      %176 = sbr.rel (0) target = $region121
    $region120: #{bert_for_pretraining.1} parent=1 // pred_region
      _
    $region121: #{bert_for_pretraining.1} parent=1 // pred_fallthru
      _
    // Predicated region
    $region122: #{bert_for_pretraining.1} parent=1 // pred_check
      _
    $region123: #{bert_for_pretraining.1} parent=1 // pred_check_branch
      %178 = sbr.rel (0) target = $region125
    $region124: #{bert_for_pretraining.1} parent=1 // pred_region
      _
    $region125: #{bert_for_pretraining.1} parent=1 // pred_fallthru
      _
    // Predicated region
    $region126: #{bert_for_pretraining.1} parent=1 // pred_check
      _
    $region127: #{bert_for_pretraining.1} parent=1 // pred_check_branch
      %180 = sbr.rel (0) target = $region129
    $region128: #{bert_for_pretraining.1} parent=1 // pred_region
      %181 = dma.done [#allocation7], 16
    $region129: #{bert_for_pretraining.1} parent=1 // pred_fallthru
      _
    // Predicated region
    $region130: #{bert_for_pretraining.1} parent=1 // pred_check
      _
    $region131: #{bert_for_pretraining.1} parent=1 // pred_check_branch
      %183 = sbr.rel (0) target = $region133
    $region132: #{bert_for_pretraining.1} parent=1 // pred_region
      %184 = dma.done [#allocation5], 16
    $region133: #{bert_for_pretraining.1} parent=1 // pred_fallthru
      _
    // Predicated region
    $region134: #{bert_for_pretraining.1} parent=1 // pred_check
      _
    $region135: #{bert_for_pretraining.1} parent=1 // pred_check_branch
      %186 = sbr.rel (0) target = $region137
    $region136: #{bert_for_pretraining.1} parent=1 // pred_region
      %187 = dma.done [#allocation10], 32
    $region137: #{bert_for_pretraining.1} parent=1 // pred_fallthru
      _
    // Predicated region
    $region138: #{bert_for_pretraining.1} parent=1 // pred_check
      _
    $region139: #{bert_for_pretraining.1} parent=1 // pred_check_branch
      %189 = sbr.rel (0) target = $region141
    $region140: #{bert_for_pretraining.1} parent=1 // pred_region
      %190 = dma.done [#allocation10], 32
    $region141: #{bert_for_pretraining.1} parent=1 // pred_fallthru
      _
    // Predicated region
    $region142: #{bert_for_pretraining.1} parent=1 // pred_check
      _
    $region143: #{bert_for_pretraining.1} parent=1 // pred_check_branch
      %192 = sbr.rel (0) target = $region145
    $region144: #{bert_for_pretraining.1} parent=1 // pred_region
      %193 = dma.done [#allocation13], 16
    $region145: #{bert_for_pretraining.1} parent=1 // pred_fallthru
      _
    %194 = sfence
    %v195 = vld [vmem:[%s1] sm:$0xff]
    %v196 = vld [vmem:[%s1 + $0x8] sm:$0xff]
    %v197 = vlaneseq
    %v198 = vand.u32 %v197, 127
    %199 = vset.pattern.permute.xlu0 0
    %200 = vperm.xlu0 %199, %v195
    %v201 = vpop.permute.xlu0 %200
    %202 = vset.pattern.permute.xlu0 0
    %203 = vperm.xlu0 %202, %v196
    %v204 = vpop.permute.xlu0 %203
    %vm205 = vcmp.eq.s32.totalorder %v198, %v201
    %vm206 = vcmp.eq.s32.totalorder %v198, %v204
    %v207 = vsel %vm205, 1, 0
    %v208 = vsel %vm206, 1, 0
    %v209 = vcvt.s32.f32 %v207
    %v210 = vcvt.s32.f32 %v208
    %v211 = vld [vmem:[%s11] sm:$0xff]
    %v212 = vld [vmem:[%s11 + $0x8] sm:$0xff]
    %v213 = vld [vmem:[%s11 + $0x10] sm:$0xff]
    %v214 = vld [vmem:[%s11 + $0x18] sm:$0xff]
    %v215 = vld [vmem:[%s11 + $0x20] sm:$0xff]
    %v216 = vld [vmem:[%s11 + $0x28] sm:$0xff]
    %v217 = vld [vmem:[%s11 + $0x30] sm:$0xff]
    %v218 = vld [vmem:[%s11 + $0x38] sm:$0xff]
    %v219 = vld [vmem:[%s3] sm:$0xff]
    %v220 = vld [vmem:[%s3 + $0x8] sm:$0xff]
    %221 = vset.pattern.permute.xlu0 0
    %222 = vperm.xlu0 %221, %v219
    %v223 = vpop.permute.xlu0 %222
    %224 = vset.pattern.permute.xlu0 0
    %225 = vperm.xlu0 %224, %v220
    %v226 = vpop.permute.xlu0 %225
    %vm227 = vcmp.eq.s32.totalorder %v198, %v223
    %vm228 = vcmp.eq.s32.totalorder %v198, %v226
    %v229 = vsel %vm227, 1, 0
    %v230 = vsel %vm228, 1, 0
    %v231 = vcvt.s32.f32 %v229
    %v232 = vcvt.s32.f32 %v230
    %v233 = vld [vmem:[%s15] sm:$0x3]
    %vm234 = vcmask 15360
    %v236 = vsel %vm234, %v231, 0
    %v239 = vsel %vm234, %v232, 0
    %vm241 = vcmask 1041408
    %v243 = vsel %vm241, %v233, 0
    %245 = vmatprep.subr.mxu0 0.0
    %246 = vmatpush1.msra.mxu0 %v243
    %247 = vmatprep.subr.mxu0 0.0
    %248 = vmatpush1.msra.mxu0 0.0
    %249 = vmatprep.subr.mxu0 0.0
    %250 = vmatpush1.msra.mxu0 0.0
    %251 = vmatprep.subr.mxu0 0.0
    %252 = vmatpush1.msra.mxu0 0.0
    %253 = vmatprep.subr.mxu0 0.0
    %254 = vmatpush1.msra.mxu0 0.0
    %255 = vmatprep.subr.mxu0 0.0
    %256 = vmatpush1.msra.mxu0 0.0
    %257 = vmatprep.subr.mxu0 0.0
    %258 = vmatpush1.msra.mxu0 0.0
    %259 = vmatprep.subr.mxu0 0.0
    %260 = vmatpush1.msra.mxu0 0.0
    %261 = vmatprep.subr.mxu0 0.0
    %262 = vmatpush1.msra.mxu0 0.0
    %263 = vmatprep.subr.mxu0 0.0
    %264 = vmatpush1.msra.mxu0 0.0
    %265 = vmatprep.subr.mxu0 0.0
    %266 = vmatpush1.msra.mxu0 0.0
    %267 = vmatprep.subr.mxu0 0.0
    %268 = vmatpush1.msra.mxu0 0.0
    %269 = vmatprep.subr.mxu0 0.0
    %270 = vmatpush1.msra.mxu0 0.0
    %271 = vmatprep.subr.mxu0 0.0
    %272 = vmatpush1.msra.mxu0 0.0
    %273 = vmatprep.subr.mxu0 0.0
    %274 = vmatpush1.msra.mxu0 0.0
    %275 = vmatprep.subr.mxu0 0.0
    %276 = vmatpush1.msra.mxu0 0.0
    %277 = vmatprep.subr.mxu0 0.0
    %278 = vmatpush1.msra.mxu0 0.0
    %279 = vmatprep.subr.mxu0 0.0
    %280 = vmatpush1.msra.mxu0 0.0
    %281 = vmatprep.subr.mxu0 0.0
    %282 = vmatpush1.msra.mxu0 0.0
    %283 = vmatprep.subr.mxu0 0.0
    %284 = vmatpush1.msra.mxu0 0.0
    %285 = vmatprep.subr.mxu0 0.0
    %286 = vmatpush1.msra.mxu0 0.0
    %287 = vmatprep.subr.mxu0 0.0
    %288 = vmatpush1.msra.mxu0 0.0
    %289 = vmatprep.subr.mxu0 0.0
    %290 = vmatpush1.msra.mxu0 0.0
    %291 = vmatprep.subr.mxu0 0.0
    %292 = vmatpush1.msra.mxu0 0.0
    %293 = vmatprep.subr.mxu0 0.0
    %294 = vmatpush1.msra.mxu0 0.0
    %295 = vmatprep.subr.mxu0 0.0
    %296 = vmatpush1.msra.mxu0 0.0
    %297 = vmatprep.subr.mxu0 0.0
    %298 = vmatpush1.msra.mxu0 0.0
    %299 = vmatprep.subr.mxu0 0.0
    %300 = vmatpush1.msra.mxu0 0.0
    %301 = vmatprep.subr.mxu0 0.0
    %302 = vmatpush1.msra.mxu0 0.0
    %303 = vmatprep.subr.mxu0 0.0
    %304 = vmatpush1.msra.mxu0 0.0
    %305 = vmatprep.subr.mxu0 0.0
    %306 = vmatpush1.msra.mxu0 0.0
    %307 = vmatprep.subr.mxu0 0.0
    %308 = vmatpush1.msra.mxu0 0.0
    %309 = vmatprep.mubr.f32.mxu0 0.0
    %310 = vmatmul.mubr.f32.gmra.mrb[0].mxu0 %v236
    %v311 = vpop.f32.mrb[0].mxu0
    %v312 = vadd.f32 0.0, %v311
    %v313 = vpop.f32.mrb[0].mxu0
    %314 = vmatprep.mubr.f32.mxu0 0.0
    %315 = vmatmul.mubr.f32.gmra.mrb[0].mxu0 %v239
    %v316 = vpop.f32.mrb[0].mxu0
    %v317 = vadd.f32 0.0, %v316
    %v318 = vpop.f32.mrb[0].mxu0
    %319 = vdwg.mxu0
    %v320 = vld [vmem:[%s13] sm:$0xff]
    %vm321 = vcmask 261120
    %322 = vst.msk [vmem:[#allocation3] sm:$0xff] %vm321, %v320
    %v323 = vld [vmem:[%s13] sm:$0xff]
    %324 = vst.msk [vmem:[#allocation3 + $0x8] sm:$0xff] %vm321, %v323
    %v325 = vld [vmem:[#allocation3] sm:$0xff]
    %v326 = vld [vmem:[#allocation3 + $0x8] sm:$0xff]
    %vm327 = vcmask 523264
    %v329 = vsel %vm327, %v209, 0
    %v332 = vsel %vm327, %v210, 0
    %334 = vmatprep.subr.mxu0 0.0
    %335 = vmatpush1.msra.mxu0 %v211
    %336 = vmatprep.subr.mxu0 0.0
    %337 = vmatpush1.msra.mxu0 %v212
    %338 = vmatprep.subr.mxu0 0.0
    %339 = vmatpush1.msra.mxu0 %v213
    %340 = vmatprep.subr.mxu0 0.0
    %341 = vmatpush1.msra.mxu0 %v214
    %342 = vmatprep.subr.mxu0 0.0
    %343 = vmatpush1.msra.mxu0 %v215
    %344 = vmatprep.subr.mxu0 0.0
    %345 = vmatpush1.msra.mxu0 %v216
    %346 = vmatprep.subr.mxu0 0.0
    %347 = vmatpush1.msra.mxu0 %v217
    %348 = vmatprep.subr.mxu0 0.0
    %349 = vmatpush1.msra.mxu0 %v218
    %350 = vmatprep.subr.mxu0 0.0
    %351 = vmatpush1.msra.mxu0 0.0
    %352 = vmatprep.subr.mxu0 0.0
    %353 = vmatpush1.msra.mxu0 0.0
    %354 = vmatprep.subr.mxu0 0.0
    %355 = vmatpush1.msra.mxu0 0.0
    %356 = vmatprep.subr.mxu0 0.0
    %357 = vmatpush1.msra.mxu0 0.0
    %358 = vmatprep.subr.mxu0 0.0
    %359 = vmatpush1.msra.mxu0 0.0
    %360 = vmatprep.subr.mxu0 0.0
    %361 = vmatpush1.msra.mxu0 0.0
    %362 = vmatprep.subr.mxu0 0.0
    %363 = vmatpush1.msra.mxu0 0.0
    %364 = vmatprep.subr.mxu0 0.0
    %365 = vmatpush1.msra.mxu0 0.0
    %366 = vmatprep.subr.mxu0 0.0
    %367 = vmatpush1.msra.mxu0 0.0
    %368 = vmatprep.subr.mxu0 0.0
    %369 = vmatpush1.msra.mxu0 0.0
    %370 = vmatprep.subr.mxu0 0.0
    %371 = vmatpush1.msra.mxu0 0.0
    %372 = vmatprep.subr.mxu0 0.0
    %373 = vmatpush1.msra.mxu0 0.0
    %374 = vmatprep.subr.mxu0 0.0
    %375 = vmatpush1.msra.mxu0 0.0
    %376 = vmatprep.subr.mxu0 0.0
    %377 = vmatpush1.msra.mxu0 0.0
    %378 = vmatprep.subr.mxu0 0.0
    %379 = vmatpush1.msra.mxu0 0.0
    %380 = vmatprep.subr.mxu0 0.0
    %381 = vmatpush1.msra.mxu0 0.0
    %382 = vmatprep.subr.mxu0 0.0
    %383 = vmatpush1.msra.mxu0 0.0
    %384 = vmatprep.subr.mxu0 0.0
    %385 = vmatpush1.msra.mxu0 0.0
    %386 = vmatprep.subr.mxu0 0.0
    %387 = vmatpush1.msra.mxu0 0.0
    %388 = vmatprep.subr.mxu0 0.0
    %389 = vmatpush1.msra.mxu0 0.0
    %390 = vmatprep.subr.mxu0 0.0
    %391 = vmatpush1.msra.mxu0 0.0
    %392 = vmatprep.subr.mxu0 0.0
    %393 = vmatpush1.msra.mxu0 0.0
    %394 = vmatprep.subr.mxu0 0.0
    %395 = vmatpush1.msra.mxu0 0.0
    %396 = vmatprep.subr.mxu0 0.0
    %397 = vmatpush1.msra.mxu0 0.0
    %398 = vmatprep.mubr.f32.mxu0 0.0
    %399 = vmatmul.mubr.f32.gmra.mrb[0].mxu0 %v329
    %v400 = vpop.f32.mrb[0].mxu0
    %v401 = vadd.f32 %v312, %v400
    %v402 = vpop.f32.mrb[0].mxu0
    %403 = vmatprep.mubr.f32.mxu0 0.0
    %404 = vmatmul.mubr.f32.gmra.mrb[0].mxu0 %v332
    %v405 = vpop.f32.mrb[0].mxu0
    %v406 = vadd.f32 %v317, %v405
    %v407 = vpop.f32.mrb[0].mxu0
    %408 = vdwg.mxu0
    %v409 = vadd.f32 %v401, %v325
    %v410 = vadd.f32 %v406, %v326
    %v411 = vld [vmem:[%s17] sm:$0x1]
    %v412 = vld [vmem:[#allocation8] sm:$0x1]
    %v413 = vsel %vm321, %v409, 0.0
    %414 = vadd.xlane.f32.xlu0 %v413
    %v415 = vpop.xlane.xlu0 %414
    %v416 = vsel %vm321, %v410, 0.0
    %417 = vadd.xlane.f32.xlu0 %v416
    %v418 = vpop.xlane.xlu0 %417
    %v419 = vrcp.pop 32.0
    %v420 = vmul.f32 %v415, %v419
    %v421 = vmul.f32 %v418, %v419
    %v422 = vsub.f32 %v409, %v420
    %v423 = vsub.f32 %v410, %v421
    %v424 = vmul.f32 %v422, %v422
    %v425 = vmul.f32 %v423, %v423
    %v426 = vsel %vm321, %v424, 0.0
    %427 = vadd.xlane.f32.xlu0 %v426
    %v428 = vpop.xlane.xlu0 %427
    %v429 = vsel %vm321, %v425, 0.0
    %430 = vadd.xlane.f32.xlu0 %v429
    %v431 = vpop.xlane.xlu0 %430
    %v432 = vmul.f32 %v428, %v419
    %v433 = vmul.f32 %v431, %v419
    %v434 = vadd.f32 %v432, 1e-12
    %v435 = vadd.f32 %v433, 1e-12
    %v436 = vrsqrt.pop %v434
    %v437 = vrsqrt.pop %v435
    %v438 = vmul.f32 %v422, %v436
    %v439 = vmul.f32 %v423, %v437
    %v441 = vlaneseq
    %v442 = vshrl.u32 %v441, 7
    %v443 = vsub.s32 0, %v442
    %v444 = vrot.slane %v411, %v443
    %v446 = vmul.f32 %v438, %v444
    %v447 = vmul.f32 %v439, %v444
    %v449 = vlaneseq
    %v450 = vshrl.u32 %v449, 7
    %v451 = vsub.s32 0, %v450
    %v452 = vrot.slane %v412, %v451
    %v454 = vadd.f32 %v446, %v452
    %v455 = vadd.f32 %v447, %v452
    %v456 = vld [vmem:[%s5] sm:$0x1]
    %v457 = vcvt.s32.f32 %v456
    %v458 = vsub.f32 1.0, %v457
    %v459 = vmul.f32 %v458, -10000.0
    %v460 = vld [vmem:[%s5 + $0x1] sm:$0x1]
    %v461 = vcvt.s32.f32 %v460
    %v462 = vsub.f32 1.0, %v461
    %v463 = vmul.f32 %v462, -10000.0
    %v464 = vld [vmem:[%s21] sm:$0xff]
    %v465 = vld [vmem:[%s21 + $0x8] sm:$0xff]
    %v466 = vld [vmem:[%s21 + $0x10] sm:$0xff]
    %v467 = vld [vmem:[%s21 + $0x18] sm:$0xff]
    %v468 = vld [vmem:[%s23] sm:$0x1]
    %v470 = vlaneseq
    %v471 = vshrl.u32 %v470, 7
    %v472 = vsub.s32 0, %v471
    %v473 = vrot.slane %v468, %v472
    %v476 = vsel %vm321, %v454, 0
    %v479 = vsel %vm321, %v455, 0
    %481 = vmatprep.subr.mxu0 0.0
    %482 = vmatpush1.msra.mxu0 %v464
    %483 = vmatprep.subr.mxu0 0.0
    %484 = vmatpush1.msra.mxu0 %v465
    %485 = vmatprep.subr.mxu0 0.0
    %486 = vmatpush1.msra.mxu0 %v466
    %487 = vmatprep.subr.mxu0 0.0
    %488 = vmatpush1.msra.mxu0 %v467
    %489 = vmatprep.subr.mxu0 0.0
    %490 = vmatpush1.msra.mxu0 0.0
    %491 = vmatprep.subr.mxu0 0.0
    %492 = vmatpush1.msra.mxu0 0.0
    %493 = vmatprep.subr.mxu0 0.0
    %494 = vmatpush1.msra.mxu0 0.0
    %495 = vmatprep.subr.mxu0 0.0
    %496 = vmatpush1.msra.mxu0 0.0
    %497 = vmatprep.subr.mxu0 0.0
    %498 = vmatpush1.msra.mxu0 0.0
    %499 = vmatprep.subr.mxu0 0.0
    %500 = vmatpush1.msra.mxu0 0.0
    %501 = vmatprep.subr.mxu0 0.0
    %502 = vmatpush1.msra.mxu0 0.0
    %503 = vmatprep.subr.mxu0 0.0
    %504 = vmatpush1.msra.mxu0 0.0
    %505 = vmatprep.subr.mxu0 0.0
    %506 = vmatpush1.msra.mxu0 0.0
    %507 = vmatprep.subr.mxu0 0.0
    %508 = vmatpush1.msra.mxu0 0.0
    %509 = vmatprep.subr.mxu0 0.0
    %510 = vmatpush1.msra.mxu0 0.0
    %511 = vmatprep.subr.mxu0 0.0
    %512 = vmatpush1.msra.mxu0 0.0
    %513 = vmatprep.subr.mxu0 0.0
    %514 = vmatpush1.msra.mxu0 0.0
    %515 = vmatprep.subr.mxu0 0.0
    %516 = vmatpush1.msra.mxu0 0.0
    %517 = vmatprep.subr.mxu0 0.0
    %518 = vmatpush1.msra.mxu0 0.0
    %519 = vmatprep.subr.mxu0 0.0
    %520 = vmatpush1.msra.mxu0 0.0
    %521 = vmatprep.subr.mxu0 0.0
    %522 = vmatpush1.msra.mxu0 0.0
    %523 = vmatprep.subr.mxu0 0.0
    %524 = vmatpush1.msra.mxu0 0.0
    %525 = vmatprep.subr.mxu0 0.0
    %526 = vmatpush1.msra.mxu0 0.0
    %527 = vmatprep.subr.mxu0 0.0
    %528 = vmatpush1.msra.mxu0 0.0
    %529 = vmatprep.subr.mxu0 0.0
    %530 = vmatpush1.msra.mxu0 0.0
    %531 = vmatprep.subr.mxu0 0.0
    %532 = vmatpush1.msra.mxu0 0.0
    %533 = vmatprep.subr.mxu0 0.0
    %534 = vmatpush1.msra.mxu0 0.0
    %535 = vmatprep.subr.mxu0 0.0
    %536 = vmatpush1.msra.mxu0 0.0
    %537 = vmatprep.subr.mxu0 0.0
    %538 = vmatpush1.msra.mxu0 0.0
    %539 = vmatprep.subr.mxu0 0.0
    %540 = vmatpush1.msra.mxu0 0.0
    %541 = vmatprep.subr.mxu0 0.0
    %542 = vmatpush1.msra.mxu0 0.0
    %543 = vmatprep.subr.mxu0 0.0
    %544 = vmatpush1.msra.mxu0 0.0
    %545 = vmatprep.mubr.f32.mxu0 0.0
    %546 = vmatmul.mubr.f32.gmra.mrb[0].mxu0 %v476
    %v547 = vpop.f32.mrb[0].mxu0
    %v548 = vadd.f32 %v473, %v547
    %v549 = vpop.f32.mrb[0].mxu0
    %550 = vmatprep.mubr.f32.mxu0 0.0
    %551 = vmatmul.mubr.f32.gmra.mrb[0].mxu0 %v479
    %v552 = vpop.f32.mrb[0].mxu0
    %v553 = vadd.f32 %v473, %v552
    %v554 = vpop.f32.mrb[0].mxu0
    %555 = vdwg.mxu0
    %vm556 = vcmask 785408
    %557 = vst.msk [vmem:[#allocation2] sm:$0xff] %vm556, %v548
    %558 = vst.msk [vmem:[#allocation2 + $0x8] sm:$0xff] %vm556, %v553
    %v559 = vld [vmem:[#allocation2] sm:$0xff]
    %561 = vrot.lane.b32.xlu0 %v559, 96
    %v562 = vpop.permute.xlu0 %561
    %vm563 = vcmask 64512
    %v564 = vsel %vm563, %v559, 0
    %v566 = vsel %vm563, %v562, 0
    %568 = vmatprep.subr.mxu0 0.0
    %569 = vmatpush1.xpose.msra.mxu0 %v566
    %570 = vmatprep.subr.mxu0 0.0
    %571 = vmatpush1.xpose.msra.mxu0 0.0
    %572 = vmatprep.subr.mxu0 0.0
    %573 = vmatpush1.xpose.msra.mxu0 0.0
    %574 = vmatprep.subr.mxu0 0.0
    %575 = vmatpush1.xpose.msra.mxu0 0.0
    %576 = vmatprep.subr.mxu0 0.0
    %577 = vmatpush1.xpose.msra.mxu0 0.0
    %578 = vmatprep.subr.mxu0 0.0
    %579 = vmatpush1.xpose.msra.mxu0 0.0
    %580 = vmatprep.subr.mxu0 0.0
    %581 = vmatpush1.xpose.msra.mxu0 0.0
    %582 = vmatprep.subr.mxu0 0.0
    %583 = vmatpush1.xpose.msra.mxu0 0.0
    %584 = vmatprep.subr.mxu0 0.0
    %585 = vmatpush1.xpose.msra.mxu0 0.0
    %586 = vmatprep.subr.mxu0 0.0
    %587 = vmatpush1.xpose.msra.mxu0 0.0
    %588 = vmatprep.subr.mxu0 0.0
    %589 = vmatpush1.xpose.msra.mxu0 0.0
    %590 = vmatprep.subr.mxu0 0.0
    %591 = vmatpush1.xpose.msra.mxu0 0.0
    %592 = vmatprep.subr.mxu0 0.0
    %593 = vmatpush1.xpose.msra.mxu0 0.0
    %594 = vmatprep.subr.mxu0 0.0
    %595 = vmatpush1.xpose.msra.mxu0 0.0
    %596 = vmatprep.subr.mxu0 0.0
    %597 = vmatpush1.xpose.msra.mxu0 0.0
    %598 = vmatprep.subr.mxu0 0.0
    %599 = vmatpush1.xpose.msra.mxu0 0.0
    %600 = vmatprep.subr.mxu0 0.0
    %601 = vmatpush1.xpose.msra.mxu0 0.0
    %602 = vmatprep.subr.mxu0 0.0
    %603 = vmatpush1.xpose.msra.mxu0 0.0
    %604 = vmatprep.subr.mxu0 0.0
    %605 = vmatpush1.xpose.msra.mxu0 0.0
    %606 = vmatprep.subr.mxu0 0.0
    %607 = vmatpush1.xpose.msra.mxu0 0.0
    %608 = vmatprep.subr.mxu0 0.0
    %609 = vmatpush1.xpose.msra.mxu0 0.0
    %610 = vmatprep.subr.mxu0 0.0
    %611 = vmatpush1.xpose.msra.mxu0 0.0
    %612 = vmatprep.subr.mxu0 0.0
    %613 = vmatpush1.xpose.msra.mxu0 0.0
    %614 = vmatprep.subr.mxu0 0.0
    %615 = vmatpush1.xpose.msra.mxu0 0.0
    %616 = vmatprep.subr.mxu0 0.0
    %617 = vmatpush1.xpose.msra.mxu0 0.0
    %618 = vmatprep.subr.mxu0 0.0
    %619 = vmatpush1.xpose.msra.mxu0 0.0
    %620 = vmatprep.subr.mxu0 0.0
    %621 = vmatpush1.xpose.msra.mxu0 0.0
    %622 = vmatprep.subr.mxu0 0.0
    %623 = vmatpush1.xpose.msra.mxu0 0.0
    %624 = vmatprep.subr.mxu0 0.0
    %625 = vmatpush1.xpose.msra.mxu0 0.0
    %626 = vmatprep.subr.mxu0 0.0
    %627 = vmatpush1.xpose.msra.mxu0 0.0
    %628 = vmatprep.subr.mxu0 0.0
    %629 = vmatpush1.xpose.msra.mxu0 0.0
    %630 = vmatprep.subr.mxu0 0.0
    %631 = vmatpush1.xpose.msra.mxu0 0.0
    %632 = vmatprep.mubr.f32.mxu0 0.0
    %633 = vmatmul.mubr.f32.gmra.mrb[0].mxu0 %v564
    %v634 = vpop.f32.mrb[0].mxu0
    %v635 = vadd.f32 0.0, %v634
    %v636 = vpop.f32.mrb[0].mxu0
    %637 = vdwg.mxu0
    %v638 = vmul.f32 %v635, 0.35355338
    %v639 = vlaneseq
    %v640 = vshrl.u32 %v639, 7
    %v641 = vsub.s32 0, %v640
    %v642 = vrot.slane %v459, %v641
    %v643 = vadd.f32 %v638, %v642
    %v644 = vsel %vm563, %v643, -inf
    %645 = vmax.xlane.f32.xlu0 %v644
    %v646 = vpop.xlane.xlu0 %645
    %v647 = vsub.f32 %v643, %v646
    %v648 = vmul.f32 %v647, 1.442695
    %v649 = vpow.pop %v648
    %v650 = vsel %vm563, %v649, 0.0
    %651 = vadd.xlane.f32.xlu0 %v650
    %v652 = vpop.xlane.xlu0 %651
    %v653 = vrcp.pop %v652
    %v654 = vmul.f32 %v649, %v653
    %655 = vrot.lane.b32.xlu0 %v559, 64
    %v656 = vpop.permute.xlu0 %655
    %v659 = vsel %vm563, %v654, 0
    %661 = vmatprep.subr.mxu0 0.0
    %662 = vmatpush1.msra.mxu0 %v656
    %663 = vmatprep.subr.mxu0 0.0
    %664 = vmatpush1.msra.mxu0 0.0
    %665 = vmatprep.subr.mxu0 0.0
    %666 = vmatpush1.msra.mxu0 0.0
    %667 = vmatprep.subr.mxu0 0.0
    %668 = vmatpush1.msra.mxu0 0.0
    %669 = vmatprep.subr.mxu0 0.0
    %670 = vmatpush1.msra.mxu0 0.0
    %671 = vmatprep.subr.mxu0 0.0
    %672 = vmatpush1.msra.mxu0 0.0
    %673 = vmatprep.subr.mxu0 0.0
    %674 = vmatpush1.msra.mxu0 0.0
    %675 = vmatprep.subr.mxu0 0.0
    %676 = vmatpush1.msra.mxu0 0.0
    %677 = vmatprep.subr.mxu0 0.0
    %678 = vmatpush1.msra.mxu0 0.0
    %679 = vmatprep.subr.mxu0 0.0
    %680 = vmatpush1.msra.mxu0 0.0
    %681 = vmatprep.subr.mxu0 0.0
    %682 = vmatpush1.msra.mxu0 0.0
    %683 = vmatprep.subr.mxu0 0.0
    %684 = vmatpush1.msra.mxu0 0.0
    %685 = vmatprep.subr.mxu0 0.0
    %686 = vmatpush1.msra.mxu0 0.0
    %687 = vmatprep.subr.mxu0 0.0
    %688 = vmatpush1.msra.mxu0 0.0
    %689 = vmatprep.subr.mxu0 0.0
    %690 = vmatpush1.msra.mxu0 0.0
    %691 = vmatprep.subr.mxu0 0.0
    %692 = vmatpush1.msra.mxu0 0.0
    %693 = vmatprep.subr.mxu0 0.0
    %694 = vmatpush1.msra.mxu0 0.0
    %695 = vmatprep.subr.mxu0 0.0
    %696 = vmatpush1.msra.mxu0 0.0
    %697 = vmatprep.subr.mxu0 0.0
    %698 = vmatpush1.msra.mxu0 0.0
    %699 = vmatprep.subr.mxu0 0.0
    %700 = vmatpush1.msra.mxu0 0.0
    %701 = vmatprep.subr.mxu0 0.0
    %702 = vmatpush1.msra.mxu0 0.0
    %703 = vmatprep.subr.mxu0 0.0
    %704 = vmatpush1.msra.mxu0 0.0
    %705 = vmatprep.subr.mxu0 0.0
    %706 = vmatpush1.msra.mxu0 0.0
    %707 = vmatprep.subr.mxu0 0.0
    %708 = vmatpush1.msra.mxu0 0.0
    %709 = vmatprep.subr.mxu0 0.0
    %710 = vmatpush1.msra.mxu0 0.0
    %711 = vmatprep.subr.mxu0 0.0
    %712 = vmatpush1.msra.mxu0 0.0
    %713 = vmatprep.subr.mxu0 0.0
    %714 = vmatpush1.msra.mxu0 0.0
    %715 = vmatprep.subr.mxu0 0.0
    %716 = vmatpush1.msra.mxu0 0.0
    %717 = vmatprep.subr.mxu0 0.0
    %718 = vmatpush1.msra.mxu0 0.0
    %719 = vmatprep.subr.mxu0 0.0
    %720 = vmatpush1.msra.mxu0 0.0
    %721 = vmatprep.subr.mxu0 0.0
    %722 = vmatpush1.msra.mxu0 0.0
    %723 = vmatprep.subr.mxu0 0.0
    %724 = vmatpush1.msra.mxu0 0.0
    %725 = vmatprep.mubr.f32.mxu0 0.0
    %726 = vmatmul.mubr.f32.gmra.mrb[0].mxu0 %v659
    %v727 = vpop.f32.mrb[0].mxu0
    %v728 = vadd.f32 0.0, %v727
    %v729 = vpop.f32.mrb[0].mxu0
    %730 = vdwg.mxu0
    %731 = vst.msk [vmem:[#allocation3] sm:$0xff] %vm563, %v728
    %v732 = vld [vmem:[#allocation2] sm:$0xff]
    %734 = vrot.lane.b32.xlu0 %v732, 120
    %v735 = vpop.permute.xlu0 %734
    %736 = vrot.lane.b32.xlu0 %v732, 88
    %v737 = vpop.permute.xlu0 %736
    %v738 = vsel %vm563, %v735, 0
    %v740 = vsel %vm563, %v737, 0
    %742 = vmatprep.subr.mxu0 0.0
    %743 = vmatpush1.xpose.msra.mxu0 %v740
    %744 = vmatprep.subr.mxu0 0.0
    %745 = vmatpush1.xpose.msra.mxu0 0.0
    %746 = vmatprep.subr.mxu0 0.0
    %747 = vmatpush1.xpose.msra.mxu0 0.0
    %748 = vmatprep.subr.mxu0 0.0
    %749 = vmatpush1.xpose.msra.mxu0 0.0
    %750 = vmatprep.subr.mxu0 0.0
    %751 = vmatpush1.xpose.msra.mxu0 0.0
    %752 = vmatprep.subr.mxu0 0.0
    %753 = vmatpush1.xpose.msra.mxu0 0.0
    %754 = vmatprep.subr.mxu0 0.0
    %755 = vmatpush1.xpose.msra.mxu0 0.0
    %756 = vmatprep.subr.mxu0 0.0
    %757 = vmatpush1.xpose.msra.mxu0 0.0
    %758 = vmatprep.subr.mxu0 0.0
    %759 = vmatpush1.xpose.msra.mxu0 0.0
    %760 = vmatprep.subr.mxu0 0.0
    %761 = vmatpush1.xpose.msra.mxu0 0.0
    %762 = vmatprep.subr.mxu0 0.0
    %763 = vmatpush1.xpose.msra.mxu0 0.0
    %764 = vmatprep.subr.mxu0 0.0
    %765 = vmatpush1.xpose.msra.mxu0 0.0
    %766 = vmatprep.subr.mxu0 0.0
    %767 = vmatpush1.xpose.msra.mxu0 0.0
    %768 = vmatprep.subr.mxu0 0.0
    %769 = vmatpush1.xpose.msra.mxu0 0.0
    %770 = vmatprep.subr.mxu0 0.0
    %771 = vmatpush1.xpose.msra.mxu0 0.0
    %772 = vmatprep.subr.mxu0 0.0
    %773 = vmatpush1.xpose.msra.mxu0 0.0
    %774 = vmatprep.subr.mxu0 0.0
    %775 = vmatpush1.xpose.msra.mxu0 0.0
    %776 = vmatprep.subr.mxu0 0.0
    %777 = vmatpush1.xpose.msra.mxu0 0.0
    %778 = vmatprep.subr.mxu0 0.0
    %779 = vmatpush1.xpose.msra.mxu0 0.0
    %780 = vmatprep.subr.mxu0 0.0
    %781 = vmatpush1.xpose.msra.mxu0 0.0
    %782 = vmatprep.subr.mxu0 0.0
    %783 = vmatpush1.xpose.msra.mxu0 0.0
    %784 = vmatprep.subr.mxu0 0.0
    %785 = vmatpush1.xpose.msra.mxu0 0.0
    %786 = vmatprep.subr.mxu0 0.0
    %787 = vmatpush1.xpose.msra.mxu0 0.0
    %788 = vmatprep.subr.mxu0 0.0
    %789 = vmatpush1.xpose.msra.mxu0 0.0
    %790 = vmatprep.subr.mxu0 0.0
    %791 = vmatpush1.xpose.msra.mxu0 0.0
    %792 = vmatprep.subr.mxu0 0.0
    %793 = vmatpush1.xpose.msra.mxu0 0.0
    %794 = vmatprep.subr.mxu0 0.0
    %795 = vmatpush1.xpose.msra.mxu0 0.0
    %796 = vmatprep.subr.mxu0 0.0
    %797 = vmatpush1.xpose.msra.mxu0 0.0
    %798 = vmatprep.subr.mxu0 0.0
    %799 = vmatpush1.xpose.msra.mxu0 0.0
    %800 = vmatprep.subr.mxu0 0.0
    %801 = vmatpush1.xpose.msra.mxu0 0.0
    %802 = vmatprep.subr.mxu0 0.0
    %803 = vmatpush1.xpose.msra.mxu0 0.0
    %804 = vmatprep.subr.mxu0 0.0
    %805 = vmatpush1.xpose.msra.mxu0 0.0
    %806 = vmatprep.mubr.f32.mxu0 0.0
    %807 = vmatmul.mubr.f32.gmra.mrb[0].mxu0 %v738
    %v808 = vpop.f32.mrb[0].mxu0
    %v809 = vadd.f32 0.0, %v808
    %v810 = vpop.f32.mrb[0].mxu0
    %811 = vdwg.mxu0
    %v812 = vmul.f32 %v809, 0.35355338
    %v813 = vadd.f32 %v812, %v642
    %v814 = vsel %vm563, %v813, -inf
    %815 = vmax.xlane.f32.xlu0 %v814
    %v816 = vpop.xlane.xlu0 %815
    %v817 = vsub.f32 %v813, %v816
    %v818 = vmul.f32 %v817, 1.442695
    %v819 = vpow.pop %v818
    %v820 = vsel %vm563, %v819, 0.0
    %821 = vadd.xlane.f32.xlu0 %v820
    %v822 = vpop.xlane.xlu0 %821
    %v823 = vrcp.pop %v822
    %v824 = vmul.f32 %v819, %v823
    %825 = vrot.lane.b32.xlu0 %v732, 56
    %v826 = vpop.permute.xlu0 %825
    %v829 = vsel %vm563, %v824, 0
    %831 = vmatprep.subr.mxu0 0.0
    %832 = vmatpush1.msra.mxu0 %v826
    %833 = vmatprep.subr.mxu0 0.0
    %834 = vmatpush1.msra.mxu0 0.0
    %835 = vmatprep.subr.mxu0 0.0
    %836 = vmatpush1.msra.mxu0 0.0
    %837 = vmatprep.subr.mxu0 0.0
    %838 = vmatpush1.msra.mxu0 0.0
    %839 = vmatprep.subr.mxu0 0.0
    %840 = vmatpush1.msra.mxu0 0.0
    %841 = vmatprep.subr.mxu0 0.0
    %842 = vmatpush1.msra.mxu0 0.0
    %843 = vmatprep.subr.mxu0 0.0
    %844 = vmatpush1.msra.mxu0 0.0
    %845 = vmatprep.subr.mxu0 0.0
    %846 = vmatpush1.msra.mxu0 0.0
    %847 = vmatprep.subr.mxu0 0.0
    %848 = vmatpush1.msra.mxu0 0.0
    %849 = vmatprep.subr.mxu0 0.0
    %850 = vmatpush1.msra.mxu0 0.0
    %851 = vmatprep.subr.mxu0 0.0
    %852 = vmatpush1.msra.mxu0 0.0
    %853 = vmatprep.subr.mxu0 0.0
    %854 = vmatpush1.msra.mxu0 0.0
    %855 = vmatprep.subr.mxu0 0.0
    %856 = vmatpush1.msra.mxu0 0.0
    %857 = vmatprep.subr.mxu0 0.0
    %858 = vmatpush1.msra.mxu0 0.0
    %859 = vmatprep.subr.mxu0 0.0
    %860 = vmatpush1.msra.mxu0 0.0
    %861 = vmatprep.subr.mxu0 0.0
    %862 = vmatpush1.msra.mxu0 0.0
    %863 = vmatprep.subr.mxu0 0.0
    %864 = vmatpush1.msra.mxu0 0.0
    %865 = vmatprep.subr.mxu0 0.0
    %866 = vmatpush1.msra.mxu0 0.0
    %867 = vmatprep.subr.mxu0 0.0
    %868 = vmatpush1.msra.mxu0 0.0
    %869 = vmatprep.subr.mxu0 0.0
    %870 = vmatpush1.msra.mxu0 0.0
    %871 = vmatprep.subr.mxu0 0.0
    %872 = vmatpush1.msra.mxu0 0.0
    %873 = vmatprep.subr.mxu0 0.0
    %874 = vmatpush1.msra.mxu0 0.0
    %875 = vmatprep.subr.mxu0 0.0
    %876 = vmatpush1.msra.mxu0 0.0
    %877 = vmatprep.subr.mxu0 0.0
    %878 = vmatpush1.msra.mxu0 0.0
    %879 = vmatprep.subr.mxu0 0.0
    %880 = vmatpush1.msra.mxu0 0.0
    %881 = vmatprep.subr.mxu0 0.0
    %882 = vmatpush1.msra.mxu0 0.0
    %883 = vmatprep.subr.mxu0 0.0
    %884 = vmatpush1.msra.mxu0 0.0
    %885 = vmatprep.subr.mxu0 0.0
    %886 = vmatpush1.msra.mxu0 0.0
    %887 = vmatprep.subr.mxu0 0.0
    %888 = vmatpush1.msra.mxu0 0.0
    %889 = vmatprep.subr.mxu0 0.0
    %890 = vmatpush1.msra.mxu0 0.0
    %891 = vmatprep.subr.mxu0 0.0
    %892 = vmatpush1.msra.mxu0 0.0
    %893 = vmatprep.subr.mxu0 0.0
    %894 = vmatpush1.msra.mxu0 0.0
    %895 = vmatprep.mubr.f32.mxu0 0.0
    %896 = vmatmul.mubr.f32.gmra.mrb[0].mxu0 %v829
    %v897 = vpop.f32.mrb[0].mxu0
    %v898 = vadd.f32 0.0, %v897
    %v899 = vpop.f32.mrb[0].mxu0
    %900 = vdwg.mxu0
    %902 = vrot.lane.b32.xlu0 %v898, 8
    %v903 = vpop.permute.xlu0 %902
    %vm905 = vcmask 130112
    %906 = vst.msk [vmem:[#allocation3] sm:$0xff] %vm905, %v903
    %v907 = vld [vmem:[#allocation2] sm:$0xff]
    %909 = vrot.lane.b32.xlu0 %v907, 112
    %v910 = vpop.permute.xlu0 %909
    %911 = vrot.lane.b32.xlu0 %v907, 80
    %v912 = vpop.permute.xlu0 %911
    %v913 = vsel %vm563, %v910, 0
    %v915 = vsel %vm563, %v912, 0
    %917 = vmatprep.subr.mxu0 0.0
    %918 = vmatpush1.xpose.msra.mxu0 %v915
    %919 = vmatprep.subr.mxu0 0.0
    %920 = vmatpush1.xpose.msra.mxu0 0.0
    %921 = vmatprep.subr.mxu0 0.0
    %922 = vmatpush1.xpose.msra.mxu0 0.0
    %923 = vmatprep.subr.mxu0 0.0
    %924 = vmatpush1.xpose.msra.mxu0 0.0
    %925 = vmatprep.subr.mxu0 0.0
    %926 = vmatpush1.xpose.msra.mxu0 0.0
    %927 = vmatprep.subr.mxu0 0.0
    %928 = vmatpush1.xpose.msra.mxu0 0.0
    %929 = vmatprep.subr.mxu0 0.0
    %930 = vmatpush1.xpose.msra.mxu0 0.0
    %931 = vmatprep.subr.mxu0 0.0
    %932 = vmatpush1.xpose.msra.mxu0 0.0
    %933 = vmatprep.subr.mxu0 0.0
    %934 = vmatpush1.xpose.msra.mxu0 0.0
    %935 = vmatprep.subr.mxu0 0.0
    %936 = vmatpush1.xpose.msra.mxu0 0.0
    %937 = vmatprep.subr.mxu0 0.0
    %938 = vmatpush1.xpose.msra.mxu0 0.0
    %939 = vmatprep.subr.mxu0 0.0
    %940 = vmatpush1.xpose.msra.mxu0 0.0
    %941 = vmatprep.subr.mxu0 0.0
    %942 = vmatpush1.xpose.msra.mxu0 0.0
    %943 = vmatprep.subr.mxu0 0.0
    %944 = vmatpush1.xpose.msra.mxu0 0.0
    %945 = vmatprep.subr.mxu0 0.0
    %946 = vmatpush1.xpose.msra.mxu0 0.0
    %947 = vmatprep.subr.mxu0 0.0
    %948 = vmatpush1.xpose.msra.mxu0 0.0
    %949 = vmatprep.subr.mxu0 0.0
    %950 = vmatpush1.xpose.msra.mxu0 0.0
    %951 = vmatprep.subr.mxu0 0.0
    %952 = vmatpush1.xpose.msra.mxu0 0.0
    %953 = vmatprep.subr.mxu0 0.0
    %954 = vmatpush1.xpose.msra.mxu0 0.0
    %955 = vmatprep.subr.mxu0 0.0
    %956 = vmatpush1.xpose.msra.mxu0 0.0
    %957 = vmatprep.subr.mxu0 0.0
    %958 = vmatpush1.xpose.msra.mxu0 0.0
    %959 = vmatprep.subr.mxu0 0.0
    %960 = vmatpush1.xpose.msra.mxu0 0.0
    %961 = vmatprep.subr.mxu0 0.0
    %962 = vmatpush1.xpose.msra.mxu0 0.0
    %963 = vmatprep.subr.mxu0 0.0
    %964 = vmatpush1.xpose.msra.mxu0 0.0
    %965 = vmatprep.subr.mxu0 0.0
    %966 = vmatpush1.xpose.msra.mxu0 0.0
    %967 = vmatprep.subr.mxu0 0.0
    %968 = vmatpush1.xpose.msra.mxu0 0.0
    %969 = vmatprep.subr.mxu0 0.0
    %970 = vmatpush1.xpose.msra.mxu0 0.0
    %971 = vmatprep.subr.mxu0 0.0
    %972 = vmatpush1.xpose.msra.mxu0 0.0
    %973 = vmatprep.subr.mxu0 0.0
    %974 = vmatpush1.xpose.msra.mxu0 0.0
    %975 = vmatprep.subr.mxu0 0.0
    %976 = vmatpush1.xpose.msra.mxu0 0.0
    %977 = vmatprep.subr.mxu0 0.0
    %978 = vmatpush1.xpose.msra.mxu0 0.0
    %979 = vmatprep.subr.mxu0 0.0
    %980 = vmatpush1.xpose.msra.mxu0 0.0
    %981 = vmatprep.mubr.f32.mxu0 0.0
    %982 = vmatmul.mubr.f32.gmra.mrb[0].mxu0 %v913
    %v983 = vpop.f32.mrb[0].mxu0
    %v984 = vadd.f32 0.0, %v983
    %v985 = vpop.f32.mrb[0].mxu0
    %986 = vdwg.mxu0
    %v987 = vmul.f32 %v984, 0.35355338
    %v988 = vadd.f32 %v987, %v642
    %v989 = vsel %vm563, %v988, -inf
    %990 = vmax.xlane.f32.xlu0 %v989
    %v991 = vpop.xlane.xlu0 %990
    %v992 = vsub.f32 %v988, %v991
    %v993 = vmul.f32 %v992, 1.442695
    %v994 = vpow.pop %v993
    %v995 = vsel %vm563, %v994, 0.0
    %996 = vadd.xlane.f32.xlu0 %v995
    %v997 = vpop.xlane.xlu0 %996
    %v998 = vrcp.pop %v997
    %v999 = vmul.f32 %v994, %v998
    %1000 = vrot.lane.b32.xlu0 %v907, 48
    %v1001 = vpop.permute.xlu0 %1000
    %v1004 = vsel %vm563, %v999, 0
    %1006 = vmatprep.subr.mxu0 0.0
    %1007 = vmatpush1.msra.mxu0 %v1001
    %1008 = vmatprep.subr.mxu0 0.0
    %1009 = vmatpush1.msra.mxu0 0.0
    %1010 = vmatprep.subr.mxu0 0.0
    %1011 = vmatpush1.msra.mxu0 0.0
    %1012 = vmatprep.subr.mxu0 0.0
    %1013 = vmatpush1.msra.mxu0 0.0
    %1014 = vmatprep.subr.mxu0 0.0
    %1015 = vmatpush1.msra.mxu0 0.0
    %1016 = vmatprep.subr.mxu0 0.0
    %1017 = vmatpush1.msra.mxu0 0.0
    %1018 = vmatprep.subr.mxu0 0.0
    %1019 = vmatpush1.msra.mxu0 0.0
    %1020 = vmatprep.subr.mxu0 0.0
    %1021 = vmatpush1.msra.mxu0 0.0
    %1022 = vmatprep.subr.mxu0 0.0
    %1023 = vmatpush1.msra.mxu0 0.0
    %1024 = vmatprep.subr.mxu0 0.0
    %1025 = vmatpush1.msra.mxu0 0.0
    %1026 = vmatprep.subr.mxu0 0.0
    %1027 = vmatpush1.msra.mxu0 0.0
    %1028 = vmatprep.subr.mxu0 0.0
    %1029 = vmatpush1.msra.mxu0 0.0
    %1030 = vmatprep.subr.mxu0 0.0
    %1031 = vmatpush1.msra.mxu0 0.0
    %1032 = vmatprep.subr.mxu0 0.0
    %1033 = vmatpush1.msra.mxu0 0.0
    %1034 = vmatprep.subr.mxu0 0.0
    %1035 = vmatpush1.msra.mxu0 0.0
    %1036 = vmatprep.subr.mxu0 0.0
    %1037 = vmatpush1.msra.mxu0 0.0
    %1038 = vmatprep.subr.mxu0 0.0
    %1039 = vmatpush1.msra.mxu0 0.0
    %1040 = vmatprep.subr.mxu0 0.0
    %1041 = vmatpush1.msra.mxu0 0.0
    %1042 = vmatprep.subr.mxu0 0.0
    %1043 = vmatpush1.msra.mxu0 0.0
    %1044 = vmatprep.subr.mxu0 0.0
    %1045 = vmatpush1.msra.mxu0 0.0
    %1046 = vmatprep.subr.mxu0 0.0
    %1047 = vmatpush1.msra.mxu0 0.0
    %1048 = vmatprep.subr.mxu0 0.0
    %1049 = vmatpush1.msra.mxu0 0.0
    %1050 = vmatprep.subr.mxu0 0.0
    %1051 = vmatpush1.msra.mxu0 0.0
    %1052 = vmatprep.subr.mxu0 0.0
    %1053 = vmatpush1.msra.mxu0 0.0
    %1054 = vmatprep.subr.mxu0 0.0
    %1055 = vmatpush1.msra.mxu0 0.0
    %1056 = vmatprep.subr.mxu0 0.0
    %1057 = vmatpush1.msra.mxu0 0.0
    %1058 = vmatprep.subr.mxu0 0.0
    %1059 = vmatpush1.msra.mxu0 0.0
    %1060 = vmatprep.subr.mxu0 0.0
    %1061 = vmatpush1.msra.mxu0 0.0
    %1062 = vmatprep.subr.mxu0 0.0
    %1063 = vmatpush1.msra.mxu0 0.0
    %1064 = vmatprep.subr.mxu0 0.0
    %1065 = vmatpush1.msra.mxu0 0.0
    %1066 = vmatprep.subr.mxu0 0.0
    %1067 = vmatpush1.msra.mxu0 0.0
    %1068 = vmatprep.subr.mxu0 0.0
    %1069 = vmatpush1.msra.mxu0 0.0
    %1070 = vmatprep.mubr.f32.mxu0 0.0
    %1071 = vmatmul.mubr.f32.gmra.mrb[0].mxu0 %v1004
    %v1072 = vpop.f32.mrb[0].mxu0
    %v1073 = vadd.f32 0.0, %v1072
    %v1074 = vpop.f32.mrb[0].mxu0
    %1075 = vdwg.mxu0
    %1077 = vrot.lane.b32.xlu0 %v1073, 16
    %v1078 = vpop.permute.xlu0 %1077
    %vm1080 = vcmask 195712
    %1081 = vst.msk [vmem:[#allocation3] sm:$0xff] %vm1080, %v1078
    %v1082 = vld [vmem:[#allocation2] sm:$0xff]
    %1084 = vrot.lane.b32.xlu0 %v1082, 104
    %v1085 = vpop.permute.xlu0 %1084
    %1086 = vrot.lane.b32.xlu0 %v1082, 72
    %v1087 = vpop.permute.xlu0 %1086
    %v1088 = vsel %vm563, %v1085, 0
    %v1090 = vsel %vm563, %v1087, 0
    %1092 = vmatprep.subr.mxu0 0.0
    %1093 = vmatpush1.xpose.msra.mxu0 %v1090
    %1094 = vmatprep.subr.mxu0 0.0
    %1095 = vmatpush1.xpose.msra.mxu0 0.0
    %1096 = vmatprep.subr.mxu0 0.0
    %1097 = vmatpush1.xpose.msra.mxu0 0.0
    %1098 = vmatprep.subr.mxu0 0.0
    %1099 = vmatpush1.xpose.msra.mxu0 0.0
    %1100 = vmatprep.subr.mxu0 0.0
    %1101 = vmatpush1.xpose.msra.mxu0 0.0
    %1102 = vmatprep.subr.mxu0 0.0
    %1103 = vmatpush1.xpose.msra.mxu0 0.0
    %1104 = vmatprep.subr.mxu0 0.0
    %1105 = vmatpush1.xpose.msra.mxu0 0.0
    %1106 = vmatprep.subr.mxu0 0.0
    %1107 = vmatpush1.xpose.msra.mxu0 0.0
    %1108 = vmatprep.subr.mxu0 0.0
    %1109 = vmatpush1.xpose.msra.mxu0 0.0
    %1110 = vmatprep.subr.mxu0 0.0
    %1111 = vmatpush1.xpose.msra.mxu0 0.0
    %1112 = vmatprep.subr.mxu0 0.0
    %1113 = vmatpush1.xpose.msra.mxu0 0.0
    %1114 = vmatprep.subr.mxu0 0.0
    %1115 = vmatpush1.xpose.msra.mxu0 0.0
    %1116 = vmatprep.subr.mxu0 0.0
    %1117 = vmatpush1.xpose.msra.mxu0 0.0
    %1118 = vmatprep.subr.mxu0 0.0
    %1119 = vmatpush1.xpose.msra.mxu0 0.0
    %1120 = vmatprep.subr.mxu0 0.0
    %1121 = vmatpush1.xpose.msra.mxu0 0.0
    %1122 = vmatprep.subr.mxu0 0.0
    %1123 = vmatpush1.xpose.msra.mxu0 0.0
    %1124 = vmatprep.subr.mxu0 0.0
    %1125 = vmatpush1.xpose.msra.mxu0 0.0
    %1126 = vmatprep.subr.mxu0 0.0
    %1127 = vmatpush1.xpose.msra.mxu0 0.0
    %1128 = vmatprep.subr.mxu0 0.0
    %1129 = vmatpush1.xpose.msra.mxu0 0.0
    %1130 = vmatprep.subr.mxu0 0.0
    %1131 = vmatpush1.xpose.msra.mxu0 0.0
    %1132 = vmatprep.subr.mxu0 0.0
    %1133 = vmatpush1.xpose.msra.mxu0 0.0
    %1134 = vmatprep.subr.mxu0 0.0
    %1135 = vmatpush1.xpose.msra.mxu0 0.0
    %1136 = vmatprep.subr.mxu0 0.0
    %1137 = vmatpush1.xpose.msra.mxu0 0.0
    %1138 = vmatprep.subr.mxu0 0.0
    %1139 = vmatpush1.xpose.msra.mxu0 0.0
    %1140 = vmatprep.subr.mxu0 0.0
    %1141 = vmatpush1.xpose.msra.mxu0 0.0
    %1142 = vmatprep.subr.mxu0 0.0
    %1143 = vmatpush1.xpose.msra.mxu0 0.0
    %1144 = vmatprep.subr.mxu0 0.0
    %1145 = vmatpush1.xpose.msra.mxu0 0.0
    %1146 = vmatprep.subr.mxu0 0.0
    %1147 = vmatpush1.xpose.msra.mxu0 0.0
    %1148 = vmatprep.subr.mxu0 0.0
    %1149 = vmatpush1.xpose.msra.mxu0 0.0
    %1150 = vmatprep.subr.mxu0 0.0
    %1151 = vmatpush1.xpose.msra.mxu0 0.0
    %1152 = vmatprep.subr.mxu0 0.0
    %1153 = vmatpush1.xpose.msra.mxu0 0.0
    %1154 = vmatprep.subr.mxu0 0.0
    %1155 = vmatpush1.xpose.msra.mxu0 0.0
    %1156 = vmatprep.mubr.f32.mxu0 0.0
    %1157 = vmatmul.mubr.f32.gmra.mrb[0].mxu0 %v1088
    %v1158 = vpop.f32.mrb[0].mxu0
    %v1159 = vadd.f32 0.0, %v1158
    %v1160 = vpop.f32.mrb[0].mxu0
    %1161 = vdwg.mxu0
    %v1162 = vmul.f32 %v1159, 0.35355338
    %v1163 = vadd.f32 %v1162, %v642
    %v1164 = vsel %vm563, %v1163, -inf
    %1165 = vmax.xlane.f32.xlu0 %v1164
    %v1166 = vpop.xlane.xlu0 %1165
    %v1167 = vsub.f32 %v1163, %v1166
    %v1168 = vmul.f32 %v1167, 1.442695
    %v1169 = vpow.pop %v1168
    %v1170 = vsel %vm563, %v1169, 0.0
    %1171 = vadd.xlane.f32.xlu0 %v1170
    %v1172 = vpop.xlane.xlu0 %1171
    %v1173 = vrcp.pop %v1172
    %v1174 = vmul.f32 %v1169, %v1173
    %1175 = vrot.lane.b32.xlu0 %v1082, 40
    %v1176 = vpop.permute.xlu0 %1175
    %v1179 = vsel %vm563, %v1174, 0
    %1181 = vmatprep.subr.mxu0 0.0
    %1182 = vmatpush1.msra.mxu0 %v1176
    %1183 = vmatprep.subr.mxu0 0.0
    %1184 = vmatpush1.msra.mxu0 0.0
    %1185 = vmatprep.subr.mxu0 0.0
    %1186 = vmatpush1.msra.mxu0 0.0
    %1187 = vmatprep.subr.mxu0 0.0
    %1188 = vmatpush1.msra.mxu0 0.0
    %1189 = vmatprep.subr.mxu0 0.0
    %1190 = vmatpush1.msra.mxu0 0.0
    %1191 = vmatprep.subr.mxu0 0.0
    %1192 = vmatpush1.msra.mxu0 0.0
    %1193 = vmatprep.subr.mxu0 0.0
    %1194 = vmatpush1.msra.mxu0 0.0
    %1195 = vmatprep.subr.mxu0 0.0
    %1196 = vmatpush1.msra.mxu0 0.0
    %1197 = vmatprep.subr.mxu0 0.0
    %1198 = vmatpush1.msra.mxu0 0.0
    %1199 = vmatprep.subr.mxu0 0.0
    %1200 = vmatpush1.msra.mxu0 0.0
    %1201 = vmatprep.subr.mxu0 0.0
    %1202 = vmatpush1.msra.mxu0 0.0
    %1203 = vmatprep.subr.mxu0 0.0
    %1204 = vmatpush1.msra.mxu0 0.0
    %1205 = vmatprep.subr.mxu0 0.0
    %1206 = vmatpush1.msra.mxu0 0.0
    %1207 = vmatprep.subr.mxu0 0.0
    %1208 = vmatpush1.msra.mxu0 0.0
    %1209 = vmatprep.subr.mxu0 0.0
    %1210 = vmatpush1.msra.mxu0 0.0
    %1211 = vmatprep.subr.mxu0 0.0
    %1212 = vmatpush1.msra.mxu0 0.0
    %1213 = vmatprep.subr.mxu0 0.0
    %1214 = vmatpush1.msra.mxu0 0.0
    %1215 = vmatprep.subr.mxu0 0.0
    %1216 = vmatpush1.msra.mxu0 0.0
    %1217 = vmatprep.subr.mxu0 0.0
    %1218 = vmatpush1.msra.mxu0 0.0
    %1219 = vmatprep.subr.mxu0 0.0
    %1220 = vmatpush1.msra.mxu0 0.0
    %1221 = vmatprep.subr.mxu0 0.0
    %1222 = vmatpush1.msra.mxu0 0.0
    %1223 = vmatprep.subr.mxu0 0.0
    %1224 = vmatpush1.msra.mxu0 0.0
    %1225 = vmatprep.subr.mxu0 0.0
    %1226 = vmatpush1.msra.mxu0 0.0
    %1227 = vmatprep.subr.mxu0 0.0
    %1228 = vmatpush1.msra.mxu0 0.0
    %1229 = vmatprep.subr.mxu0 0.0
    %1230 = vmatpush1.msra.mxu0 0.0
    %1231 = vmatprep.subr.mxu0 0.0
    %1232 = vmatpush1.msra.mxu0 0.0
    %1233 = vmatprep.subr.mxu0 0.0
    %1234 = vmatpush1.msra.mxu0 0.0
    %1235 = vmatprep.subr.mxu0 0.0
    %1236 = vmatpush1.msra.mxu0 0.0
    %1237 = vmatprep.subr.mxu0 0.0
    %1238 = vmatpush1.msra.mxu0 0.0
    %1239 = vmatprep.subr.mxu0 0.0
    %1240 = vmatpush1.msra.mxu0 0.0
    %1241 = vmatprep.subr.mxu0 0.0
    %1242 = vmatpush1.msra.mxu0 0.0
    %1243 = vmatprep.subr.mxu0 0.0
    %1244 = vmatpush1.msra.mxu0 0.0
    %1245 = vmatprep.mubr.f32.mxu0 0.0
    %1246 = vmatmul.mubr.f32.gmra.mrb[0].mxu0 %v1179
    %v1247 = vpop.f32.mrb[0].mxu0
    %v1248 = vadd.f32 0.0, %v1247
    %v1249 = vpop.f32.mrb[0].mxu0
    %1250 = vdwg.mxu0
    %1252 = vrot.lane.b32.xlu0 %v1248, 24
    %v1253 = vpop.permute.xlu0 %1252
    %vm1255 = vcmask 261312
    %1256 = vst.msk [vmem:[#allocation3] sm:$0xff] %vm1255, %v1253
    %v1257 = vld [vmem:[#allocation2 + $0x8] sm:$0xff]
    %1259 = vrot.lane.b32.xlu0 %v1257, 96
    %v1260 = vpop.permute.xlu0 %1259
    %v1261 = vsel %vm563, %v1257, 0
    %v1263 = vsel %vm563, %v1260, 0
    %1265 = vmatprep.subr.mxu0 0.0
    %1266 = vmatpush1.xpose.msra.mxu0 %v1263
    %1267 = vmatprep.subr.mxu0 0.0
    %1268 = vmatpush1.xpose.msra.mxu0 0.0
    %1269 = vmatprep.subr.mxu0 0.0
    %1270 = vmatpush1.xpose.msra.mxu0 0.0
    %1271 = vmatprep.subr.mxu0 0.0
    %1272 = vmatpush1.xpose.msra.mxu0 0.0
    %1273 = vmatprep.subr.mxu0 0.0
    %1274 = vmatpush1.xpose.msra.mxu0 0.0
    %1275 = vmatprep.subr.mxu0 0.0
    %1276 = vmatpush1.xpose.msra.mxu0 0.0
    %1277 = vmatprep.subr.mxu0 0.0
    %1278 = vmatpush1.xpose.msra.mxu0 0.0
    %1279 = vmatprep.subr.mxu0 0.0
    %1280 = vmatpush1.xpose.msra.mxu0 0.0
    %1281 = vmatprep.subr.mxu0 0.0
    %1282 = vmatpush1.xpose.msra.mxu0 0.0
    %1283 = vmatprep.subr.mxu0 0.0
    %1284 = vmatpush1.xpose.msra.mxu0 0.0
    %1285 = vmatprep.subr.mxu0 0.0
    %1286 = vmatpush1.xpose.msra.mxu0 0.0
    %1287 = vmatprep.subr.mxu0 0.0
    %1288 = vmatpush1.xpose.msra.mxu0 0.0
    %1289 = vmatprep.subr.mxu0 0.0
    %1290 = vmatpush1.xpose.msra.mxu0 0.0
    %1291 = vmatprep.subr.mxu0 0.0
    %1292 = vmatpush1.xpose.msra.mxu0 0.0
    %1293 = vmatprep.subr.mxu0 0.0
    %1294 = vmatpush1.xpose.msra.mxu0 0.0
    %1295 = vmatprep.subr.mxu0 0.0
    %1296 = vmatpush1.xpose.msra.mxu0 0.0
    %1297 = vmatprep.subr.mxu0 0.0
    %1298 = vmatpush1.xpose.msra.mxu0 0.0
    %1299 = vmatprep.subr.mxu0 0.0
    %1300 = vmatpush1.xpose.msra.mxu0 0.0
    %1301 = vmatprep.subr.mxu0 0.0
    %1302 = vmatpush1.xpose.msra.mxu0 0.0
    %1303 = vmatprep.subr.mxu0 0.0
    %1304 = vmatpush1.xpose.msra.mxu0 0.0
    %1305 = vmatprep.subr.mxu0 0.0
    %1306 = vmatpush1.xpose.msra.mxu0 0.0
    %1307 = vmatprep.subr.mxu0 0.0
    %1308 = vmatpush1.xpose.msra.mxu0 0.0
    %1309 = vmatprep.subr.mxu0 0.0
    %1310 = vmatpush1.xpose.msra.mxu0 0.0
    %1311 = vmatprep.subr.mxu0 0.0
    %1312 = vmatpush1.xpose.msra.mxu0 0.0
    %1313 = vmatprep.subr.mxu0 0.0
    %1314 = vmatpush1.xpose.msra.mxu0 0.0
    %1315 = vmatprep.subr.mxu0 0.0
    %1316 = vmatpush1.xpose.msra.mxu0 0.0
    %1317 = vmatprep.subr.mxu0 0.0
    %1318 = vmatpush1.xpose.msra.mxu0 0.0
    %1319 = vmatprep.subr.mxu0 0.0
    %1320 = vmatpush1.xpose.msra.mxu0 0.0
    %1321 = vmatprep.subr.mxu0 0.0
    %1322 = vmatpush1.xpose.msra.mxu0 0.0
    %1323 = vmatprep.subr.mxu0 0.0
    %1324 = vmatpush1.xpose.msra.mxu0 0.0
    %1325 = vmatprep.subr.mxu0 0.0
    %1326 = vmatpush1.xpose.msra.mxu0 0.0
    %1327 = vmatprep.subr.mxu0 0.0
    %1328 = vmatpush1.xpose.msra.mxu0 0.0
    %1329 = vmatprep.mubr.f32.mxu0 0.0
    %1330 = vmatmul.mubr.f32.gmra.mrb[0].mxu0 %v1261
    %v1331 = vpop.f32.mrb[0].mxu0
    %v1332 = vadd.f32 0.0, %v1331
    %v1333 = vpop.f32.mrb[0].mxu0
    %1334 = vdwg.mxu0
    %v1335 = vmul.f32 %v1332, 0.35355338
    %v1336 = vlaneseq
    %v1337 = vshrl.u32 %v1336, 7
    %v1338 = vsub.s32 0, %v1337
    %v1339 = vrot.slane %v463, %v1338
    %v1340 = vadd.f32 %v1335, %v1339
    %v1341 = vsel %vm563, %v1340, -inf
    %1342 = vmax.xlane.f32.xlu0 %v1341
    %v1343 = vpop.xlane.xlu0 %1342
    %v1344 = vsub.f32 %v1340, %v1343
    %v1345 = vmul.f32 %v1344, 1.442695
    %v1346 = vpow.pop %v1345
    %v1347 = vsel %vm563, %v1346, 0.0
    %1348 = vadd.xlane.f32.xlu0 %v1347
    %v1349 = vpop.xlane.xlu0 %1348
    %v1350 = vrcp.pop %v1349
    %v1351 = vmul.f32 %v1346, %v1350
    %1352 = vrot.lane.b32.xlu0 %v1257, 64
    %v1353 = vpop.permute.xlu0 %1352
    %v1356 = vsel %vm563, %v1351, 0
    %1358 = vmatprep.subr.mxu0 0.0
    %1359 = vmatpush1.msra.mxu0 %v1353
    %1360 = vmatprep.subr.mxu0 0.0
    %1361 = vmatpush1.msra.mxu0 0.0
    %1362 = vmatprep.subr.mxu0 0.0
    %1363 = vmatpush1.msra.mxu0 0.0
    %1364 = vmatprep.subr.mxu0 0.0
    %1365 = vmatpush1.msra.mxu0 0.0
    %1366 = vmatprep.subr.mxu0 0.0
    %1367 = vmatpush1.msra.mxu0 0.0
    %1368 = vmatprep.subr.mxu0 0.0
    %1369 = vmatpush1.msra.mxu0 0.0
    %1370 = vmatprep.subr.mxu0 0.0
    %1371 = vmatpush1.msra.mxu0 0.0
    %1372 = vmatprep.subr.mxu0 0.0
    %1373 = vmatpush1.msra.mxu0 0.0
    %1374 = vmatprep.subr.mxu0 0.0
    %1375 = vmatpush1.msra.mxu0 0.0
    %1376 = vmatprep.subr.mxu0 0.0
    %1377 = vmatpush1.msra.mxu0 0.0
    %1378 = vmatprep.subr.mxu0 0.0
    %1379 = vmatpush1.msra.mxu0 0.0
    %1380 = vmatprep.subr.mxu0 0.0
    %1381 = vmatpush1.msra.mxu0 0.0
    %1382 = vmatprep.subr.mxu0 0.0
    %1383 = vmatpush1.msra.mxu0 0.0
    %1384 = vmatprep.subr.mxu0 0.0
    %1385 = vmatpush1.msra.mxu0 0.0
    %1386 = vmatprep.subr.mxu0 0.0
    %1387 = vmatpush1.msra.mxu0 0.0
    %1388 = vmatprep.subr.mxu0 0.0
    %1389 = vmatpush1.msra.mxu0 0.0
    %1390 = vmatprep.subr.mxu0 0.0
    %1391 = vmatpush1.msra.mxu0 0.0
    %1392 = vmatprep.subr.mxu0 0.0
    %1393 = vmatpush1.msra.mxu0 0.0
    %1394 = vmatprep.subr.mxu0 0.0
    %1395 = vmatpush1.msra.mxu0 0.0
    %1396 = vmatprep.subr.mxu0 0.0
    %1397 = vmatpush1.msra.mxu0 0.0
    %1398 = vmatprep.subr.mxu0 0.0
    %1399 = vmatpush1.msra.mxu0 0.0
    %1400 = vmatprep.subr.mxu0 0.0
    %1401 = vmatpush1.msra.mxu0 0.0
    %1402 = vmatprep.subr.mxu0 0.0
    %1403 = vmatpush1.msra.mxu0 0.0
    %1404 = vmatprep.subr.mxu0 0.0
    %1405 = vmatpush1.msra.mxu0 0.0
    %1406 = vmatprep.subr.mxu0 0.0
    %1407 = vmatpush1.msra.mxu0 0.0
    %1408 = vmatprep.subr.mxu0 0.0
    %1409 = vmatpush1.msra.mxu0 0.0
    %1410 = vmatprep.subr.mxu0 0.0
    %1411 = vmatpush1.msra.mxu0 0.0
    %1412 = vmatprep.subr.mxu0 0.0
    %1413 = vmatpush1.msra.mxu0 0.0
    %1414 = vmatprep.subr.mxu0 0.0
    %1415 = vmatpush1.msra.mxu0 0.0
    %1416 = vmatprep.subr.mxu0 0.0
    %1417 = vmatpush1.msra.mxu0 0.0
    %1418 = vmatprep.subr.mxu0 0.0
    %1419 = vmatpush1.msra.mxu0 0.0
    %1420 = vmatprep.subr.mxu0 0.0
    %1421 = vmatpush1.msra.mxu0 0.0
    %1422 = vmatprep.mubr.f32.mxu0 0.0
    %1423 = vmatmul.mubr.f32.gmra.mrb[0].mxu0 %v1356
    %v1424 = vpop.f32.mrb[0].mxu0
    %v1425 = vadd.f32 0.0, %v1424
    %v1426 = vpop.f32.mrb[0].mxu0
    %1427 = vdwg.mxu0
    %1428 = vst.msk [vmem:[#allocation3 + $0x8] sm:$0xff] %vm563, %v1425
    %v1429 = vld [vmem:[#allocation2 + $0x8] sm:$0xff]
    %1431 = vrot.lane.b32.xlu0 %v1429, 120
    %v1432 = vpop.permute.xlu0 %1431
    %1433 = vrot.lane.b32.xlu0 %v1429, 88
    %v1434 = vpop.permute.xlu0 %1433
    %v1435 = vsel %vm563, %v1432, 0
    %v1437 = vsel %vm563, %v1434, 0
    %1439 = vmatprep.subr.mxu0 0.0
    %1440 = vmatpush1.xpose.msra.mxu0 %v1437
    %1441 = vmatprep.subr.mxu0 0.0
    %1442 = vmatpush1.xpose.msra.mxu0 0.0
    %1443 = vmatprep.subr.mxu0 0.0
    %1444 = vmatpush1.xpose.msra.mxu0 0.0
    %1445 = vmatprep.subr.mxu0 0.0
    %1446 = vmatpush1.xpose.msra.mxu0 0.0
    %1447 = vmatprep.subr.mxu0 0.0
    %1448 = vmatpush1.xpose.msra.mxu0 0.0
    %1449 = vmatprep.subr.mxu0 0.0
    %1450 = vmatpush1.xpose.msra.mxu0 0.0
    %1451 = vmatprep.subr.mxu0 0.0
    %1452 = vmatpush1.xpose.msra.mxu0 0.0
    %1453 = vmatprep.subr.mxu0 0.0
    %1454 = vmatpush1.xpose.msra.mxu0 0.0
    %1455 = vmatprep.subr.mxu0 0.0
    %1456 = vmatpush1.xpose.msra.mxu0 0.0
    %1457 = vmatprep.subr.mxu0 0.0
    %1458 = vmatpush1.xpose.msra.mxu0 0.0
    %1459 = vmatprep.subr.mxu0 0.0
    %1460 = vmatpush1.xpose.msra.mxu0 0.0
    %1461 = vmatprep.subr.mxu0 0.0
    %1462 = vmatpush1.xpose.msra.mxu0 0.0
    %1463 = vmatprep.subr.mxu0 0.0
    %1464 = vmatpush1.xpose.msra.mxu0 0.0
    %1465 = vmatprep.subr.mxu0 0.0
    %1466 = vmatpush1.xpose.msra.mxu0 0.0
    %1467 = vmatprep.subr.mxu0 0.0
    %1468 = vmatpush1.xpose.msra.mxu0 0.0
    %1469 = vmatprep.subr.mxu0 0.0
    %1470 = vmatpush1.xpose.msra.mxu0 0.0
    %1471 = vmatprep.subr.mxu0 0.0
    %1472 = vmatpush1.xpose.msra.mxu0 0.0
    %1473 = vmatprep.subr.mxu0 0.0
    %1474 = vmatpush1.xpose.msra.mxu0 0.0
    %1475 = vmatprep.subr.mxu0 0.0
    %1476 = vmatpush1.xpose.msra.mxu0 0.0
    %1477 = vmatprep.subr.mxu0 0.0
    %1478 = vmatpush1.xpose.msra.mxu0 0.0
    %1479 = vmatprep.subr.mxu0 0.0
    %1480 = vmatpush1.xpose.msra.mxu0 0.0
    %1481 = vmatprep.subr.mxu0 0.0
    %1482 = vmatpush1.xpose.msra.mxu0 0.0
    %1483 = vmatprep.subr.mxu0 0.0
    %1484 = vmatpush1.xpose.msra.mxu0 0.0
    %1485 = vmatprep.subr.mxu0 0.0
    %1486 = vmatpush1.xpose.msra.mxu0 0.0
    %1487 = vmatprep.subr.mxu0 0.0
    %1488 = vmatpush1.xpose.msra.mxu0 0.0
    %1489 = vmatprep.subr.mxu0 0.0
    %1490 = vmatpush1.xpose.msra.mxu0 0.0
    %1491 = vmatprep.subr.mxu0 0.0
    %1492 = vmatpush1.xpose.msra.mxu0 0.0
    %1493 = vmatprep.subr.mxu0 0.0
    %1494 = vmatpush1.xpose.msra.mxu0 0.0
    %1495 = vmatprep.subr.mxu0 0.0
    %1496 = vmatpush1.xpose.msra.mxu0 0.0
    %1497 = vmatprep.subr.mxu0 0.0
    %1498 = vmatpush1.xpose.msra.mxu0 0.0
    %1499 = vmatprep.subr.mxu0 0.0
    %1500 = vmatpush1.xpose.msra.mxu0 0.0
    %1501 = vmatprep.subr.mxu0 0.0
    %1502 = vmatpush1.xpose.msra.mxu0 0.0
    %1503 = vmatprep.mubr.f32.mxu0 0.0
    %1504 = vmatmul.mubr.f32.gmra.mrb[0].mxu0 %v1435
    %v1505 = vpop.f32.mrb[0].mxu0
    %v1506 = vadd.f32 0.0, %v1505
    %v1507 = vpop.f32.mrb[0].mxu0
    %1508 = vdwg.mxu0
    %v1509 = vmul.f32 %v1506, 0.35355338
    %v1510 = vadd.f32 %v1509, %v1339
    %v1511 = vsel %vm563, %v1510, -inf
    %1512 = vmax.xlane.f32.xlu0 %v1511
    %v1513 = vpop.xlane.xlu0 %1512
    %v1514 = vsub.f32 %v1510, %v1513
    %v1515 = vmul.f32 %v1514, 1.442695
    %v1516 = vpow.pop %v1515
    %v1517 = vsel %vm563, %v1516, 0.0
    %1518 = vadd.xlane.f32.xlu0 %v1517
    %v1519 = vpop.xlane.xlu0 %1518
    %v1520 = vrcp.pop %v1519
    %v1521 = vmul.f32 %v1516, %v1520
    %1522 = vrot.lane.b32.xlu0 %v1429, 56
    %v1523 = vpop.permute.xlu0 %1522
    %v1526 = vsel %vm563, %v1521, 0
    %1528 = vmatprep.subr.mxu0 0.0
    %1529 = vmatpush1.msra.mxu0 %v1523
    %1530 = vmatprep.subr.mxu0 0.0
    %1531 = vmatpush1.msra.mxu0 0.0
    %1532 = vmatprep.subr.mxu0 0.0
    %1533 = vmatpush1.msra.mxu0 0.0
    %1534 = vmatprep.subr.mxu0 0.0
    %1535 = vmatpush1.msra.mxu0 0.0
    %1536 = vmatprep.subr.mxu0 0.0
    %1537 = vmatpush1.msra.mxu0 0.0
    %1538 = vmatprep.subr.mxu0 0.0
    %1539 = vmatpush1.msra.mxu0 0.0
    %1540 = vmatprep.subr.mxu0 0.0
    %1541 = vmatpush1.msra.mxu0 0.0
    %1542 = vmatprep.subr.mxu0 0.0
    %1543 = vmatpush1.msra.mxu0 0.0
    %1544 = vmatprep.subr.mxu0 0.0
    %1545 = vmatpush1.msra.mxu0 0.0
    %1546 = vmatprep.subr.mxu0 0.0
    %1547 = vmatpush1.msra.mxu0 0.0
    %1548 = vmatprep.subr.mxu0 0.0
    %1549 = vmatpush1.msra.mxu0 0.0
    %1550 = vmatprep.subr.mxu0 0.0
    %1551 = vmatpush1.msra.mxu0 0.0
    %1552 = vmatprep.subr.mxu0 0.0
    %1553 = vmatpush1.msra.mxu0 0.0
    %1554 = vmatprep.subr.mxu0 0.0
    %1555 = vmatpush1.msra.mxu0 0.0
    %1556 = vmatprep.subr.mxu0 0.0
    %1557 = vmatpush1.msra.mxu0 0.0
    %1558 = vmatprep.subr.mxu0 0.0
    %1559 = vmatpush1.msra.mxu0 0.0
    %1560 = vmatprep.subr.mxu0 0.0
    %1561 = vmatpush1.msra.mxu0 0.0
    %1562 = vmatprep.subr.mxu0 0.0
    %1563 = vmatpush1.msra.mxu0 0.0
    %1564 = vmatprep.subr.mxu0 0.0
    %1565 = vmatpush1.msra.mxu0 0.0
    %1566 = vmatprep.subr.mxu0 0.0
    %1567 = vmatpush1.msra.mxu0 0.0
    %1568 = vmatprep.subr.mxu0 0.0
    %1569 = vmatpush1.msra.mxu0 0.0
    %1570 = vmatprep.subr.mxu0 0.0
    %1571 = vmatpush1.msra.mxu0 0.0
    %1572 = vmatprep.subr.mxu0 0.0
    %1573 = vmatpush1.msra.mxu0 0.0
    %1574 = vmatprep.subr.mxu0 0.0
    %1575 = vmatpush1.msra.mxu0 0.0
    %1576 = vmatprep.subr.mxu0 0.0
    %1577 = vmatpush1.msra.mxu0 0.0
    %1578 = vmatprep.subr.mxu0 0.0
    %1579 = vmatpush1.msra.mxu0 0.0
    %1580 = vmatprep.subr.mxu0 0.0
    %1581 = vmatpush1.msra.mxu0 0.0
    %1582 = vmatprep.subr.mxu0 0.0
    %1583 = vmatpush1.msra.mxu0 0.0
    %1584 = vmatprep.subr.mxu0 0.0
    %1585 = vmatpush1.msra.mxu0 0.0
    %1586 = vmatprep.subr.mxu0 0.0
    %1587 = vmatpush1.msra.mxu0 0.0
    %1588 = vmatprep.subr.mxu0 0.0
    %1589 = vmatpush1.msra.mxu0 0.0
    %1590 = vmatprep.subr.mxu0 0.0
    %1591 = vmatpush1.msra.mxu0 0.0
    %1592 = vmatprep.mubr.f32.mxu0 0.0
    %1593 = vmatmul.mubr.f32.gmra.mrb[0].mxu0 %v1526
    %v1594 = vpop.f32.mrb[0].mxu0
    %v1595 = vadd.f32 0.0, %v1594
    %v1596 = vpop.f32.mrb[0].mxu0
    %1597 = vdwg.mxu0
    %1599 = vrot.lane.b32.xlu0 %v1595, 8
    %v1600 = vpop.permute.xlu0 %1599
    %1602 = vst.msk [vmem:[#allocation3 + $0x8] sm:$0xff] %vm905, %v1600
    %v1603 = vld [vmem:[#allocation2 + $0x8] sm:$0xff]
    %1605 = vrot.lane.b32.xlu0 %v1603, 112
    %v1606 = vpop.permute.xlu0 %1605
    %1607 = vrot.lane.b32.xlu0 %v1603, 80
    %v1608 = vpop.permute.xlu0 %1607
    %v1609 = vsel %vm563, %v1606, 0
    %v1611 = vsel %vm563, %v1608, 0
    %1613 = vmatprep.subr.mxu0 0.0
    %1614 = vmatpush1.xpose.msra.mxu0 %v1611
    %1615 = vmatprep.subr.mxu0 0.0
    %1616 = vmatpush1.xpose.msra.mxu0 0.0
    %1617 = vmatprep.subr.mxu0 0.0
    %1618 = vmatpush1.xpose.msra.mxu0 0.0
    %1619 = vmatprep.subr.mxu0 0.0
    %1620 = vmatpush1.xpose.msra.mxu0 0.0
    %1621 = vmatprep.subr.mxu0 0.0
    %1622 = vmatpush1.xpose.msra.mxu0 0.0
    %1623 = vmatprep.subr.mxu0 0.0
    %1624 = vmatpush1.xpose.msra.mxu0 0.0
    %1625 = vmatprep.subr.mxu0 0.0
    %1626 = vmatpush1.xpose.msra.mxu0 0.0
    %1627 = vmatprep.subr.mxu0 0.0
    %1628 = vmatpush1.xpose.msra.mxu0 0.0
    %1629 = vmatprep.subr.mxu0 0.0
    %1630 = vmatpush1.xpose.msra.mxu0 0.0
    %1631 = vmatprep.subr.mxu0 0.0
    %1632 = vmatpush1.xpose.msra.mxu0 0.0
    %1633 = vmatprep.subr.mxu0 0.0
    %1634 = vmatpush1.xpose.msra.mxu0 0.0
    %1635 = vmatprep.subr.mxu0 0.0
    %1636 = vmatpush1.xpose.msra.mxu0 0.0
    %1637 = vmatprep.subr.mxu0 0.0
    %1638 = vmatpush1.xpose.msra.mxu0 0.0
    %1639 = vmatprep.subr.mxu0 0.0
    %1640 = vmatpush1.xpose.msra.mxu0 0.0
    %1641 = vmatprep.subr.mxu0 0.0
    %1642 = vmatpush1.xpose.msra.mxu0 0.0
    %1643 = vmatprep.subr.mxu0 0.0
    %1644 = vmatpush1.xpose.msra.mxu0 0.0
    %1645 = vmatprep.subr.mxu0 0.0
    %1646 = vmatpush1.xpose.msra.mxu0 0.0
    %1647 = vmatprep.subr.mxu0 0.0
    %1648 = vmatpush1.xpose.msra.mxu0 0.0
    %1649 = vmatprep.subr.mxu0 0.0
    %1650 = vmatpush1.xpose.msra.mxu0 0.0
    %1651 = vmatprep.subr.mxu0 0.0
    %1652 = vmatpush1.xpose.msra.mxu0 0.0
    %1653 = vmatprep.subr.mxu0 0.0
    %1654 = vmatpush1.xpose.msra.mxu0 0.0
    %1655 = vmatprep.subr.mxu0 0.0
    %1656 = vmatpush1.xpose.msra.mxu0 0.0
    %1657 = vmatprep.subr.mxu0 0.0
    %1658 = vmatpush1.xpose.msra.mxu0 0.0
    %1659 = vmatprep.subr.mxu0 0.0
    %1660 = vmatpush1.xpose.msra.mxu0 0.0
    %1661 = vmatprep.subr.mxu0 0.0
    %1662 = vmatpush1.xpose.msra.mxu0 0.0
    %1663 = vmatprep.subr.mxu0 0.0
    %1664 = vmatpush1.xpose.msra.mxu0 0.0
    %1665 = vmatprep.subr.mxu0 0.0
    %1666 = vmatpush1.xpose.msra.mxu0 0.0
    %1667 = vmatprep.subr.mxu0 0.0
    %1668 = vmatpush1.xpose.msra.mxu0 0.0
    %1669 = vmatprep.subr.mxu0 0.0
    %1670 = vmatpush1.xpose.msra.mxu0 0.0
    %1671 = vmatprep.subr.mxu0 0.0
    %1672 = vmatpush1.xpose.msra.mxu0 0.0
    %1673 = vmatprep.subr.mxu0 0.0
    %1674 = vmatpush1.xpose.msra.mxu0 0.0
    %1675 = vmatprep.subr.mxu0 0.0
    %1676 = vmatpush1.xpose.msra.mxu0 0.0
    %1677 = vmatprep.mubr.f32.mxu0 0.0
    %1678 = vmatmul.mubr.f32.gmra.mrb[0].mxu0 %v1609
    %v1679 = vpop.f32.mrb[0].mxu0
    %v1680 = vadd.f32 0.0, %v1679
    %v1681 = vpop.f32.mrb[0].mxu0
    %1682 = vdwg.mxu0
    %v1683 = vmul.f32 %v1680, 0.35355338
    %v1684 = vadd.f32 %v1683, %v1339
    %v1685 = vsel %vm563, %v1684, -inf
    %1686 = vmax.xlane.f32.xlu0 %v1685
    %v1687 = vpop.xlane.xlu0 %1686
    %v1688 = vsub.f32 %v1684, %v1687
    %v1689 = vmul.f32 %v1688, 1.442695
    %v1690 = vpow.pop %v1689
    %v1691 = vsel %vm563, %v1690, 0.0
    %1692 = vadd.xlane.f32.xlu0 %v1691
    %v1693 = vpop.xlane.xlu0 %1692
    %v1694 = vrcp.pop %v1693
    %v1695 = vmul.f32 %v1690, %v1694
    %1696 = vrot.lane.b32.xlu0 %v1603, 48
    %v1697 = vpop.permute.xlu0 %1696
    %v1700 = vsel %vm563, %v1695, 0
    %1702 = vmatprep.subr.mxu0 0.0
    %1703 = vmatpush1.msra.mxu0 %v1697
    %1704 = vmatprep.subr.mxu0 0.0
    %1705 = vmatpush1.msra.mxu0 0.0
    %1706 = vmatprep.subr.mxu0 0.0
    %1707 = vmatpush1.msra.mxu0 0.0
    %1708 = vmatprep.subr.mxu0 0.0
    %1709 = vmatpush1.msra.mxu0 0.0
    %1710 = vmatprep.subr.mxu0 0.0
    %1711 = vmatpush1.msra.mxu0 0.0
    %1712 = vmatprep.subr.mxu0 0.0
    %1713 = vmatpush1.msra.mxu0 0.0
    %1714 = vmatprep.subr.mxu0 0.0
    %1715 = vmatpush1.msra.mxu0 0.0
    %1716 = vmatprep.subr.mxu0 0.0
    %1717 = vmatpush1.msra.mxu0 0.0
    %1718 = vmatprep.subr.mxu0 0.0
    %1719 = vmatpush1.msra.mxu0 0.0
    %1720 = vmatprep.subr.mxu0 0.0
    %1721 = vmatpush1.msra.mxu0 0.0
    %1722 = vmatprep.subr.mxu0 0.0
    %1723 = vmatpush1.msra.mxu0 0.0
    %1724 = vmatprep.subr.mxu0 0.0
    %1725 = vmatpush1.msra.mxu0 0.0
    %1726 = vmatprep.subr.mxu0 0.0
    %1727 = vmatpush1.msra.mxu0 0.0
    %1728 = vmatprep.subr.mxu0 0.0
    %1729 = vmatpush1.msra.mxu0 0.0
    %1730 = vmatprep.subr.mxu0 0.0
    %1731 = vmatpush1.msra.mxu0 0.0
    %1732 = vmatprep.subr.mxu0 0.0
    %1733 = vmatpush1.msra.mxu0 0.0
    %1734 = vmatprep.subr.mxu0 0.0
    %1735 = vmatpush1.msra.mxu0 0.0
    %1736 = vmatprep.subr.mxu0 0.0
    %1737 = vmatpush1.msra.mxu0 0.0
    %1738 = vmatprep.subr.mxu0 0.0
    %1739 = vmatpush1.msra.mxu0 0.0
    %1740 = vmatprep.subr.mxu0 0.0
    %1741 = vmatpush1.msra.mxu0 0.0
    %1742 = vmatprep.subr.mxu0 0.0
    %1743 = vmatpush1.msra.mxu0 0.0
    %1744 = vmatprep.subr.mxu0 0.0
    %1745 = vmatpush1.msra.mxu0 0.0
    %1746 = vmatprep.subr.mxu0 0.0
    %1747 = vmatpush1.msra.mxu0 0.0
    %1748 = vmatprep.subr.mxu0 0.0
    %1749 = vmatpush1.msra.mxu0 0.0
    %1750 = vmatprep.subr.mxu0 0.0
    %1751 = vmatpush1.msra.mxu0 0.0
    %1752 = vmatprep.subr.mxu0 0.0
    %1753 = vmatpush1.msra.mxu0 0.0
    %1754 = vmatprep.subr.mxu0 0.0
    %1755 = vmatpush1.msra.mxu0 0.0
    %1756 = vmatprep.subr.mxu0 0.0
    %1757 = vmatpush1.msra.mxu0 0.0
    %1758 = vmatprep.subr.mxu0 0.0
    %1759 = vmatpush1.msra.mxu0 0.0
    %1760 = vmatprep.subr.mxu0 0.0
    %1761 = vmatpush1.msra.mxu0 0.0
    %1762 = vmatprep.subr.mxu0 0.0
    %1763 = vmatpush1.msra.mxu0 0.0
    %1764 = vmatprep.subr.mxu0 0.0
    %1765 = vmatpush1.msra.mxu0 0.0
    %1766 = vmatprep.mubr.f32.mxu0 0.0
    %1767 = vmatmul.mubr.f32.gmra.mrb[0].mxu0 %v1700
    %v1768 = vpop.f32.mrb[0].mxu0
    %v1769 = vadd.f32 0.0, %v1768
    %v1770 = vpop.f32.mrb[0].mxu0
    %1771 = vdwg.mxu0
    %1773 = vrot.lane.b32.xlu0 %v1769, 16
    %v1774 = vpop.permute.xlu0 %1773
    %1776 = vst.msk [vmem:[#allocation3 + $0x8] sm:$0xff] %vm1080, %v1774
    %v1777 = vld [vmem:[#allocation2 + $0x8] sm:$0xff]
    %1779 = vrot.lane.b32.xlu0 %v1777, 104
    %v1780 = vpop.permute.xlu0 %1779
    %1781 = vrot.lane.b32.xlu0 %v1777, 72
    %v1782 = vpop.permute.xlu0 %1781
    %v1783 = vsel %vm563, %v1780, 0
    %v1785 = vsel %vm563, %v1782, 0
    %1787 = vmatprep.subr.mxu0 0.0
    %1788 = vmatpush1.xpose.msra.mxu0 %v1785
    %1789 = vmatprep.subr.mxu0 0.0
    %1790 = vmatpush1.xpose.msra.mxu0 0.0
    %1791 = vmatprep.subr.mxu0 0.0
    %1792 = vmatpush1.xpose.msra.mxu0 0.0
    %1793 = vmatprep.subr.mxu0 0.0
    %1794 = vmatpush1.xpose.msra.mxu0 0.0
    %1795 = vmatprep.subr.mxu0 0.0
    %1796 = vmatpush1.xpose.msra.mxu0 0.0
    %1797 = vmatprep.subr.mxu0 0.0
    %1798 = vmatpush1.xpose.msra.mxu0 0.0
    %1799 = vmatprep.subr.mxu0 0.0
    %1800 = vmatpush1.xpose.msra.mxu0 0.0
    %1801 = vmatprep.subr.mxu0 0.0
    %1802 = vmatpush1.xpose.msra.mxu0 0.0
    %1803 = vmatprep.subr.mxu0 0.0
    %1804 = vmatpush1.xpose.msra.mxu0 0.0
    %1805 = vmatprep.subr.mxu0 0.0
    %1806 = vmatpush1.xpose.msra.mxu0 0.0
    %1807 = vmatprep.subr.mxu0 0.0
    %1808 = vmatpush1.xpose.msra.mxu0 0.0
    %1809 = vmatprep.subr.mxu0 0.0
    %1810 = vmatpush1.xpose.msra.mxu0 0.0
    %1811 = vmatprep.subr.mxu0 0.0
    %1812 = vmatpush1.xpose.msra.mxu0 0.0
    %1813 = vmatprep.subr.mxu0 0.0
    %1814 = vmatpush1.xpose.msra.mxu0 0.0
    %1815 = vmatprep.subr.mxu0 0.0
    %1816 = vmatpush1.xpose.msra.mxu0 0.0
    %1817 = vmatprep.subr.mxu0 0.0
    %1818 = vmatpush1.xpose.msra.mxu0 0.0
    %1819 = vmatprep.subr.mxu0 0.0
    %1820 = vmatpush1.xpose.msra.mxu0 0.0
    %1821 = vmatprep.subr.mxu0 0.0
    %1822 = vmatpush1.xpose.msra.mxu0 0.0
    %1823 = vmatprep.subr.mxu0 0.0
    %1824 = vmatpush1.xpose.msra.mxu0 0.0
    %1825 = vmatprep.subr.mxu0 0.0
    %1826 = vmatpush1.xpose.msra.mxu0 0.0
    %1827 = vmatprep.subr.mxu0 0.0
    %1828 = vmatpush1.xpose.msra.mxu0 0.0
    %1829 = vmatprep.subr.mxu0 0.0
    %1830 = vmatpush1.xpose.msra.mxu0 0.0
    %1831 = vmatprep.subr.mxu0 0.0
    %1832 = vmatpush1.xpose.msra.mxu0 0.0
    %1833 = vmatprep.subr.mxu0 0.0
    %1834 = vmatpush1.xpose.msra.mxu0 0.0
    %1835 = vmatprep.subr.mxu0 0.0
    %1836 = vmatpush1.xpose.msra.mxu0 0.0
    %1837 = vmatprep.subr.mxu0 0.0
    %1838 = vmatpush1.xpose.msra.mxu0 0.0
    %1839 = vmatprep.subr.mxu0 0.0
    %1840 = vmatpush1.xpose.msra.mxu0 0.0
    %1841 = vmatprep.subr.mxu0 0.0
    %1842 = vmatpush1.xpose.msra.mxu0 0.0
    %1843 = vmatprep.subr.mxu0 0.0
    %1844 = vmatpush1.xpose.msra.mxu0 0.0
    %1845 = vmatprep.subr.mxu0 0.0
    %1846 = vmatpush1.xpose.msra.mxu0 0.0
    %1847 = vmatprep.subr.mxu0 0.0
    %1848 = vmatpush1.xpose.msra.mxu0 0.0
    %1849 = vmatprep.subr.mxu0 0.0
    %1850 = vmatpush1.xpose.msra.mxu0 0.0
    %1851 = vmatprep.mubr.f32.mxu0 0.0
    %1852 = vmatmul.mubr.f32.gmra.mrb[0].mxu0 %v1783
    %v1853 = vpop.f32.mrb[0].mxu0
    %v1854 = vadd.f32 0.0, %v1853
    %v1855 = vpop.f32.mrb[0].mxu0
    %1856 = vdwg.mxu0
    %v1857 = vmul.f32 %v1854, 0.35355338
    %v1858 = vadd.f32 %v1857, %v1339
    %v1859 = vsel %vm563, %v1858, -inf
    %1860 = vmax.xlane.f32.xlu0 %v1859
    %v1861 = vpop.xlane.xlu0 %1860
    %v1862 = vsub.f32 %v1858, %v1861
    %v1863 = vmul.f32 %v1862, 1.442695
    %v1864 = vpow.pop %v1863
    %v1865 = vsel %vm563, %v1864, 0.0
    %1866 = vadd.xlane.f32.xlu0 %v1865
    %v1867 = vpop.xlane.xlu0 %1866
    %v1868 = vrcp.pop %v1867
    %v1869 = vmul.f32 %v1864, %v1868
    %1870 = vrot.lane.b32.xlu0 %v1777, 40
    %v1871 = vpop.permute.xlu0 %1870
    %v1874 = vsel %vm563, %v1869, 0
    %1876 = vmatprep.subr.mxu0 0.0
    %1877 = vmatpush1.msra.mxu0 %v1871
    %1878 = vmatprep.subr.mxu0 0.0
    %1879 = vmatpush1.msra.mxu0 0.0
    %1880 = vmatprep.subr.mxu0 0.0
    %1881 = vmatpush1.msra.mxu0 0.0
    %1882 = vmatprep.subr.mxu0 0.0
    %1883 = vmatpush1.msra.mxu0 0.0
    %1884 = vmatprep.subr.mxu0 0.0
    %1885 = vmatpush1.msra.mxu0 0.0
    %1886 = vmatprep.subr.mxu0 0.0
    %1887 = vmatpush1.msra.mxu0 0.0
    %1888 = vmatprep.subr.mxu0 0.0
    %1889 = vmatpush1.msra.mxu0 0.0
    %1890 = vmatprep.subr.mxu0 0.0
    %1891 = vmatpush1.msra.mxu0 0.0
    %1892 = vmatprep.subr.mxu0 0.0
    %1893 = vmatpush1.msra.mxu0 0.0
    %1894 = vmatprep.subr.mxu0 0.0
    %1895 = vmatpush1.msra.mxu0 0.0
    %1896 = vmatprep.subr.mxu0 0.0
    %1897 = vmatpush1.msra.mxu0 0.0
    %1898 = vmatprep.subr.mxu0 0.0
    %1899 = vmatpush1.msra.mxu0 0.0
    %1900 = vmatprep.subr.mxu0 0.0
    %1901 = vmatpush1.msra.mxu0 0.0
    %1902 = vmatprep.subr.mxu0 0.0
    %1903 = vmatpush1.msra.mxu0 0.0
    %1904 = vmatprep.subr.mxu0 0.0
    %1905 = vmatpush1.msra.mxu0 0.0
    %1906 = vmatprep.subr.mxu0 0.0
    %1907 = vmatpush1.msra.mxu0 0.0
    %1908 = vmatprep.subr.mxu0 0.0
    %1909 = vmatpush1.msra.mxu0 0.0
    %1910 = vmatprep.subr.mxu0 0.0
    %1911 = vmatpush1.msra.mxu0 0.0
    %1912 = vmatprep.subr.mxu0 0.0
    %1913 = vmatpush1.msra.mxu0 0.0
    %1914 = vmatprep.subr.mxu0 0.0
    %1915 = vmatpush1.msra.mxu0 0.0
    %1916 = vmatprep.subr.mxu0 0.0
    %1917 = vmatpush1.msra.mxu0 0.0
    %1918 = vmatprep.subr.mxu0 0.0
    %1919 = vmatpush1.msra.mxu0 0.0
    %1920 = vmatprep.subr.mxu0 0.0
    %1921 = vmatpush1.msra.mxu0 0.0
    %1922 = vmatprep.subr.mxu0 0.0
    %1923 = vmatpush1.msra.mxu0 0.0
    %1924 = vmatprep.subr.mxu0 0.0
    %1925 = vmatpush1.msra.mxu0 0.0
    %1926 = vmatprep.subr.mxu0 0.0
    %1927 = vmatpush1.msra.mxu0 0.0
    %1928 = vmatprep.subr.mxu0 0.0
    %1929 = vmatpush1.msra.mxu0 0.0
    %1930 = vmatprep.subr.mxu0 0.0
    %1931 = vmatpush1.msra.mxu0 0.0
    %1932 = vmatprep.subr.mxu0 0.0
    %1933 = vmatpush1.msra.mxu0 0.0
    %1934 = vmatprep.subr.mxu0 0.0
    %1935 = vmatpush1.msra.mxu0 0.0
    %1936 = vmatprep.subr.mxu0 0.0
    %1937 = vmatpush1.msra.mxu0 0.0
    %1938 = vmatprep.subr.mxu0 0.0
    %1939 = vmatpush1.msra.mxu0 0.0
    %1940 = vmatprep.mubr.f32.mxu0 0.0
    %1941 = vmatmul.mubr.f32.gmra.mrb[0].mxu0 %v1874
    %v1942 = vpop.f32.mrb[0].mxu0
    %v1943 = vadd.f32 0.0, %v1942
    %v1944 = vpop.f32.mrb[0].mxu0
    %1945 = vdwg.mxu0
    %1947 = vrot.lane.b32.xlu0 %v1943, 24
    %v1948 = vpop.permute.xlu0 %1947
    %1950 = vst.msk [vmem:[#allocation3 + $0x8] sm:$0xff] %vm1255, %v1948
    %v1951 = vld [vmem:[#allocation3] sm:$0xff]
    %v1952 = vld [vmem:[#allocation3 + $0x8] sm:$0xff]
    %v1953 = vld [vmem:[%s25] sm:$0xff]
    %v1954 = vld [vmem:[%s25 + $0x8] sm:$0xff]
    %v1955 = vld [vmem:[%s25 + $0x10] sm:$0xff]
    %v1956 = vld [vmem:[%s25 + $0x18] sm:$0xff]
    %v1957 = vld [vmem:[%s27] sm:$0x1]
    %v1959 = vlaneseq
    %v1960 = vshrl.u32 %v1959, 7
    %v1961 = vsub.s32 0, %v1960
    %v1962 = vrot.slane %v1957, %v1961
    %v1965 = vsel %vm321, %v1951, 0
    %v1968 = vsel %vm321, %v1952, 0
    %1970 = vmatprep.subr.mxu0 0.0
    %1971 = vmatpush1.msra.mxu0 %v1953
    %1972 = vmatprep.subr.mxu0 0.0
    %1973 = vmatpush1.msra.mxu0 %v1954
    %1974 = vmatprep.subr.mxu0 0.0
    %1975 = vmatpush1.msra.mxu0 %v1955
    %1976 = vmatprep.subr.mxu0 0.0
    %1977 = vmatpush1.msra.mxu0 %v1956
    %1978 = vmatprep.subr.mxu0 0.0
    %1979 = vmatpush1.msra.mxu0 0.0
    %1980 = vmatprep.subr.mxu0 0.0
    %1981 = vmatpush1.msra.mxu0 0.0
    %1982 = vmatprep.subr.mxu0 0.0
    %1983 = vmatpush1.msra.mxu0 0.0
    %1984 = vmatprep.subr.mxu0 0.0
    %1985 = vmatpush1.msra.mxu0 0.0
    %1986 = vmatprep.subr.mxu0 0.0
    %1987 = vmatpush1.msra.mxu0 0.0
    %1988 = vmatprep.subr.mxu0 0.0
    %1989 = vmatpush1.msra.mxu0 0.0
    %1990 = vmatprep.subr.mxu0 0.0
    %1991 = vmatpush1.msra.mxu0 0.0
    %1992 = vmatprep.subr.mxu0 0.0
    %1993 = vmatpush1.msra.mxu0 0.0
    %1994 = vmatprep.subr.mxu0 0.0
    %1995 = vmatpush1.msra.mxu0 0.0
    %1996 = vmatprep.subr.mxu0 0.0
    %1997 = vmatpush1.msra.mxu0 0.0
    %1998 = vmatprep.subr.mxu0 0.0
    %1999 = vmatpush1.msra.mxu0 0.0
    %2000 = vmatprep.subr.mxu0 0.0
    %2001 = vmatpush1.msra.mxu0 0.0
    %2002 = vmatprep.subr.mxu0 0.0
    %2003 = vmatpush1.msra.mxu0 0.0
    %2004 = vmatprep.subr.mxu0 0.0
    %2005 = vmatpush1.msra.mxu0 0.0
    %2006 = vmatprep.subr.mxu0 0.0
    %2007 = vmatpush1.msra.mxu0 0.0
    %2008 = vmatprep.subr.mxu0 0.0
    %2009 = vmatpush1.msra.mxu0 0.0
    %2010 = vmatprep.subr.mxu0 0.0
    %2011 = vmatpush1.msra.mxu0 0.0
    %2012 = vmatprep.subr.mxu0 0.0
    %2013 = vmatpush1.msra.mxu0 0.0
    %2014 = vmatprep.subr.mxu0 0.0
    %2015 = vmatpush1.msra.mxu0 0.0
    %2016 = vmatprep.subr.mxu0 0.0
    %2017 = vmatpush1.msra.mxu0 0.0
    %2018 = vmatprep.subr.mxu0 0.0
    %2019 = vmatpush1.msra.mxu0 0.0
    %2020 = vmatprep.subr.mxu0 0.0
    %2021 = vmatpush1.msra.mxu0 0.0
    %2022 = vmatprep.subr.mxu0 0.0
    %2023 = vmatpush1.msra.mxu0 0.0
    %2024 = vmatprep.subr.mxu0 0.0
    %2025 = vmatpush1.msra.mxu0 0.0
    %2026 = vmatprep.subr.mxu0 0.0
    %2027 = vmatpush1.msra.mxu0 0.0
    %2028 = vmatprep.subr.mxu0 0.0
    %2029 = vmatpush1.msra.mxu0 0.0
    %2030 = vmatprep.subr.mxu0 0.0
    %2031 = vmatpush1.msra.mxu0 0.0
    %2032 = vmatprep.subr.mxu0 0.0
    %2033 = vmatpush1.msra.mxu0 0.0
    %2034 = vmatprep.mubr.f32.mxu0 0.0
    %2035 = vmatmul.mubr.f32.gmra.mrb[0].mxu0 %v1965
    %v2036 = vpop.f32.mrb[0].mxu0
    %v2037 = vadd.f32 %v1962, %v2036
    %v2038 = vpop.f32.mrb[0].mxu0
    %2039 = vmatprep.mubr.f32.mxu0 0.0
    %2040 = vmatmul.mubr.f32.gmra.mrb[0].mxu0 %v1968
    %v2041 = vpop.f32.mrb[0].mxu0
    %v2042 = vadd.f32 %v1962, %v2041
    %v2043 = vpop.f32.mrb[0].mxu0
    %2044 = vdwg.mxu0
    %v2045 = vadd.f32 %v2037, %v454
    %v2046 = vadd.f32 %v2042, %v455
    %v2047 = vld [vmem:[#allocation9] sm:$0x1]
    %v2048 = vld [vmem:[#allocation11] sm:$0x1]
    %v2049 = vsel %vm321, %v2045, 0.0
    %2050 = vadd.xlane.f32.xlu0 %v2049
    %v2051 = vpop.xlane.xlu0 %2050
    %v2052 = vsel %vm321, %v2046, 0.0
    %2053 = vadd.xlane.f32.xlu0 %v2052
    %v2054 = vpop.xlane.xlu0 %2053
    %v2055 = vmul.f32 %v2051, %v419
    %v2056 = vmul.f32 %v2054, %v419
    %v2057 = vsub.f32 %v2045, %v2055
    %v2058 = vsub.f32 %v2046, %v2056
    %v2059 = vmul.f32 %v2057, %v2057
    %v2060 = vmul.f32 %v2058, %v2058
    %v2061 = vsel %vm321, %v2059, 0.0
    %2062 = vadd.xlane.f32.xlu0 %v2061
    %v2063 = vpop.xlane.xlu0 %2062
    %v2064 = vsel %vm321, %v2060, 0.0
    %2065 = vadd.xlane.f32.xlu0 %v2064
    %v2066 = vpop.xlane.xlu0 %2065
    %v2067 = vmul.f32 %v2063, %v419
    %v2068 = vmul.f32 %v2066, %v419
    %v2069 = vadd.f32 %v2067, 1e-12
    %v2070 = vadd.f32 %v2068, 1e-12
    %v2071 = vrsqrt.pop %v2069
    %v2072 = vrsqrt.pop %v2070
    %v2073 = vmul.f32 %v2057, %v2071
    %v2074 = vmul.f32 %v2058, %v2072
    %v2076 = vlaneseq
    %v2077 = vshrl.u32 %v2076, 7
    %v2078 = vsub.s32 0, %v2077
    %v2079 = vrot.slane %v2047, %v2078
    %v2081 = vmul.f32 %v2073, %v2079
    %v2082 = vmul.f32 %v2074, %v2079
    %v2084 = vlaneseq
    %v2085 = vshrl.u32 %v2084, 7
    %v2086 = vsub.s32 0, %v2085
    %v2087 = vrot.slane %v2048, %v2086
    %v2089 = vadd.f32 %v2081, %v2087
    %v2090 = vadd.f32 %v2082, %v2087
    %v2091 = vld [vmem:[%s33] sm:$0xff]
    %v2092 = vld [vmem:[%s33 + $0x8] sm:$0xff]
    %v2093 = vld [vmem:[%s33 + $0x10] sm:$0xff]
    %v2094 = vld [vmem:[%s33 + $0x18] sm:$0xff]
    %v2095 = vld [vmem:[%s35] sm:$0x1]
    %v2097 = vlaneseq
    %v2098 = vshrl.u32 %v2097, 7
    %v2099 = vsub.s32 0, %v2098
    %v2100 = vrot.slane %v2095, %v2099
    %v2103 = vsel %vm321, %v2089, 0
    %v2106 = vsel %vm321, %v2090, 0
    %2108 = vmatprep.subr.mxu0 0.0
    %2109 = vmatpush1.msra.mxu0 %v2091
    %2110 = vmatprep.subr.mxu0 0.0
    %2111 = vmatpush1.msra.mxu0 %v2092
    %2112 = vmatprep.subr.mxu0 0.0
    %2113 = vmatpush1.msra.mxu0 %v2093
    %2114 = vmatprep.subr.mxu0 0.0
    %2115 = vmatpush1.msra.mxu0 %v2094
    %2116 = vmatprep.subr.mxu0 0.0
    %2117 = vmatpush1.msra.mxu0 0.0
    %2118 = vmatprep.subr.mxu0 0.0
    %2119 = vmatpush1.msra.mxu0 0.0
    %2120 = vmatprep.subr.mxu0 0.0
    %2121 = vmatpush1.msra.mxu0 0.0
    %2122 = vmatprep.subr.mxu0 0.0
    %2123 = vmatpush1.msra.mxu0 0.0
    %2124 = vmatprep.subr.mxu0 0.0
    %2125 = vmatpush1.msra.mxu0 0.0
    %2126 = vmatprep.subr.mxu0 0.0
    %2127 = vmatpush1.msra.mxu0 0.0
    %2128 = vmatprep.subr.mxu0 0.0
    %2129 = vmatpush1.msra.mxu0 0.0
    %2130 = vmatprep.subr.mxu0 0.0
    %2131 = vmatpush1.msra.mxu0 0.0
    %2132 = vmatprep.subr.mxu0 0.0
    %2133 = vmatpush1.msra.mxu0 0.0
    %2134 = vmatprep.subr.mxu0 0.0
    %2135 = vmatpush1.msra.mxu0 0.0
    %2136 = vmatprep.subr.mxu0 0.0
    %2137 = vmatpush1.msra.mxu0 0.0
    %2138 = vmatprep.subr.mxu0 0.0
    %2139 = vmatpush1.msra.mxu0 0.0
    %2140 = vmatprep.subr.mxu0 0.0
    %2141 = vmatpush1.msra.mxu0 0.0
    %2142 = vmatprep.subr.mxu0 0.0
    %2143 = vmatpush1.msra.mxu0 0.0
    %2144 = vmatprep.subr.mxu0 0.0
    %2145 = vmatpush1.msra.mxu0 0.0
    %2146 = vmatprep.subr.mxu0 0.0
    %2147 = vmatpush1.msra.mxu0 0.0
    %2148 = vmatprep.subr.mxu0 0.0
    %2149 = vmatpush1.msra.mxu0 0.0
    %2150 = vmatprep.subr.mxu0 0.0
    %2151 = vmatpush1.msra.mxu0 0.0
    %2152 = vmatprep.subr.mxu0 0.0
    %2153 = vmatpush1.msra.mxu0 0.0
    %2154 = vmatprep.subr.mxu0 0.0
    %2155 = vmatpush1.msra.mxu0 0.0
    %2156 = vmatprep.subr.mxu0 0.0
    %2157 = vmatpush1.msra.mxu0 0.0
    %2158 = vmatprep.subr.mxu0 0.0
    %2159 = vmatpush1.msra.mxu0 0.0
    %2160 = vmatprep.subr.mxu0 0.0
    %2161 = vmatpush1.msra.mxu0 0.0
    %2162 = vmatprep.subr.mxu0 0.0
    %2163 = vmatpush1.msra.mxu0 0.0
    %2164 = vmatprep.subr.mxu0 0.0
    %2165 = vmatpush1.msra.mxu0 0.0
    %2166 = vmatprep.subr.mxu0 0.0
    %2167 = vmatpush1.msra.mxu0 0.0
    %2168 = vmatprep.subr.mxu0 0.0
    %2169 = vmatpush1.msra.mxu0 0.0
    %2170 = vmatprep.subr.mxu0 0.0
    %2171 = vmatpush1.msra.mxu0 0.0
    %2172 = vmatprep.mubr.f32.mxu0 0.0
    %2173 = vmatmul.mubr.f32.gmra.mrb[0].mxu0 %v2103
    %v2174 = vpop.f32.mrb[0].mxu0
    %v2175 = vadd.f32 %v2100, %v2174
    %v2176 = vpop.f32.mrb[0].mxu0
    %2177 = vmatprep.mubr.f32.mxu0 0.0
    %2178 = vmatmul.mubr.f32.gmra.mrb[0].mxu0 %v2106
    %v2179 = vpop.f32.mrb[0].mxu0
    %v2180 = vadd.f32 %v2100, %v2179
    %v2181 = vpop.f32.mrb[0].mxu0
    %2182 = vdwg.mxu0
    %v2183 = vmul.f32 %v2175, 0.5
    %v2184 = vmul.f32 %v2180, 0.5
    %v2185 = vmul.f32 %v2175, 0.70710677
    %v2186 = vmul.f32 %v2180, 0.70710677
    %v2187 = verf.f32.pop %v2185
    %v2188 = verf.f32.pop %v2186
    %v2189 = vadd.f32 %v2187, 1.0
    %v2190 = vadd.f32 %v2188, 1.0
    %v2191 = vmul.f32 %v2183, %v2189
    %v2192 = vmul.f32 %v2184, %v2190
    %v2193 = vld [vmem:[%s37] sm:$0xff]
    %v2194 = vld [vmem:[%s37 + $0x8] sm:$0xff]
    %v2195 = vld [vmem:[%s37 + $0x10] sm:$0xff]
    %v2196 = vld [vmem:[%s37 + $0x18] sm:$0xff]
    %v2197 = vld [vmem:[%s37 + $0x20] sm:$0xff]
    %v2198 = vld [vmem:[%s37 + $0x28] sm:$0xff]
    %v2199 = vld [vmem:[%s37 + $0x30] sm:$0xff]
    %v2200 = vld [vmem:[%s37 + $0x38] sm:$0xff]
    %v2201 = vld [vmem:[%s39] sm:$0x1]
    %v2203 = vlaneseq
    %v2204 = vshrl.u32 %v2203, 7
    %v2205 = vsub.s32 0, %v2204
    %v2206 = vrot.slane %v2201, %v2205
    %v2209 = vsel %vm327, %v2191, 0
    %v2212 = vsel %vm327, %v2192, 0
    %2214 = vmatprep.subr.mxu0 0.0
    %2215 = vmatpush1.msra.mxu0 %v2193
    %2216 = vmatprep.subr.mxu0 0.0
    %2217 = vmatpush1.msra.mxu0 %v2194
    %2218 = vmatprep.subr.mxu0 0.0
    %2219 = vmatpush1.msra.mxu0 %v2195
    %2220 = vmatprep.subr.mxu0 0.0
    %2221 = vmatpush1.msra.mxu0 %v2196
    %2222 = vmatprep.subr.mxu0 0.0
    %2223 = vmatpush1.msra.mxu0 %v2197
    %2224 = vmatprep.subr.mxu0 0.0
    %2225 = vmatpush1.msra.mxu0 %v2198
    %2226 = vmatprep.subr.mxu0 0.0
    %2227 = vmatpush1.msra.mxu0 %v2199
    %2228 = vmatprep.subr.mxu0 0.0
    %2229 = vmatpush1.msra.mxu0 %v2200
    %2230 = vmatprep.subr.mxu0 0.0
    %2231 = vmatpush1.msra.mxu0 0.0
    %2232 = vmatprep.subr.mxu0 0.0
    %2233 = vmatpush1.msra.mxu0 0.0
    %2234 = vmatprep.subr.mxu0 0.0
    %2235 = vmatpush1.msra.mxu0 0.0
    %2236 = vmatprep.subr.mxu0 0.0
    %2237 = vmatpush1.msra.mxu0 0.0
    %2238 = vmatprep.subr.mxu0 0.0
    %2239 = vmatpush1.msra.mxu0 0.0
    %2240 = vmatprep.subr.mxu0 0.0
    %2241 = vmatpush1.msra.mxu0 0.0
    %2242 = vmatprep.subr.mxu0 0.0
    %2243 = vmatpush1.msra.mxu0 0.0
    %2244 = vmatprep.subr.mxu0 0.0
    %2245 = vmatpush1.msra.mxu0 0.0
    %2246 = vmatprep.subr.mxu0 0.0
    %2247 = vmatpush1.msra.mxu0 0.0
    %2248 = vmatprep.subr.mxu0 0.0
    %2249 = vmatpush1.msra.mxu0 0.0
    %2250 = vmatprep.subr.mxu0 0.0
    %2251 = vmatpush1.msra.mxu0 0.0
    %2252 = vmatprep.subr.mxu0 0.0
    %2253 = vmatpush1.msra.mxu0 0.0
    %2254 = vmatprep.subr.mxu0 0.0
    %2255 = vmatpush1.msra.mxu0 0.0
    %2256 = vmatprep.subr.mxu0 0.0
    %2257 = vmatpush1.msra.mxu0 0.0
    %2258 = vmatprep.subr.mxu0 0.0
    %2259 = vmatpush1.msra.mxu0 0.0
    %2260 = vmatprep.subr.mxu0 0.0
    %2261 = vmatpush1.msra.mxu0 0.0
    %2262 = vmatprep.subr.mxu0 0.0
    %2263 = vmatpush1.msra.mxu0 0.0
    %2264 = vmatprep.subr.mxu0 0.0
    %2265 = vmatpush1.msra.mxu0 0.0
    %2266 = vmatprep.subr.mxu0 0.0
    %2267 = vmatpush1.msra.mxu0 0.0
    %2268 = vmatprep.subr.mxu0 0.0
    %2269 = vmatpush1.msra.mxu0 0.0
    %2270 = vmatprep.subr.mxu0 0.0
    %2271 = vmatpush1.msra.mxu0 0.0
    %2272 = vmatprep.subr.mxu0 0.0
    %2273 = vmatpush1.msra.mxu0 0.0
    %2274 = vmatprep.subr.mxu0 0.0
    %2275 = vmatpush1.msra.mxu0 0.0
    %2276 = vmatprep.subr.mxu0 0.0
    %2277 = vmatpush1.msra.mxu0 0.0
    %2278 = vmatprep.mubr.f32.mxu0 0.0
    %2279 = vmatmul.mubr.f32.gmra.mrb[0].mxu0 %v2209
    %v2280 = vpop.f32.mrb[0].mxu0
    %v2281 = vadd.f32 %v2206, %v2280
    %v2282 = vpop.f32.mrb[0].mxu0
    %2283 = vmatprep.mubr.f32.mxu0 0.0
    %2284 = vmatmul.mubr.f32.gmra.mrb[0].mxu0 %v2212
    %v2285 = vpop.f32.mrb[0].mxu0
    %v2286 = vadd.f32 %v2206, %v2285
    %v2287 = vpop.f32.mrb[0].mxu0
    %2288 = vdwg.mxu0
    %v2289 = vadd.f32 %v2281, %v2089
    %v2290 = vadd.f32 %v2286, %v2090
    %v2291 = vld [vmem:[%s41] sm:$0x1]
    %v2292 = vld [vmem:[%s43] sm:$0x1]
    %v2293 = vsel %vm321, %v2289, 0.0
    %2294 = vadd.xlane.f32.xlu0 %v2293
    %v2295 = vpop.xlane.xlu0 %2294
    %v2296 = vsel %vm321, %v2290, 0.0
    %2297 = vadd.xlane.f32.xlu0 %v2296
    %v2298 = vpop.xlane.xlu0 %2297
    %v2299 = vmul.f32 %v2295, %v419
    %v2300 = vmul.f32 %v2298, %v419
    %v2301 = vsub.f32 %v2289, %v2299
    %v2302 = vsub.f32 %v2290, %v2300
    %v2303 = vmul.f32 %v2301, %v2301
    %v2304 = vmul.f32 %v2302, %v2302
    %v2305 = vsel %vm321, %v2303, 0.0
    %2306 = vadd.xlane.f32.xlu0 %v2305
    %v2307 = vpop.xlane.xlu0 %2306
    %v2308 = vsel %vm321, %v2304, 0.0
    %2309 = vadd.xlane.f32.xlu0 %v2308
    %v2310 = vpop.xlane.xlu0 %2309
    %v2311 = vmul.f32 %v2307, %v419
    %v2312 = vmul.f32 %v2310, %v419
    %v2313 = vadd.f32 %v2311, 1e-12
    %v2314 = vadd.f32 %v2312, 1e-12
    %v2315 = vrsqrt.pop %v2313
    %v2316 = vrsqrt.pop %v2314
    %v2317 = vmul.f32 %v2301, %v2315
    %v2318 = vmul.f32 %v2302, %v2316
    %v2320 = vlaneseq
    %v2321 = vshrl.u32 %v2320, 7
    %v2322 = vsub.s32 0, %v2321
    %v2323 = vrot.slane %v2291, %v2322
    %v2325 = vmul.f32 %v2317, %v2323
    %v2326 = vmul.f32 %v2318, %v2323
    %v2328 = vlaneseq
    %v2329 = vshrl.u32 %v2328, 7
    %v2330 = vsub.s32 0, %v2329
    %v2331 = vrot.slane %v2292, %v2330
    %v2333 = vadd.f32 %v2325, %v2331
    %v2334 = vadd.f32 %v2326, %v2331
    %s2335 = scalar_lea.vmem %s21, 32
    %v2336 = vld [vmem:[%s2335] sm:$0xff]
    %v2337 = vld [vmem:[%s2335 + $0x8] sm:$0xff]
    %v2338 = vld [vmem:[%s2335 + $0x10] sm:$0xff]
    %v2339 = vld [vmem:[%s2335 + $0x18] sm:$0xff]
    %s2340 = scalar_lea.vmem %s23, 1
    %v2341 = vld [vmem:[%s2340] sm:$0x1]
    %v2343 = vlaneseq
    %v2344 = vshrl.u32 %v2343, 7
    %v2345 = vsub.s32 0, %v2344
    %v2346 = vrot.slane %v2341, %v2345
    %v2349 = vsel %vm321, %v2333, 0
    %v2352 = vsel %vm321, %v2334, 0
    %2354 = vmatprep.subr.mxu0 0.0
    %2355 = vmatpush1.msra.mxu0 %v2336
    %2356 = vmatprep.subr.mxu0 0.0
    %2357 = vmatpush1.msra.mxu0 %v2337
    %2358 = vmatprep.subr.mxu0 0.0
    %2359 = vmatpush1.msra.mxu0 %v2338
    %2360 = vmatprep.subr.mxu0 0.0
    %2361 = vmatpush1.msra.mxu0 %v2339
    %2362 = vmatprep.subr.mxu0 0.0
    %2363 = vmatpush1.msra.mxu0 0.0
    %2364 = vmatprep.subr.mxu0 0.0
    %2365 = vmatpush1.msra.mxu0 0.0
    %2366 = vmatprep.subr.mxu0 0.0
    %2367 = vmatpush1.msra.mxu0 0.0
    %2368 = vmatprep.subr.mxu0 0.0
    %2369 = vmatpush1.msra.mxu0 0.0
    %2370 = vmatprep.subr.mxu0 0.0
    %2371 = vmatpush1.msra.mxu0 0.0
    %2372 = vmatprep.subr.mxu0 0.0
    %2373 = vmatpush1.msra.mxu0 0.0
    %2374 = vmatprep.subr.mxu0 0.0
    %2375 = vmatpush1.msra.mxu0 0.0
    %2376 = vmatprep.subr.mxu0 0.0
    %2377 = vmatpush1.msra.mxu0 0.0
    %2378 = vmatprep.subr.mxu0 0.0
    %2379 = vmatpush1.msra.mxu0 0.0
    %2380 = vmatprep.subr.mxu0 0.0
    %2381 = vmatpush1.msra.mxu0 0.0
    %2382 = vmatprep.subr.mxu0 0.0
    %2383 = vmatpush1.msra.mxu0 0.0
    %2384 = vmatprep.subr.mxu0 0.0
    %2385 = vmatpush1.msra.mxu0 0.0
    %2386 = vmatprep.subr.mxu0 0.0
    %2387 = vmatpush1.msra.mxu0 0.0
    %2388 = vmatprep.subr.mxu0 0.0
    %2389 = vmatpush1.msra.mxu0 0.0
    %2390 = vmatprep.subr.mxu0 0.0
    %2391 = vmatpush1.msra.mxu0 0.0
    %2392 = vmatprep.subr.mxu0 0.0
    %2393 = vmatpush1.msra.mxu0 0.0
    %2394 = vmatprep.subr.mxu0 0.0
    %2395 = vmatpush1.msra.mxu0 0.0
    %2396 = vmatprep.subr.mxu0 0.0
    %2397 = vmatpush1.msra.mxu0 0.0
    %2398 = vmatprep.subr.mxu0 0.0
    %2399 = vmatpush1.msra.mxu0 0.0
    %2400 = vmatprep.subr.mxu0 0.0
    %2401 = vmatpush1.msra.mxu0 0.0
    %2402 = vmatprep.subr.mxu0 0.0
    %2403 = vmatpush1.msra.mxu0 0.0
    %2404 = vmatprep.subr.mxu0 0.0
    %2405 = vmatpush1.msra.mxu0 0.0
    %2406 = vmatprep.subr.mxu0 0.0
    %2407 = vmatpush1.msra.mxu0 0.0
    %2408 = vmatprep.subr.mxu0 0.0
    %2409 = vmatpush1.msra.mxu0 0.0
    %2410 = vmatprep.subr.mxu0 0.0
    %2411 = vmatpush1.msra.mxu0 0.0
    %2412 = vmatprep.subr.mxu0 0.0
    %2413 = vmatpush1.msra.mxu0 0.0
    %2414 = vmatprep.subr.mxu0 0.0
    %2415 = vmatpush1.msra.mxu0 0.0
    %2416 = vmatprep.subr.mxu0 0.0
    %2417 = vmatpush1.msra.mxu0 0.0
    %2418 = vmatprep.mubr.f32.mxu0 0.0
    %2419 = vmatmul.mubr.f32.gmra.mrb[0].mxu0 %v2349
    %v2420 = vpop.f32.mrb[0].mxu0
    %v2421 = vadd.f32 %v2346, %v2420
    %v2422 = vpop.f32.mrb[0].mxu0
    %2423 = vmatprep.mubr.f32.mxu0 0.0
    %2424 = vmatmul.mubr.f32.gmra.mrb[0].mxu0 %v2352
    %v2425 = vpop.f32.mrb[0].mxu0
    %v2426 = vadd.f32 %v2346, %v2425
    %v2427 = vpop.f32.mrb[0].mxu0
    %2428 = vdwg.mxu0
    %2429 = vst.msk [vmem:[#allocation2] sm:$0xff] %vm556, %v2421
    %2430 = vst.msk [vmem:[#allocation2 + $0x8] sm:$0xff] %vm556, %v2426
    %v2431 = vld [vmem:[#allocation2] sm:$0xff]
    %2433 = vrot.lane.b32.xlu0 %v2431, 96
    %v2434 = vpop.permute.xlu0 %2433
    %v2435 = vsel %vm563, %v2431, 0
    %v2437 = vsel %vm563, %v2434, 0
    %2439 = vmatprep.subr.mxu0 0.0
    %2440 = vmatpush1.xpose.msra.mxu0 %v2437
    %2441 = vmatprep.subr.mxu0 0.0
    %2442 = vmatpush1.xpose.msra.mxu0 0.0
    %2443 = vmatprep.subr.mxu0 0.0
    %2444 = vmatpush1.xpose.msra.mxu0 0.0
    %2445 = vmatprep.subr.mxu0 0.0
    %2446 = vmatpush1.xpose.msra.mxu0 0.0
    %2447 = vmatprep.subr.mxu0 0.0
    %2448 = vmatpush1.xpose.msra.mxu0 0.0
    %2449 = vmatprep.subr.mxu0 0.0
    %2450 = vmatpush1.xpose.msra.mxu0 0.0
    %2451 = vmatprep.subr.mxu0 0.0
    %2452 = vmatpush1.xpose.msra.mxu0 0.0
    %2453 = vmatprep.subr.mxu0 0.0
    %2454 = vmatpush1.xpose.msra.mxu0 0.0
    %2455 = vmatprep.subr.mxu0 0.0
    %2456 = vmatpush1.xpose.msra.mxu0 0.0
    %2457 = vmatprep.subr.mxu0 0.0
    %2458 = vmatpush1.xpose.msra.mxu0 0.0
    %2459 = vmatprep.subr.mxu0 0.0
    %2460 = vmatpush1.xpose.msra.mxu0 0.0
    %2461 = vmatprep.subr.mxu0 0.0
    %2462 = vmatpush1.xpose.msra.mxu0 0.0
    %2463 = vmatprep.subr.mxu0 0.0
    %2464 = vmatpush1.xpose.msra.mxu0 0.0
    %2465 = vmatprep.subr.mxu0 0.0
    %2466 = vmatpush1.xpose.msra.mxu0 0.0
    %2467 = vmatprep.subr.mxu0 0.0
    %2468 = vmatpush1.xpose.msra.mxu0 0.0
    %2469 = vmatprep.subr.mxu0 0.0
    %2470 = vmatpush1.xpose.msra.mxu0 0.0
    %2471 = vmatprep.subr.mxu0 0.0
    %2472 = vmatpush1.xpose.msra.mxu0 0.0
    %2473 = vmatprep.subr.mxu0 0.0
    %2474 = vmatpush1.xpose.msra.mxu0 0.0
    %2475 = vmatprep.subr.mxu0 0.0
    %2476 = vmatpush1.xpose.msra.mxu0 0.0
    %2477 = vmatprep.subr.mxu0 0.0
    %2478 = vmatpush1.xpose.msra.mxu0 0.0
    %2479 = vmatprep.subr.mxu0 0.0
    %2480 = vmatpush1.xpose.msra.mxu0 0.0
    %2481 = vmatprep.subr.mxu0 0.0
    %2482 = vmatpush1.xpose.msra.mxu0 0.0
    %2483 = vmatprep.subr.mxu0 0.0
    %2484 = vmatpush1.xpose.msra.mxu0 0.0
    %2485 = vmatprep.subr.mxu0 0.0
    %2486 = vmatpush1.xpose.msra.mxu0 0.0
    %2487 = vmatprep.subr.mxu0 0.0
    %2488 = vmatpush1.xpose.msra.mxu0 0.0
    %2489 = vmatprep.subr.mxu0 0.0
    %2490 = vmatpush1.xpose.msra.mxu0 0.0
    %2491 = vmatprep.subr.mxu0 0.0
    %2492 = vmatpush1.xpose.msra.mxu0 0.0
    %2493 = vmatprep.subr.mxu0 0.0
    %2494 = vmatpush1.xpose.msra.mxu0 0.0
    %2495 = vmatprep.subr.mxu0 0.0
    %2496 = vmatpush1.xpose.msra.mxu0 0.0
    %2497 = vmatprep.subr.mxu0 0.0
    %2498 = vmatpush1.xpose.msra.mxu0 0.0
    %2499 = vmatprep.subr.mxu0 0.0
    %2500 = vmatpush1.xpose.msra.mxu0 0.0
    %2501 = vmatprep.subr.mxu0 0.0
    %2502 = vmatpush1.xpose.msra.mxu0 0.0
    %2503 = vmatprep.mubr.f32.mxu0 0.0
    %2504 = vmatmul.mubr.f32.gmra.mrb[0].mxu0 %v2435
    %v2505 = vpop.f32.mrb[0].mxu0
    %v2506 = vadd.f32 0.0, %v2505
    %v2507 = vpop.f32.mrb[0].mxu0
    %2508 = vdwg.mxu0
    %v2509 = vmul.f32 %v2506, 0.35355338
    %v2510 = vadd.f32 %v2509, %v642
    %v2511 = vsel %vm563, %v2510, -inf
    %2512 = vmax.xlane.f32.xlu0 %v2511
    %v2513 = vpop.xlane.xlu0 %2512
    %v2514 = vsub.f32 %v2510, %v2513
    %v2515 = vmul.f32 %v2514, 1.442695
    %v2516 = vpow.pop %v2515
    %v2517 = vsel %vm563, %v2516, 0.0
    %2518 = vadd.xlane.f32.xlu0 %v2517
    %v2519 = vpop.xlane.xlu0 %2518
    %v2520 = vrcp.pop %v2519
    %v2521 = vmul.f32 %v2516, %v2520
    %2522 = vrot.lane.b32.xlu0 %v2431, 64
    %v2523 = vpop.permute.xlu0 %2522
    %v2526 = vsel %vm563, %v2521, 0
    %2528 = vmatprep.subr.mxu0 0.0
    %2529 = vmatpush1.msra.mxu0 %v2523
    %2530 = vmatprep.subr.mxu0 0.0
    %2531 = vmatpush1.msra.mxu0 0.0
    %2532 = vmatprep.subr.mxu0 0.0
    %2533 = vmatpush1.msra.mxu0 0.0
    %2534 = vmatprep.subr.mxu0 0.0
    %2535 = vmatpush1.msra.mxu0 0.0
    %2536 = vmatprep.subr.mxu0 0.0
    %2537 = vmatpush1.msra.mxu0 0.0
    %2538 = vmatprep.subr.mxu0 0.0
    %2539 = vmatpush1.msra.mxu0 0.0
    %2540 = vmatprep.subr.mxu0 0.0
    %2541 = vmatpush1.msra.mxu0 0.0
    %2542 = vmatprep.subr.mxu0 0.0
    %2543 = vmatpush1.msra.mxu0 0.0
    %2544 = vmatprep.subr.mxu0 0.0
    %2545 = vmatpush1.msra.mxu0 0.0
    %2546 = vmatprep.subr.mxu0 0.0
    %2547 = vmatpush1.msra.mxu0 0.0
    %2548 = vmatprep.subr.mxu0 0.0
    %2549 = vmatpush1.msra.mxu0 0.0
    %2550 = vmatprep.subr.mxu0 0.0
    %2551 = vmatpush1.msra.mxu0 0.0
    %2552 = vmatprep.subr.mxu0 0.0
    %2553 = vmatpush1.msra.mxu0 0.0
    %2554 = vmatprep.subr.mxu0 0.0
    %2555 = vmatpush1.msra.mxu0 0.0
    %2556 = vmatprep.subr.mxu0 0.0
    %2557 = vmatpush1.msra.mxu0 0.0
    %2558 = vmatprep.subr.mxu0 0.0
    %2559 = vmatpush1.msra.mxu0 0.0
    %2560 = vmatprep.subr.mxu0 0.0
    %2561 = vmatpush1.msra.mxu0 0.0
    %2562 = vmatprep.subr.mxu0 0.0
    %2563 = vmatpush1.msra.mxu0 0.0
    %2564 = vmatprep.subr.mxu0 0.0
    %2565 = vmatpush1.msra.mxu0 0.0
    %2566 = vmatprep.subr.mxu0 0.0
    %2567 = vmatpush1.msra.mxu0 0.0
    %2568 = vmatprep.subr.mxu0 0.0
    %2569 = vmatpush1.msra.mxu0 0.0
    %2570 = vmatprep.subr.mxu0 0.0
    %2571 = vmatpush1.msra.mxu0 0.0
    %2572 = vmatprep.subr.mxu0 0.0
    %2573 = vmatpush1.msra.mxu0 0.0
    %2574 = vmatprep.subr.mxu0 0.0
    %2575 = vmatpush1.msra.mxu0 0.0
    %2576 = vmatprep.subr.mxu0 0.0
    %2577 = vmatpush1.msra.mxu0 0.0
    %2578 = vmatprep.subr.mxu0 0.0
    %2579 = vmatpush1.msra.mxu0 0.0
    %2580 = vmatprep.subr.mxu0 0.0
    %2581 = vmatpush1.msra.mxu0 0.0
    %2582 = vmatprep.subr.mxu0 0.0
    %2583 = vmatpush1.msra.mxu0 0.0
    %2584 = vmatprep.subr.mxu0 0.0
    %2585 = vmatpush1.msra.mxu0 0.0
    %2586 = vmatprep.subr.mxu0 0.0
    %2587 = vmatpush1.msra.mxu0 0.0
    %2588 = vmatprep.subr.mxu0 0.0
    %2589 = vmatpush1.msra.mxu0 0.0
    %2590 = vmatprep.subr.mxu0 0.0
    %2591 = vmatpush1.msra.mxu0 0.0
    %2592 = vmatprep.mubr.f32.mxu0 0.0
    %2593 = vmatmul.mubr.f32.gmra.mrb[0].mxu0 %v2526
    %v2594 = vpop.f32.mrb[0].mxu0
    %v2595 = vadd.f32 0.0, %v2594
    %v2596 = vpop.f32.mrb[0].mxu0
    %2597 = vdwg.mxu0
    %2598 = vst.msk [vmem:[#allocation3] sm:$0xff] %vm563, %v2595
    %v2599 = vld [vmem:[#allocation2] sm:$0xff]
    %2601 = vrot.lane.b32.xlu0 %v2599, 120
    %v2602 = vpop.permute.xlu0 %2601
    %2603 = vrot.lane.b32.xlu0 %v2599, 88
    %v2604 = vpop.permute.xlu0 %2603
    %v2605 = vsel %vm563, %v2602, 0
    %v2607 = vsel %vm563, %v2604, 0
    %2609 = vmatprep.subr.mxu0 0.0
    %2610 = vmatpush1.xpose.msra.mxu0 %v2607
    %2611 = vmatprep.subr.mxu0 0.0
    %2612 = vmatpush1.xpose.msra.mxu0 0.0
    %2613 = vmatprep.subr.mxu0 0.0
    %2614 = vmatpush1.xpose.msra.mxu0 0.0
    %2615 = vmatprep.subr.mxu0 0.0
    %2616 = vmatpush1.xpose.msra.mxu0 0.0
    %2617 = vmatprep.subr.mxu0 0.0
    %2618 = vmatpush1.xpose.msra.mxu0 0.0
    %2619 = vmatprep.subr.mxu0 0.0
    %2620 = vmatpush1.xpose.msra.mxu0 0.0
    %2621 = vmatprep.subr.mxu0 0.0
    %2622 = vmatpush1.xpose.msra.mxu0 0.0
    %2623 = vmatprep.subr.mxu0 0.0
    %2624 = vmatpush1.xpose.msra.mxu0 0.0
    %2625 = vmatprep.subr.mxu0 0.0
    %2626 = vmatpush1.xpose.msra.mxu0 0.0
    %2627 = vmatprep.subr.mxu0 0.0
    %2628 = vmatpush1.xpose.msra.mxu0 0.0
    %2629 = vmatprep.subr.mxu0 0.0
    %2630 = vmatpush1.xpose.msra.mxu0 0.0
    %2631 = vmatprep.subr.mxu0 0.0
    %2632 = vmatpush1.xpose.msra.mxu0 0.0
    %2633 = vmatprep.subr.mxu0 0.0
    %2634 = vmatpush1.xpose.msra.mxu0 0.0
    %2635 = vmatprep.subr.mxu0 0.0
    %2636 = vmatpush1.xpose.msra.mxu0 0.0
    %2637 = vmatprep.subr.mxu0 0.0
    %2638 = vmatpush1.xpose.msra.mxu0 0.0
    %2639 = vmatprep.subr.mxu0 0.0
    %2640 = vmatpush1.xpose.msra.mxu0 0.0
    %2641 = vmatprep.subr.mxu0 0.0
    %2642 = vmatpush1.xpose.msra.mxu0 0.0
    %2643 = vmatprep.subr.mxu0 0.0
    %2644 = vmatpush1.xpose.msra.mxu0 0.0
    %2645 = vmatprep.subr.mxu0 0.0
    %2646 = vmatpush1.xpose.msra.mxu0 0.0
    %2647 = vmatprep.subr.mxu0 0.0
    %2648 = vmatpush1.xpose.msra.mxu0 0.0
    %2649 = vmatprep.subr.mxu0 0.0
    %2650 = vmatpush1.xpose.msra.mxu0 0.0
    %2651 = vmatprep.subr.mxu0 0.0
    %2652 = vmatpush1.xpose.msra.mxu0 0.0
    %2653 = vmatprep.subr.mxu0 0.0
    %2654 = vmatpush1.xpose.msra.mxu0 0.0
    %2655 = vmatprep.subr.mxu0 0.0
    %2656 = vmatpush1.xpose.msra.mxu0 0.0
    %2657 = vmatprep.subr.mxu0 0.0
    %2658 = vmatpush1.xpose.msra.mxu0 0.0
    %2659 = vmatprep.subr.mxu0 0.0
    %2660 = vmatpush1.xpose.msra.mxu0 0.0
    %2661 = vmatprep.subr.mxu0 0.0
    %2662 = vmatpush1.xpose.msra.mxu0 0.0
    %2663 = vmatprep.subr.mxu0 0.0
    %2664 = vmatpush1.xpose.msra.mxu0 0.0
    %2665 = vmatprep.subr.mxu0 0.0
    %2666 = vmatpush1.xpose.msra.mxu0 0.0
    %2667 = vmatprep.subr.mxu0 0.0
    %2668 = vmatpush1.xpose.msra.mxu0 0.0
    %2669 = vmatprep.subr.mxu0 0.0
    %2670 = vmatpush1.xpose.msra.mxu0 0.0
    %2671 = vmatprep.subr.mxu0 0.0
    %2672 = vmatpush1.xpose.msra.mxu0 0.0
    %2673 = vmatprep.mubr.f32.mxu0 0.0
    %2674 = vmatmul.mubr.f32.gmra.mrb[0].mxu0 %v2605
    %v2675 = vpop.f32.mrb[0].mxu0
    %v2676 = vadd.f32 0.0, %v2675
    %v2677 = vpop.f32.mrb[0].mxu0
    %2678 = vdwg.mxu0
    %v2679 = vmul.f32 %v2676, 0.35355338
    %v2680 = vadd.f32 %v2679, %v642
    %v2681 = vsel %vm563, %v2680, -inf
    %2682 = vmax.xlane.f32.xlu0 %v2681
    %v2683 = vpop.xlane.xlu0 %2682
    %v2684 = vsub.f32 %v2680, %v2683
    %v2685 = vmul.f32 %v2684, 1.442695
    %v2686 = vpow.pop %v2685
    %v2687 = vsel %vm563, %v2686, 0.0
    %2688 = vadd.xlane.f32.xlu0 %v2687
    %v2689 = vpop.xlane.xlu0 %2688
    %v2690 = vrcp.pop %v2689
    %v2691 = vmul.f32 %v2686, %v2690
    %2692 = vrot.lane.b32.xlu0 %v2599, 56
    %v2693 = vpop.permute.xlu0 %2692
    %v2696 = vsel %vm563, %v2691, 0
    %2698 = vmatprep.subr.mxu0 0.0
    %2699 = vmatpush1.msra.mxu0 %v2693
    %2700 = vmatprep.subr.mxu0 0.0
    %2701 = vmatpush1.msra.mxu0 0.0
    %2702 = vmatprep.subr.mxu0 0.0
    %2703 = vmatpush1.msra.mxu0 0.0
    %2704 = vmatprep.subr.mxu0 0.0
    %2705 = vmatpush1.msra.mxu0 0.0
    %2706 = vmatprep.subr.mxu0 0.0
    %2707 = vmatpush1.msra.mxu0 0.0
    %2708 = vmatprep.subr.mxu0 0.0
    %2709 = vmatpush1.msra.mxu0 0.0
    %2710 = vmatprep.subr.mxu0 0.0
    %2711 = vmatpush1.msra.mxu0 0.0
    %2712 = vmatprep.subr.mxu0 0.0
    %2713 = vmatpush1.msra.mxu0 0.0
    %2714 = vmatprep.subr.mxu0 0.0
    %2715 = vmatpush1.msra.mxu0 0.0
    %2716 = vmatprep.subr.mxu0 0.0
    %2717 = vmatpush1.msra.mxu0 0.0
    %2718 = vmatprep.subr.mxu0 0.0
    %2719 = vmatpush1.msra.mxu0 0.0
    %2720 = vmatprep.subr.mxu0 0.0
    %2721 = vmatpush1.msra.mxu0 0.0
    %2722 = vmatprep.subr.mxu0 0.0
    %2723 = vmatpush1.msra.mxu0 0.0
    %2724 = vmatprep.subr.mxu0 0.0
    %2725 = vmatpush1.msra.mxu0 0.0
    %2726 = vmatprep.subr.mxu0 0.0
    %2727 = vmatpush1.msra.mxu0 0.0
    %2728 = vmatprep.subr.mxu0 0.0
    %2729 = vmatpush1.msra.mxu0 0.0
    %2730 = vmatprep.subr.mxu0 0.0
    %2731 = vmatpush1.msra.mxu0 0.0
    %2732 = vmatprep.subr.mxu0 0.0
    %2733 = vmatpush1.msra.mxu0 0.0
    %2734 = vmatprep.subr.mxu0 0.0
    %2735 = vmatpush1.msra.mxu0 0.0
    %2736 = vmatprep.subr.mxu0 0.0
    %2737 = vmatpush1.msra.mxu0 0.0
    %2738 = vmatprep.subr.mxu0 0.0
    %2739 = vmatpush1.msra.mxu0 0.0
    %2740 = vmatprep.subr.mxu0 0.0
    %2741 = vmatpush1.msra.mxu0 0.0
    %2742 = vmatprep.subr.mxu0 0.0
    %2743 = vmatpush1.msra.mxu0 0.0
    %2744 = vmatprep.subr.mxu0 0.0
    %2745 = vmatpush1.msra.mxu0 0.0
    %2746 = vmatprep.subr.mxu0 0.0
    %2747 = vmatpush1.msra.mxu0 0.0
    %2748 = vmatprep.subr.mxu0 0.0
    %2749 = vmatpush1.msra.mxu0 0.0
    %2750 = vmatprep.subr.mxu0 0.0
    %2751 = vmatpush1.msra.mxu0 0.0
    %2752 = vmatprep.subr.mxu0 0.0
    %2753 = vmatpush1.msra.mxu0 0.0
    %2754 = vmatprep.subr.mxu0 0.0
    %2755 = vmatpush1.msra.mxu0 0.0
    %2756 = vmatprep.subr.mxu0 0.0
    %2757 = vmatpush1.msra.mxu0 0.0
    %2758 = vmatprep.subr.mxu0 0.0
    %2759 = vmatpush1.msra.mxu0 0.0
    %2760 = vmatprep.subr.mxu0 0.0
    %2761 = vmatpush1.msra.mxu0 0.0
    %2762 = vmatprep.mubr.f32.mxu0 0.0
    %2763 = vmatmul.mubr.f32.gmra.mrb[0].mxu0 %v2696
    %v2764 = vpop.f32.mrb[0].mxu0
    %v2765 = vadd.f32 0.0, %v2764
    %v2766 = vpop.f32.mrb[0].mxu0
    %2767 = vdwg.mxu0
    %2769 = vrot.lane.b32.xlu0 %v2765, 8
    %v2770 = vpop.permute.xlu0 %2769
    %2772 = vst.msk [vmem:[#allocation3] sm:$0xff] %vm905, %v2770
    %v2773 = vld [vmem:[#allocation2] sm:$0xff]
    %2775 = vrot.lane.b32.xlu0 %v2773, 112
    %v2776 = vpop.permute.xlu0 %2775
    %2777 = vrot.lane.b32.xlu0 %v2773, 80
    %v2778 = vpop.permute.xlu0 %2777
    %v2779 = vsel %vm563, %v2776, 0
    %v2781 = vsel %vm563, %v2778, 0
    %2783 = vmatprep.subr.mxu0 0.0
    %2784 = vmatpush1.xpose.msra.mxu0 %v2781
    %2785 = vmatprep.subr.mxu0 0.0
    %2786 = vmatpush1.xpose.msra.mxu0 0.0
    %2787 = vmatprep.subr.mxu0 0.0
    %2788 = vmatpush1.xpose.msra.mxu0 0.0
    %2789 = vmatprep.subr.mxu0 0.0
    %2790 = vmatpush1.xpose.msra.mxu0 0.0
    %2791 = vmatprep.subr.mxu0 0.0
    %2792 = vmatpush1.xpose.msra.mxu0 0.0
    %2793 = vmatprep.subr.mxu0 0.0
    %2794 = vmatpush1.xpose.msra.mxu0 0.0
    %2795 = vmatprep.subr.mxu0 0.0
    %2796 = vmatpush1.xpose.msra.mxu0 0.0
    %2797 = vmatprep.subr.mxu0 0.0
    %2798 = vmatpush1.xpose.msra.mxu0 0.0
    %2799 = vmatprep.subr.mxu0 0.0
    %2800 = vmatpush1.xpose.msra.mxu0 0.0
    %2801 = vmatprep.subr.mxu0 0.0
    %2802 = vmatpush1.xpose.msra.mxu0 0.0
    %2803 = vmatprep.subr.mxu0 0.0
    %2804 = vmatpush1.xpose.msra.mxu0 0.0
    %2805 = vmatprep.subr.mxu0 0.0
    %2806 = vmatpush1.xpose.msra.mxu0 0.0
    %2807 = vmatprep.subr.mxu0 0.0
    %2808 = vmatpush1.xpose.msra.mxu0 0.0
    %2809 = vmatprep.subr.mxu0 0.0
    %2810 = vmatpush1.xpose.msra.mxu0 0.0
    %2811 = vmatprep.subr.mxu0 0.0
    %2812 = vmatpush1.xpose.msra.mxu0 0.0
    %2813 = vmatprep.subr.mxu0 0.0
    %2814 = vmatpush1.xpose.msra.mxu0 0.0
    %2815 = vmatprep.subr.mxu0 0.0
    %2816 = vmatpush1.xpose.msra.mxu0 0.0
    %2817 = vmatprep.subr.mxu0 0.0
    %2818 = vmatpush1.xpose.msra.mxu0 0.0
    %2819 = vmatprep.subr.mxu0 0.0
    %2820 = vmatpush1.xpose.msra.mxu0 0.0
    %2821 = vmatprep.subr.mxu0 0.0
    %2822 = vmatpush1.xpose.msra.mxu0 0.0
    %2823 = vmatprep.subr.mxu0 0.0
    %2824 = vmatpush1.xpose.msra.mxu0 0.0
    %2825 = vmatprep.subr.mxu0 0.0
    %2826 = vmatpush1.xpose.msra.mxu0 0.0
    %2827 = vmatprep.subr.mxu0 0.0
    %2828 = vmatpush1.xpose.msra.mxu0 0.0
    %2829 = vmatprep.subr.mxu0 0.0
    %2830 = vmatpush1.xpose.msra.mxu0 0.0
    %2831 = vmatprep.subr.mxu0 0.0
    %2832 = vmatpush1.xpose.msra.mxu0 0.0
    %2833 = vmatprep.subr.mxu0 0.0
    %2834 = vmatpush1.xpose.msra.mxu0 0.0
    %2835 = vmatprep.subr.mxu0 0.0
    %2836 = vmatpush1.xpose.msra.mxu0 0.0
    %2837 = vmatprep.subr.mxu0 0.0
    %2838 = vmatpush1.xpose.msra.mxu0 0.0
    %2839 = vmatprep.subr.mxu0 0.0
    %2840 = vmatpush1.xpose.msra.mxu0 0.0
    %2841 = vmatprep.subr.mxu0 0.0
    %2842 = vmatpush1.xpose.msra.mxu0 0.0
    %2843 = vmatprep.subr.mxu0 0.0
    %2844 = vmatpush1.xpose.msra.mxu0 0.0
    %2845 = vmatprep.subr.mxu0 0.0
    %2846 = vmatpush1.xpose.msra.mxu0 0.0
    %2847 = vmatprep.mubr.f32.mxu0 0.0
    %2848 = vmatmul.mubr.f32.gmra.mrb[0].mxu0 %v2779
    %v2849 = vpop.f32.mrb[0].mxu0
    %v2850 = vadd.f32 0.0, %v2849
    %v2851 = vpop.f32.mrb[0].mxu0
    %2852 = vdwg.mxu0
    %v2853 = vmul.f32 %v2850, 0.35355338
    %v2854 = vadd.f32 %v2853, %v642
    %v2855 = vsel %vm563, %v2854, -inf
    %2856 = vmax.xlane.f32.xlu0 %v2855
    %v2857 = vpop.xlane.xlu0 %2856
    %v2858 = vsub.f32 %v2854, %v2857
    %v2859 = vmul.f32 %v2858, 1.442695
    %v2860 = vpow.pop %v2859
    %v2861 = vsel %vm563, %v2860, 0.0
    %2862 = vadd.xlane.f32.xlu0 %v2861
    %v2863 = vpop.xlane.xlu0 %2862
    %v2864 = vrcp.pop %v2863
    %v2865 = vmul.f32 %v2860, %v2864
    %2866 = vrot.lane.b32.xlu0 %v2773, 48
    %v2867 = vpop.permute.xlu0 %2866
    %v2870 = vsel %vm563, %v2865, 0
    %2872 = vmatprep.subr.mxu0 0.0
    %2873 = vmatpush1.msra.mxu0 %v2867
    %2874 = vmatprep.subr.mxu0 0.0
    %2875 = vmatpush1.msra.mxu0 0.0
    %2876 = vmatprep.subr.mxu0 0.0
    %2877 = vmatpush1.msra.mxu0 0.0
    %2878 = vmatprep.subr.mxu0 0.0
    %2879 = vmatpush1.msra.mxu0 0.0
    %2880 = vmatprep.subr.mxu0 0.0
    %2881 = vmatpush1.msra.mxu0 0.0
    %2882 = vmatprep.subr.mxu0 0.0
    %2883 = vmatpush1.msra.mxu0 0.0
    %2884 = vmatprep.subr.mxu0 0.0
    %2885 = vmatpush1.msra.mxu0 0.0
    %2886 = vmatprep.subr.mxu0 0.0
    %2887 = vmatpush1.msra.mxu0 0.0
    %2888 = vmatprep.subr.mxu0 0.0
    %2889 = vmatpush1.msra.mxu0 0.0
    %2890 = vmatprep.subr.mxu0 0.0
    %2891 = vmatpush1.msra.mxu0 0.0
    %2892 = vmatprep.subr.mxu0 0.0
    %2893 = vmatpush1.msra.mxu0 0.0
    %2894 = vmatprep.subr.mxu0 0.0
    %2895 = vmatpush1.msra.mxu0 0.0
    %2896 = vmatprep.subr.mxu0 0.0
    %2897 = vmatpush1.msra.mxu0 0.0
    %2898 = vmatprep.subr.mxu0 0.0
    %2899 = vmatpush1.msra.mxu0 0.0
    %2900 = vmatprep.subr.mxu0 0.0
    %2901 = vmatpush1.msra.mxu0 0.0
    %2902 = vmatprep.subr.mxu0 0.0
    %2903 = vmatpush1.msra.mxu0 0.0
    %2904 = vmatprep.subr.mxu0 0.0
    %2905 = vmatpush1.msra.mxu0 0.0
    %2906 = vmatprep.subr.mxu0 0.0
    %2907 = vmatpush1.msra.mxu0 0.0
    %2908 = vmatprep.subr.mxu0 0.0
    %2909 = vmatpush1.msra.mxu0 0.0
    %2910 = vmatprep.subr.mxu0 0.0
    %2911 = vmatpush1.msra.mxu0 0.0
    %2912 = vmatprep.subr.mxu0 0.0
    %2913 = vmatpush1.msra.mxu0 0.0
    %2914 = vmatprep.subr.mxu0 0.0
    %2915 = vmatpush1.msra.mxu0 0.0
    %2916 = vmatprep.subr.mxu0 0.0
    %2917 = vmatpush1.msra.mxu0 0.0
    %2918 = vmatprep.subr.mxu0 0.0
    %2919 = vmatpush1.msra.mxu0 0.0
    %2920 = vmatprep.subr.mxu0 0.0
    %2921 = vmatpush1.msra.mxu0 0.0
    %2922 = vmatprep.subr.mxu0 0.0
    %2923 = vmatpush1.msra.mxu0 0.0
    %2924 = vmatprep.subr.mxu0 0.0
    %2925 = vmatpush1.msra.mxu0 0.0
    %2926 = vmatprep.subr.mxu0 0.0
    %2927 = vmatpush1.msra.mxu0 0.0
    %2928 = vmatprep.subr.mxu0 0.0
    %2929 = vmatpush1.msra.mxu0 0.0
    %2930 = vmatprep.subr.mxu0 0.0
    %2931 = vmatpush1.msra.mxu0 0.0
    %2932 = vmatprep.subr.mxu0 0.0
    %2933 = vmatpush1.msra.mxu0 0.0
    %2934 = vmatprep.subr.mxu0 0.0
    %2935 = vmatpush1.msra.mxu0 0.0
    %2936 = vmatprep.mubr.f32.mxu0 0.0
    %2937 = vmatmul.mubr.f32.gmra.mrb[0].mxu0 %v2870
    %v2938 = vpop.f32.mrb[0].mxu0
    %v2939 = vadd.f32 0.0, %v2938
    %v2940 = vpop.f32.mrb[0].mxu0
    %2941 = vdwg.mxu0
    %2943 = vrot.lane.b32.xlu0 %v2939, 16
    %v2944 = vpop.permute.xlu0 %2943
    %2946 = vst.msk [vmem:[#allocation3] sm:$0xff] %vm1080, %v2944
    %v2947 = vld [vmem:[#allocation2] sm:$0xff]
    %2949 = vrot.lane.b32.xlu0 %v2947, 104
    %v2950 = vpop.permute.xlu0 %2949
    %2951 = vrot.lane.b32.xlu0 %v2947, 72
    %v2952 = vpop.permute.xlu0 %2951
    %v2953 = vsel %vm563, %v2950, 0
    %v2955 = vsel %vm563, %v2952, 0
    %2957 = vmatprep.subr.mxu0 0.0
    %2958 = vmatpush1.xpose.msra.mxu0 %v2955
    %2959 = vmatprep.subr.mxu0 0.0
    %2960 = vmatpush1.xpose.msra.mxu0 0.0
    %2961 = vmatprep.subr.mxu0 0.0
    %2962 = vmatpush1.xpose.msra.mxu0 0.0
    %2963 = vmatprep.subr.mxu0 0.0
    %2964 = vmatpush1.xpose.msra.mxu0 0.0
    %2965 = vmatprep.subr.mxu0 0.0
    %2966 = vmatpush1.xpose.msra.mxu0 0.0
    %2967 = vmatprep.subr.mxu0 0.0
    %2968 = vmatpush1.xpose.msra.mxu0 0.0
    %2969 = vmatprep.subr.mxu0 0.0
    %2970 = vmatpush1.xpose.msra.mxu0 0.0
    %2971 = vmatprep.subr.mxu0 0.0
    %2972 = vmatpush1.xpose.msra.mxu0 0.0
    %2973 = vmatprep.subr.mxu0 0.0
    %2974 = vmatpush1.xpose.msra.mxu0 0.0
    %2975 = vmatprep.subr.mxu0 0.0
    %2976 = vmatpush1.xpose.msra.mxu0 0.0
    %2977 = vmatprep.subr.mxu0 0.0
    %2978 = vmatpush1.xpose.msra.mxu0 0.0
    %2979 = vmatprep.subr.mxu0 0.0
    %2980 = vmatpush1.xpose.msra.mxu0 0.0
    %2981 = vmatprep.subr.mxu0 0.0
    %2982 = vmatpush1.xpose.msra.mxu0 0.0
    %2983 = vmatprep.subr.mxu0 0.0
    %2984 = vmatpush1.xpose.msra.mxu0 0.0
    %2985 = vmatprep.subr.mxu0 0.0
    %2986 = vmatpush1.xpose.msra.mxu0 0.0
    %2987 = vmatprep.subr.mxu0 0.0
    %2988 = vmatpush1.xpose.msra.mxu0 0.0
    %2989 = vmatprep.subr.mxu0 0.0
    %2990 = vmatpush1.xpose.msra.mxu0 0.0
    %2991 = vmatprep.subr.mxu0 0.0
    %2992 = vmatpush1.xpose.msra.mxu0 0.0
    %2993 = vmatprep.subr.mxu0 0.0
    %2994 = vmatpush1.xpose.msra.mxu0 0.0
    %2995 = vmatprep.subr.mxu0 0.0
    %2996 = vmatpush1.xpose.msra.mxu0 0.0
    %2997 = vmatprep.subr.mxu0 0.0
    %2998 = vmatpush1.xpose.msra.mxu0 0.0
    %2999 = vmatprep.subr.mxu0 0.0
    %3000 = vmatpush1.xpose.msra.mxu0 0.0
    %3001 = vmatprep.subr.mxu0 0.0
    %3002 = vmatpush1.xpose.msra.mxu0 0.0
    %3003 = vmatprep.subr.mxu0 0.0
    %3004 = vmatpush1.xpose.msra.mxu0 0.0
    %3005 = vmatprep.subr.mxu0 0.0
    %3006 = vmatpush1.xpose.msra.mxu0 0.0
    %3007 = vmatprep.subr.mxu0 0.0
    %3008 = vmatpush1.xpose.msra.mxu0 0.0
    %3009 = vmatprep.subr.mxu0 0.0
    %3010 = vmatpush1.xpose.msra.mxu0 0.0
    %3011 = vmatprep.subr.mxu0 0.0
    %3012 = vmatpush1.xpose.msra.mxu0 0.0
    %3013 = vmatprep.subr.mxu0 0.0
    %3014 = vmatpush1.xpose.msra.mxu0 0.0
    %3015 = vmatprep.subr.mxu0 0.0
    %3016 = vmatpush1.xpose.msra.mxu0 0.0
    %3017 = vmatprep.subr.mxu0 0.0
    %3018 = vmatpush1.xpose.msra.mxu0 0.0
    %3019 = vmatprep.subr.mxu0 0.0
    %3020 = vmatpush1.xpose.msra.mxu0 0.0
    %3021 = vmatprep.mubr.f32.mxu0 0.0
    %3022 = vmatmul.mubr.f32.gmra.mrb[0].mxu0 %v2953
    %v3023 = vpop.f32.mrb[0].mxu0
    %v3024 = vadd.f32 0.0, %v3023
    %v3025 = vpop.f32.mrb[0].mxu0
    %3026 = vdwg.mxu0
    %v3027 = vmul.f32 %v3024, 0.35355338
    %v3028 = vadd.f32 %v3027, %v642
    %v3029 = vsel %vm563, %v3028, -inf
    %3030 = vmax.xlane.f32.xlu0 %v3029
    %v3031 = vpop.xlane.xlu0 %3030
    %v3032 = vsub.f32 %v3028, %v3031
    %v3033 = vmul.f32 %v3032, 1.442695
    %v3034 = vpow.pop %v3033
    %v3035 = vsel %vm563, %v3034, 0.0
    %3036 = vadd.xlane.f32.xlu0 %v3035
    %v3037 = vpop.xlane.xlu0 %3036
    %v3038 = vrcp.pop %v3037
    %v3039 = vmul.f32 %v3034, %v3038
    %3040 = vrot.lane.b32.xlu0 %v2947, 40
    %v3041 = vpop.permute.xlu0 %3040
    %v3044 = vsel %vm563, %v3039, 0
    %3046 = vmatprep.subr.mxu0 0.0
    %3047 = vmatpush1.msra.mxu0 %v3041
    %3048 = vmatprep.subr.mxu0 0.0
    %3049 = vmatpush1.msra.mxu0 0.0
    %3050 = vmatprep.subr.mxu0 0.0
    %3051 = vmatpush1.msra.mxu0 0.0
    %3052 = vmatprep.subr.mxu0 0.0
    %3053 = vmatpush1.msra.mxu0 0.0
    %3054 = vmatprep.subr.mxu0 0.0
    %3055 = vmatpush1.msra.mxu0 0.0
    %3056 = vmatprep.subr.mxu0 0.0
    %3057 = vmatpush1.msra.mxu0 0.0
    %3058 = vmatprep.subr.mxu0 0.0
    %3059 = vmatpush1.msra.mxu0 0.0
    %3060 = vmatprep.subr.mxu0 0.0
    %3061 = vmatpush1.msra.mxu0 0.0
    %3062 = vmatprep.subr.mxu0 0.0
    %3063 = vmatpush1.msra.mxu0 0.0
    %3064 = vmatprep.subr.mxu0 0.0
    %3065 = vmatpush1.msra.mxu0 0.0
    %3066 = vmatprep.subr.mxu0 0.0
    %3067 = vmatpush1.msra.mxu0 0.0
    %3068 = vmatprep.subr.mxu0 0.0
    %3069 = vmatpush1.msra.mxu0 0.0
    %3070 = vmatprep.subr.mxu0 0.0
    %3071 = vmatpush1.msra.mxu0 0.0
    %3072 = vmatprep.subr.mxu0 0.0
    %3073 = vmatpush1.msra.mxu0 0.0
    %3074 = vmatprep.subr.mxu0 0.0
    %3075 = vmatpush1.msra.mxu0 0.0
    %3076 = vmatprep.subr.mxu0 0.0
    %3077 = vmatpush1.msra.mxu0 0.0
    %3078 = vmatprep.subr.mxu0 0.0
    %3079 = vmatpush1.msra.mxu0 0.0
    %3080 = vmatprep.subr.mxu0 0.0
    %3081 = vmatpush1.msra.mxu0 0.0
    %3082 = vmatprep.subr.mxu0 0.0
    %3083 = vmatpush1.msra.mxu0 0.0
    %3084 = vmatprep.subr.mxu0 0.0
    %3085 = vmatpush1.msra.mxu0 0.0
    %3086 = vmatprep.subr.mxu0 0.0
    %3087 = vmatpush1.msra.mxu0 0.0
    %3088 = vmatprep.subr.mxu0 0.0
    %3089 = vmatpush1.msra.mxu0 0.0
    %3090 = vmatprep.subr.mxu0 0.0
    %3091 = vmatpush1.msra.mxu0 0.0
    %3092 = vmatprep.subr.mxu0 0.0
    %3093 = vmatpush1.msra.mxu0 0.0
    %3094 = vmatprep.subr.mxu0 0.0
    %3095 = vmatpush1.msra.mxu0 0.0
    %3096 = vmatprep.subr.mxu0 0.0
    %3097 = vmatpush1.msra.mxu0 0.0
    %3098 = vmatprep.subr.mxu0 0.0
    %3099 = vmatpush1.msra.mxu0 0.0
    %3100 = vmatprep.subr.mxu0 0.0
    %3101 = vmatpush1.msra.mxu0 0.0
    %3102 = vmatprep.subr.mxu0 0.0
    %3103 = vmatpush1.msra.mxu0 0.0
    %3104 = vmatprep.subr.mxu0 0.0
    %3105 = vmatpush1.msra.mxu0 0.0
    %3106 = vmatprep.subr.mxu0 0.0
    %3107 = vmatpush1.msra.mxu0 0.0
    %3108 = vmatprep.subr.mxu0 0.0
    %3109 = vmatpush1.msra.mxu0 0.0
    %3110 = vmatprep.mubr.f32.mxu0 0.0
    %3111 = vmatmul.mubr.f32.gmra.mrb[0].mxu0 %v3044
    %v3112 = vpop.f32.mrb[0].mxu0
    %v3113 = vadd.f32 0.0, %v3112
    %v3114 = vpop.f32.mrb[0].mxu0
    %3115 = vdwg.mxu0
    %3117 = vrot.lane.b32.xlu0 %v3113, 24
    %v3118 = vpop.permute.xlu0 %3117
    %3120 = vst.msk [vmem:[#allocation3] sm:$0xff] %vm1255, %v3118
    %v3121 = vld [vmem:[#allocation2 + $0x8] sm:$0xff]
    %3123 = vrot.lane.b32.xlu0 %v3121, 96
    %v3124 = vpop.permute.xlu0 %3123
    %v3125 = vsel %vm563, %v3121, 0
    %v3127 = vsel %vm563, %v3124, 0
    %3129 = vmatprep.subr.mxu0 0.0
    %3130 = vmatpush1.xpose.msra.mxu0 %v3127
    %3131 = vmatprep.subr.mxu0 0.0
    %3132 = vmatpush1.xpose.msra.mxu0 0.0
    %3133 = vmatprep.subr.mxu0 0.0
    %3134 = vmatpush1.xpose.msra.mxu0 0.0
    %3135 = vmatprep.subr.mxu0 0.0
    %3136 = vmatpush1.xpose.msra.mxu0 0.0
    %3137 = vmatprep.subr.mxu0 0.0
    %3138 = vmatpush1.xpose.msra.mxu0 0.0
    %3139 = vmatprep.subr.mxu0 0.0
    %3140 = vmatpush1.xpose.msra.mxu0 0.0
    %3141 = vmatprep.subr.mxu0 0.0
    %3142 = vmatpush1.xpose.msra.mxu0 0.0
    %3143 = vmatprep.subr.mxu0 0.0
    %3144 = vmatpush1.xpose.msra.mxu0 0.0
    %3145 = vmatprep.subr.mxu0 0.0
    %3146 = vmatpush1.xpose.msra.mxu0 0.0
    %3147 = vmatprep.subr.mxu0 0.0
    %3148 = vmatpush1.xpose.msra.mxu0 0.0
    %3149 = vmatprep.subr.mxu0 0.0
    %3150 = vmatpush1.xpose.msra.mxu0 0.0
    %3151 = vmatprep.subr.mxu0 0.0
    %3152 = vmatpush1.xpose.msra.mxu0 0.0
    %3153 = vmatprep.subr.mxu0 0.0
    %3154 = vmatpush1.xpose.msra.mxu0 0.0
    %3155 = vmatprep.subr.mxu0 0.0
    %3156 = vmatpush1.xpose.msra.mxu0 0.0
    %3157 = vmatprep.subr.mxu0 0.0
    %3158 = vmatpush1.xpose.msra.mxu0 0.0
    %3159 = vmatprep.subr.mxu0 0.0
    %3160 = vmatpush1.xpose.msra.mxu0 0.0
    %3161 = vmatprep.subr.mxu0 0.0
    %3162 = vmatpush1.xpose.msra.mxu0 0.0
    %3163 = vmatprep.subr.mxu0 0.0
    %3164 = vmatpush1.xpose.msra.mxu0 0.0
    %3165 = vmatprep.subr.mxu0 0.0
    %3166 = vmatpush1.xpose.msra.mxu0 0.0
    %3167 = vmatprep.subr.mxu0 0.0
    %3168 = vmatpush1.xpose.msra.mxu0 0.0
    %3169 = vmatprep.subr.mxu0 0.0
    %3170 = vmatpush1.xpose.msra.mxu0 0.0
    %3171 = vmatprep.subr.mxu0 0.0
    %3172 = vmatpush1.xpose.msra.mxu0 0.0
    %3173 = vmatprep.subr.mxu0 0.0
    %3174 = vmatpush1.xpose.msra.mxu0 0.0
    %3175 = vmatprep.subr.mxu0 0.0
    %3176 = vmatpush1.xpose.msra.mxu0 0.0
    %3177 = vmatprep.subr.mxu0 0.0
    %3178 = vmatpush1.xpose.msra.mxu0 0.0
    %3179 = vmatprep.subr.mxu0 0.0
    %3180 = vmatpush1.xpose.msra.mxu0 0.0
    %3181 = vmatprep.subr.mxu0 0.0
    %3182 = vmatpush1.xpose.msra.mxu0 0.0
    %3183 = vmatprep.subr.mxu0 0.0
    %3184 = vmatpush1.xpose.msra.mxu0 0.0
    %3185 = vmatprep.subr.mxu0 0.0
    %3186 = vmatpush1.xpose.msra.mxu0 0.0
    %3187 = vmatprep.subr.mxu0 0.0
    %3188 = vmatpush1.xpose.msra.mxu0 0.0
    %3189 = vmatprep.subr.mxu0 0.0
    %3190 = vmatpush1.xpose.msra.mxu0 0.0
    %3191 = vmatprep.subr.mxu0 0.0
    %3192 = vmatpush1.xpose.msra.mxu0 0.0
    %3193 = vmatprep.mubr.f32.mxu0 0.0
    %3194 = vmatmul.mubr.f32.gmra.mrb[0].mxu0 %v3125
    %v3195 = vpop.f32.mrb[0].mxu0
    %v3196 = vadd.f32 0.0, %v3195
    %v3197 = vpop.f32.mrb[0].mxu0
    %3198 = vdwg.mxu0
    %v3199 = vmul.f32 %v3196, 0.35355338
    %v3200 = vadd.f32 %v3199, %v1339
    %v3201 = vsel %vm563, %v3200, -inf
    %3202 = vmax.xlane.f32.xlu0 %v3201
    %v3203 = vpop.xlane.xlu0 %3202
    %v3204 = vsub.f32 %v3200, %v3203
    %v3205 = vmul.f32 %v3204, 1.442695
    %v3206 = vpow.pop %v3205
    %v3207 = vsel %vm563, %v3206, 0.0
    %3208 = vadd.xlane.f32.xlu0 %v3207
    %v3209 = vpop.xlane.xlu0 %3208
    %v3210 = vrcp.pop %v3209
    %v3211 = vmul.f32 %v3206, %v3210
    %3212 = vrot.lane.b32.xlu0 %v3121, 64
    %v3213 = vpop.permute.xlu0 %3212
    %v3216 = vsel %vm563, %v3211, 0
    %3218 = vmatprep.subr.mxu0 0.0
    %3219 = vmatpush1.msra.mxu0 %v3213
    %3220 = vmatprep.subr.mxu0 0.0
    %3221 = vmatpush1.msra.mxu0 0.0
    %3222 = vmatprep.subr.mxu0 0.0
    %3223 = vmatpush1.msra.mxu0 0.0
    %3224 = vmatprep.subr.mxu0 0.0
    %3225 = vmatpush1.msra.mxu0 0.0
    %3226 = vmatprep.subr.mxu0 0.0
    %3227 = vmatpush1.msra.mxu0 0.0
    %3228 = vmatprep.subr.mxu0 0.0
    %3229 = vmatpush1.msra.mxu0 0.0
    %3230 = vmatprep.subr.mxu0 0.0
    %3231 = vmatpush1.msra.mxu0 0.0
    %3232 = vmatprep.subr.mxu0 0.0
    %3233 = vmatpush1.msra.mxu0 0.0
    %3234 = vmatprep.subr.mxu0 0.0
    %3235 = vmatpush1.msra.mxu0 0.0
    %3236 = vmatprep.subr.mxu0 0.0
    %3237 = vmatpush1.msra.mxu0 0.0
    %3238 = vmatprep.subr.mxu0 0.0
    %3239 = vmatpush1.msra.mxu0 0.0
    %3240 = vmatprep.subr.mxu0 0.0
    %3241 = vmatpush1.msra.mxu0 0.0
    %3242 = vmatprep.subr.mxu0 0.0
    %3243 = vmatpush1.msra.mxu0 0.0
    %3244 = vmatprep.subr.mxu0 0.0
    %3245 = vmatpush1.msra.mxu0 0.0
    %3246 = vmatprep.subr.mxu0 0.0
    %3247 = vmatpush1.msra.mxu0 0.0
    %3248 = vmatprep.subr.mxu0 0.0
    %3249 = vmatpush1.msra.mxu0 0.0
    %3250 = vmatprep.subr.mxu0 0.0
    %3251 = vmatpush1.msra.mxu0 0.0
    %3252 = vmatprep.subr.mxu0 0.0
    %3253 = vmatpush1.msra.mxu0 0.0
    %3254 = vmatprep.subr.mxu0 0.0
    %3255 = vmatpush1.msra.mxu0 0.0
    %3256 = vmatprep.subr.mxu0 0.0
    %3257 = vmatpush1.msra.mxu0 0.0
    %3258 = vmatprep.subr.mxu0 0.0
    %3259 = vmatpush1.msra.mxu0 0.0
    %3260 = vmatprep.subr.mxu0 0.0
    %3261 = vmatpush1.msra.mxu0 0.0
    %3262 = vmatprep.subr.mxu0 0.0
    %3263 = vmatpush1.msra.mxu0 0.0
    %3264 = vmatprep.subr.mxu0 0.0
    %3265 = vmatpush1.msra.mxu0 0.0
    %3266 = vmatprep.subr.mxu0 0.0
    %3267 = vmatpush1.msra.mxu0 0.0
    %3268 = vmatprep.subr.mxu0 0.0
    %3269 = vmatpush1.msra.mxu0 0.0
    %3270 = vmatprep.subr.mxu0 0.0
    %3271 = vmatpush1.msra.mxu0 0.0
    %3272 = vmatprep.subr.mxu0 0.0
    %3273 = vmatpush1.msra.mxu0 0.0
    %3274 = vmatprep.subr.mxu0 0.0
    %3275 = vmatpush1.msra.mxu0 0.0
    %3276 = vmatprep.subr.mxu0 0.0
    %3277 = vmatpush1.msra.mxu0 0.0
    %3278 = vmatprep.subr.mxu0 0.0
    %3279 = vmatpush1.msra.mxu0 0.0
    %3280 = vmatprep.subr.mxu0 0.0
    %3281 = vmatpush1.msra.mxu0 0.0
    %3282 = vmatprep.mubr.f32.mxu0 0.0
    %3283 = vmatmul.mubr.f32.gmra.mrb[0].mxu0 %v3216
    %v3284 = vpop.f32.mrb[0].mxu0
    %v3285 = vadd.f32 0.0, %v3284
    %v3286 = vpop.f32.mrb[0].mxu0
    %3287 = vdwg.mxu0
    %3288 = vst.msk [vmem:[#allocation3 + $0x8] sm:$0xff] %vm563, %v3285
    %v3289 = vld [vmem:[#allocation2 + $0x8] sm:$0xff]
    %3291 = vrot.lane.b32.xlu0 %v3289, 120
    %v3292 = vpop.permute.xlu0 %3291
    %3293 = vrot.lane.b32.xlu0 %v3289, 88
    %v3294 = vpop.permute.xlu0 %3293
    %v3295 = vsel %vm563, %v3292, 0
    %v3297 = vsel %vm563, %v3294, 0
    %3299 = vmatprep.subr.mxu0 0.0
    %3300 = vmatpush1.xpose.msra.mxu0 %v3297
    %3301 = vmatprep.subr.mxu0 0.0
    %3302 = vmatpush1.xpose.msra.mxu0 0.0
    %3303 = vmatprep.subr.mxu0 0.0
    %3304 = vmatpush1.xpose.msra.mxu0 0.0
    %3305 = vmatprep.subr.mxu0 0.0
    %3306 = vmatpush1.xpose.msra.mxu0 0.0
    %3307 = vmatprep.subr.mxu0 0.0
    %3308 = vmatpush1.xpose.msra.mxu0 0.0
    %3309 = vmatprep.subr.mxu0 0.0
    %3310 = vmatpush1.xpose.msra.mxu0 0.0
    %3311 = vmatprep.subr.mxu0 0.0
    %3312 = vmatpush1.xpose.msra.mxu0 0.0
    %3313 = vmatprep.subr.mxu0 0.0
    %3314 = vmatpush1.xpose.msra.mxu0 0.0
    %3315 = vmatprep.subr.mxu0 0.0
    %3316 = vmatpush1.xpose.msra.mxu0 0.0
    %3317 = vmatprep.subr.mxu0 0.0
    %3318 = vmatpush1.xpose.msra.mxu0 0.0
    %3319 = vmatprep.subr.mxu0 0.0
    %3320 = vmatpush1.xpose.msra.mxu0 0.0
    %3321 = vmatprep.subr.mxu0 0.0
    %3322 = vmatpush1.xpose.msra.mxu0 0.0
    %3323 = vmatprep.subr.mxu0 0.0
    %3324 = vmatpush1.xpose.msra.mxu0 0.0
    %3325 = vmatprep.subr.mxu0 0.0
    %3326 = vmatpush1.xpose.msra.mxu0 0.0
    %3327 = vmatprep.subr.mxu0 0.0
    %3328 = vmatpush1.xpose.msra.mxu0 0.0
    %3329 = vmatprep.subr.mxu0 0.0
    %3330 = vmatpush1.xpose.msra.mxu0 0.0
    %3331 = vmatprep.subr.mxu0 0.0
    %3332 = vmatpush1.xpose.msra.mxu0 0.0
    %3333 = vmatprep.subr.mxu0 0.0
    %3334 = vmatpush1.xpose.msra.mxu0 0.0
    %3335 = vmatprep.subr.mxu0 0.0
    %3336 = vmatpush1.xpose.msra.mxu0 0.0
    %3337 = vmatprep.subr.mxu0 0.0
    %3338 = vmatpush1.xpose.msra.mxu0 0.0
    %3339 = vmatprep.subr.mxu0 0.0
    %3340 = vmatpush1.xpose.msra.mxu0 0.0
    %3341 = vmatprep.subr.mxu0 0.0
    %3342 = vmatpush1.xpose.msra.mxu0 0.0
    %3343 = vmatprep.subr.mxu0 0.0
    %3344 = vmatpush1.xpose.msra.mxu0 0.0
    %3345 = vmatprep.subr.mxu0 0.0
    %3346 = vmatpush1.xpose.msra.mxu0 0.0
    %3347 = vmatprep.subr.mxu0 0.0
    %3348 = vmatpush1.xpose.msra.mxu0 0.0
    %3349 = vmatprep.subr.mxu0 0.0
    %3350 = vmatpush1.xpose.msra.mxu0 0.0
    %3351 = vmatprep.subr.mxu0 0.0
    %3352 = vmatpush1.xpose.msra.mxu0 0.0
    %3353 = vmatprep.subr.mxu0 0.0
    %3354 = vmatpush1.xpose.msra.mxu0 0.0
    %3355 = vmatprep.subr.mxu0 0.0
    %3356 = vmatpush1.xpose.msra.mxu0 0.0
    %3357 = vmatprep.subr.mxu0 0.0
    %3358 = vmatpush1.xpose.msra.mxu0 0.0
    %3359 = vmatprep.subr.mxu0 0.0
    %3360 = vmatpush1.xpose.msra.mxu0 0.0
    %3361 = vmatprep.subr.mxu0 0.0
    %3362 = vmatpush1.xpose.msra.mxu0 0.0
    %3363 = vmatprep.mubr.f32.mxu0 0.0
    %3364 = vmatmul.mubr.f32.gmra.mrb[0].mxu0 %v3295
    %v3365 = vpop.f32.mrb[0].mxu0
    %v3366 = vadd.f32 0.0, %v3365
    %v3367 = vpop.f32.mrb[0].mxu0
    %3368 = vdwg.mxu0
    %v3369 = vmul.f32 %v3366, 0.35355338
    %v3370 = vadd.f32 %v3369, %v1339
    %v3371 = vsel %vm563, %v3370, -inf
    %3372 = vmax.xlane.f32.xlu0 %v3371
    %v3373 = vpop.xlane.xlu0 %3372
    %v3374 = vsub.f32 %v3370, %v3373
    %v3375 = vmul.f32 %v3374, 1.442695
    %v3376 = vpow.pop %v3375
    %v3377 = vsel %vm563, %v3376, 0.0
    %3378 = vadd.xlane.f32.xlu0 %v3377
    %v3379 = vpop.xlane.xlu0 %3378
    %v3380 = vrcp.pop %v3379
    %v3381 = vmul.f32 %v3376, %v3380
    %3382 = vrot.lane.b32.xlu0 %v3289, 56
    %v3383 = vpop.permute.xlu0 %3382
    %v3386 = vsel %vm563, %v3381, 0
    %3388 = vmatprep.subr.mxu0 0.0
    %3389 = vmatpush1.msra.mxu0 %v3383
    %3390 = vmatprep.subr.mxu0 0.0
    %3391 = vmatpush1.msra.mxu0 0.0
    %3392 = vmatprep.subr.mxu0 0.0
    %3393 = vmatpush1.msra.mxu0 0.0
    %3394 = vmatprep.subr.mxu0 0.0
    %3395 = vmatpush1.msra.mxu0 0.0
    %3396 = vmatprep.subr.mxu0 0.0
    %3397 = vmatpush1.msra.mxu0 0.0
    %3398 = vmatprep.subr.mxu0 0.0
    %3399 = vmatpush1.msra.mxu0 0.0
    %3400 = vmatprep.subr.mxu0 0.0
    %3401 = vmatpush1.msra.mxu0 0.0
    %3402 = vmatprep.subr.mxu0 0.0
    %3403 = vmatpush1.msra.mxu0 0.0
    %3404 = vmatprep.subr.mxu0 0.0
    %3405 = vmatpush1.msra.mxu0 0.0
    %3406 = vmatprep.subr.mxu0 0.0
    %3407 = vmatpush1.msra.mxu0 0.0
    %3408 = vmatprep.subr.mxu0 0.0
    %3409 = vmatpush1.msra.mxu0 0.0
    %3410 = vmatprep.subr.mxu0 0.0
    %3411 = vmatpush1.msra.mxu0 0.0
    %3412 = vmatprep.subr.mxu0 0.0
    %3413 = vmatpush1.msra.mxu0 0.0
    %3414 = vmatprep.subr.mxu0 0.0
    %3415 = vmatpush1.msra.mxu0 0.0
    %3416 = vmatprep.subr.mxu0 0.0
    %3417 = vmatpush1.msra.mxu0 0.0
    %3418 = vmatprep.subr.mxu0 0.0
    %3419 = vmatpush1.msra.mxu0 0.0
    %3420 = vmatprep.subr.mxu0 0.0
    %3421 = vmatpush1.msra.mxu0 0.0
    %3422 = vmatprep.subr.mxu0 0.0
    %3423 = vmatpush1.msra.mxu0 0.0
    %3424 = vmatprep.subr.mxu0 0.0
    %3425 = vmatpush1.msra.mxu0 0.0
    %3426 = vmatprep.subr.mxu0 0.0
    %3427 = vmatpush1.msra.mxu0 0.0
    %3428 = vmatprep.subr.mxu0 0.0
    %3429 = vmatpush1.msra.mxu0 0.0
    %3430 = vmatprep.subr.mxu0 0.0
    %3431 = vmatpush1.msra.mxu0 0.0
    %3432 = vmatprep.subr.mxu0 0.0
    %3433 = vmatpush1.msra.mxu0 0.0
    %3434 = vmatprep.subr.mxu0 0.0
    %3435 = vmatpush1.msra.mxu0 0.0
    %3436 = vmatprep.subr.mxu0 0.0
    %3437 = vmatpush1.msra.mxu0 0.0
    %3438 = vmatprep.subr.mxu0 0.0
    %3439 = vmatpush1.msra.mxu0 0.0
    %3440 = vmatprep.subr.mxu0 0.0
    %3441 = vmatpush1.msra.mxu0 0.0
    %3442 = vmatprep.subr.mxu0 0.0
    %3443 = vmatpush1.msra.mxu0 0.0
    %3444 = vmatprep.subr.mxu0 0.0
    %3445 = vmatpush1.msra.mxu0 0.0
    %3446 = vmatprep.subr.mxu0 0.0
    %3447 = vmatpush1.msra.mxu0 0.0
    %3448 = vmatprep.subr.mxu0 0.0
    %3449 = vmatpush1.msra.mxu0 0.0
    %3450 = vmatprep.subr.mxu0 0.0
    %3451 = vmatpush1.msra.mxu0 0.0
    %3452 = vmatprep.mubr.f32.mxu0 0.0
    %3453 = vmatmul.mubr.f32.gmra.mrb[0].mxu0 %v3386
    %v3454 = vpop.f32.mrb[0].mxu0
    %v3455 = vadd.f32 0.0, %v3454
    %v3456 = vpop.f32.mrb[0].mxu0
    %3457 = vdwg.mxu0
    %3459 = vrot.lane.b32.xlu0 %v3455, 8
    %v3460 = vpop.permute.xlu0 %3459
    %3462 = vst.msk [vmem:[#allocation3 + $0x8] sm:$0xff] %vm905, %v3460
    %v3463 = vld [vmem:[#allocation2 + $0x8] sm:$0xff]
    %3465 = vrot.lane.b32.xlu0 %v3463, 112
    %v3466 = vpop.permute.xlu0 %3465
    %3467 = vrot.lane.b32.xlu0 %v3463, 80
    %v3468 = vpop.permute.xlu0 %3467
    %v3469 = vsel %vm563, %v3466, 0
    %v3471 = vsel %vm563, %v3468, 0
    %3473 = vmatprep.subr.mxu0 0.0
    %3474 = vmatpush1.xpose.msra.mxu0 %v3471
    %3475 = vmatprep.subr.mxu0 0.0
    %3476 = vmatpush1.xpose.msra.mxu0 0.0
    %3477 = vmatprep.subr.mxu0 0.0
    %3478 = vmatpush1.xpose.msra.mxu0 0.0
    %3479 = vmatprep.subr.mxu0 0.0
    %3480 = vmatpush1.xpose.msra.mxu0 0.0
    %3481 = vmatprep.subr.mxu0 0.0
    %3482 = vmatpush1.xpose.msra.mxu0 0.0
    %3483 = vmatprep.subr.mxu0 0.0
    %3484 = vmatpush1.xpose.msra.mxu0 0.0
    %3485 = vmatprep.subr.mxu0 0.0
    %3486 = vmatpush1.xpose.msra.mxu0 0.0
    %3487 = vmatprep.subr.mxu0 0.0
    %3488 = vmatpush1.xpose.msra.mxu0 0.0
    %3489 = vmatprep.subr.mxu0 0.0
    %3490 = vmatpush1.xpose.msra.mxu0 0.0
    %3491 = vmatprep.subr.mxu0 0.0
    %3492 = vmatpush1.xpose.msra.mxu0 0.0
    %3493 = vmatprep.subr.mxu0 0.0
    %3494 = vmatpush1.xpose.msra.mxu0 0.0
    %3495 = vmatprep.subr.mxu0 0.0
    %3496 = vmatpush1.xpose.msra.mxu0 0.0
    %3497 = vmatprep.subr.mxu0 0.0
    %3498 = vmatpush1.xpose.msra.mxu0 0.0
    %3499 = vmatprep.subr.mxu0 0.0
    %3500 = vmatpush1.xpose.msra.mxu0 0.0
    %3501 = vmatprep.subr.mxu0 0.0
    %3502 = vmatpush1.xpose.msra.mxu0 0.0
    %3503 = vmatprep.subr.mxu0 0.0
    %3504 = vmatpush1.xpose.msra.mxu0 0.0
    %3505 = vmatprep.subr.mxu0 0.0
    %3506 = vmatpush1.xpose.msra.mxu0 0.0
    %3507 = vmatprep.subr.mxu0 0.0
    %3508 = vmatpush1.xpose.msra.mxu0 0.0
    %3509 = vmatprep.subr.mxu0 0.0
    %3510 = vmatpush1.xpose.msra.mxu0 0.0
    %3511 = vmatprep.subr.mxu0 0.0
    %3512 = vmatpush1.xpose.msra.mxu0 0.0
    %3513 = vmatprep.subr.mxu0 0.0
    %3514 = vmatpush1.xpose.msra.mxu0 0.0
    %3515 = vmatprep.subr.mxu0 0.0
    %3516 = vmatpush1.xpose.msra.mxu0 0.0
    %3517 = vmatprep.subr.mxu0 0.0
    %3518 = vmatpush1.xpose.msra.mxu0 0.0
    %3519 = vmatprep.subr.mxu0 0.0
    %3520 = vmatpush1.xpose.msra.mxu0 0.0
    %3521 = vmatprep.subr.mxu0 0.0
    %3522 = vmatpush1.xpose.msra.mxu0 0.0
    %3523 = vmatprep.subr.mxu0 0.0
    %3524 = vmatpush1.xpose.msra.mxu0 0.0
    %3525 = vmatprep.subr.mxu0 0.0
    %3526 = vmatpush1.xpose.msra.mxu0 0.0
    %3527 = vmatprep.subr.mxu0 0.0
    %3528 = vmatpush1.xpose.msra.mxu0 0.0
    %3529 = vmatprep.subr.mxu0 0.0
    %3530 = vmatpush1.xpose.msra.mxu0 0.0
    %3531 = vmatprep.subr.mxu0 0.0
    %3532 = vmatpush1.xpose.msra.mxu0 0.0
    %3533 = vmatprep.subr.mxu0 0.0
    %3534 = vmatpush1.xpose.msra.mxu0 0.0
    %3535 = vmatprep.subr.mxu0 0.0
    %3536 = vmatpush1.xpose.msra.mxu0 0.0
    %3537 = vmatprep.mubr.f32.mxu0 0.0
    %3538 = vmatmul.mubr.f32.gmra.mrb[0].mxu0 %v3469
    %v3539 = vpop.f32.mrb[0].mxu0
    %v3540 = vadd.f32 0.0, %v3539
    %v3541 = vpop.f32.mrb[0].mxu0
    %3542 = vdwg.mxu0
    %v3543 = vmul.f32 %v3540, 0.35355338
    %v3544 = vadd.f32 %v3543, %v1339
    %v3545 = vsel %vm563, %v3544, -inf
    %3546 = vmax.xlane.f32.xlu0 %v3545
    %v3547 = vpop.xlane.xlu0 %3546
    %v3548 = vsub.f32 %v3544, %v3547
    %v3549 = vmul.f32 %v3548, 1.442695
    %v3550 = vpow.pop %v3549
    %v3551 = vsel %vm563, %v3550, 0.0
    %3552 = vadd.xlane.f32.xlu0 %v3551
    %v3553 = vpop.xlane.xlu0 %3552
    %v3554 = vrcp.pop %v3553
    %v3555 = vmul.f32 %v3550, %v3554
    %3556 = vrot.lane.b32.xlu0 %v3463, 48
    %v3557 = vpop.permute.xlu0 %3556
    %v3560 = vsel %vm563, %v3555, 0
    %3562 = vmatprep.subr.mxu0 0.0
    %3563 = vmatpush1.msra.mxu0 %v3557
    %3564 = vmatprep.subr.mxu0 0.0
    %3565 = vmatpush1.msra.mxu0 0.0
    %3566 = vmatprep.subr.mxu0 0.0
    %3567 = vmatpush1.msra.mxu0 0.0
    %3568 = vmatprep.subr.mxu0 0.0
    %3569 = vmatpush1.msra.mxu0 0.0
    %3570 = vmatprep.subr.mxu0 0.0
    %3571 = vmatpush1.msra.mxu0 0.0
    %3572 = vmatprep.subr.mxu0 0.0
    %3573 = vmatpush1.msra.mxu0 0.0
    %3574 = vmatprep.subr.mxu0 0.0
    %3575 = vmatpush1.msra.mxu0 0.0
    %3576 = vmatprep.subr.mxu0 0.0
    %3577 = vmatpush1.msra.mxu0 0.0
    %3578 = vmatprep.subr.mxu0 0.0
    %3579 = vmatpush1.msra.mxu0 0.0
    %3580 = vmatprep.subr.mxu0 0.0
    %3581 = vmatpush1.msra.mxu0 0.0
    %3582 = vmatprep.subr.mxu0 0.0
    %3583 = vmatpush1.msra.mxu0 0.0
    %3584 = vmatprep.subr.mxu0 0.0
    %3585 = vmatpush1.msra.mxu0 0.0
    %3586 = vmatprep.subr.mxu0 0.0
    %3587 = vmatpush1.msra.mxu0 0.0
    %3588 = vmatprep.subr.mxu0 0.0
    %3589 = vmatpush1.msra.mxu0 0.0
    %3590 = vmatprep.subr.mxu0 0.0
    %3591 = vmatpush1.msra.mxu0 0.0
    %3592 = vmatprep.subr.mxu0 0.0
    %3593 = vmatpush1.msra.mxu0 0.0
    %3594 = vmatprep.subr.mxu0 0.0
    %3595 = vmatpush1.msra.mxu0 0.0
    %3596 = vmatprep.subr.mxu0 0.0
    %3597 = vmatpush1.msra.mxu0 0.0
    %3598 = vmatprep.subr.mxu0 0.0
    %3599 = vmatpush1.msra.mxu0 0.0
    %3600 = vmatprep.subr.mxu0 0.0
    %3601 = vmatpush1.msra.mxu0 0.0
    %3602 = vmatprep.subr.mxu0 0.0
    %3603 = vmatpush1.msra.mxu0 0.0
    %3604 = vmatprep.subr.mxu0 0.0
    %3605 = vmatpush1.msra.mxu0 0.0
    %3606 = vmatprep.subr.mxu0 0.0
    %3607 = vmatpush1.msra.mxu0 0.0
    %3608 = vmatprep.subr.mxu0 0.0
    %3609 = vmatpush1.msra.mxu0 0.0
    %3610 = vmatprep.subr.mxu0 0.0
    %3611 = vmatpush1.msra.mxu0 0.0
    %3612 = vmatprep.subr.mxu0 0.0
    %3613 = vmatpush1.msra.mxu0 0.0
    %3614 = vmatprep.subr.mxu0 0.0
    %3615 = vmatpush1.msra.mxu0 0.0
    %3616 = vmatprep.subr.mxu0 0.0
    %3617 = vmatpush1.msra.mxu0 0.0
    %3618 = vmatprep.subr.mxu0 0.0
    %3619 = vmatpush1.msra.mxu0 0.0
    %3620 = vmatprep.subr.mxu0 0.0
    %3621 = vmatpush1.msra.mxu0 0.0
    %3622 = vmatprep.subr.mxu0 0.0
    %3623 = vmatpush1.msra.mxu0 0.0
    %3624 = vmatprep.subr.mxu0 0.0
    %3625 = vmatpush1.msra.mxu0 0.0
    %3626 = vmatprep.mubr.f32.mxu0 0.0
    %3627 = vmatmul.mubr.f32.gmra.mrb[0].mxu0 %v3560
    %v3628 = vpop.f32.mrb[0].mxu0
    %v3629 = vadd.f32 0.0, %v3628
    %v3630 = vpop.f32.mrb[0].mxu0
    %3631 = vdwg.mxu0
    %3633 = vrot.lane.b32.xlu0 %v3629, 16
    %v3634 = vpop.permute.xlu0 %3633
    %3636 = vst.msk [vmem:[#allocation3 + $0x8] sm:$0xff] %vm1080, %v3634
    %v3637 = vld [vmem:[#allocation2 + $0x8] sm:$0xff]
    %3639 = vrot.lane.b32.xlu0 %v3637, 104
    %v3640 = vpop.permute.xlu0 %3639
    %3641 = vrot.lane.b32.xlu0 %v3637, 72
    %v3642 = vpop.permute.xlu0 %3641
    %v3643 = vsel %vm563, %v3640, 0
    %v3645 = vsel %vm563, %v3642, 0
    %3647 = vmatprep.subr.mxu0 0.0
    %3648 = vmatpush1.xpose.msra.mxu0 %v3645
    %3649 = vmatprep.subr.mxu0 0.0
    %3650 = vmatpush1.xpose.msra.mxu0 0.0
    %3651 = vmatprep.subr.mxu0 0.0
    %3652 = vmatpush1.xpose.msra.mxu0 0.0
    %3653 = vmatprep.subr.mxu0 0.0
    %3654 = vmatpush1.xpose.msra.mxu0 0.0
    %3655 = vmatprep.subr.mxu0 0.0
    %3656 = vmatpush1.xpose.msra.mxu0 0.0
    %3657 = vmatprep.subr.mxu0 0.0
    %3658 = vmatpush1.xpose.msra.mxu0 0.0
    %3659 = vmatprep.subr.mxu0 0.0
    %3660 = vmatpush1.xpose.msra.mxu0 0.0
    %3661 = vmatprep.subr.mxu0 0.0
    %3662 = vmatpush1.xpose.msra.mxu0 0.0
    %3663 = vmatprep.subr.mxu0 0.0
    %3664 = vmatpush1.xpose.msra.mxu0 0.0
    %3665 = vmatprep.subr.mxu0 0.0
    %3666 = vmatpush1.xpose.msra.mxu0 0.0
    %3667 = vmatprep.subr.mxu0 0.0
    %3668 = vmatpush1.xpose.msra.mxu0 0.0
    %3669 = vmatprep.subr.mxu0 0.0
    %3670 = vmatpush1.xpose.msra.mxu0 0.0
    %3671 = vmatprep.subr.mxu0 0.0
    %3672 = vmatpush1.xpose.msra.mxu0 0.0
    %3673 = vmatprep.subr.mxu0 0.0
    %3674 = vmatpush1.xpose.msra.mxu0 0.0
    %3675 = vmatprep.subr.mxu0 0.0
    %3676 = vmatpush1.xpose.msra.mxu0 0.0
    %3677 = vmatprep.subr.mxu0 0.0
    %3678 = vmatpush1.xpose.msra.mxu0 0.0
    %3679 = vmatprep.subr.mxu0 0.0
    %3680 = vmatpush1.xpose.msra.mxu0 0.0
    %3681 = vmatprep.subr.mxu0 0.0
    %3682 = vmatpush1.xpose.msra.mxu0 0.0
    %3683 = vmatprep.subr.mxu0 0.0
    %3684 = vmatpush1.xpose.msra.mxu0 0.0
    %3685 = vmatprep.subr.mxu0 0.0
    %3686 = vmatpush1.xpose.msra.mxu0 0.0
    %3687 = vmatprep.subr.mxu0 0.0
    %3688 = vmatpush1.xpose.msra.mxu0 0.0
    %3689 = vmatprep.subr.mxu0 0.0
    %3690 = vmatpush1.xpose.msra.mxu0 0.0
    %3691 = vmatprep.subr.mxu0 0.0
    %3692 = vmatpush1.xpose.msra.mxu0 0.0
    %3693 = vmatprep.subr.mxu0 0.0
    %3694 = vmatpush1.xpose.msra.mxu0 0.0
    %3695 = vmatprep.subr.mxu0 0.0
    %3696 = vmatpush1.xpose.msra.mxu0 0.0
    %3697 = vmatprep.subr.mxu0 0.0
    %3698 = vmatpush1.xpose.msra.mxu0 0.0
    %3699 = vmatprep.subr.mxu0 0.0
    %3700 = vmatpush1.xpose.msra.mxu0 0.0
    %3701 = vmatprep.subr.mxu0 0.0
    %3702 = vmatpush1.xpose.msra.mxu0 0.0
    %3703 = vmatprep.subr.mxu0 0.0
    %3704 = vmatpush1.xpose.msra.mxu0 0.0
    %3705 = vmatprep.subr.mxu0 0.0
    %3706 = vmatpush1.xpose.msra.mxu0 0.0
    %3707 = vmatprep.subr.mxu0 0.0
    %3708 = vmatpush1.xpose.msra.mxu0 0.0
    %3709 = vmatprep.subr.mxu0 0.0
    %3710 = vmatpush1.xpose.msra.mxu0 0.0
    %3711 = vmatprep.mubr.f32.mxu0 0.0
    %3712 = vmatmul.mubr.f32.gmra.mrb[0].mxu0 %v3643
    %v3713 = vpop.f32.mrb[0].mxu0
    %v3714 = vadd.f32 0.0, %v3713
    %v3715 = vpop.f32.mrb[0].mxu0
    %3716 = vdwg.mxu0
    %v3717 = vmul.f32 %v3714, 0.35355338
    %v3718 = vadd.f32 %v3717, %v1339
    %v3719 = vsel %vm563, %v3718, -inf
    %3720 = vmax.xlane.f32.xlu0 %v3719
    %v3721 = vpop.xlane.xlu0 %3720
    %v3722 = vsub.f32 %v3718, %v3721
    %v3723 = vmul.f32 %v3722, 1.442695
    %v3724 = vpow.pop %v3723
    %v3725 = vsel %vm563, %v3724, 0.0
    %3726 = vadd.xlane.f32.xlu0 %v3725
    %v3727 = vpop.xlane.xlu0 %3726
    %v3728 = vrcp.pop %v3727
    %v3729 = vmul.f32 %v3724, %v3728
    %3730 = vrot.lane.b32.xlu0 %v3637, 40
    %v3731 = vpop.permute.xlu0 %3730
    %v3734 = vsel %vm563, %v3729, 0
    %3736 = vmatprep.subr.mxu0 0.0
    %3737 = vmatpush1.msra.mxu0 %v3731
    %3738 = vmatprep.subr.mxu0 0.0
    %3739 = vmatpush1.msra.mxu0 0.0
    %3740 = vmatprep.subr.mxu0 0.0
    %3741 = vmatpush1.msra.mxu0 0.0
    %3742 = vmatprep.subr.mxu0 0.0
    %3743 = vmatpush1.msra.mxu0 0.0
    %3744 = vmatprep.subr.mxu0 0.0
    %3745 = vmatpush1.msra.mxu0 0.0
    %3746 = vmatprep.subr.mxu0 0.0
    %3747 = vmatpush1.msra.mxu0 0.0
    %3748 = vmatprep.subr.mxu0 0.0
    %3749 = vmatpush1.msra.mxu0 0.0
    %3750 = vmatprep.subr.mxu0 0.0
    %3751 = vmatpush1.msra.mxu0 0.0
    %3752 = vmatprep.subr.mxu0 0.0
    %3753 = vmatpush1.msra.mxu0 0.0
    %3754 = vmatprep.subr.mxu0 0.0
    %3755 = vmatpush1.msra.mxu0 0.0
    %3756 = vmatprep.subr.mxu0 0.0
    %3757 = vmatpush1.msra.mxu0 0.0
    %3758 = vmatprep.subr.mxu0 0.0
    %3759 = vmatpush1.msra.mxu0 0.0
    %3760 = vmatprep.subr.mxu0 0.0
    %3761 = vmatpush1.msra.mxu0 0.0
    %3762 = vmatprep.subr.mxu0 0.0
    %3763 = vmatpush1.msra.mxu0 0.0
    %3764 = vmatprep.subr.mxu0 0.0
    %3765 = vmatpush1.msra.mxu0 0.0
    %3766 = vmatprep.subr.mxu0 0.0
    %3767 = vmatpush1.msra.mxu0 0.0
    %3768 = vmatprep.subr.mxu0 0.0
    %3769 = vmatpush1.msra.mxu0 0.0
    %3770 = vmatprep.subr.mxu0 0.0
    %3771 = vmatpush1.msra.mxu0 0.0
    %3772 = vmatprep.subr.mxu0 0.0
    %3773 = vmatpush1.msra.mxu0 0.0
    %3774 = vmatprep.subr.mxu0 0.0
    %3775 = vmatpush1.msra.mxu0 0.0
    %3776 = vmatprep.subr.mxu0 0.0
    %3777 = vmatpush1.msra.mxu0 0.0
    %3778 = vmatprep.subr.mxu0 0.0
    %3779 = vmatpush1.msra.mxu0 0.0
    %3780 = vmatprep.subr.mxu0 0.0
    %3781 = vmatpush1.msra.mxu0 0.0
    %3782 = vmatprep.subr.mxu0 0.0
    %3783 = vmatpush1.msra.mxu0 0.0
    %3784 = vmatprep.subr.mxu0 0.0
    %3785 = vmatpush1.msra.mxu0 0.0
    %3786 = vmatprep.subr.mxu0 0.0
    %3787 = vmatpush1.msra.mxu0 0.0
    %3788 = vmatprep.subr.mxu0 0.0
    %3789 = vmatpush1.msra.mxu0 0.0
    %3790 = vmatprep.subr.mxu0 0.0
    %3791 = vmatpush1.msra.mxu0 0.0
    %3792 = vmatprep.subr.mxu0 0.0
    %3793 = vmatpush1.msra.mxu0 0.0
    %3794 = vmatprep.subr.mxu0 0.0
    %3795 = vmatpush1.msra.mxu0 0.0
    %3796 = vmatprep.subr.mxu0 0.0
    %3797 = vmatpush1.msra.mxu0 0.0
    %3798 = vmatprep.subr.mxu0 0.0
    %3799 = vmatpush1.msra.mxu0 0.0
    %3800 = vmatprep.mubr.f32.mxu0 0.0
    %3801 = vmatmul.mubr.f32.gmra.mrb[0].mxu0 %v3734
    %v3802 = vpop.f32.mrb[0].mxu0
    %v3803 = vadd.f32 0.0, %v3802
    %v3804 = vpop.f32.mrb[0].mxu0
    %3805 = vdwg.mxu0
    %3807 = vrot.lane.b32.xlu0 %v3803, 24
    %v3808 = vpop.permute.xlu0 %3807
    %3810 = vst.msk [vmem:[#allocation3 + $0x8] sm:$0xff] %vm1255, %v3808
    %v3811 = vld [vmem:[#allocation3] sm:$0xff]
    %v3812 = vld [vmem:[#allocation3 + $0x8] sm:$0xff]
    %s3813 = scalar_lea.vmem %s25, 32
    %v3814 = vld [vmem:[%s3813] sm:$0xff]
    %v3815 = vld [vmem:[%s3813 + $0x8] sm:$0xff]
    %v3816 = vld [vmem:[%s3813 + $0x10] sm:$0xff]
    %v3817 = vld [vmem:[%s3813 + $0x18] sm:$0xff]
    %s3818 = scalar_lea.vmem %s27, 1
    %v3819 = vld [vmem:[%s3818] sm:$0x1]
    %v3821 = vlaneseq
    %v3822 = vshrl.u32 %v3821, 7
    %v3823 = vsub.s32 0, %v3822
    %v3824 = vrot.slane %v3819, %v3823
    %v3827 = vsel %vm321, %v3811, 0
    %v3830 = vsel %vm321, %v3812, 0
    %3832 = vmatprep.subr.mxu0 0.0
    %3833 = vmatpush1.msra.mxu0 %v3814
    %3834 = vmatprep.subr.mxu0 0.0
    %3835 = vmatpush1.msra.mxu0 %v3815
    %3836 = vmatprep.subr.mxu0 0.0
    %3837 = vmatpush1.msra.mxu0 %v3816
    %3838 = vmatprep.subr.mxu0 0.0
    %3839 = vmatpush1.msra.mxu0 %v3817
    %3840 = vmatprep.subr.mxu0 0.0
    %3841 = vmatpush1.msra.mxu0 0.0
    %3842 = vmatprep.subr.mxu0 0.0
    %3843 = vmatpush1.msra.mxu0 0.0
    %3844 = vmatprep.subr.mxu0 0.0
    %3845 = vmatpush1.msra.mxu0 0.0
    %3846 = vmatprep.subr.mxu0 0.0
    %3847 = vmatpush1.msra.mxu0 0.0
    %3848 = vmatprep.subr.mxu0 0.0
    %3849 = vmatpush1.msra.mxu0 0.0
    %3850 = vmatprep.subr.mxu0 0.0
    %3851 = vmatpush1.msra.mxu0 0.0
    %3852 = vmatprep.subr.mxu0 0.0
    %3853 = vmatpush1.msra.mxu0 0.0
    %3854 = vmatprep.subr.mxu0 0.0
    %3855 = vmatpush1.msra.mxu0 0.0
    %3856 = vmatprep.subr.mxu0 0.0
    %3857 = vmatpush1.msra.mxu0 0.0
    %3858 = vmatprep.subr.mxu0 0.0
    %3859 = vmatpush1.msra.mxu0 0.0
    %3860 = vmatprep.subr.mxu0 0.0
    %3861 = vmatpush1.msra.mxu0 0.0
    %3862 = vmatprep.subr.mxu0 0.0
    %3863 = vmatpush1.msra.mxu0 0.0
    %3864 = vmatprep.subr.mxu0 0.0
    %3865 = vmatpush1.msra.mxu0 0.0
    %3866 = vmatprep.subr.mxu0 0.0
    %3867 = vmatpush1.msra.mxu0 0.0
    %3868 = vmatprep.subr.mxu0 0.0
    %3869 = vmatpush1.msra.mxu0 0.0
    %3870 = vmatprep.subr.mxu0 0.0
    %3871 = vmatpush1.msra.mxu0 0.0
    %3872 = vmatprep.subr.mxu0 0.0
    %3873 = vmatpush1.msra.mxu0 0.0
    %3874 = vmatprep.subr.mxu0 0.0
    %3875 = vmatpush1.msra.mxu0 0.0
    %3876 = vmatprep.subr.mxu0 0.0
    %3877 = vmatpush1.msra.mxu0 0.0
    %3878 = vmatprep.subr.mxu0 0.0
    %3879 = vmatpush1.msra.mxu0 0.0
    %3880 = vmatprep.subr.mxu0 0.0
    %3881 = vmatpush1.msra.mxu0 0.0
    %3882 = vmatprep.subr.mxu0 0.0
    %3883 = vmatpush1.msra.mxu0 0.0
    %3884 = vmatprep.subr.mxu0 0.0
    %3885 = vmatpush1.msra.mxu0 0.0
    %3886 = vmatprep.subr.mxu0 0.0
    %3887 = vmatpush1.msra.mxu0 0.0
    %3888 = vmatprep.subr.mxu0 0.0
    %3889 = vmatpush1.msra.mxu0 0.0
    %3890 = vmatprep.subr.mxu0 0.0
    %3891 = vmatpush1.msra.mxu0 0.0
    %3892 = vmatprep.subr.mxu0 0.0
    %3893 = vmatpush1.msra.mxu0 0.0
    %3894 = vmatprep.subr.mxu0 0.0
    %3895 = vmatpush1.msra.mxu0 0.0
    %3896 = vmatprep.mubr.f32.mxu0 0.0
    %3897 = vmatmul.mubr.f32.gmra.mrb[0].mxu0 %v3827
    %v3898 = vpop.f32.mrb[0].mxu0
    %v3899 = vadd.f32 %v3824, %v3898
    %v3900 = vpop.f32.mrb[0].mxu0
    %3901 = vmatprep.mubr.f32.mxu0 0.0
    %3902 = vmatmul.mubr.f32.gmra.mrb[0].mxu0 %v3830
    %v3903 = vpop.f32.mrb[0].mxu0
    %v3904 = vadd.f32 %v3824, %v3903
    %v3905 = vpop.f32.mrb[0].mxu0
    %3906 = vdwg.mxu0
    %v3907 = vadd.f32 %v3899, %v2333
    %v3908 = vadd.f32 %v3904, %v2334
    %s3909 = scalar_lea.vmem [#allocation9], 1
    %v3910 = vld [vmem:[%s3909] sm:$0x1]
    %s3911 = scalar_lea.vmem [#allocation11], 1
    %v3912 = vld [vmem:[%s3911] sm:$0x1]
    %v3913 = vsel %vm321, %v3907, 0.0
    %3914 = vadd.xlane.f32.xlu0 %v3913
    %v3915 = vpop.xlane.xlu0 %3914
    %v3916 = vsel %vm321, %v3908, 0.0
    %3917 = vadd.xlane.f32.xlu0 %v3916
    %v3918 = vpop.xlane.xlu0 %3917
    %v3919 = vmul.f32 %v3915, %v419
    %v3920 = vmul.f32 %v3918, %v419
    %v3921 = vsub.f32 %v3907, %v3919
    %v3922 = vsub.f32 %v3908, %v3920
    %v3923 = vmul.f32 %v3921, %v3921
    %v3924 = vmul.f32 %v3922, %v3922
    %v3925 = vsel %vm321, %v3923, 0.0
    %3926 = vadd.xlane.f32.xlu0 %v3925
    %v3927 = vpop.xlane.xlu0 %3926
    %v3928 = vsel %vm321, %v3924, 0.0
    %3929 = vadd.xlane.f32.xlu0 %v3928
    %v3930 = vpop.xlane.xlu0 %3929
    %v3931 = vmul.f32 %v3927, %v419
    %v3932 = vmul.f32 %v3930, %v419
    %v3933 = vadd.f32 %v3931, 1e-12
    %v3934 = vadd.f32 %v3932, 1e-12
    %v3935 = vrsqrt.pop %v3933
    %v3936 = vrsqrt.pop %v3934
    %v3937 = vmul.f32 %v3921, %v3935
    %v3938 = vmul.f32 %v3922, %v3936
    %v3940 = vlaneseq
    %v3941 = vshrl.u32 %v3940, 7
    %v3942 = vsub.s32 0, %v3941
    %v3943 = vrot.slane %v3910, %v3942
    %v3945 = vmul.f32 %v3937, %v3943
    %v3946 = vmul.f32 %v3938, %v3943
    %v3948 = vlaneseq
    %v3949 = vshrl.u32 %v3948, 7
    %v3950 = vsub.s32 0, %v3949
    %v3951 = vrot.slane %v3912, %v3950
    %v3953 = vadd.f32 %v3945, %v3951
    %v3954 = vadd.f32 %v3946, %v3951
    %s3955 = scalar_lea.vmem %s33, 32
    %v3956 = vld [vmem:[%s3955] sm:$0xff]
    %v3957 = vld [vmem:[%s3955 + $0x8] sm:$0xff]
    %v3958 = vld [vmem:[%s3955 + $0x10] sm:$0xff]
    %v3959 = vld [vmem:[%s3955 + $0x18] sm:$0xff]
    %s3960 = scalar_lea.vmem %s35, 1
    %v3961 = vld [vmem:[%s3960] sm:$0x1]
    %v3963 = vlaneseq
    %v3964 = vshrl.u32 %v3963, 7
    %v3965 = vsub.s32 0, %v3964
    %v3966 = vrot.slane %v3961, %v3965
    %v3969 = vsel %vm321, %v3953, 0
    %v3972 = vsel %vm321, %v3954, 0
    %3974 = vmatprep.subr.mxu0 0.0
    %3975 = vmatpush1.msra.mxu0 %v3956
    %3976 = vmatprep.subr.mxu0 0.0
    %3977 = vmatpush1.msra.mxu0 %v3957
    %3978 = vmatprep.subr.mxu0 0.0
    %3979 = vmatpush1.msra.mxu0 %v3958
    %3980 = vmatprep.subr.mxu0 0.0
    %3981 = vmatpush1.msra.mxu0 %v3959
    %3982 = vmatprep.subr.mxu0 0.0
    %3983 = vmatpush1.msra.mxu0 0.0
    %3984 = vmatprep.subr.mxu0 0.0
    %3985 = vmatpush1.msra.mxu0 0.0
    %3986 = vmatprep.subr.mxu0 0.0
    %3987 = vmatpush1.msra.mxu0 0.0
    %3988 = vmatprep.subr.mxu0 0.0
    %3989 = vmatpush1.msra.mxu0 0.0
    %3990 = vmatprep.subr.mxu0 0.0
    %3991 = vmatpush1.msra.mxu0 0.0
    %3992 = vmatprep.subr.mxu0 0.0
    %3993 = vmatpush1.msra.mxu0 0.0
    %3994 = vmatprep.subr.mxu0 0.0
    %3995 = vmatpush1.msra.mxu0 0.0
    %3996 = vmatprep.subr.mxu0 0.0
    %3997 = vmatpush1.msra.mxu0 0.0
    %3998 = vmatprep.subr.mxu0 0.0
    %3999 = vmatpush1.msra.mxu0 0.0
    %4000 = vmatprep.subr.mxu0 0.0
    %4001 = vmatpush1.msra.mxu0 0.0
    %4002 = vmatprep.subr.mxu0 0.0
    %4003 = vmatpush1.msra.mxu0 0.0
    %4004 = vmatprep.subr.mxu0 0.0
    %4005 = vmatpush1.msra.mxu0 0.0
    %4006 = vmatprep.subr.mxu0 0.0
    %4007 = vmatpush1.msra.mxu0 0.0
    %4008 = vmatprep.subr.mxu0 0.0
    %4009 = vmatpush1.msra.mxu0 0.0
    %4010 = vmatprep.subr.mxu0 0.0
    %4011 = vmatpush1.msra.mxu0 0.0
    %4012 = vmatprep.subr.mxu0 0.0
    %4013 = vmatpush1.msra.mxu0 0.0
    %4014 = vmatprep.subr.mxu0 0.0
    %4015 = vmatpush1.msra.mxu0 0.0
    %4016 = vmatprep.subr.mxu0 0.0
    %4017 = vmatpush1.msra.mxu0 0.0
    %4018 = vmatprep.subr.mxu0 0.0
    %4019 = vmatpush1.msra.mxu0 0.0
    %4020 = vmatprep.subr.mxu0 0.0
    %4021 = vmatpush1.msra.mxu0 0.0
    %4022 = vmatprep.subr.mxu0 0.0
    %4023 = vmatpush1.msra.mxu0 0.0
    %4024 = vmatprep.subr.mxu0 0.0
    %4025 = vmatpush1.msra.mxu0 0.0
    %4026 = vmatprep.subr.mxu0 0.0
    %4027 = vmatpush1.msra.mxu0 0.0
    %4028 = vmatprep.subr.mxu0 0.0
    %4029 = vmatpush1.msra.mxu0 0.0
    %4030 = vmatprep.subr.mxu0 0.0
    %4031 = vmatpush1.msra.mxu0 0.0
    %4032 = vmatprep.subr.mxu0 0.0
    %4033 = vmatpush1.msra.mxu0 0.0
    %4034 = vmatprep.subr.mxu0 0.0
    %4035 = vmatpush1.msra.mxu0 0.0
    %4036 = vmatprep.subr.mxu0 0.0
    %4037 = vmatpush1.msra.mxu0 0.0
    %4038 = vmatprep.mubr.f32.mxu0 0.0
    %4039 = vmatmul.mubr.f32.gmra.mrb[0].mxu0 %v3969
    %v4040 = vpop.f32.mrb[0].mxu0
    %v4041 = vadd.f32 %v3966, %v4040
    %v4042 = vpop.f32.mrb[0].mxu0
    %4043 = vmatprep.mubr.f32.mxu0 0.0
    %4044 = vmatmul.mubr.f32.gmra.mrb[0].mxu0 %v3972
    %v4045 = vpop.f32.mrb[0].mxu0
    %v4046 = vadd.f32 %v3966, %v4045
    %v4047 = vpop.f32.mrb[0].mxu0
    %4048 = vdwg.mxu0
    %v4049 = vmul.f32 %v4041, 0.5
    %v4050 = vmul.f32 %v4046, 0.5
    %v4051 = vmul.f32 %v4041, 0.70710677
    %v4052 = vmul.f32 %v4046, 0.70710677
    %v4053 = verf.f32.pop %v4051
    %v4054 = verf.f32.pop %v4052
    %v4055 = vadd.f32 %v4053, 1.0
    %v4056 = vadd.f32 %v4054, 1.0
    %v4057 = vmul.f32 %v4049, %v4055
    %v4058 = vmul.f32 %v4050, %v4056
    %s4059 = scalar_lea.vmem %s37, 64
    %v4060 = vld [vmem:[%s4059] sm:$0xff]
    %v4061 = vld [vmem:[%s4059 + $0x8] sm:$0xff]
    %v4062 = vld [vmem:[%s4059 + $0x10] sm:$0xff]
    %v4063 = vld [vmem:[%s4059 + $0x18] sm:$0xff]
    %v4064 = vld [vmem:[%s4059 + $0x20] sm:$0xff]
    %v4065 = vld [vmem:[%s4059 + $0x28] sm:$0xff]
    %v4066 = vld [vmem:[%s4059 + $0x30] sm:$0xff]
    %v4067 = vld [vmem:[%s4059 + $0x38] sm:$0xff]
    %s4068 = scalar_lea.vmem %s39, 1
    %v4069 = vld [vmem:[%s4068] sm:$0x1]
    %v4071 = vlaneseq
    %v4072 = vshrl.u32 %v4071, 7
    %v4073 = vsub.s32 0, %v4072
    %v4074 = vrot.slane %v4069, %v4073
    %v4077 = vsel %vm327, %v4057, 0
    %v4080 = vsel %vm327, %v4058, 0
    %4082 = vmatprep.subr.mxu0 0.0
    %4083 = vmatpush1.msra.mxu0 %v4060
    %4084 = vmatprep.subr.mxu0 0.0
    %4085 = vmatpush1.msra.mxu0 %v4061
    %4086 = vmatprep.subr.mxu0 0.0
    %4087 = vmatpush1.msra.mxu0 %v4062
    %4088 = vmatprep.subr.mxu0 0.0
    %4089 = vmatpush1.msra.mxu0 %v4063
    %4090 = vmatprep.subr.mxu0 0.0
    %4091 = vmatpush1.msra.mxu0 %v4064
    %4092 = vmatprep.subr.mxu0 0.0
    %4093 = vmatpush1.msra.mxu0 %v4065
    %4094 = vmatprep.subr.mxu0 0.0
    %4095 = vmatpush1.msra.mxu0 %v4066
    %4096 = vmatprep.subr.mxu0 0.0
    %4097 = vmatpush1.msra.mxu0 %v4067
    %4098 = vmatprep.subr.mxu0 0.0
    %4099 = vmatpush1.msra.mxu0 0.0
    %4100 = vmatprep.subr.mxu0 0.0
    %4101 = vmatpush1.msra.mxu0 0.0
    %4102 = vmatprep.subr.mxu0 0.0
    %4103 = vmatpush1.msra.mxu0 0.0
    %4104 = vmatprep.subr.mxu0 0.0
    %4105 = vmatpush1.msra.mxu0 0.0
    %4106 = vmatprep.subr.mxu0 0.0
    %4107 = vmatpush1.msra.mxu0 0.0
    %4108 = vmatprep.subr.mxu0 0.0
    %4109 = vmatpush1.msra.mxu0 0.0
    %4110 = vmatprep.subr.mxu0 0.0
    %4111 = vmatpush1.msra.mxu0 0.0
    %4112 = vmatprep.subr.mxu0 0.0
    %4113 = vmatpush1.msra.mxu0 0.0
    %4114 = vmatprep.subr.mxu0 0.0
    %4115 = vmatpush1.msra.mxu0 0.0
    %4116 = vmatprep.subr.mxu0 0.0
    %4117 = vmatpush1.msra.mxu0 0.0
    %4118 = vmatprep.subr.mxu0 0.0
    %4119 = vmatpush1.msra.mxu0 0.0
    %4120 = vmatprep.subr.mxu0 0.0
    %4121 = vmatpush1.msra.mxu0 0.0
    %4122 = vmatprep.subr.mxu0 0.0
    %4123 = vmatpush1.msra.mxu0 0.0
    %4124 = vmatprep.subr.mxu0 0.0
    %4125 = vmatpush1.msra.mxu0 0.0
    %4126 = vmatprep.subr.mxu0 0.0
    %4127 = vmatpush1.msra.mxu0 0.0
    %4128 = vmatprep.subr.mxu0 0.0
    %4129 = vmatpush1.msra.mxu0 0.0
    %4130 = vmatprep.subr.mxu0 0.0
    %4131 = vmatpush1.msra.mxu0 0.0
    %4132 = vmatprep.subr.mxu0 0.0
    %4133 = vmatpush1.msra.mxu0 0.0
    %4134 = vmatprep.subr.mxu0 0.0
    %4135 = vmatpush1.msra.mxu0 0.0
    %4136 = vmatprep.subr.mxu0 0.0
    %4137 = vmatpush1.msra.mxu0 0.0
    %4138 = vmatprep.subr.mxu0 0.0
    %4139 = vmatpush1.msra.mxu0 0.0
    %4140 = vmatprep.subr.mxu0 0.0
    %4141 = vmatpush1.msra.mxu0 0.0
    %4142 = vmatprep.subr.mxu0 0.0
    %4143 = vmatpush1.msra.mxu0 0.0
    %4144 = vmatprep.subr.mxu0 0.0
    %4145 = vmatpush1.msra.mxu0 0.0
    %4146 = vmatprep.mubr.f32.mxu0 0.0
    %4147 = vmatmul.mubr.f32.gmra.mrb[0].mxu0 %v4077
    %v4148 = vpop.f32.mrb[0].mxu0
    %v4149 = vadd.f32 %v4074, %v4148
    %v4150 = vpop.f32.mrb[0].mxu0
    %4151 = vmatprep.mubr.f32.mxu0 0.0
    %4152 = vmatmul.mubr.f32.gmra.mrb[0].mxu0 %v4080
    %v4153 = vpop.f32.mrb[0].mxu0
    %v4154 = vadd.f32 %v4074, %v4153
    %v4155 = vpop.f32.mrb[0].mxu0
    %4156 = vdwg.mxu0
    %v4157 = vadd.f32 %v4149, %v3953
    %v4158 = vadd.f32 %v4154, %v3954
    %s4159 = scalar_lea.vmem %s41, 1
    %v4160 = vld [vmem:[%s4159] sm:$0x1]
    %s4161 = scalar_lea.vmem %s43, 1
    %v4162 = vld [vmem:[%s4161] sm:$0x1]
    %v4163 = vsel %vm321, %v4157, 0.0
    %4164 = vadd.xlane.f32.xlu0 %v4163
    %v4165 = vpop.xlane.xlu0 %4164
    %v4166 = vsel %vm321, %v4158, 0.0
    %4167 = vadd.xlane.f32.xlu0 %v4166
    %v4168 = vpop.xlane.xlu0 %4167
    %v4169 = vmul.f32 %v4165, %v419
    %v4170 = vmul.f32 %v4168, %v419
    %v4171 = vsub.f32 %v4157, %v4169
    %v4172 = vsub.f32 %v4158, %v4170
    %v4173 = vmul.f32 %v4171, %v4171
    %v4174 = vmul.f32 %v4172, %v4172
    %v4175 = vsel %vm321, %v4173, 0.0
    %4176 = vadd.xlane.f32.xlu0 %v4175
    %v4177 = vpop.xlane.xlu0 %4176
    %v4178 = vsel %vm321, %v4174, 0.0
    %4179 = vadd.xlane.f32.xlu0 %v4178
    %v4180 = vpop.xlane.xlu0 %4179
    %v4181 = vmul.f32 %v4177, %v419
    %v4182 = vmul.f32 %v4180, %v419
    %v4183 = vadd.f32 %v4181, 1e-12
    %v4184 = vadd.f32 %v4182, 1e-12
    %v4185 = vrsqrt.pop %v4183
    %v4186 = vrsqrt.pop %v4184
    %v4187 = vmul.f32 %v4171, %v4185
    %v4188 = vmul.f32 %v4172, %v4186
    %v4190 = vlaneseq
    %v4191 = vshrl.u32 %v4190, 7
    %v4192 = vsub.s32 0, %v4191
    %v4193 = vrot.slane %v4160, %v4192
    %v4195 = vmul.f32 %v4187, %v4193
    %v4196 = vmul.f32 %v4188, %v4193
    %v4198 = vlaneseq
    %v4199 = vshrl.u32 %v4198, 7
    %v4200 = vsub.s32 0, %v4199
    %v4201 = vrot.slane %v4162, %v4200
    %v4203 = vadd.f32 %v4195, %v4201
    %v4204 = vadd.f32 %v4196, %v4201
    %4205 = vst.msk [vmem:[#allocation3] sm:$0xff] %vm321, %v4203
    %4206 = vst.msk [vmem:[#allocation3 + $0x8] sm:$0xff] %vm321, %v4204
    %v4207 = vld [vmem:[%s49] sm:$0xff]
    %v4208 = vld [vmem:[%s49 + $0x8] sm:$0xff]
    %v4209 = vld [vmem:[%s49 + $0x10] sm:$0xff]
    %v4210 = vld [vmem:[%s49 + $0x18] sm:$0xff]
    %v4211 = vld [vmem:[%s51] sm:$0x1]
    %v4213 = vlaneseq
    %v4214 = vshrl.u32 %v4213, 7
    %v4215 = vsub.s32 0, %v4214
    %v4216 = vrot.slane %v4211, %v4215
    %v4219 = vsel %vm321, %v4203, 0
    %v4222 = vsel %vm321, %v4204, 0
    %4224 = vmatprep.subr.mxu0 0.0
    %4225 = vmatpush1.msra.mxu0 %v4207
    %4226 = vmatprep.subr.mxu0 0.0
    %4227 = vmatpush1.msra.mxu0 %v4208
    %4228 = vmatprep.subr.mxu0 0.0
    %4229 = vmatpush1.msra.mxu0 %v4209
    %4230 = vmatprep.subr.mxu0 0.0
    %4231 = vmatpush1.msra.mxu0 %v4210
    %4232 = vmatprep.subr.mxu0 0.0
    %4233 = vmatpush1.msra.mxu0 0.0
    %4234 = vmatprep.subr.mxu0 0.0
    %4235 = vmatpush1.msra.mxu0 0.0
    %4236 = vmatprep.subr.mxu0 0.0
    %4237 = vmatpush1.msra.mxu0 0.0
    %4238 = vmatprep.subr.mxu0 0.0
    %4239 = vmatpush1.msra.mxu0 0.0
    %4240 = vmatprep.subr.mxu0 0.0
    %4241 = vmatpush1.msra.mxu0 0.0
    %4242 = vmatprep.subr.mxu0 0.0
    %4243 = vmatpush1.msra.mxu0 0.0
    %4244 = vmatprep.subr.mxu0 0.0
    %4245 = vmatpush1.msra.mxu0 0.0
    %4246 = vmatprep.subr.mxu0 0.0
    %4247 = vmatpush1.msra.mxu0 0.0
    %4248 = vmatprep.subr.mxu0 0.0
    %4249 = vmatpush1.msra.mxu0 0.0
    %4250 = vmatprep.subr.mxu0 0.0
    %4251 = vmatpush1.msra.mxu0 0.0
    %4252 = vmatprep.subr.mxu0 0.0
    %4253 = vmatpush1.msra.mxu0 0.0
    %4254 = vmatprep.subr.mxu0 0.0
    %4255 = vmatpush1.msra.mxu0 0.0
    %4256 = vmatprep.subr.mxu0 0.0
    %4257 = vmatpush1.msra.mxu0 0.0
    %4258 = vmatprep.subr.mxu0 0.0
    %4259 = vmatpush1.msra.mxu0 0.0
    %4260 = vmatprep.subr.mxu0 0.0
    %4261 = vmatpush1.msra.mxu0 0.0
    %4262 = vmatprep.subr.mxu0 0.0
    %4263 = vmatpush1.msra.mxu0 0.0
    %4264 = vmatprep.subr.mxu0 0.0
    %4265 = vmatpush1.msra.mxu0 0.0
    %4266 = vmatprep.subr.mxu0 0.0
    %4267 = vmatpush1.msra.mxu0 0.0
    %4268 = vmatprep.subr.mxu0 0.0
    %4269 = vmatpush1.msra.mxu0 0.0
    %4270 = vmatprep.subr.mxu0 0.0
    %4271 = vmatpush1.msra.mxu0 0.0
    %4272 = vmatprep.subr.mxu0 0.0
    %4273 = vmatpush1.msra.mxu0 0.0
    %4274 = vmatprep.subr.mxu0 0.0
    %4275 = vmatpush1.msra.mxu0 0.0
    %4276 = vmatprep.subr.mxu0 0.0
    %4277 = vmatpush1.msra.mxu0 0.0
    %4278 = vmatprep.subr.mxu0 0.0
    %4279 = vmatpush1.msra.mxu0 0.0
    %4280 = vmatprep.subr.mxu0 0.0
    %4281 = vmatpush1.msra.mxu0 0.0
    %4282 = vmatprep.subr.mxu0 0.0
    %4283 = vmatpush1.msra.mxu0 0.0
    %4284 = vmatprep.subr.mxu0 0.0
    %4285 = vmatpush1.msra.mxu0 0.0
    %4286 = vmatprep.subr.mxu0 0.0
    %4287 = vmatpush1.msra.mxu0 0.0
    %4288 = vmatprep.mubr.f32.mxu0 0.0
    %4289 = vmatmul.mubr.f32.gmra.mrb[0].mxu0 %v4219
    %v4290 = vpop.f32.mrb[0].mxu0
    %v4291 = vadd.f32 %v4216, %v4290
    %v4292 = vpop.f32.mrb[0].mxu0
    %4293 = vmatprep.mubr.f32.mxu0 0.0
    %4294 = vmatmul.mubr.f32.gmra.mrb[0].mxu0 %v4222
    %v4295 = vpop.f32.mrb[0].mxu0
    %v4296 = vadd.f32 %v4216, %v4295
    %v4297 = vpop.f32.mrb[0].mxu0
    %4298 = vdwg.mxu0
    %v4299 = vmul.f32 %v4291, 0.5
    %v4300 = vmul.f32 %v4296, 0.5
    %v4301 = vmul.f32 %v4291, 0.70710677
    %v4302 = vmul.f32 %v4296, 0.70710677
    %v4303 = verf.f32.pop %v4301
    %v4304 = verf.f32.pop %v4302
    %v4305 = vadd.f32 %v4303, 1.0
    %v4306 = vadd.f32 %v4304, 1.0
    %v4307 = vmul.f32 %v4299, %v4305
    %v4308 = vmul.f32 %v4300, %v4306
    %v4309 = vld [vmem:[%s53] sm:$0x1]
    %v4310 = vld [vmem:[%s55] sm:$0x1]
    %v4311 = vsel %vm321, %v4307, 0.0
    %4312 = vadd.xlane.f32.xlu0 %v4311
    %v4313 = vpop.xlane.xlu0 %4312
    %v4314 = vsel %vm321, %v4308, 0.0
    %4315 = vadd.xlane.f32.xlu0 %v4314
    %v4316 = vpop.xlane.xlu0 %4315
    %v4317 = vmul.f32 %v4313, %v419
    %v4318 = vmul.f32 %v4316, %v419
    %v4319 = vsub.f32 %v4307, %v4317
    %v4320 = vsub.f32 %v4308, %v4318
    %v4321 = vmul.f32 %v4319, %v4319
    %v4322 = vmul.f32 %v4320, %v4320
    %v4323 = vsel %vm321, %v4321, 0.0
    %4324 = vadd.xlane.f32.xlu0 %v4323
    %v4325 = vpop.xlane.xlu0 %4324
    %v4326 = vsel %vm321, %v4322, 0.0
    %4327 = vadd.xlane.f32.xlu0 %v4326
    %v4328 = vpop.xlane.xlu0 %4327
    %v4329 = vmul.f32 %v4325, %v419
    %v4330 = vmul.f32 %v4328, %v419
    %v4331 = vadd.f32 %v4329, 1e-12
    %v4332 = vadd.f32 %v4330, 1e-12
    %v4333 = vrsqrt.pop %v4331
    %v4334 = vrsqrt.pop %v4332
    %v4335 = vmul.f32 %v4319, %v4333
    %v4336 = vmul.f32 %v4320, %v4334
    %v4338 = vlaneseq
    %v4339 = vshrl.u32 %v4338, 7
    %v4340 = vsub.s32 0, %v4339
    %v4341 = vrot.slane %v4309, %v4340
    %v4343 = vmul.f32 %v4335, %v4341
    %v4344 = vmul.f32 %v4336, %v4341
    %v4346 = vlaneseq
    %v4347 = vshrl.u32 %v4346, 7
    %v4348 = vsub.s32 0, %v4347
    %v4349 = vrot.slane %v4310, %v4348
    %v4351 = vadd.f32 %v4343, %v4349
    %v4352 = vadd.f32 %v4344, %v4349
    %v4353 = vld [vmem:[%s11] sm:$0xff]
    %v4354 = vld [vmem:[%s11 + $0x8] sm:$0xff]
    %v4355 = vld [vmem:[%s11 + $0x10] sm:$0xff]
    %v4356 = vld [vmem:[%s11 + $0x18] sm:$0xff]
    %v4357 = vld [vmem:[%s11 + $0x20] sm:$0xff]
    %v4358 = vld [vmem:[%s11 + $0x28] sm:$0xff]
    %v4359 = vld [vmem:[%s11 + $0x30] sm:$0xff]
    %v4360 = vld [vmem:[%s11 + $0x38] sm:$0xff]
    %v4361 = vld [vmem:[#allocation12] sm:$0x1]
    %v4363 = vlaneseq
    %v4364 = vshrl.u32 %v4363, 7
    %v4365 = vsub.s32 0, %v4364
    %v4366 = vrot.slane %v4361, %v4365
    %v4369 = vsel %vm321, %v4351, 0
    %v4372 = vsel %vm321, %v4352, 0
    %v4375 = vsel %vm321, %v4353, 0
    %v4378 = vsel %vm321, %v4354, 0
    %v4381 = vsel %vm321, %v4355, 0
    %v4384 = vsel %vm321, %v4356, 0
    %v4387 = vsel %vm321, %v4357, 0
    %v4390 = vsel %vm321, %v4358, 0
    %v4393 = vsel %vm321, %v4359, 0
    %v4396 = vsel %vm321, %v4360, 0
    %4398 = vmatprep.subr.mxu0 0.0
    %4399 = vmatpush1.xpose.msra.mxu0 %v4375
    %4400 = vmatprep.subr.mxu0 0.0
    %4401 = vmatpush1.xpose.msra.mxu0 %v4378
    %4402 = vmatprep.subr.mxu0 0.0
    %4403 = vmatpush1.xpose.msra.mxu0 %v4381
    %4404 = vmatprep.subr.mxu0 0.0
    %4405 = vmatpush1.xpose.msra.mxu0 %v4384
    %4406 = vmatprep.subr.mxu0 0.0
    %4407 = vmatpush1.xpose.msra.mxu0 %v4387
    %4408 = vmatprep.subr.mxu0 0.0
    %4409 = vmatpush1.xpose.msra.mxu0 %v4390
    %4410 = vmatprep.subr.mxu0 0.0
    %4411 = vmatpush1.xpose.msra.mxu0 %v4393
    %4412 = vmatprep.subr.mxu0 0.0
    %4413 = vmatpush1.xpose.msra.mxu0 %v4396
    %4414 = vmatprep.subr.mxu0 0.0
    %4415 = vmatpush1.xpose.msra.mxu0 0.0
    %4416 = vmatprep.subr.mxu0 0.0
    %4417 = vmatpush1.xpose.msra.mxu0 0.0
    %4418 = vmatprep.subr.mxu0 0.0
    %4419 = vmatpush1.xpose.msra.mxu0 0.0
    %4420 = vmatprep.subr.mxu0 0.0
    %4421 = vmatpush1.xpose.msra.mxu0 0.0
    %4422 = vmatprep.subr.mxu0 0.0
    %4423 = vmatpush1.xpose.msra.mxu0 0.0
    %4424 = vmatprep.subr.mxu0 0.0
    %4425 = vmatpush1.xpose.msra.mxu0 0.0
    %4426 = vmatprep.subr.mxu0 0.0
    %4427 = vmatpush1.xpose.msra.mxu0 0.0
    %4428 = vmatprep.subr.mxu0 0.0
    %4429 = vmatpush1.xpose.msra.mxu0 0.0
    %4430 = vmatprep.subr.mxu0 0.0
    %4431 = vmatpush1.xpose.msra.mxu0 0.0
    %4432 = vmatprep.subr.mxu0 0.0
    %4433 = vmatpush1.xpose.msra.mxu0 0.0
    %4434 = vmatprep.subr.mxu0 0.0
    %4435 = vmatpush1.xpose.msra.mxu0 0.0
    %4436 = vmatprep.subr.mxu0 0.0
    %4437 = vmatpush1.xpose.msra.mxu0 0.0
    %4438 = vmatprep.subr.mxu0 0.0
    %4439 = vmatpush1.xpose.msra.mxu0 0.0
    %4440 = vmatprep.subr.mxu0 0.0
    %4441 = vmatpush1.xpose.msra.mxu0 0.0
    %4442 = vmatprep.subr.mxu0 0.0
    %4443 = vmatpush1.xpose.msra.mxu0 0.0
    %4444 = vmatprep.subr.mxu0 0.0
    %4445 = vmatpush1.xpose.msra.mxu0 0.0
    %4446 = vmatprep.subr.mxu0 0.0
    %4447 = vmatpush1.xpose.msra.mxu0 0.0
    %4448 = vmatprep.subr.mxu0 0.0
    %4449 = vmatpush1.xpose.msra.mxu0 0.0
    %4450 = vmatprep.subr.mxu0 0.0
    %4451 = vmatpush1.xpose.msra.mxu0 0.0
    %4452 = vmatprep.subr.mxu0 0.0
    %4453 = vmatpush1.xpose.msra.mxu0 0.0
    %4454 = vmatprep.subr.mxu0 0.0
    %4455 = vmatpush1.xpose.msra.mxu0 0.0
    %4456 = vmatprep.subr.mxu0 0.0
    %4457 = vmatpush1.xpose.msra.mxu0 0.0
    %4458 = vmatprep.subr.mxu0 0.0
    %4459 = vmatpush1.xpose.msra.mxu0 0.0
    %4460 = vmatprep.subr.mxu0 0.0
    %4461 = vmatpush1.xpose.msra.mxu0 0.0
    %4462 = vmatprep.mubr.f32.mxu0 0.0
    %4463 = vmatmul.mubr.f32.gmra.mrb[0].mxu0 %v4369
    %v4464 = vpop.f32.mrb[0].mxu0
    %v4465 = vadd.f32 %v4366, %v4464
    %v4466 = vpop.f32.mrb[0].mxu0
    %4467 = vmatprep.mubr.f32.mxu0 0.0
    %4468 = vmatmul.mubr.f32.gmra.mrb[0].mxu0 %v4372
    %v4469 = vpop.f32.mrb[0].mxu0
    %v4470 = vadd.f32 %v4366, %v4469
    %v4471 = vpop.f32.mrb[0].mxu0
    %4472 = vdwg.mxu0
    %v4473 = vld [vmem:[%s7] sm:$0xff]
    %v4474 = vld [vmem:[%s7 + $0x8] sm:$0xff]
    %vm4475 = vcmp.ne.s32.totalorder %v4473, 4294967295
    %vm4476 = vcmp.ne.s32.totalorder %v4474, 4294967295
    %v4477 = vsel %vm4475, 1, 0
    %v4478 = vsel %vm4476, 1, 0
    %v4479 = vcvt.s32.f32 %v4477
    %v4480 = vcvt.s32.f32 %v4478
    %4481 = vset.pattern.permute.xlu0 0
    %4482 = vperm.xlu0 %4481, %v4473
    %v4483 = vpop.permute.xlu0 %4482
    %4484 = vset.pattern.permute.xlu0 0
    %4485 = vperm.xlu0 %4484, %v4474
    %v4486 = vpop.permute.xlu0 %4485
    %vm4487 = vcmp.eq.s32.totalorder %v198, %v4483
    %vm4488 = vcmp.eq.s32.totalorder %v198, %v4486
    %v4489 = vsel %vm4487, 1, 0
    %v4490 = vsel %vm4488, 1, 0
    %v4491 = vcvt.s32.f32 %v4489
    %v4492 = vcvt.s32.f32 %v4490
    %v4493 = vsel %vm327, %v4465, -inf
    %4494 = vmax.xlane.f32.xlu0 %v4493
    %v4495 = vpop.xlane.xlu0 %4494
    %v4496 = vsel %vm327, %v4470, -inf
    %4497 = vmax.xlane.f32.xlu0 %v4496
    %v4498 = vpop.xlane.xlu0 %4497
    %v4499 = vsub.f32 %v4465, %v4495
    %v4500 = vsub.f32 %v4470, %v4498
    %v4501 = vmul.f32 %v4499, 1.442695
    %v4502 = vpow.pop %v4501
    %v4503 = vmul.f32 %v4500, 1.442695
    %v4504 = vpow.pop %v4503
    %v4505 = vsel %vm327, %v4502, 0.0
    %4506 = vadd.xlane.f32.xlu0 %v4505
    %v4507 = vpop.xlane.xlu0 %4506
    %v4508 = vsel %vm327, %v4504, 0.0
    %4509 = vadd.xlane.f32.xlu0 %v4508
    %v4510 = vpop.xlane.xlu0 %4509
    %v4511 = vlog2.pop %v4507
    %v4512 = vmul.f32 %v4511, 0.6931472
    %v4513 = vlog2.pop %v4510
    %v4514 = vmul.f32 %v4513, 0.6931472
    %v4515 = vadd.f32 %v4512, %v4495
    %v4516 = vadd.f32 %v4514, %v4498
    %v4517 = vmul.f32 %v4491, %v4465
    %v4518 = vmul.f32 %v4492, %v4470
    %v4519 = vsel %vm327, %v4517, 0.0
    %4520 = vadd.xlane.f32.xlu0 %v4519
    %v4521 = vpop.xlane.xlu0 %4520
    %v4522 = vsel %vm327, %v4518, 0.0
    %4523 = vadd.xlane.f32.xlu0 %v4522
    %v4524 = vpop.xlane.xlu0 %4523
    %v4525 = vsub.f32 %v4515, %v4521
    %v4526 = vsub.f32 %v4516, %v4524
    %v4527 = vmul.f32 %v4525, %v4479
    %v4528 = vmul.f32 %v4526, %v4480
    %vm4529 = vcmask 130048
    %v4531 = vsel %vm4529, 1.0, 0
    %4533 = vmatprep.subr.mxu0 0.0
    %4534 = vmatpush1.msra.mxu0 %v4527
    %4535 = vmatprep.subr.mxu0 0.0
    %4536 = vmatpush1.msra.mxu0 %v4528
    %4537 = vmatprep.subr.mxu0 0.0
    %4538 = vmatpush1.msra.mxu0 0.0
    %4539 = vmatprep.subr.mxu0 0.0
    %4540 = vmatpush1.msra.mxu0 0.0
    %4541 = vmatprep.subr.mxu0 0.0
    %4542 = vmatpush1.msra.mxu0 0.0
    %4543 = vmatprep.subr.mxu0 0.0
    %4544 = vmatpush1.msra.mxu0 0.0
    %4545 = vmatprep.subr.mxu0 0.0
    %4546 = vmatpush1.msra.mxu0 0.0
    %4547 = vmatprep.subr.mxu0 0.0
    %4548 = vmatpush1.msra.mxu0 0.0
    %4549 = vmatprep.subr.mxu0 0.0
    %4550 = vmatpush1.msra.mxu0 0.0
    %4551 = vmatprep.subr.mxu0 0.0
    %4552 = vmatpush1.msra.mxu0 0.0
    %4553 = vmatprep.subr.mxu0 0.0
    %4554 = vmatpush1.msra.mxu0 0.0
    %4555 = vmatprep.subr.mxu0 0.0
    %4556 = vmatpush1.msra.mxu0 0.0
    %4557 = vmatprep.subr.mxu0 0.0
    %4558 = vmatpush1.msra.mxu0 0.0
    %4559 = vmatprep.subr.mxu0 0.0
    %4560 = vmatpush1.msra.mxu0 0.0
    %4561 = vmatprep.subr.mxu0 0.0
    %4562 = vmatpush1.msra.mxu0 0.0
    %4563 = vmatprep.subr.mxu0 0.0
    %4564 = vmatpush1.msra.mxu0 0.0
    %4565 = vmatprep.subr.mxu0 0.0
    %4566 = vmatpush1.msra.mxu0 0.0
    %4567 = vmatprep.subr.mxu0 0.0
    %4568 = vmatpush1.msra.mxu0 0.0
    %4569 = vmatprep.subr.mxu0 0.0
    %4570 = vmatpush1.msra.mxu0 0.0
    %4571 = vmatprep.subr.mxu0 0.0
    %4572 = vmatpush1.msra.mxu0 0.0
    %4573 = vmatprep.subr.mxu0 0.0
    %4574 = vmatpush1.msra.mxu0 0.0
    %4575 = vmatprep.subr.mxu0 0.0
    %4576 = vmatpush1.msra.mxu0 0.0
    %4577 = vmatprep.subr.mxu0 0.0
    %4578 = vmatpush1.msra.mxu0 0.0
    %4579 = vmatprep.subr.mxu0 0.0
    %4580 = vmatpush1.msra.mxu0 0.0
    %4581 = vmatprep.subr.mxu0 0.0
    %4582 = vmatpush1.msra.mxu0 0.0
    %4583 = vmatprep.subr.mxu0 0.0
    %4584 = vmatpush1.msra.mxu0 0.0
    %4585 = vmatprep.subr.mxu0 0.0
    %4586 = vmatpush1.msra.mxu0 0.0
    %4587 = vmatprep.subr.mxu0 0.0
    %4588 = vmatpush1.msra.mxu0 0.0
    %4589 = vmatprep.subr.mxu0 0.0
    %4590 = vmatpush1.msra.mxu0 0.0
    %4591 = vmatprep.subr.mxu0 0.0
    %4592 = vmatpush1.msra.mxu0 0.0
    %4593 = vmatprep.subr.mxu0 0.0
    %4594 = vmatpush1.msra.mxu0 0.0
    %4595 = vmatprep.subr.mxu0 0.0
    %4596 = vmatpush1.msra.mxu0 0.0
    %4597 = vmatprep.mubr.f32.mxu0 0.0
    %4598 = vmatmul.mubr.f32.gmra.mrb[0].mxu0 %v4531
    %v4599 = vpop.f32.mrb[0].mxu0
    %v4600 = vadd.f32 0.0, %v4599
    %v4601 = vpop.f32.mrb[0].mxu0
    %4602 = vdwg.mxu0
    %4603 = vmatprep.subr.mxu0 0.0
    %4604 = vmatpush1.msra.mxu0 %v4479
    %4605 = vmatprep.subr.mxu0 0.0
    %4606 = vmatpush1.msra.mxu0 %v4480
    %4607 = vmatprep.subr.mxu0 0.0
    %4608 = vmatpush1.msra.mxu0 0.0
    %4609 = vmatprep.subr.mxu0 0.0
    %4610 = vmatpush1.msra.mxu0 0.0
    %4611 = vmatprep.subr.mxu0 0.0
    %4612 = vmatpush1.msra.mxu0 0.0
    %4613 = vmatprep.subr.mxu0 0.0
    %4614 = vmatpush1.msra.mxu0 0.0
    %4615 = vmatprep.subr.mxu0 0.0
    %4616 = vmatpush1.msra.mxu0 0.0
    %4617 = vmatprep.subr.mxu0 0.0
    %4618 = vmatpush1.msra.mxu0 0.0
    %4619 = vmatprep.subr.mxu0 0.0
    %4620 = vmatpush1.msra.mxu0 0.0
    %4621 = vmatprep.subr.mxu0 0.0
    %4622 = vmatpush1.msra.mxu0 0.0
    %4623 = vmatprep.subr.mxu0 0.0
    %4624 = vmatpush1.msra.mxu0 0.0
    %4625 = vmatprep.subr.mxu0 0.0
    %4626 = vmatpush1.msra.mxu0 0.0
    %4627 = vmatprep.subr.mxu0 0.0
    %4628 = vmatpush1.msra.mxu0 0.0
    %4629 = vmatprep.subr.mxu0 0.0
    %4630 = vmatpush1.msra.mxu0 0.0
    %4631 = vmatprep.subr.mxu0 0.0
    %4632 = vmatpush1.msra.mxu0 0.0
    %4633 = vmatprep.subr.mxu0 0.0
    %4634 = vmatpush1.msra.mxu0 0.0
    %4635 = vmatprep.subr.mxu0 0.0
    %4636 = vmatpush1.msra.mxu0 0.0
    %4637 = vmatprep.subr.mxu0 0.0
    %4638 = vmatpush1.msra.mxu0 0.0
    %4639 = vmatprep.subr.mxu0 0.0
    %4640 = vmatpush1.msra.mxu0 0.0
    %4641 = vmatprep.subr.mxu0 0.0
    %4642 = vmatpush1.msra.mxu0 0.0
    %4643 = vmatprep.subr.mxu0 0.0
    %4644 = vmatpush1.msra.mxu0 0.0
    %4645 = vmatprep.subr.mxu0 0.0
    %4646 = vmatpush1.msra.mxu0 0.0
    %4647 = vmatprep.subr.mxu0 0.0
    %4648 = vmatpush1.msra.mxu0 0.0
    %4649 = vmatprep.subr.mxu0 0.0
    %4650 = vmatpush1.msra.mxu0 0.0
    %4651 = vmatprep.subr.mxu0 0.0
    %4652 = vmatpush1.msra.mxu0 0.0
    %4653 = vmatprep.subr.mxu0 0.0
    %4654 = vmatpush1.msra.mxu0 0.0
    %4655 = vmatprep.subr.mxu0 0.0
    %4656 = vmatpush1.msra.mxu0 0.0
    %4657 = vmatprep.subr.mxu0 0.0
    %4658 = vmatpush1.msra.mxu0 0.0
    %4659 = vmatprep.subr.mxu0 0.0
    %4660 = vmatpush1.msra.mxu0 0.0
    %4661 = vmatprep.subr.mxu0 0.0
    %4662 = vmatpush1.msra.mxu0 0.0
    %4663 = vmatprep.subr.mxu0 0.0
    %4664 = vmatpush1.msra.mxu0 0.0
    %4665 = vmatprep.subr.mxu0 0.0
    %4666 = vmatpush1.msra.mxu0 0.0
    %4667 = vmatprep.mubr.f32.mxu0 0.0
    %4668 = vmatmul.mubr.f32.gmra.mrb[0].mxu0 %v4531
    %v4669 = vpop.f32.mrb[0].mxu0
    %v4670 = vadd.f32 0.0, %v4669
    %v4671 = vpop.f32.mrb[0].mxu0
    %4672 = vdwg.mxu0
    %v4673 = vmax.f32 %v4670, 1.0
    %v4674 = vrcp.pop %v4673
    %v4675 = vmul.f32 %v4600, %v4674
    %v4676 = vld [vmem:[#allocation3] sm:$0x1]
    %v4677 = vld [vmem:[%s45] sm:$0xff]
    %v4678 = vld [vmem:[%s45 + $0x8] sm:$0xff]
    %v4679 = vld [vmem:[%s45 + $0x10] sm:$0xff]
    %v4680 = vld [vmem:[%s45 + $0x18] sm:$0xff]
    %v4681 = vld [vmem:[%s47] sm:$0x1]
    %v4683 = vsel %vm321, %v4676, 0
    %4685 = vmatprep.subr.mxu0 0.0
    %4686 = vmatpush1.msra.mxu0 %v4677
    %4687 = vmatprep.subr.mxu0 0.0
    %4688 = vmatpush1.msra.mxu0 %v4678
    %4689 = vmatprep.subr.mxu0 0.0
    %4690 = vmatpush1.msra.mxu0 %v4679
    %4691 = vmatprep.subr.mxu0 0.0
    %4692 = vmatpush1.msra.mxu0 %v4680
    %4693 = vmatprep.subr.mxu0 0.0
    %4694 = vmatpush1.msra.mxu0 0.0
    %4695 = vmatprep.subr.mxu0 0.0
    %4696 = vmatpush1.msra.mxu0 0.0
    %4697 = vmatprep.subr.mxu0 0.0
    %4698 = vmatpush1.msra.mxu0 0.0
    %4699 = vmatprep.subr.mxu0 0.0
    %4700 = vmatpush1.msra.mxu0 0.0
    %4701 = vmatprep.subr.mxu0 0.0
    %4702 = vmatpush1.msra.mxu0 0.0
    %4703 = vmatprep.subr.mxu0 0.0
    %4704 = vmatpush1.msra.mxu0 0.0
    %4705 = vmatprep.subr.mxu0 0.0
    %4706 = vmatpush1.msra.mxu0 0.0
    %4707 = vmatprep.subr.mxu0 0.0
    %4708 = vmatpush1.msra.mxu0 0.0
    %4709 = vmatprep.subr.mxu0 0.0
    %4710 = vmatpush1.msra.mxu0 0.0
    %4711 = vmatprep.subr.mxu0 0.0
    %4712 = vmatpush1.msra.mxu0 0.0
    %4713 = vmatprep.subr.mxu0 0.0
    %4714 = vmatpush1.msra.mxu0 0.0
    %4715 = vmatprep.subr.mxu0 0.0
    %4716 = vmatpush1.msra.mxu0 0.0
    %4717 = vmatprep.subr.mxu0 0.0
    %4718 = vmatpush1.msra.mxu0 0.0
    %4719 = vmatprep.subr.mxu0 0.0
    %4720 = vmatpush1.msra.mxu0 0.0
    %4721 = vmatprep.subr.mxu0 0.0
    %4722 = vmatpush1.msra.mxu0 0.0
    %4723 = vmatprep.subr.mxu0 0.0
    %4724 = vmatpush1.msra.mxu0 0.0
    %4725 = vmatprep.subr.mxu0 0.0
    %4726 = vmatpush1.msra.mxu0 0.0
    %4727 = vmatprep.subr.mxu0 0.0
    %4728 = vmatpush1.msra.mxu0 0.0
    %4729 = vmatprep.subr.mxu0 0.0
    %4730 = vmatpush1.msra.mxu0 0.0
    %4731 = vmatprep.subr.mxu0 0.0
    %4732 = vmatpush1.msra.mxu0 0.0
    %4733 = vmatprep.subr.mxu0 0.0
    %4734 = vmatpush1.msra.mxu0 0.0
    %4735 = vmatprep.subr.mxu0 0.0
    %4736 = vmatpush1.msra.mxu0 0.0
    %4737 = vmatprep.subr.mxu0 0.0
    %4738 = vmatpush1.msra.mxu0 0.0
    %4739 = vmatprep.subr.mxu0 0.0
    %4740 = vmatpush1.msra.mxu0 0.0
    %4741 = vmatprep.subr.mxu0 0.0
    %4742 = vmatpush1.msra.mxu0 0.0
    %4743 = vmatprep.subr.mxu0 0.0
    %4744 = vmatpush1.msra.mxu0 0.0
    %4745 = vmatprep.subr.mxu0 0.0
    %4746 = vmatpush1.msra.mxu0 0.0
    %4747 = vmatprep.subr.mxu0 0.0
    %4748 = vmatpush1.msra.mxu0 0.0
    %4749 = vmatprep.mubr.f32.mxu0 0.0
    %4750 = vmatmul.mubr.f32.gmra.mrb[0].mxu0 %v4683
    %v4751 = vpop.f32.mrb[0].mxu0
    %v4752 = vadd.f32 %v4681, %v4751
    %v4753 = vpop.f32.mrb[0].mxu0
    %4754 = vdwg.mxu0
    %v4755 = vtanh.pop %v4752
    %v4756 = vld [vmem:[%s59] sm:$0xff]
    %v4757 = vld [vmem:[%s59 + $0x8] sm:$0xff]
    %v4758 = vld [vmem:[%s59 + $0x10] sm:$0xff]
    %v4759 = vld [vmem:[%s59 + $0x18] sm:$0xff]
    %v4760 = vld [vmem:[%s61] sm:$0x1]
    %v4762 = vsel %vm321, %v4755, 0
    %4764 = vmatprep.subr.mxu0 0.0
    %4765 = vmatpush1.msra.mxu0 %v4756
    %4766 = vmatprep.subr.mxu0 0.0
    %4767 = vmatpush1.msra.mxu0 %v4757
    %4768 = vmatprep.subr.mxu0 0.0
    %4769 = vmatpush1.msra.mxu0 %v4758
    %4770 = vmatprep.subr.mxu0 0.0
    %4771 = vmatpush1.msra.mxu0 %v4759
    %4772 = vmatprep.subr.mxu0 0.0
    %4773 = vmatpush1.msra.mxu0 0.0
    %4774 = vmatprep.subr.mxu0 0.0
    %4775 = vmatpush1.msra.mxu0 0.0
    %4776 = vmatprep.subr.mxu0 0.0
    %4777 = vmatpush1.msra.mxu0 0.0
    %4778 = vmatprep.subr.mxu0 0.0
    %4779 = vmatpush1.msra.mxu0 0.0
    %4780 = vmatprep.subr.mxu0 0.0
    %4781 = vmatpush1.msra.mxu0 0.0
    %4782 = vmatprep.subr.mxu0 0.0
    %4783 = vmatpush1.msra.mxu0 0.0
    %4784 = vmatprep.subr.mxu0 0.0
    %4785 = vmatpush1.msra.mxu0 0.0
    %4786 = vmatprep.subr.mxu0 0.0
    %4787 = vmatpush1.msra.mxu0 0.0
    %4788 = vmatprep.subr.mxu0 0.0
    %4789 = vmatpush1.msra.mxu0 0.0
    %4790 = vmatprep.subr.mxu0 0.0
    %4791 = vmatpush1.msra.mxu0 0.0
    %4792 = vmatprep.subr.mxu0 0.0
    %4793 = vmatpush1.msra.mxu0 0.0
    %4794 = vmatprep.subr.mxu0 0.0
    %4795 = vmatpush1.msra.mxu0 0.0
    %4796 = vmatprep.subr.mxu0 0.0
    %4797 = vmatpush1.msra.mxu0 0.0
    %4798 = vmatprep.subr.mxu0 0.0
    %4799 = vmatpush1.msra.mxu0 0.0
    %4800 = vmatprep.subr.mxu0 0.0
    %4801 = vmatpush1.msra.mxu0 0.0
    %4802 = vmatprep.subr.mxu0 0.0
    %4803 = vmatpush1.msra.mxu0 0.0
    %4804 = vmatprep.subr.mxu0 0.0
    %4805 = vmatpush1.msra.mxu0 0.0
    %4806 = vmatprep.subr.mxu0 0.0
    %4807 = vmatpush1.msra.mxu0 0.0
    %4808 = vmatprep.subr.mxu0 0.0
    %4809 = vmatpush1.msra.mxu0 0.0
    %4810 = vmatprep.subr.mxu0 0.0
    %4811 = vmatpush1.msra.mxu0 0.0
    %4812 = vmatprep.subr.mxu0 0.0
    %4813 = vmatpush1.msra.mxu0 0.0
    %4814 = vmatprep.subr.mxu0 0.0
    %4815 = vmatpush1.msra.mxu0 0.0
    %4816 = vmatprep.subr.mxu0 0.0
    %4817 = vmatpush1.msra.mxu0 0.0
    %4818 = vmatprep.subr.mxu0 0.0
    %4819 = vmatpush1.msra.mxu0 0.0
    %4820 = vmatprep.subr.mxu0 0.0
    %4821 = vmatpush1.msra.mxu0 0.0
    %4822 = vmatprep.subr.mxu0 0.0
    %4823 = vmatpush1.msra.mxu0 0.0
    %4824 = vmatprep.subr.mxu0 0.0
    %4825 = vmatpush1.msra.mxu0 0.0
    %4826 = vmatprep.subr.mxu0 0.0
    %4827 = vmatpush1.msra.mxu0 0.0
    %4828 = vmatprep.mubr.f32.mxu0 0.0
    %4829 = vmatmul.mubr.f32.gmra.mrb[0].mxu0 %v4762
    %v4830 = vpop.f32.mrb[0].mxu0
    %v4831 = vadd.f32 %v4760, %v4830
    %v4832 = vpop.f32.mrb[0].mxu0
    %4833 = vdwg.mxu0
    %s4834 = sld [smem:[#allocation4]]
    %v4835 = vstv %s4834
    %vm4836 = vcmp.eq.s32.totalorder %v198, %v4835
    %v4837 = vsel %vm4836, 1, 0
    %v4838 = vcvt.s32.f32 %v4837
    %vm4839 = vcmask 8192
    %v4840 = vsel %vm4839, %v4831, -inf
    %4841 = vmax.xlane.f32.xlu0 %v4840
    %v4842 = vpop.xlane.xlu0 %4841
    %v4843 = vsub.f32 %v4831, %v4842
    %v4844 = vmul.f32 %v4843, 1.442695
    %v4845 = vpow.pop %v4844
    %v4846 = vsel %vm4839, %v4845, 0.0
    %4847 = vadd.xlane.f32.xlu0 %v4846
    %v4848 = vpop.xlane.xlu0 %4847
    %v4849 = vlog2.pop %v4848
    %v4850 = vmul.f32 %v4849, 0.6931472
    %v4851 = vadd.f32 %v4850, %v4842
    %v4852 = vmul.f32 %v4838, %v4831
    %v4853 = vsel %vm4839, %v4852, 0.0
    %4854 = vadd.xlane.f32.xlu0 %v4853
    %v4855 = vpop.xlane.xlu0 %4854
    %v4856 = vsub.f32 %v4851, %v4855
    %v4857 = vadd.f32 %v4856, 0.0
    %v4858 = vld [vmem:[#allocation3 + $0x8] sm:$0x1]
    %v4860 = vsel %vm321, %v4858, 0
    %4862 = vmatprep.subr.mxu0 0.0
    %4863 = vmatpush1.msra.mxu0 %v4677
    %4864 = vmatprep.subr.mxu0 0.0
    %4865 = vmatpush1.msra.mxu0 %v4678
    %4866 = vmatprep.subr.mxu0 0.0
    %4867 = vmatpush1.msra.mxu0 %v4679
    %4868 = vmatprep.subr.mxu0 0.0
    %4869 = vmatpush1.msra.mxu0 %v4680
    %4870 = vmatprep.subr.mxu0 0.0
    %4871 = vmatpush1.msra.mxu0 0.0
    %4872 = vmatprep.subr.mxu0 0.0
    %4873 = vmatpush1.msra.mxu0 0.0
    %4874 = vmatprep.subr.mxu0 0.0
    %4875 = vmatpush1.msra.mxu0 0.0
    %4876 = vmatprep.subr.mxu0 0.0
    %4877 = vmatpush1.msra.mxu0 0.0
    %4878 = vmatprep.subr.mxu0 0.0
    %4879 = vmatpush1.msra.mxu0 0.0
    %4880 = vmatprep.subr.mxu0 0.0
    %4881 = vmatpush1.msra.mxu0 0.0
    %4882 = vmatprep.subr.mxu0 0.0
    %4883 = vmatpush1.msra.mxu0 0.0
    %4884 = vmatprep.subr.mxu0 0.0
    %4885 = vmatpush1.msra.mxu0 0.0
    %4886 = vmatprep.subr.mxu0 0.0
    %4887 = vmatpush1.msra.mxu0 0.0
    %4888 = vmatprep.subr.mxu0 0.0
    %4889 = vmatpush1.msra.mxu0 0.0
    %4890 = vmatprep.subr.mxu0 0.0
    %4891 = vmatpush1.msra.mxu0 0.0
    %4892 = vmatprep.subr.mxu0 0.0
    %4893 = vmatpush1.msra.mxu0 0.0
    %4894 = vmatprep.subr.mxu0 0.0
    %4895 = vmatpush1.msra.mxu0 0.0
    %4896 = vmatprep.subr.mxu0 0.0
    %4897 = vmatpush1.msra.mxu0 0.0
    %4898 = vmatprep.subr.mxu0 0.0
    %4899 = vmatpush1.msra.mxu0 0.0
    %4900 = vmatprep.subr.mxu0 0.0
    %4901 = vmatpush1.msra.mxu0 0.0
    %4902 = vmatprep.subr.mxu0 0.0
    %4903 = vmatpush1.msra.mxu0 0.0
    %4904 = vmatprep.subr.mxu0 0.0
    %4905 = vmatpush1.msra.mxu0 0.0
    %4906 = vmatprep.subr.mxu0 0.0
    %4907 = vmatpush1.msra.mxu0 0.0
    %4908 = vmatprep.subr.mxu0 0.0
    %4909 = vmatpush1.msra.mxu0 0.0
    %4910 = vmatprep.subr.mxu0 0.0
    %4911 = vmatpush1.msra.mxu0 0.0
    %4912 = vmatprep.subr.mxu0 0.0
    %4913 = vmatpush1.msra.mxu0 0.0
    %4914 = vmatprep.subr.mxu0 0.0
    %4915 = vmatpush1.msra.mxu0 0.0
    %4916 = vmatprep.subr.mxu0 0.0
    %4917 = vmatpush1.msra.mxu0 0.0
    %4918 = vmatprep.subr.mxu0 0.0
    %4919 = vmatpush1.msra.mxu0 0.0
    %4920 = vmatprep.subr.mxu0 0.0
    %4921 = vmatpush1.msra.mxu0 0.0
    %4922 = vmatprep.subr.mxu0 0.0
    %4923 = vmatpush1.msra.mxu0 0.0
    %4924 = vmatprep.subr.mxu0 0.0
    %4925 = vmatpush1.msra.mxu0 0.0
    %4926 = vmatprep.mubr.f32.mxu0 0.0
    %4927 = vmatmul.mubr.f32.gmra.mrb[0].mxu0 %v4860
    %v4928 = vpop.f32.mrb[0].mxu0
    %v4929 = vadd.f32 %v4681, %v4928
    %v4930 = vpop.f32.mrb[0].mxu0
    %4931 = vdwg.mxu0
    %v4932 = vtanh.pop %v4929
    %v4934 = vsel %vm321, %v4932, 0
    %4936 = vmatprep.subr.mxu0 0.0
    %4937 = vmatpush1.msra.mxu0 %v4756
    %4938 = vmatprep.subr.mxu0 0.0
    %4939 = vmatpush1.msra.mxu0 %v4757
    %4940 = vmatprep.subr.mxu0 0.0
    %4941 = vmatpush1.msra.mxu0 %v4758
    %4942 = vmatprep.subr.mxu0 0.0
    %4943 = vmatpush1.msra.mxu0 %v4759
    %4944 = vmatprep.subr.mxu0 0.0
    %4945 = vmatpush1.msra.mxu0 0.0
    %4946 = vmatprep.subr.mxu0 0.0
    %4947 = vmatpush1.msra.mxu0 0.0
    %4948 = vmatprep.subr.mxu0 0.0
    %4949 = vmatpush1.msra.mxu0 0.0
    %4950 = vmatprep.subr.mxu0 0.0
    %4951 = vmatpush1.msra.mxu0 0.0
    %4952 = vmatprep.subr.mxu0 0.0
    %4953 = vmatpush1.msra.mxu0 0.0
    %4954 = vmatprep.subr.mxu0 0.0
    %4955 = vmatpush1.msra.mxu0 0.0
    %4956 = vmatprep.subr.mxu0 0.0
    %4957 = vmatpush1.msra.mxu0 0.0
    %4958 = vmatprep.subr.mxu0 0.0
    %4959 = vmatpush1.msra.mxu0 0.0
    %4960 = vmatprep.subr.mxu0 0.0
    %4961 = vmatpush1.msra.mxu0 0.0
    %4962 = vmatprep.subr.mxu0 0.0
    %4963 = vmatpush1.msra.mxu0 0.0
    %4964 = vmatprep.subr.mxu0 0.0
    %4965 = vmatpush1.msra.mxu0 0.0
    %4966 = vmatprep.subr.mxu0 0.0
    %4967 = vmatpush1.msra.mxu0 0.0
    %4968 = vmatprep.subr.mxu0 0.0
    %4969 = vmatpush1.msra.mxu0 0.0
    %4970 = vmatprep.subr.mxu0 0.0
    %4971 = vmatpush1.msra.mxu0 0.0
    %4972 = vmatprep.subr.mxu0 0.0
    %4973 = vmatpush1.msra.mxu0 0.0
    %4974 = vmatprep.subr.mxu0 0.0
    %4975 = vmatpush1.msra.mxu0 0.0
    %4976 = vmatprep.subr.mxu0 0.0
    %4977 = vmatpush1.msra.mxu0 0.0
    %4978 = vmatprep.subr.mxu0 0.0
    %4979 = vmatpush1.msra.mxu0 0.0
    %4980 = vmatprep.subr.mxu0 0.0
    %4981 = vmatpush1.msra.mxu0 0.0
    %4982 = vmatprep.subr.mxu0 0.0
    %4983 = vmatpush1.msra.mxu0 0.0
    %4984 = vmatprep.subr.mxu0 0.0
    %4985 = vmatpush1.msra.mxu0 0.0
    %4986 = vmatprep.subr.mxu0 0.0
    %4987 = vmatpush1.msra.mxu0 0.0
    %4988 = vmatprep.subr.mxu0 0.0
    %4989 = vmatpush1.msra.mxu0 0.0
    %4990 = vmatprep.subr.mxu0 0.0
    %4991 = vmatpush1.msra.mxu0 0.0
    %4992 = vmatprep.subr.mxu0 0.0
    %4993 = vmatpush1.msra.mxu0 0.0
    %4994 = vmatprep.subr.mxu0 0.0
    %4995 = vmatpush1.msra.mxu0 0.0
    %4996 = vmatprep.subr.mxu0 0.0
    %4997 = vmatpush1.msra.mxu0 0.0
    %4998 = vmatprep.subr.mxu0 0.0
    %4999 = vmatpush1.msra.mxu0 0.0
    %5000 = vmatprep.mubr.f32.mxu0 0.0
    %5001 = vmatmul.mubr.f32.gmra.mrb[0].mxu0 %v4934
    %v5002 = vpop.f32.mrb[0].mxu0
    %v5003 = vadd.f32 %v4760, %v5002
    %v5004 = vpop.f32.mrb[0].mxu0
    %5005 = vdwg.mxu0
    %s5006 = sld [smem:[#allocation4 + $0x1]]
    %v5007 = vstv %s5006
    %vm5008 = vcmp.eq.s32.totalorder %v198, %v5007
    %v5009 = vsel %vm5008, 1, 0
    %v5010 = vcvt.s32.f32 %v5009
    %v5011 = vsel %vm4839, %v5003, -inf
    %5012 = vmax.xlane.f32.xlu0 %v5011
    %v5013 = vpop.xlane.xlu0 %5012
    %v5014 = vsub.f32 %v5003, %v5013
    %v5015 = vmul.f32 %v5014, 1.442695
    %v5016 = vpow.pop %v5015
    %v5017 = vsel %vm4839, %v5016, 0.0
    %5018 = vadd.xlane.f32.xlu0 %v5017
    %v5019 = vpop.xlane.xlu0 %5018
    %v5020 = vlog2.pop %v5019
    %v5021 = vmul.f32 %v5020, 0.6931472
    %v5022 = vadd.f32 %v5021, %v5013
    %v5023 = vmul.f32 %v5010, %v5003
    %v5024 = vsel %vm4839, %v5023, 0.0
    %5025 = vadd.xlane.f32.xlu0 %v5024
    %v5026 = vpop.xlane.xlu0 %5025
    %v5027 = vsub.f32 %v5022, %v5026
    %v5028 = vadd.f32 %v4857, %v5027
    %v5029 = vmul.f32 %v5028, 0.5
    %v5030 = vadd.f32 %v4675, %v5029
    %vm5031 = vcmask 0
    %5032 = vst.msk [vmem:[#allocation14] sm:$0x1] %vm5031, %v5030
    // Predicated region
    $region146: #{bert_for_pretraining.1} parent=1 // pred_check
      _
    $region147: #{bert_for_pretraining.1} parent=1 // pred_check_branch
      %5034 = sbr.rel (0) target = $region149
    $region148: #{bert_for_pretraining.1} parent=1 // pred_region
      %s5036 = ssub.s32 16, 16
      %5037 = vsyncadd [#allocation6], %s5036
      %s5039 = sshll.u32 [#allocation14], 4
      %s5040 = int_to_ptr.vmem [resolvable:$true] %s5039
      %5042 = dma.vmem_to_hbm [thread:$0]  %s5040, 16, %s63, [#allocation6]
    $region149: #{bert_for_pretraining.1} parent=1 // pred_fallthru
      _
    // Predicated region
    $region150: #{bert_for_pretraining.1} parent=1 // pred_check
      _
    $region151: #{bert_for_pretraining.1} parent=1 // pred_check_branch
      %5044 = sbr.rel (0) target = $region153
    $region152: #{bert_for_pretraining.1} parent=1 // pred_region
      %5045 = dma.done [#allocation6], 16
    $region153: #{bert_for_pretraining.1} parent=1 // pred_fallthru
      _
    %5046 = vsyncpa [#allocation5], 1
    %5047 = vsyncpa [#allocation10], 1
    %5048 = vsyncpa [#allocation13], 1
    %5049 = vsyncpa [#allocation6], 1
    %5050 = vsyncpa [#allocation7], 1

</llo_original>
